<compile_context>
chip_gen: v5e
topology: v5e:2x2
jax: 0.10.0
libtpu: 0.0.40
codegen_flags: <defaults>
</compile_context>

<pallas_src>
import functools

import jax
import jax.numpy as jnp
from jax import lax
from jax.experimental import pallas as pl
from jax.experimental.pallas import tpu as pltpu

GROUPS = 32
EPS = 1e-5
TAP_PAD = 128                      # lane-aligned per-tap channel block in the K-concat patch
CHANNELS = (64, 96, 128, 256)      # SimpleCNN conv1..conv4 output channels


def _layer_cfgs(H, W, input_dim):
    cfgs = []
    h, w = H, W
    cin = input_dim
    for l, cout in enumerate(CHANNELS):
        cfgs.append(dict(H=h, W=w, Cin=cin, Cout=cout, pool=(l < 3)))
        if l < 3:
            h, w = h // 2, w // 2
        cin = cout
    return cfgs


# ----------------------------------------------------------------------------
# Fully fused kernel: conv1..conv4 (+GN+ReLU, +pool for layers 1-3) per block
# of NB images.  Inter-layer activations stay in VMEM slabs with zero guard
# rows (vertical zero padding); left/right column masks kill row-wrap taps.
# ----------------------------------------------------------------------------
def _fused_simple_cnn_kernel(*refs, cfgs, NB, global_pool):
    x_ref = refs[0]
    pos = 1
    layer_refs = []
    for l in range(4):
        cnt = 6 if l == 0 else 8               # layers 2-4 also carry (ml, mr) masks
        layer_refs.append(refs[pos:pos + cnt])
        pos += cnt
    o_ref = refs[pos]; pos += 1
    slab_refs = refs[pos:pos + 3]; pos += 3    # input slabs of layers 2, 3, 4
    patch_ref = refs[pos]; pos += 1            # shared K-concat patch (f32, zero-padded)
    yb_refs = refs[pos:pos + 4]                # per-layer (NB*HW, Cout) f32 work buffers

    # Zero guard rows / padded patch columns every step (interiors are always
    # fully overwritten below; unconditional so megacore-split grids stay safe).
    for s in slab_refs:
        s[...] = jnp.zeros_like(s)
    patch_ref[...] = jnp.zeros_like(patch_ref)

    for l in range(4):
        cfg = cfgs[l]
        Hc, Wc, Cin, Cout, pool = cfg["H"], cfg["W"], cfg["Cin"], cfg["Cout"], cfg["pool"]
        HW = Hc * Wc
        cpg = Cout // GROUPS
        inv_cnt = 1.0 / float(HW * cpg)

        # ---- 3x3 conv as ONE bf16 MXU matmul (K-concatenated taps) ----------
        if l == 0:
            w_ref, b_ref, g_ref, be_ref, memb_ref, membT_ref = layer_refs[0]
            lhs = x_ref[...]                                   # (NB*HW, 9*Cin) bf16, host-packed
        else:
            (w_ref, b_ref, g_ref, be_ref, memb_ref, membT_ref,
             ml_ref, mr_ref) = layer_refs[l]
            slab = slab_refs[l - 1]
            P = Wc + 1
            slabH = HW + 2 * P
            ml = ml_ref[...]                                   # (HW, 1) kills wrapped left taps
            mr = mr_ref[...]                                   # (HW, 1) kills wrapped right taps
            for i in range(NB):
                base = i * slabH
                for t in range(9):
                    dy, dx = t // 3, t % 3
                    src = slab[pl.ds(base + dy * Wc + dx, HW), :]     # (HW, Cin) f32
                    if dx == 0:
                        src = src * ml
                    elif dx == 2:
                        src = src * mr
                    patch_ref[pl.ds(i * HW, HW), pl.ds(t * TAP_PAD, Cin)] = src
            lhs = patch_ref[pl.ds(0, NB * HW), :].astype(jnp.bfloat16)

        y = jnp.dot(lhs, w_ref[...], preferred_element_type=jnp.float32)   # (NB*HW, Cout) f32
        yb = yb_refs[l]
        yb[...] = y + b_ref[...]

        memb = memb_ref[...]       # (Cout, 32) group membership
        membT = membT_ref[...]     # (32, Cout)
        gamma = g_ref[...]
        beta = be_ref[...]

        if pool:
            Ho, Wo = Hc // 2, Wc // 2
            nslab = slab_refs[l]                 # next layer's input slab
            P_n = Wo + 1
            slabH_n = Ho * Wo + 2 * P_n

        # ---- per-image GroupNorm(32) + ReLU (+ fused 2x2 maxpool / mean) ----
        for i in range(NB):
            yi = yb[pl.ds(i * HW, HW), :]                           # (HW, Cout) f32
            s1 = jnp.sum(yi, axis=0, keepdims=True)                 # one-pass stats (f32)
            s2 = jnp.sum(yi * yi, axis=0, keepdims=True)
            meanC = jnp.dot(jnp.dot(s1, memb, preferred_element_type=jnp.float32) * inv_cnt,
                            membT, preferred_element_type=jnp.float32)
            ex2C = jnp.dot(jnp.dot(s2, memb, preferred_element_type=jnp.float32) * inv_cnt,
                           membT, preferred_element_type=jnp.float32)
            varC = jnp.maximum(ex2C - meanC * meanC, 0.0)
            scale = gamma * lax.rsqrt(varC + EPS)                   # (1, Cout)
            shift = beta - meanC * scale
            ai = jnp.maximum(yi * scale + shift, 0.0)               # (HW, Cout)

            if pool:
                # horizontal pairs via stride-2 loads, vertical pairs via slices,
                # pooled rows land directly in the next layer's slab interior.
                yb[pl.ds(i * HW, HW), :] = ai
                wmax = jnp.maximum(yb[pl.ds(i * HW, HW // 2, stride=2), :],
                                   yb[pl.ds(i * HW + 1, HW // 2, stride=2), :])
                for m in range(Ho):
                    pooled = jnp.maximum(
                        wmax[(2 * m) * Wo:(2 * m + 1) * Wo, :],
                        wmax[(2 * m + 1) * Wo:(2 * m + 2) * Wo, :])
                    nslab[pl.ds(i * slabH_n + P_n + m * Wo, Wo), :] = pooled
            else:
                if global_pool:
                    o_ref[pl.ds(i, 1), :] = (jnp.sum(ai, axis=0, keepdims=True)
                                             * (1.0 / float(HW)))
                else:
                    o_ref[pl.ds(i * HW, HW), :] = ai


# ----------------------------------------------------------------------------
# Host-side wrapper
# ----------------------------------------------------------------------------
def _pack_conv1_input(x_nchw):
    """NCHW -> tap-concatenated im2col patches (N*H*W, 9*Cin) in bf16."""
    N, C, H, W = x_nchw.shape
    x = jnp.transpose(x_nchw, (0, 2, 3, 1))
    xp = jnp.pad(x, ((0, 0), (1, 1), (1, 1), (0, 0)))
    taps = [xp[:, dy:dy + H, dx:dx + W, :] for dy in range(3) for dx in range(3)]
    x9 = jnp.concatenate(taps, axis=-1)                  # (N, H, W, 9*C), tap-major
    return x9.reshape(N * H * W, 9 * C).astype(jnp.bfloat16)


def simple_cnn_forward(x_nchw, prepped, global_pool=False):
    N, Cin, H, W = x_nchw.shape
    assert H % 8 == 0 and W % 8 == 0, "spatial dims must be divisible by 8"
    NB = N if N <= 8 else 8                      # images per grid step (M-batching)
    assert N % NB == 0, "batch must be <= 8 or a multiple of 8"
    cfgs = _layer_cfgs(H, W, Cin)
    assert prepped[0][0].shape[0] == 9 * Cin, "prepared conv1 weights mismatch input_dim"

    x27 = _pack_conv1_input(x_nchw)

    def _full_spec(arr):
        assert arr.ndim == 2
        return pl.BlockSpec(tuple(arr.shape), lambda n: (0, 0))

    args = [x27]
    in_specs = [pl.BlockSpec((NB * H * W, 9 * Cin), lambda n: (n, 0))]
    for l in range(4):
        w, b, g, be, memb, membT = prepped[l]
        layer_args = [w, b, g, be, memb, membT]
        if l > 0:
            Hl, Wl = cfgs[l]["H"], cfgs[l]["W"]
            HWl = Hl * Wl
            col = jnp.arange(HWl, dtype=jnp.int32) % Wl
            ml = (col > 0).astype(jnp.float32).reshape(HWl, 1)
            mr = (col < Wl - 1).astype(jnp.float32).reshape(HWl, 1)
            layer_args += [ml, mr]
        args += layer_args
        in_specs += [_full_spec(a) for a in layer_args]

    Hf, Wf = cfgs[3]["H"], cfgs[3]["W"]
    HW4 = Hf * Wf
    Cf = CHANNELS[-1]
    if global_pool:
        out_shape = jax.ShapeDtypeStruct((N, Cf), jnp.float32)
        out_spec = pl.BlockSpec((NB, Cf), lambda n: (n, 0))
    else:
        out_shape = jax.ShapeDtypeStruct((N * HW4, Cf), jnp.float32)
        out_spec = pl.BlockSpec((NB * HW4, Cf), lambda n: (n, 0))

    scratch = []
    for l in range(1, 4):                                    # zero-guarded input slabs
        Hs, Ws, Cs = cfgs[l]["H"], cfgs[l]["W"], cfgs[l]["Cin"]
        slabH = Hs * Ws + 2 * (Ws + 1)
        scratch.append(pltpu.VMEM((NB * slabH, Cs), jnp.float32))
    scratch.append(pltpu.VMEM((NB * cfgs[1]["H"] * cfgs[1]["W"], 9 * TAP_PAD),
                              jnp.float32))                  # shared K-concat patch
    for l in range(4):                                       # per-layer work buffers
        scratch.append(pltpu.VMEM((NB * cfgs[l]["H"] * cfgs[l]["W"],
                                   cfgs[l]["Cout"]), jnp.float32))

    kernel = functools.partial(_fused_simple_cnn_kernel, cfgs=cfgs, NB=NB,
                               global_pool=global_pool)
    out = pl.pallas_call(
        kernel,
        out_shape=out_shape,
        grid=(N // NB,),
        in_specs=in_specs,
        out_specs=out_spec,
        scratch_shapes=scratch,
        compiler_params=pltpu.CompilerParams(
            dimension_semantics=("parallel",),
            vmem_limit_bytes=32 * 1024 * 1024),
    )(*args)

    if global_pool:
        return out                                            # (N, 256)
    return jnp.transpose(out.reshape(N, Hf, Wf, Cf), (0, 3, 1, 2))   # NCHW


# ----------------------------------------------------------------------------
# Parameters: torch-layout init + kernel-layout preparation
# ----------------------------------------------------------------------------
def init_params(key, input_dim=3):
    dims = [(input_dim, 64), (64, 96), (96, 128), (128, 256)]
    params = {}
    for i, (cin, cout) in enumerate(dims, start=1):
        key, kw, kb = jax.random.split(key, 3)
        fan_in = cin * 9
        w = jax.random.normal(kw, (cout, cin, 3, 3), jnp.float32) / jnp.sqrt(fan_in)
        b = jax.random.normal(kb, (cout,), jnp.float32) * 0.05
        gamma = jnp.ones((cout,), jnp.float32)   # GroupNorm default weight
        beta = jnp.zeros((cout,), jnp.float32)   # GroupNorm default bias
        params[f"conv{i}"] = (w, b, gamma, beta)
    return params


def prepare_params(params, groups=GROUPS):
    prepped = []
    for i, name in enumerate(["conv1", "conv2", "conv3", "conv4"]):
        w, b, g, be = params[name]
        cout, cin = w.shape[0], w.shape[1]
        # (Cout,Cin,kh,kw) -> (9, Cin, Cout), tap-major / channel-minor
        wt = jnp.transpose(w, (2, 3, 1, 0)).reshape(9, cin, cout)
        if i == 0:
            wk = wt.reshape(9 * cin, cout)                        # conv1: dense K=27
        else:
            wk = jnp.zeros((9, TAP_PAD, cout), jnp.float32).at[:, :cin, :].set(wt)
            wk = wk.reshape(9 * TAP_PAD, cout)                    # lane-aligned per-tap blocks
        memb = (jnp.arange(cout)[:, None] // (cout // groups)
                == jnp.arange(groups)[None, :]).astype(jnp.float32)
        prepped.append((wk.astype(jnp.bfloat16),
                        b.reshape(1, cout).astype(jnp.float32),
                        g.reshape(1, cout).astype(jnp.float32),
                        be.reshape(1, cout).astype(jnp.float32),
                        memb, memb.T))
    return tuple(prepped)


# ----------------------------------------------------------------------------
# Pure-JAX reference (numerical verification only)
# ----------------------------------------------------------------------------
def ref_forward(x_nchw, params, global_pool=False):
    x = x_nchw
    for idx, name in enumerate(["conv1", "conv2", "conv3", "conv4"]):
        w, b, g, be = params[name]
        x = jax.lax.conv_general_dilated(
            x, w, (1, 1), ((1, 1), (1, 1)),
            dimension_numbers=("NCHW", "OIHW", "NCHW"),
            precision=jax.lax.Precision.HIGHEST)
        x = x + b[None, :, None, None]
        N, C, H, W = x.shape
        xg = x.reshape(N, 32, C // 32, H, W)
        mean = xg.mean(axis=(2, 3, 4), keepdims=True)
        var = xg.var(axis=(2, 3, 4), keepdims=True)
        xg = (xg - mean) / jnp.sqrt(var + 1e-5)
        x = xg.reshape(N, C, H, W) * g[None, :, None, None] + be[None, :, None, None]
        x = jnp.maximum(x, 0.0)
        if idx < 3:
            x = x.reshape(N, C, H // 2, 2, W // 2, 2).max(axis=(3, 5))
    if global_pool:
        x = x.mean(axis=3).mean(axis=2)
    return x


if __name__ == "__main__":
    key = jax.random.PRNGKey(0)
    pkey, xkey = jax.random.split(key)
    params = init_params(pkey, input_dim=3)
    prepped = prepare_params(params)
    x = jax.random.normal(xkey, (2, 3, 16, 16), jnp.float32)   # NCHW, small shapes

    fwd = jax.jit(simple_cnn_forward, static_argnames=("global_pool",))

    out = jax.block_until_ready(fwd(x, prepped, global_pool=False))
    assert out.shape == (2, 256, 2, 2), out.shape
    ref = ref_forward(x, params, global_pool=False)
    err = float(jnp.max(jnp.abs(out - ref)))
    # Tolerance accounts for bf16 MXU inputs (f32 accumulation) across 4 conv layers.
    assert err < 1e-1, err

    out_gp = jax.block_until_ready(fwd(x, prepped, global_pool=True))
    assert out_gp.shape == (2, 256), out_gp.shape
    ref_gp = ref_forward(x, params, global_pool=True)
    err_gp = float(jnp.max(jnp.abs(out_gp - ref_gp)))
    assert err_gp < 1e-1, err_gp

    print("KERNEL_OK")
</pallas_src>

<mosaic_0001>
module attributes {stable_mosaic.version = 11 : i64} {
  func.func @_fused_simple_cnn_kernel(%arg0: i32, %arg1: memref<512x27xbf16, #tpu.memory_space<vmem>>, %arg2: memref<27x64xbf16, #tpu.memory_space<vmem>>, %arg3: memref<1x64xf32, #tpu.memory_space<vmem>>, %arg4: memref<1x64xf32, #tpu.memory_space<vmem>>, %arg5: memref<1x64xf32, #tpu.memory_space<vmem>>, %arg6: memref<64x32xf32, #tpu.memory_space<vmem>>, %arg7: memref<32x64xf32, #tpu.memory_space<vmem>>, %arg8: memref<1152x96xbf16, #tpu.memory_space<vmem>>, %arg9: memref<1x96xf32, #tpu.memory_space<vmem>>, %arg10: memref<1x96xf32, #tpu.memory_space<vmem>>, %arg11: memref<1x96xf32, #tpu.memory_space<vmem>>, %arg12: memref<96x32xf32, #tpu.memory_space<vmem>>, %arg13: memref<32x96xf32, #tpu.memory_space<vmem>>, %arg14: memref<64x1xf32, #tpu.memory_space<vmem>>, %arg15: memref<64x1xf32, #tpu.memory_space<vmem>>, %arg16: memref<1152x128xbf16, #tpu.memory_space<vmem>>, %arg17: memref<1x128xf32, #tpu.memory_space<vmem>>, %arg18: memref<1x128xf32, #tpu.memory_space<vmem>>, %arg19: memref<1x128xf32, #tpu.memory_space<vmem>>, %arg20: memref<128x32xf32, #tpu.memory_space<vmem>>, %arg21: memref<32x128xf32, #tpu.memory_space<vmem>>, %arg22: memref<16x1xf32, #tpu.memory_space<vmem>>, %arg23: memref<16x1xf32, #tpu.memory_space<vmem>>, %arg24: memref<1152x256xbf16, #tpu.memory_space<vmem>>, %arg25: memref<1x256xf32, #tpu.memory_space<vmem>>, %arg26: memref<1x256xf32, #tpu.memory_space<vmem>>, %arg27: memref<1x256xf32, #tpu.memory_space<vmem>>, %arg28: memref<256x32xf32, #tpu.memory_space<vmem>>, %arg29: memref<32x256xf32, #tpu.memory_space<vmem>>, %arg30: memref<4x1xf32, #tpu.memory_space<vmem>>, %arg31: memref<4x1xf32, #tpu.memory_space<vmem>>, %arg32: memref<8x256xf32, #tpu.memory_space<vmem>>, %arg33: memref<164x64xf32, #tpu.memory_space<vmem>>, %arg34: memref<52x96xf32, #tpu.memory_space<vmem>>, %arg35: memref<20x128xf32, #tpu.memory_space<vmem>>, %arg36: memref<128x1152xf32, #tpu.memory_space<vmem>>, %arg37: memref<512x64xf32, #tpu.memory_space<vmem>>, %arg38: memref<128x96xf32, #tpu.memory_space<vmem>>, %arg39: memref<32x128xf32, #tpu.memory_space<vmem>>, %arg40: memref<8x256xf32, #tpu.memory_space<vmem>>) attributes {dimension_semantics = [#tpu.dimension_semantics<parallel>], iteration_bounds = array<i64: 1>, scalar_prefetch = 0 : i64, scratch_operands = 8 : i64, tpu.core_type = #tpu.core_type<tc>, window_params = [{transform_indices = @transform_0, window_bounds = array<i64: 512, 27>}, {pipeline_mode = #tpu.pipeline_mode<synchronous>, transform_indices = @transform_1, window_bounds = array<i64: 27, 64>}, {pipeline_mode = #tpu.pipeline_mode<synchronous>, transform_indices = @transform_2, window_bounds = array<i64: 1, 64>}, {pipeline_mode = #tpu.pipeline_mode<synchronous>, transform_indices = @transform_3, window_bounds = array<i64: 1, 64>}, {pipeline_mode = #tpu.pipeline_mode<synchronous>, transform_indices = @transform_4, window_bounds = array<i64: 1, 64>}, {pipeline_mode = #tpu.pipeline_mode<synchronous>, transform_indices = @transform_5, window_bounds = array<i64: 64, 32>}, {pipeline_mode = #tpu.pipeline_mode<synchronous>, transform_indices = @transform_6, window_bounds = array<i64: 32, 64>}, {pipeline_mode = #tpu.pipeline_mode<synchronous>, transform_indices = @transform_7, window_bounds = array<i64: 1152, 96>}, {pipeline_mode = #tpu.pipeline_mode<synchronous>, transform_indices = @transform_8, window_bounds = array<i64: 1, 96>}, {pipeline_mode = #tpu.pipeline_mode<synchronous>, transform_indices = @transform_9, window_bounds = array<i64: 1, 96>}, {pipeline_mode = #tpu.pipeline_mode<synchronous>, transform_indices = @transform_10, window_bounds = array<i64: 1, 96>}, {pipeline_mode = #tpu.pipeline_mode<synchronous>, transform_indices = @transform_11, window_bounds = array<i64: 96, 32>}, {pipeline_mode = #tpu.pipeline_mode<synchronous>, transform_indices = @transform_12, window_bounds = array<i64: 32, 96>}, {pipeline_mode = #tpu.pipeline_mode<synchronous>, transform_indices = @transform_13, window_bounds = array<i64: 64, 1>}, {pipeline_mode = #tpu.pipeline_mode<synchronous>, transform_indices = @transform_14, window_bounds = array<i64: 64, 1>}, {pipeline_mode = #tpu.pipeline_mode<synchronous>, transform_indices = @transform_15, window_bounds = array<i64: 1152, 128>}, {pipeline_mode = #tpu.pipeline_mode<synchronous>, transform_indices = @transform_16, window_bounds = array<i64: 1, 128>}, {pipeline_mode = #tpu.pipeline_mode<synchronous>, transform_indices = @transform_17, window_bounds = array<i64: 1, 128>}, {pipeline_mode = #tpu.pipeline_mode<synchronous>, transform_indices = @transform_18, window_bounds = array<i64: 1, 128>}, {pipeline_mode = #tpu.pipeline_mode<synchronous>, transform_indices = @transform_19, window_bounds = array<i64: 128, 32>}, {pipeline_mode = #tpu.pipeline_mode<synchronous>, transform_indices = @transform_20, window_bounds = array<i64: 32, 128>}, {pipeline_mode = #tpu.pipeline_mode<synchronous>, transform_indices = @transform_21, window_bounds = array<i64: 16, 1>}, {pipeline_mode = #tpu.pipeline_mode<synchronous>, transform_indices = @transform_22, window_bounds = array<i64: 16, 1>}, {pipeline_mode = #tpu.pipeline_mode<synchronous>, transform_indices = @transform_23, window_bounds = array<i64: 1152, 256>}, {pipeline_mode = #tpu.pipeline_mode<synchronous>, transform_indices = @transform_24, window_bounds = array<i64: 1, 256>}, {pipeline_mode = #tpu.pipeline_mode<synchronous>, transform_indices = @transform_25, window_bounds = array<i64: 1, 256>}, {pipeline_mode = #tpu.pipeline_mode<synchronous>, transform_indices = @transform_26, window_bounds = array<i64: 1, 256>}, {pipeline_mode = #tpu.pipeline_mode<synchronous>, transform_indices = @transform_27, window_bounds = array<i64: 256, 32>}, {pipeline_mode = #tpu.pipeline_mode<synchronous>, transform_indices = @transform_28, window_bounds = array<i64: 32, 256>}, {pipeline_mode = #tpu.pipeline_mode<synchronous>, transform_indices = @transform_29, window_bounds = array<i64: 4, 1>}, {pipeline_mode = #tpu.pipeline_mode<synchronous>, transform_indices = @transform_30, window_bounds = array<i64: 4, 1>}, {transform_indices = @transform_31, window_bounds = array<i64: 8, 256>}]} {
    %cst = arith.constant 0.000000e+00 : f32
    %0 = vector.broadcast %cst : f32 to vector<164x64xf32>
    %c0 = arith.constant 0 : index
    %c0_0 = arith.constant 0 : index
    %1 = vector.load %arg33[%c0, %c0_0] : memref<164x64xf32, #tpu.memory_space<vmem>>, vector<164x64xf32>
    tpu.vector_store %arg33[%c0, %c0_0], %0 {strides = array<i32>} : memref<164x64xf32, #tpu.memory_space<vmem>>, vector<164x64xf32>,
    %cst_1 = arith.constant 0.000000e+00 : f32
    %2 = vector.broadcast %cst_1 : f32 to vector<52x96xf32>
    %c0_2 = arith.constant 0 : index
    %c0_3 = arith.constant 0 : index
    %3 = vector.load %arg34[%c0_2, %c0_3] : memref<52x96xf32, #tpu.memory_space<vmem>>, vector<52x96xf32>
    tpu.vector_store %arg34[%c0_2, %c0_3], %2 {strides = array<i32>} : memref<52x96xf32, #tpu.memory_space<vmem>>, vector<52x96xf32>,
    %cst_4 = arith.constant 0.000000e+00 : f32
    %4 = vector.broadcast %cst_4 : f32 to vector<20x128xf32>
    %c0_5 = arith.constant 0 : index
    %c0_6 = arith.constant 0 : index
    %5 = vector.load %arg35[%c0_5, %c0_6] : memref<20x128xf32, #tpu.memory_space<vmem>>, vector<20x128xf32>
    tpu.vector_store %arg35[%c0_5, %c0_6], %4 {strides = array<i32>} : memref<20x128xf32, #tpu.memory_space<vmem>>, vector<20x128xf32>,
    %cst_7 = arith.constant 0.000000e+00 : f32
    %6 = vector.broadcast %cst_7 : f32 to vector<128x1152xf32>
    %c0_8 = arith.constant 0 : index
    %c0_9 = arith.constant 0 : index
    %7 = vector.load %arg36[%c0_8, %c0_9] : memref<128x1152xf32, #tpu.memory_space<vmem>>, vector<128x1152xf32>
    tpu.vector_store %arg36[%c0_8, %c0_9], %6 {strides = array<i32>} : memref<128x1152xf32, #tpu.memory_space<vmem>>, vector<128x1152xf32>,
    %c0_10 = arith.constant 0 : index
    %c0_11 = arith.constant 0 : index
    %8 = vector.load %arg1[%c0_10, %c0_11] : memref<512x27xbf16, #tpu.memory_space<vmem>>, vector<512x27xbf16>
    %c0_12 = arith.constant 0 : index
    %c0_13 = arith.constant 0 : index
    %9 = vector.load %arg2[%c0_12, %c0_13] : memref<27x64xbf16, #tpu.memory_space<vmem>>, vector<27x64xbf16>
    %cst_14 = arith.constant dense<0.000000e+00> : vector<512x64xf32>
    %10 = tpu.matmul %8, %9, %cst_14 {dimension_numbers = #tpu.dot_dimension_numbers<[1], [0], [0], [1], [0, 0, 1, 1], [], []>} : vector<512x27xbf16>, vector<27x64xbf16>, vector<512x64xf32> -> vector<512x64xf32>
    %c0_15 = arith.constant 0 : index
    %c0_16 = arith.constant 0 : index
    %11 = vector.load %arg3[%c0_15, %c0_16] : memref<1x64xf32, #tpu.memory_space<vmem>>, vector<1x64xf32>
    %12 = vector.broadcast %11 : vector<1x64xf32> to vector<512x64xf32>
    %13 = arith.addf %10, %12 : vector<512x64xf32>
    %c0_17 = arith.constant 0 : index
    %c0_18 = arith.constant 0 : index
    %14 = vector.load %arg37[%c0_17, %c0_18] : memref<512x64xf32, #tpu.memory_space<vmem>>, vector<512x64xf32>
    tpu.vector_store %arg37[%c0_17, %c0_18], %13 {strides = array<i32>} : memref<512x64xf32, #tpu.memory_space<vmem>>, vector<512x64xf32>,
    %c0_19 = arith.constant 0 : index
    %c0_20 = arith.constant 0 : index
    %15 = vector.load %arg6[%c0_19, %c0_20] : memref<64x32xf32, #tpu.memory_space<vmem>>, vector<64x32xf32>
    %c0_21 = arith.constant 0 : index
    %c0_22 = arith.constant 0 : index
    %16 = vector.load %arg7[%c0_21, %c0_22] : memref<32x64xf32, #tpu.memory_space<vmem>>, vector<32x64xf32>
    %c0_23 = arith.constant 0 : index
    %c0_24 = arith.constant 0 : index
    %17 = vector.load %arg4[%c0_23, %c0_24] : memref<1x64xf32, #tpu.memory_space<vmem>>, vector<1x64xf32>
    %c0_25 = arith.constant 0 : index
    %c0_26 = arith.constant 0 : index
    %18 = vector.load %arg5[%c0_25, %c0_26] : memref<1x64xf32, #tpu.memory_space<vmem>>, vector<1x64xf32>
    %c0_27 = arith.constant 0 : index
    %c0_28 = arith.constant 0 : index
    %19 = vector.load %arg37[%c0_27, %c0_28] : memref<512x64xf32, #tpu.memory_space<vmem>>, vector<256x64xf32>
    %cst_29 = arith.constant dense<0.000000e+00> : vector<64xf32>
    %20 = vector.multi_reduction <add>, %19, %cst_29 [0] : vector<256x64xf32> to vector<64xf32>
    %21 = vector.shape_cast %20 : vector<64xf32> to vector<1x64xf32>
    %22 = arith.mulf %19, %19 : vector<256x64xf32>
    %cst_30 = arith.constant dense<0.000000e+00> : vector<64xf32>
    %23 = vector.multi_reduction <add>, %22, %cst_30 [0] : vector<256x64xf32> to vector<64xf32>
    %24 = vector.shape_cast %23 : vector<64xf32> to vector<1x64xf32>
    %cst_31 = arith.constant dense<0.000000e+00> : vector<1x32xf32>
    %25 = tpu.matmul %21, %15, %cst_31 {dimension_numbers = #tpu.dot_dimension_numbers<[1], [0], [0], [1], [0, 0, 1, 1], [], []>} : vector<1x64xf32>, vector<64x32xf32>, vector<1x32xf32> -> vector<1x32xf32>
    %cst_32 = arith.constant 0.001953125 : f32
    %26 = vector.broadcast %cst_32 : f32 to vector<1x32xf32>
    %27 = arith.mulf %25, %26 : vector<1x32xf32>
    %cst_33 = arith.constant dense<0.000000e+00> : vector<1x64xf32>
    %28 = tpu.matmul %27, %16, %cst_33 {dimension_numbers = #tpu.dot_dimension_numbers<[1], [0], [0], [1], [0, 0, 1, 1], [], []>} : vector<1x32xf32>, vector<32x64xf32>, vector<1x64xf32> -> vector<1x64xf32>
    %cst_34 = arith.constant dense<0.000000e+00> : vector<1x32xf32>
    %29 = tpu.matmul %24, %15, %cst_34 {dimension_numbers = #tpu.dot_dimension_numbers<[1], [0], [0], [1], [0, 0, 1, 1], [], []>} : vector<1x64xf32>, vector<64x32xf32>, vector<1x32xf32> -> vector<1x32xf32>
    %cst_35 = arith.constant 0.001953125 : f32
    %30 = vector.broadcast %cst_35 : f32 to vector<1x32xf32>
    %31 = arith.mulf %29, %30 : vector<1x32xf32>
    %cst_36 = arith.constant dense<0.000000e+00> : vector<1x64xf32>
    %32 = tpu.matmul %31, %16, %cst_36 {dimension_numbers = #tpu.dot_dimension_numbers<[1], [0], [0], [1], [0, 0, 1, 1], [], []>} : vector<1x32xf32>, vector<32x64xf32>, vector<1x64xf32> -> vector<1x64xf32>
    %33 = arith.mulf %28, %28 : vector<1x64xf32>
    %34 = arith.subf %32, %33 : vector<1x64xf32>
    %cst_37 = arith.constant 0.000000e+00 : f32
    %35 = vector.broadcast %cst_37 : f32 to vector<1x64xf32>
    %36 = arith.maximumf %34, %35 : vector<1x64xf32>
    %cst_38 = arith.constant 9.99999974E-6 : f32
    %37 = vector.broadcast %cst_38 : f32 to vector<1x64xf32>
    %38 = arith.addf %36, %37 : vector<1x64xf32>
    %39 = math.rsqrt %38 : vector<1x64xf32>
    %40 = arith.mulf %17, %39 : vector<1x64xf32>
    %41 = arith.mulf %28, %40 : vector<1x64xf32>
    %42 = arith.subf %18, %41 : vector<1x64xf32>
    %43 = vector.broadcast %40 : vector<1x64xf32> to vector<256x64xf32>
    %44 = arith.mulf %19, %43 : vector<256x64xf32>
    %45 = vector.broadcast %42 : vector<1x64xf32> to vector<256x64xf32>
    %46 = arith.addf %44, %45 : vector<256x64xf32>
    %cst_39 = arith.constant 0.000000e+00 : f32
    %47 = vector.broadcast %cst_39 : f32 to vector<256x64xf32>
    %48 = arith.maximumf %46, %47 : vector<256x64xf32>
    %c0_40 = arith.constant 0 : index
    %c0_41 = arith.constant 0 : index
    %49 = vector.load %arg37[%c0_40, %c0_41] : memref<512x64xf32, #tpu.memory_space<vmem>>, vector<256x64xf32>
    tpu.vector_store %arg37[%c0_40, %c0_41], %48 {strides = array<i32>} : memref<512x64xf32, #tpu.memory_space<vmem>>, vector<256x64xf32>,
    %c0_42 = arith.constant 0 : index
    %c0_43 = arith.constant 0 : index
    %50 = tpu.strided_load %arg37[%c0_42, %c0_43] {strides = array<i32: 2, 1>} : memref<512x64xf32, #tpu.memory_space<vmem>>, vector<128x64xf32>
    %c1 = arith.constant 1 : index
    %c0_44 = arith.constant 0 : index
    %51 = tpu.strided_load %arg37[%c1, %c0_44] {strides = array<i32: 2, 1>} : memref<512x64xf32, #tpu.memory_space<vmem>>, vector<128x64xf32>
    %52 = arith.maximumf %50, %51 : vector<128x64xf32>
    %53 = vector.extract_strided_slice %52 {offsets = [0, 0], sizes = [8, 64], strides = [1, 1]} : vector<128x64xf32> to vector<8x64xf32>
    %54 = vector.extract_strided_slice %52 {offsets = [8, 0], sizes = [8, 64], strides = [1, 1]} : vector<128x64xf32> to vector<8x64xf32>
    %55 = arith.maximumf %53, %54 : vector<8x64xf32>
    %c9 = arith.constant 9 : index
    %c0_45 = arith.constant 0 : index
    %56 = vector.load %arg33[%c9, %c0_45] : memref<164x64xf32, #tpu.memory_space<vmem>>, vector<8x64xf32>
    tpu.vector_store %arg33[%c9, %c0_45], %55 {strides = array<i32>} : memref<164x64xf32, #tpu.memory_space<vmem>>, vector<8x64xf32>,
    %57 = vector.extract_strided_slice %52 {offsets = [16, 0], sizes = [8, 64], strides = [1, 1]} : vector<128x64xf32> to vector<8x64xf32>
    %58 = vector.extract_strided_slice %52 {offsets = [24, 0], sizes = [8, 64], strides = [1, 1]} : vector<128x64xf32> to vector<8x64xf32>
    %59 = arith.maximumf %57, %58 : vector<8x64xf32>
    %c17 = arith.constant 17 : index
    %c0_46 = arith.constant 0 : index
    %60 = vector.load %arg33[%c17, %c0_46] : memref<164x64xf32, #tpu.memory_space<vmem>>, vector<8x64xf32>
    tpu.vector_store %arg33[%c17, %c0_46], %59 {strides = array<i32>} : memref<164x64xf32, #tpu.memory_space<vmem>>, vector<8x64xf32>,
    %61 = vector.extract_strided_slice %52 {offsets = [32, 0], sizes = [8, 64], strides = [1, 1]} : vector<128x64xf32> to vector<8x64xf32>
    %62 = vector.extract_strided_slice %52 {offsets = [40, 0], sizes = [8, 64], strides = [1, 1]} : vector<128x64xf32> to vector<8x64xf32>
    %63 = arith.maximumf %61, %62 : vector<8x64xf32>
    %c25 = arith.constant 25 : index
    %c0_47 = arith.constant 0 : index
    %64 = vector.load %arg33[%c25, %c0_47] : memref<164x64xf32, #tpu.memory_space<vmem>>, vector<8x64xf32>
    tpu.vector_store %arg33[%c25, %c0_47], %63 {strides = array<i32>} : memref<164x64xf32, #tpu.memory_space<vmem>>, vector<8x64xf32>,
    %65 = vector.extract_strided_slice %52 {offsets = [48, 0], sizes = [8, 64], strides = [1, 1]} : vector<128x64xf32> to vector<8x64xf32>
    %66 = vector.extract_strided_slice %52 {offsets = [56, 0], sizes = [8, 64], strides = [1, 1]} : vector<128x64xf32> to vector<8x64xf32>
    %67 = arith.maximumf %65, %66 : vector<8x64xf32>
    %c33 = arith.constant 33 : index
    %c0_48 = arith.constant 0 : index
    %68 = vector.load %arg33[%c33, %c0_48] : memref<164x64xf32, #tpu.memory_space<vmem>>, vector<8x64xf32>
    tpu.vector_store %arg33[%c33, %c0_48], %67 {strides = array<i32>} : memref<164x64xf32, #tpu.memory_space<vmem>>, vector<8x64xf32>,
    %69 = vector.extract_strided_slice %52 {offsets = [64, 0], sizes = [8, 64], strides = [1, 1]} : vector<128x64xf32> to vector<8x64xf32>
    %70 = vector.extract_strided_slice %52 {offsets = [72, 0], sizes = [8, 64], strides = [1, 1]} : vector<128x64xf32> to vector<8x64xf32>
    %71 = arith.maximumf %69, %70 : vector<8x64xf32>
    %c41 = arith.constant 41 : index
    %c0_49 = arith.constant 0 : index
    %72 = vector.load %arg33[%c41, %c0_49] : memref<164x64xf32, #tpu.memory_space<vmem>>, vector<8x64xf32>
    tpu.vector_store %arg33[%c41, %c0_49], %71 {strides = array<i32>} : memref<164x64xf32, #tpu.memory_space<vmem>>, vector<8x64xf32>,
    %73 = vector.extract_strided_slice %52 {offsets = [80, 0], sizes = [8, 64], strides = [1, 1]} : vector<128x64xf32> to vector<8x64xf32>
    %74 = vector.extract_strided_slice %52 {offsets = [88, 0], sizes = [8, 64], strides = [1, 1]} : vector<128x64xf32> to vector<8x64xf32>
    %75 = arith.maximumf %73, %74 : vector<8x64xf32>
    %c49 = arith.constant 49 : index
    %c0_50 = arith.constant 0 : index
    %76 = vector.load %arg33[%c49, %c0_50] : memref<164x64xf32, #tpu.memory_space<vmem>>, vector<8x64xf32>
    tpu.vector_store %arg33[%c49, %c0_50], %75 {strides = array<i32>} : memref<164x64xf32, #tpu.memory_space<vmem>>, vector<8x64xf32>,
    %77 = vector.extract_strided_slice %52 {offsets = [96, 0], sizes = [8, 64], strides = [1, 1]} : vector<128x64xf32> to vector<8x64xf32>
    %78 = vector.extract_strided_slice %52 {offsets = [104, 0], sizes = [8, 64], strides = [1, 1]} : vector<128x64xf32> to vector<8x64xf32>
    %79 = arith.maximumf %77, %78 : vector<8x64xf32>
    %c57 = arith.constant 57 : index
    %c0_51 = arith.constant 0 : index
    %80 = vector.load %arg33[%c57, %c0_51] : memref<164x64xf32, #tpu.memory_space<vmem>>, vector<8x64xf32>
    tpu.vector_store %arg33[%c57, %c0_51], %79 {strides = array<i32>} : memref<164x64xf32, #tpu.memory_space<vmem>>, vector<8x64xf32>,
    %81 = vector.extract_strided_slice %52 {offsets = [112, 0], sizes = [8, 64], strides = [1, 1]} : vector<128x64xf32> to vector<8x64xf32>
    %82 = vector.extract_strided_slice %52 {offsets = [120, 0], sizes = [8, 64], strides = [1, 1]} : vector<128x64xf32> to vector<8x64xf32>
    %83 = arith.maximumf %81, %82 : vector<8x64xf32>
    %c65 = arith.constant 65 : index
    %c0_52 = arith.constant 0 : index
    %84 = vector.load %arg33[%c65, %c0_52] : memref<164x64xf32, #tpu.memory_space<vmem>>, vector<8x64xf32>
    tpu.vector_store %arg33[%c65, %c0_52], %83 {strides = array<i32>} : memref<164x64xf32, #tpu.memory_space<vmem>>, vector<8x64xf32>,
    %c256 = arith.constant 256 : index
    %c0_53 = arith.constant 0 : index
    %85 = vector.load %arg37[%c256, %c0_53] : memref<512x64xf32, #tpu.memory_space<vmem>>, vector<256x64xf32>
    %cst_54 = arith.constant dense<0.000000e+00> : vector<64xf32>
    %86 = vector.multi_reduction <add>, %85, %cst_54 [0] : vector<256x64xf32> to vector<64xf32>
    %87 = vector.shape_cast %86 : vector<64xf32> to vector<1x64xf32>
    %88 = arith.mulf %85, %85 : vector<256x64xf32>
    %cst_55 = arith.constant dense<0.000000e+00> : vector<64xf32>
    %89 = vector.multi_reduction <add>, %88, %cst_55 [0] : vector<256x64xf32> to vector<64xf32>
    %90 = vector.shape_cast %89 : vector<64xf32> to vector<1x64xf32>
    %cst_56 = arith.constant dense<0.000000e+00> : vector<1x32xf32>
    %91 = tpu.matmul %87, %15, %cst_56 {dimension_numbers = #tpu.dot_dimension_numbers<[1], [0], [0], [1], [0, 0, 1, 1], [], []>} : vector<1x64xf32>, vector<64x32xf32>, vector<1x32xf32> -> vector<1x32xf32>
    %cst_57 = arith.constant 0.001953125 : f32
    %92 = vector.broadcast %cst_57 : f32 to vector<1x32xf32>
    %93 = arith.mulf %91, %92 : vector<1x32xf32>
    %cst_58 = arith.constant dense<0.000000e+00> : vector<1x64xf32>
    %94 = tpu.matmul %93, %16, %cst_58 {dimension_numbers = #tpu.dot_dimension_numbers<[1], [0], [0], [1], [0, 0, 1, 1], [], []>} : vector<1x32xf32>, vector<32x64xf32>, vector<1x64xf32> -> vector<1x64xf32>
    %cst_59 = arith.constant dense<0.000000e+00> : vector<1x32xf32>
    %95 = tpu.matmul %90, %15, %cst_59 {dimension_numbers = #tpu.dot_dimension_numbers<[1], [0], [0], [1], [0, 0, 1, 1], [], []>} : vector<1x64xf32>, vector<64x32xf32>, vector<1x32xf32> -> vector<1x32xf32>
    %cst_60 = arith.constant 0.001953125 : f32
    %96 = vector.broadcast %cst_60 : f32 to vector<1x32xf32>
    %97 = arith.mulf %95, %96 : vector<1x32xf32>
    %cst_61 = arith.constant dense<0.000000e+00> : vector<1x64xf32>
    %98 = tpu.matmul %97, %16, %cst_61 {dimension_numbers = #tpu.dot_dimension_numbers<[1], [0], [0], [1], [0, 0, 1, 1], [], []>} : vector<1x32xf32>, vector<32x64xf32>, vector<1x64xf32> -> vector<1x64xf32>
    %99 = arith.mulf %94, %94 : vector<1x64xf32>
    %100 = arith.subf %98, %99 : vector<1x64xf32>
    %cst_62 = arith.constant 0.000000e+00 : f32
    %101 = vector.broadcast %cst_62 : f32 to vector<1x64xf32>
    %102 = arith.maximumf %100, %101 : vector<1x64xf32>
    %cst_63 = arith.constant 9.99999974E-6 : f32
    %103 = vector.broadcast %cst_63 : f32 to vector<1x64xf32>
    %104 = arith.addf %102, %103 : vector<1x64xf32>
    %105 = math.rsqrt %104 : vector<1x64xf32>
    %106 = arith.mulf %17, %105 : vector<1x64xf32>
    %107 = arith.mulf %94, %106 : vector<1x64xf32>
    %108 = arith.subf %18, %107 : vector<1x64xf32>
    %109 = vector.broadcast %106 : vector<1x64xf32> to vector<256x64xf32>
    %110 = arith.mulf %85, %109 : vector<256x64xf32>
    %111 = vector.broadcast %108 : vector<1x64xf32> to vector<256x64xf32>
    %112 = arith.addf %110, %111 : vector<256x64xf32>
    %cst_64 = arith.constant 0.000000e+00 : f32
    %113 = vector.broadcast %cst_64 : f32 to vector<256x64xf32>
    %114 = arith.maximumf %112, %113 : vector<256x64xf32>
    %c256_65 = arith.constant 256 : index
    %c0_66 = arith.constant 0 : index
    %115 = vector.load %arg37[%c256_65, %c0_66] : memref<512x64xf32, #tpu.memory_space<vmem>>, vector<256x64xf32>
    tpu.vector_store %arg37[%c256_65, %c0_66], %114 {strides = array<i32>} : memref<512x64xf32, #tpu.memory_space<vmem>>, vector<256x64xf32>,
    %c256_67 = arith.constant 256 : index
    %c0_68 = arith.constant 0 : index
    %116 = tpu.strided_load %arg37[%c256_67, %c0_68] {strides = array<i32: 2, 1>} : memref<512x64xf32, #tpu.memory_space<vmem>>, vector<128x64xf32>
    %c257 = arith.constant 257 : index
    %c0_69 = arith.constant 0 : index
    %117 = tpu.strided_load %arg37[%c257, %c0_69] {strides = array<i32: 2, 1>} : memref<512x64xf32, #tpu.memory_space<vmem>>, vector<128x64xf32>
    %118 = arith.maximumf %116, %117 : vector<128x64xf32>
    %119 = vector.extract_strided_slice %118 {offsets = [0, 0], sizes = [8, 64], strides = [1, 1]} : vector<128x64xf32> to vector<8x64xf32>
    %120 = vector.extract_strided_slice %118 {offsets = [8, 0], sizes = [8, 64], strides = [1, 1]} : vector<128x64xf32> to vector<8x64xf32>
    %121 = arith.maximumf %119, %120 : vector<8x64xf32>
    %c91 = arith.constant 91 : index
    %c0_70 = arith.constant 0 : index
    %122 = vector.load %arg33[%c91, %c0_70] : memref<164x64xf32, #tpu.memory_space<vmem>>, vector<8x64xf32>
    tpu.vector_store %arg33[%c91, %c0_70], %121 {strides = array<i32>} : memref<164x64xf32, #tpu.memory_space<vmem>>, vector<8x64xf32>,
    %123 = vector.extract_strided_slice %118 {offsets = [16, 0], sizes = [8, 64], strides = [1, 1]} : vector<128x64xf32> to vector<8x64xf32>
    %124 = vector.extract_strided_slice %118 {offsets = [24, 0], sizes = [8, 64], strides = [1, 1]} : vector<128x64xf32> to vector<8x64xf32>
    %125 = arith.maximumf %123, %124 : vector<8x64xf32>
    %c99 = arith.constant 99 : index
    %c0_71 = arith.constant 0 : index
    %126 = vector.load %arg33[%c99, %c0_71] : memref<164x64xf32, #tpu.memory_space<vmem>>, vector<8x64xf32>
    tpu.vector_store %arg33[%c99, %c0_71], %125 {strides = array<i32>} : memref<164x64xf32, #tpu.memory_space<vmem>>, vector<8x64xf32>,
    %127 = vector.extract_strided_slice %118 {offsets = [32, 0], sizes = [8, 64], strides = [1, 1]} : vector<128x64xf32> to vector<8x64xf32>
    %128 = vector.extract_strided_slice %118 {offsets = [40, 0], sizes = [8, 64], strides = [1, 1]} : vector<128x64xf32> to vector<8x64xf32>
    %129 = arith.maximumf %127, %128 : vector<8x64xf32>
    %c107 = arith.constant 107 : index
    %c0_72 = arith.constant 0 : index
    %130 = vector.load %arg33[%c107, %c0_72] : memref<164x64xf32, #tpu.memory_space<vmem>>, vector<8x64xf32>
    tpu.vector_store %arg33[%c107, %c0_72], %129 {strides = array<i32>} : memref<164x64xf32, #tpu.memory_space<vmem>>, vector<8x64xf32>,
    %131 = vector.extract_strided_slice %118 {offsets = [48, 0], sizes = [8, 64], strides = [1, 1]} : vector<128x64xf32> to vector<8x64xf32>
    %132 = vector.extract_strided_slice %118 {offsets = [56, 0], sizes = [8, 64], strides = [1, 1]} : vector<128x64xf32> to vector<8x64xf32>
    %133 = arith.maximumf %131, %132 : vector<8x64xf32>
    %c115 = arith.constant 115 : index
    %c0_73 = arith.constant 0 : index
    %134 = vector.load %arg33[%c115, %c0_73] : memref<164x64xf32, #tpu.memory_space<vmem>>, vector<8x64xf32>
    tpu.vector_store %arg33[%c115, %c0_73], %133 {strides = array<i32>} : memref<164x64xf32, #tpu.memory_space<vmem>>, vector<8x64xf32>,
    %135 = vector.extract_strided_slice %118 {offsets = [64, 0], sizes = [8, 64], strides = [1, 1]} : vector<128x64xf32> to vector<8x64xf32>
    %136 = vector.extract_strided_slice %118 {offsets = [72, 0], sizes = [8, 64], strides = [1, 1]} : vector<128x64xf32> to vector<8x64xf32>
    %137 = arith.maximumf %135, %136 : vector<8x64xf32>
    %c123 = arith.constant 123 : index
    %c0_74 = arith.constant 0 : index
    %138 = vector.load %arg33[%c123, %c0_74] : memref<164x64xf32, #tpu.memory_space<vmem>>, vector<8x64xf32>
    tpu.vector_store %arg33[%c123, %c0_74], %137 {strides = array<i32>} : memref<164x64xf32, #tpu.memory_space<vmem>>, vector<8x64xf32>,
    %139 = vector.extract_strided_slice %118 {offsets = [80, 0], sizes = [8, 64], strides = [1, 1]} : vector<128x64xf32> to vector<8x64xf32>
    %140 = vector.extract_strided_slice %118 {offsets = [88, 0], sizes = [8, 64], strides = [1, 1]} : vector<128x64xf32> to vector<8x64xf32>
    %141 = arith.maximumf %139, %140 : vector<8x64xf32>
    %c131 = arith.constant 131 : index
    %c0_75 = arith.constant 0 : index
    %142 = vector.load %arg33[%c131, %c0_75] : memref<164x64xf32, #tpu.memory_space<vmem>>, vector<8x64xf32>
    tpu.vector_store %arg33[%c131, %c0_75], %141 {strides = array<i32>} : memref<164x64xf32, #tpu.memory_space<vmem>>, vector<8x64xf32>,
    %143 = vector.extract_strided_slice %118 {offsets = [96, 0], sizes = [8, 64], strides = [1, 1]} : vector<128x64xf32> to vector<8x64xf32>
    %144 = vector.extract_strided_slice %118 {offsets = [104, 0], sizes = [8, 64], strides = [1, 1]} : vector<128x64xf32> to vector<8x64xf32>
    %145 = arith.maximumf %143, %144 : vector<8x64xf32>
    %c139 = arith.constant 139 : index
    %c0_76 = arith.constant 0 : index
    %146 = vector.load %arg33[%c139, %c0_76] : memref<164x64xf32, #tpu.memory_space<vmem>>, vector<8x64xf32>
    tpu.vector_store %arg33[%c139, %c0_76], %145 {strides = array<i32>} : memref<164x64xf32, #tpu.memory_space<vmem>>, vector<8x64xf32>,
    %147 = vector.extract_strided_slice %118 {offsets = [112, 0], sizes = [8, 64], strides = [1, 1]} : vector<128x64xf32> to vector<8x64xf32>
    %148 = vector.extract_strided_slice %118 {offsets = [120, 0], sizes = [8, 64], strides = [1, 1]} : vector<128x64xf32> to vector<8x64xf32>
    %149 = arith.maximumf %147, %148 : vector<8x64xf32>
    %c147 = arith.constant 147 : index
    %c0_77 = arith.constant 0 : index
    %150 = vector.load %arg33[%c147, %c0_77] : memref<164x64xf32, #tpu.memory_space<vmem>>, vector<8x64xf32>
    tpu.vector_store %arg33[%c147, %c0_77], %149 {strides = array<i32>} : memref<164x64xf32, #tpu.memory_space<vmem>>, vector<8x64xf32>,
    %c0_78 = arith.constant 0 : index
    %c0_79 = arith.constant 0 : index
    %151 = vector.load %arg14[%c0_78, %c0_79] : memref<64x1xf32, #tpu.memory_space<vmem>>, vector<64x1xf32>
    %c0_80 = arith.constant 0 : index
    %c0_81 = arith.constant 0 : index
    %152 = vector.load %arg15[%c0_80, %c0_81] : memref<64x1xf32, #tpu.memory_space<vmem>>, vector<64x1xf32>
    %c0_82 = arith.constant 0 : index
    %c0_83 = arith.constant 0 : index
    %153 = vector.load %arg33[%c0_82, %c0_83] : memref<164x64xf32, #tpu.memory_space<vmem>>, vector<64x64xf32>
    %154 = vector.broadcast %151 : vector<64x1xf32> to vector<64x64xf32>
    %155 = arith.mulf %153, %154 : vector<64x64xf32>
    %c0_84 = arith.constant 0 : index
    %c0_85 = arith.constant 0 : index
    %156 = vector.load %arg36[%c0_84, %c0_85] : memref<128x1152xf32, #tpu.memory_space<vmem>>, vector<64x64xf32>
    tpu.vector_store %arg36[%c0_84, %c0_85], %155 {strides = array<i32>} : memref<128x1152xf32, #tpu.memory_space<vmem>>, vector<64x64xf32>,
    %c1_86 = arith.constant 1 : index
    %c0_87 = arith.constant 0 : index
    %157 = vector.load %arg33[%c1_86, %c0_87] : memref<164x64xf32, #tpu.memory_space<vmem>>, vector<64x64xf32>
    %c0_88 = arith.constant 0 : index
    %c128 = arith.constant 128 : index
    %158 = vector.load %arg36[%c0_88, %c128] : memref<128x1152xf32, #tpu.memory_space<vmem>>, vector<64x64xf32>
    tpu.vector_store %arg36[%c0_88, %c128], %157 {strides = array<i32>} : memref<128x1152xf32, #tpu.memory_space<vmem>>, vector<64x64xf32>,
    %c2 = arith.constant 2 : index
    %c0_89 = arith.constant 0 : index
    %159 = vector.load %arg33[%c2, %c0_89] : memref<164x64xf32, #tpu.memory_space<vmem>>, vector<64x64xf32>
    %160 = vector.broadcast %152 : vector<64x1xf32> to vector<64x64xf32>
    %161 = arith.mulf %159, %160 : vector<64x64xf32>
    %c0_90 = arith.constant 0 : index
    %c256_91 = arith.constant 256 : index
    %162 = vector.load %arg36[%c0_90, %c256_91] : memref<128x1152xf32, #tpu.memory_space<vmem>>, vector<64x64xf32>
    tpu.vector_store %arg36[%c0_90, %c256_91], %161 {strides = array<i32>} : memref<128x1152xf32, #tpu.memory_space<vmem>>, vector<64x64xf32>,
    %c8 = arith.constant 8 : index
    %c0_92 = arith.constant 0 : index
    %163 = vector.load %arg33[%c8, %c0_92] : memref<164x64xf32, #tpu.memory_space<vmem>>, vector<64x64xf32>
    %164 = vector.broadcast %151 : vector<64x1xf32> to vector<64x64xf32>
    %165 = arith.mulf %163, %164 : vector<64x64xf32>
    %c0_93 = arith.constant 0 : index
    %c384 = arith.constant 384 : index
    %166 = vector.load %arg36[%c0_93, %c384] : memref<128x1152xf32, #tpu.memory_space<vmem>>, vector<64x64xf32>
    tpu.vector_store %arg36[%c0_93, %c384], %165 {strides = array<i32>} : memref<128x1152xf32, #tpu.memory_space<vmem>>, vector<64x64xf32>,
    %c9_94 = arith.constant 9 : index
    %c0_95 = arith.constant 0 : index
    %167 = vector.load %arg33[%c9_94, %c0_95] : memref<164x64xf32, #tpu.memory_space<vmem>>, vector<64x64xf32>
    %c0_96 = arith.constant 0 : index
    %c512 = arith.constant 512 : index
    %168 = vector.load %arg36[%c0_96, %c512] : memref<128x1152xf32, #tpu.memory_space<vmem>>, vector<64x64xf32>
    tpu.vector_store %arg36[%c0_96, %c512], %167 {strides = array<i32>} : memref<128x1152xf32, #tpu.memory_space<vmem>>, vector<64x64xf32>,
    %c10 = arith.constant 10 : index
    %c0_97 = arith.constant 0 : index
    %169 = vector.load %arg33[%c10, %c0_97] : memref<164x64xf32, #tpu.memory_space<vmem>>, vector<64x64xf32>
    %170 = vector.broadcast %152 : vector<64x1xf32> to vector<64x64xf32>
    %171 = arith.mulf %169, %170 : vector<64x64xf32>
    %c0_98 = arith.constant 0 : index
    %c640 = arith.constant 640 : index
    %172 = vector.load %arg36[%c0_98, %c640] : memref<128x1152xf32, #tpu.memory_space<vmem>>, vector<64x64xf32>
    tpu.vector_store %arg36[%c0_98, %c640], %171 {strides = array<i32>} : memref<128x1152xf32, #tpu.memory_space<vmem>>, vector<64x64xf32>,
    %c16 = arith.constant 16 : index
    %c0_99 = arith.constant 0 : index
    %173 = vector.load %arg33[%c16, %c0_99] : memref<164x64xf32, #tpu.memory_space<vmem>>, vector<64x64xf32>
    %174 = vector.broadcast %151 : vector<64x1xf32> to vector<64x64xf32>
    %175 = arith.mulf %173, %174 : vector<64x64xf32>
    %c0_100 = arith.constant 0 : index
    %c768 = arith.constant 768 : index
    %176 = vector.load %arg36[%c0_100, %c768] : memref<128x1152xf32, #tpu.memory_space<vmem>>, vector<64x64xf32>
    tpu.vector_store %arg36[%c0_100, %c768], %175 {strides = array<i32>} : memref<128x1152xf32, #tpu.memory_space<vmem>>, vector<64x64xf32>,
    %c17_101 = arith.constant 17 : index
    %c0_102 = arith.constant 0 : index
    %177 = vector.load %arg33[%c17_101, %c0_102] : memref<164x64xf32, #tpu.memory_space<vmem>>, vector<64x64xf32>
    %c0_103 = arith.constant 0 : index
    %c896 = arith.constant 896 : index
    %178 = vector.load %arg36[%c0_103, %c896] : memref<128x1152xf32, #tpu.memory_space<vmem>>, vector<64x64xf32>
    tpu.vector_store %arg36[%c0_103, %c896], %177 {strides = array<i32>} : memref<128x1152xf32, #tpu.memory_space<vmem>>, vector<64x64xf32>,
    %c18 = arith.constant 18 : index
    %c0_104 = arith.constant 0 : index
    %179 = vector.load %arg33[%c18, %c0_104] : memref<164x64xf32, #tpu.memory_space<vmem>>, vector<64x64xf32>
    %180 = vector.broadcast %152 : vector<64x1xf32> to vector<64x64xf32>
    %181 = arith.mulf %179, %180 : vector<64x64xf32>
    %c0_105 = arith.constant 0 : index
    %c1024 = arith.constant 1024 : index
    %182 = vector.load %arg36[%c0_105, %c1024] : memref<128x1152xf32, #tpu.memory_space<vmem>>, vector<64x64xf32>
    tpu.vector_store %arg36[%c0_105, %c1024], %181 {strides = array<i32>} : memref<128x1152xf32, #tpu.memory_space<vmem>>, vector<64x64xf32>,
    %c82 = arith.constant 82 : index
    %c0_106 = arith.constant 0 : index
    %183 = vector.load %arg33[%c82, %c0_106] : memref<164x64xf32, #tpu.memory_space<vmem>>, vector<64x64xf32>
    %184 = vector.broadcast %151 : vector<64x1xf32> to vector<64x64xf32>
    %185 = arith.mulf %183, %184 : vector<64x64xf32>
    %c64 = arith.constant 64 : index
    %c0_107 = arith.constant 0 : index
    %186 = vector.load %arg36[%c64, %c0_107] : memref<128x1152xf32, #tpu.memory_space<vmem>>, vector<64x64xf32>
    tpu.vector_store %arg36[%c64, %c0_107], %185 {strides = array<i32>} : memref<128x1152xf32, #tpu.memory_space<vmem>>, vector<64x64xf32>,
    %c83 = arith.constant 83 : index
    %c0_108 = arith.constant 0 : index
    %187 = vector.load %arg33[%c83, %c0_108] : memref<164x64xf32, #tpu.memory_space<vmem>>, vector<64x64xf32>
    %c64_109 = arith.constant 64 : index
    %c128_110 = arith.constant 128 : index
    %188 = vector.load %arg36[%c64_109, %c128_110] : memref<128x1152xf32, #tpu.memory_space<vmem>>, vector<64x64xf32>
    tpu.vector_store %arg36[%c64_109, %c128_110], %187 {strides = array<i32>} : memref<128x1152xf32, #tpu.memory_space<vmem>>, vector<64x64xf32>,
    %c84 = arith.constant 84 : index
    %c0_111 = arith.constant 0 : index
    %189 = vector.load %arg33[%c84, %c0_111] : memref<164x64xf32, #tpu.memory_space<vmem>>, vector<64x64xf32>
    %190 = vector.broadcast %152 : vector<64x1xf32> to vector<64x64xf32>
    %191 = arith.mulf %189, %190 : vector<64x64xf32>
    %c64_112 = arith.constant 64 : index
    %c256_113 = arith.constant 256 : index
    %192 = vector.load %arg36[%c64_112, %c256_113] : memref<128x1152xf32, #tpu.memory_space<vmem>>, vector<64x64xf32>
    tpu.vector_store %arg36[%c64_112, %c256_113], %191 {strides = array<i32>} : memref<128x1152xf32, #tpu.memory_space<vmem>>, vector<64x64xf32>,
    %c90 = arith.constant 90 : index
    %c0_114 = arith.constant 0 : index
    %193 = vector.load %arg33[%c90, %c0_114] : memref<164x64xf32, #tpu.memory_space<vmem>>, vector<64x64xf32>
    %194 = vector.broadcast %151 : vector<64x1xf32> to vector<64x64xf32>
    %195 = arith.mulf %193, %194 : vector<64x64xf32>
    %c64_115 = arith.constant 64 : index
    %c384_116 = arith.constant 384 : index
    %196 = vector.load %arg36[%c64_115, %c384_116] : memref<128x1152xf32, #tpu.memory_space<vmem>>, vector<64x64xf32>
    tpu.vector_store %arg36[%c64_115, %c384_116], %195 {strides = array<i32>} : memref<128x1152xf32, #tpu.memory_space<vmem>>, vector<64x64xf32>,
    %c91_117 = arith.constant 91 : index
    %c0_118 = arith.constant 0 : index
    %197 = vector.load %arg33[%c91_117, %c0_118] : memref<164x64xf32, #tpu.memory_space<vmem>>, vector<64x64xf32>
    %c64_119 = arith.constant 64 : index
    %c512_120 = arith.constant 512 : index
    %198 = vector.load %arg36[%c64_119, %c512_120] : memref<128x1152xf32, #tpu.memory_space<vmem>>, vector<64x64xf32>
    tpu.vector_store %arg36[%c64_119, %c512_120], %197 {strides = array<i32>} : memref<128x1152xf32, #tpu.memory_space<vmem>>, vector<64x64xf32>,
    %c92 = arith.constant 92 : index
    %c0_121 = arith.constant 0 : index
    %199 = vector.load %arg33[%c92, %c0_121] : memref<164x64xf32, #tpu.memory_space<vmem>>, vector<64x64xf32>
    %200 = vector.broadcast %152 : vector<64x1xf32> to vector<64x64xf32>
    %201 = arith.mulf %199, %200 : vector<64x64xf32>
    %c64_122 = arith.constant 64 : index
    %c640_123 = arith.constant 640 : index
    %202 = vector.load %arg36[%c64_122, %c640_123] : memref<128x1152xf32, #tpu.memory_space<vmem>>, vector<64x64xf32>
    tpu.vector_store %arg36[%c64_122, %c640_123], %201 {strides = array<i32>} : memref<128x1152xf32, #tpu.memory_space<vmem>>, vector<64x64xf32>,
    %c98 = arith.constant 98 : index
    %c0_124 = arith.constant 0 : index
    %203 = vector.load %arg33[%c98, %c0_124] : memref<164x64xf32, #tpu.memory_space<vmem>>, vector<64x64xf32>
    %204 = vector.broadcast %151 : vector<64x1xf32> to vector<64x64xf32>
    %205 = arith.mulf %203, %204 : vector<64x64xf32>
    %c64_125 = arith.constant 64 : index
    %c768_126 = arith.constant 768 : index
    %206 = vector.load %arg36[%c64_125, %c768_126] : memref<128x1152xf32, #tpu.memory_space<vmem>>, vector<64x64xf32>
    tpu.vector_store %arg36[%c64_125, %c768_126], %205 {strides = array<i32>} : memref<128x1152xf32, #tpu.memory_space<vmem>>, vector<64x64xf32>,
    %c99_127 = arith.constant 99 : index
    %c0_128 = arith.constant 0 : index
    %207 = vector.load %arg33[%c99_127, %c0_128] : memref<164x64xf32, #tpu.memory_space<vmem>>, vector<64x64xf32>
    %c64_129 = arith.constant 64 : index
    %c896_130 = arith.constant 896 : index
    %208 = vector.load %arg36[%c64_129, %c896_130] : memref<128x1152xf32, #tpu.memory_space<vmem>>, vector<64x64xf32>
    tpu.vector_store %arg36[%c64_129, %c896_130], %207 {strides = array<i32>} : memref<128x1152xf32, #tpu.memory_space<vmem>>, vector<64x64xf32>,
    %c100 = arith.constant 100 : index
    %c0_131 = arith.constant 0 : index
    %209 = vector.load %arg33[%c100, %c0_131] : memref<164x64xf32, #tpu.memory_space<vmem>>, vector<64x64xf32>
    %210 = vector.broadcast %152 : vector<64x1xf32> to vector<64x64xf32>
    %211 = arith.mulf %209, %210 : vector<64x64xf32>
    %c64_132 = arith.constant 64 : index
    %c1024_133 = arith.constant 1024 : index
    %212 = vector.load %arg36[%c64_132, %c1024_133] : memref<128x1152xf32, #tpu.memory_space<vmem>>, vector<64x64xf32>
    tpu.vector_store %arg36[%c64_132, %c1024_133], %211 {strides = array<i32>} : memref<128x1152xf32, #tpu.memory_space<vmem>>, vector<64x64xf32>,
    %c0_134 = arith.constant 0 : index
    %c0_135 = arith.constant 0 : index
    %213 = vector.load %arg36[%c0_134, %c0_135] : memref<128x1152xf32, #tpu.memory_space<vmem>>, vector<128x1152xf32>
    %214 = arith.truncf %213 : vector<128x1152xf32> to vector<128x1152xbf16>
    %c0_136 = arith.constant 0 : index
    %c0_137 = arith.constant 0 : index
    %215 = vector.load %arg8[%c0_136, %c0_137] : memref<1152x96xbf16, #tpu.memory_space<vmem>>, vector<1152x96xbf16>
    %cst_138 = arith.constant dense<0.000000e+00> : vector<128x96xf32>
    %216 = tpu.matmul %214, %215, %cst_138 {dimension_numbers = #tpu.dot_dimension_numbers<[1], [0], [0], [1], [0, 0, 1, 1], [], []>} : vector<128x1152xbf16>, vector<1152x96xbf16>, vector<128x96xf32> -> vector<128x96xf32>
    %c0_139 = arith.constant 0 : index
    %c0_140 = arith.constant 0 : index
    %217 = vector.load %arg9[%c0_139, %c0_140] : memref<1x96xf32, #tpu.memory_space<vmem>>, vector<1x96xf32>
    %218 = vector.broadcast %217 : vector<1x96xf32> to vector<128x96xf32>
    %219 = arith.addf %216, %218 : vector<128x96xf32>
    %c0_141 = arith.constant 0 : index
    %c0_142 = arith.constant 0 : index
    %220 = vector.load %arg38[%c0_141, %c0_142] : memref<128x96xf32, #tpu.memory_space<vmem>>, vector<128x96xf32>
    tpu.vector_store %arg38[%c0_141, %c0_142], %219 {strides = array<i32>} : memref<128x96xf32, #tpu.memory_space<vmem>>, vector<128x96xf32>,
    %c0_143 = arith.constant 0 : index
    %c0_144 = arith.constant 0 : index
    %221 = vector.load %arg12[%c0_143, %c0_144] : memref<96x32xf32, #tpu.memory_space<vmem>>, vector<96x32xf32>
    %c0_145 = arith.constant 0 : index
    %c0_146 = arith.constant 0 : index
    %222 = vector.load %arg13[%c0_145, %c0_146] : memref<32x96xf32, #tpu.memory_space<vmem>>, vector<32x96xf32>
    %c0_147 = arith.constant 0 : index
    %c0_148 = arith.constant 0 : index
    %223 = vector.load %arg10[%c0_147, %c0_148] : memref<1x96xf32, #tpu.memory_space<vmem>>, vector<1x96xf32>
    %c0_149 = arith.constant 0 : index
    %c0_150 = arith.constant 0 : index
    %224 = vector.load %arg11[%c0_149, %c0_150] : memref<1x96xf32, #tpu.memory_space<vmem>>, vector<1x96xf32>
    %c0_151 = arith.constant 0 : index
    %c0_152 = arith.constant 0 : index
    %225 = vector.load %arg38[%c0_151, %c0_152] : memref<128x96xf32, #tpu.memory_space<vmem>>, vector<64x96xf32>
    %cst_153 = arith.constant dense<0.000000e+00> : vector<96xf32>
    %226 = vector.multi_reduction <add>, %225, %cst_153 [0] : vector<64x96xf32> to vector<96xf32>
    %227 = vector.shape_cast %226 : vector<96xf32> to vector<1x96xf32>
    %228 = arith.mulf %225, %225 : vector<64x96xf32>
    %cst_154 = arith.constant dense<0.000000e+00> : vector<96xf32>
    %229 = vector.multi_reduction <add>, %228, %cst_154 [0] : vector<64x96xf32> to vector<96xf32>
    %230 = vector.shape_cast %229 : vector<96xf32> to vector<1x96xf32>
    %cst_155 = arith.constant dense<0.000000e+00> : vector<1x32xf32>
    %231 = tpu.matmul %227, %221, %cst_155 {dimension_numbers = #tpu.dot_dimension_numbers<[1], [0], [0], [1], [0, 0, 1, 1], [], []>} : vector<1x96xf32>, vector<96x32xf32>, vector<1x32xf32> -> vector<1x32xf32>
    %cst_156 = arith.constant 0.00520833349 : f32
    %232 = vector.broadcast %cst_156 : f32 to vector<1x32xf32>
    %233 = arith.mulf %231, %232 : vector<1x32xf32>
    %cst_157 = arith.constant dense<0.000000e+00> : vector<1x96xf32>
    %234 = tpu.matmul %233, %222, %cst_157 {dimension_numbers = #tpu.dot_dimension_numbers<[1], [0], [0], [1], [0, 0, 1, 1], [], []>} : vector<1x32xf32>, vector<32x96xf32>, vector<1x96xf32> -> vector<1x96xf32>
    %cst_158 = arith.constant dense<0.000000e+00> : vector<1x32xf32>
    %235 = tpu.matmul %230, %221, %cst_158 {dimension_numbers = #tpu.dot_dimension_numbers<[1], [0], [0], [1], [0, 0, 1, 1], [], []>} : vector<1x96xf32>, vector<96x32xf32>, vector<1x32xf32> -> vector<1x32xf32>
    %cst_159 = arith.constant 0.00520833349 : f32
    %236 = vector.broadcast %cst_159 : f32 to vector<1x32xf32>
    %237 = arith.mulf %235, %236 : vector<1x32xf32>
    %cst_160 = arith.constant dense<0.000000e+00> : vector<1x96xf32>
    %238 = tpu.matmul %237, %222, %cst_160 {dimension_numbers = #tpu.dot_dimension_numbers<[1], [0], [0], [1], [0, 0, 1, 1], [], []>} : vector<1x32xf32>, vector<32x96xf32>, vector<1x96xf32> -> vector<1x96xf32>
    %239 = arith.mulf %234, %234 : vector<1x96xf32>
    %240 = arith.subf %238, %239 : vector<1x96xf32>
    %cst_161 = arith.constant 0.000000e+00 : f32
    %241 = vector.broadcast %cst_161 : f32 to vector<1x96xf32>
    %242 = arith.maximumf %240, %241 : vector<1x96xf32>
    %cst_162 = arith.constant 9.99999974E-6 : f32
    %243 = vector.broadcast %cst_162 : f32 to vector<1x96xf32>
    %244 = arith.addf %242, %243 : vector<1x96xf32>
    %245 = math.rsqrt %244 : vector<1x96xf32>
    %246 = arith.mulf %223, %245 : vector<1x96xf32>
    %247 = arith.mulf %234, %246 : vector<1x96xf32>
    %248 = arith.subf %224, %247 : vector<1x96xf32>
    %249 = vector.broadcast %246 : vector<1x96xf32> to vector<64x96xf32>
    %250 = arith.mulf %225, %249 : vector<64x96xf32>
    %251 = vector.broadcast %248 : vector<1x96xf32> to vector<64x96xf32>
    %252 = arith.addf %250, %251 : vector<64x96xf32>
    %cst_163 = arith.constant 0.000000e+00 : f32
    %253 = vector.broadcast %cst_163 : f32 to vector<64x96xf32>
    %254 = arith.maximumf %252, %253 : vector<64x96xf32>
    %c0_164 = arith.constant 0 : index
    %c0_165 = arith.constant 0 : index
    %255 = vector.load %arg38[%c0_164, %c0_165] : memref<128x96xf32, #tpu.memory_space<vmem>>, vector<64x96xf32>
    tpu.vector_store %arg38[%c0_164, %c0_165], %254 {strides = array<i32>} : memref<128x96xf32, #tpu.memory_space<vmem>>, vector<64x96xf32>,
    %c0_166 = arith.constant 0 : index
    %c0_167 = arith.constant 0 : index
    %256 = tpu.strided_load %arg38[%c0_166, %c0_167] {strides = array<i32: 2, 1>} : memref<128x96xf32, #tpu.memory_space<vmem>>, vector<32x96xf32>
    %c1_168 = arith.constant 1 : index
    %c0_169 = arith.constant 0 : index
    %257 = tpu.strided_load %arg38[%c1_168, %c0_169] {strides = array<i32: 2, 1>} : memref<128x96xf32, #tpu.memory_space<vmem>>, vector<32x96xf32>
    %258 = arith.maximumf %256, %257 : vector<32x96xf32>
    %259 = vector.extract_strided_slice %258 {offsets = [0, 0], sizes = [4, 96], strides = [1, 1]} : vector<32x96xf32> to vector<4x96xf32>
    %260 = vector.extract_strided_slice %258 {offsets = [4, 0], sizes = [4, 96], strides = [1, 1]} : vector<32x96xf32> to vector<4x96xf32>
    %261 = arith.maximumf %259, %260 : vector<4x96xf32>
    %c5 = arith.constant 5 : index
    %c0_170 = arith.constant 0 : index
    %262 = vector.load %arg34[%c5, %c0_170] : memref<52x96xf32, #tpu.memory_space<vmem>>, vector<4x96xf32>
    tpu.vector_store %arg34[%c5, %c0_170], %261 {strides = array<i32>} : memref<52x96xf32, #tpu.memory_space<vmem>>, vector<4x96xf32>,
    %263 = vector.extract_strided_slice %258 {offsets = [8, 0], sizes = [4, 96], strides = [1, 1]} : vector<32x96xf32> to vector<4x96xf32>
    %264 = vector.extract_strided_slice %258 {offsets = [12, 0], sizes = [4, 96], strides = [1, 1]} : vector<32x96xf32> to vector<4x96xf32>
    %265 = arith.maximumf %263, %264 : vector<4x96xf32>
    %c9_171 = arith.constant 9 : index
    %c0_172 = arith.constant 0 : index
    %266 = vector.load %arg34[%c9_171, %c0_172] : memref<52x96xf32, #tpu.memory_space<vmem>>, vector<4x96xf32>
    tpu.vector_store %arg34[%c9_171, %c0_172], %265 {strides = array<i32>} : memref<52x96xf32, #tpu.memory_space<vmem>>, vector<4x96xf32>,
    %267 = vector.extract_strided_slice %258 {offsets = [16, 0], sizes = [4, 96], strides = [1, 1]} : vector<32x96xf32> to vector<4x96xf32>
    %268 = vector.extract_strided_slice %258 {offsets = [20, 0], sizes = [4, 96], strides = [1, 1]} : vector<32x96xf32> to vector<4x96xf32>
    %269 = arith.maximumf %267, %268 : vector<4x96xf32>
    %c13 = arith.constant 13 : index
    %c0_173 = arith.constant 0 : index
    %270 = vector.load %arg34[%c13, %c0_173] : memref<52x96xf32, #tpu.memory_space<vmem>>, vector<4x96xf32>
    tpu.vector_store %arg34[%c13, %c0_173], %269 {strides = array<i32>} : memref<52x96xf32, #tpu.memory_space<vmem>>, vector<4x96xf32>,
    %271 = vector.extract_strided_slice %258 {offsets = [24, 0], sizes = [4, 96], strides = [1, 1]} : vector<32x96xf32> to vector<4x96xf32>
    %272 = vector.extract_strided_slice %258 {offsets = [28, 0], sizes = [4, 96], strides = [1, 1]} : vector<32x96xf32> to vector<4x96xf32>
    %273 = arith.maximumf %271, %272 : vector<4x96xf32>
    %c17_174 = arith.constant 17 : index
    %c0_175 = arith.constant 0 : index
    %274 = vector.load %arg34[%c17_174, %c0_175] : memref<52x96xf32, #tpu.memory_space<vmem>>, vector<4x96xf32>
    tpu.vector_store %arg34[%c17_174, %c0_175], %273 {strides = array<i32>} : memref<52x96xf32, #tpu.memory_space<vmem>>, vector<4x96xf32>,
    %c64_176 = arith.constant 64 : index
    %c0_177 = arith.constant 0 : index
    %275 = vector.load %arg38[%c64_176, %c0_177] : memref<128x96xf32, #tpu.memory_space<vmem>>, vector<64x96xf32>
    %cst_178 = arith.constant dense<0.000000e+00> : vector<96xf32>
    %276 = vector.multi_reduction <add>, %275, %cst_178 [0] : vector<64x96xf32> to vector<96xf32>
    %277 = vector.shape_cast %276 : vector<96xf32> to vector<1x96xf32>
    %278 = arith.mulf %275, %275 : vector<64x96xf32>
    %cst_179 = arith.constant dense<0.000000e+00> : vector<96xf32>
    %279 = vector.multi_reduction <add>, %278, %cst_179 [0] : vector<64x96xf32> to vector<96xf32>
    %280 = vector.shape_cast %279 : vector<96xf32> to vector<1x96xf32>
    %cst_180 = arith.constant dense<0.000000e+00> : vector<1x32xf32>
    %281 = tpu.matmul %277, %221, %cst_180 {dimension_numbers = #tpu.dot_dimension_numbers<[1], [0], [0], [1], [0, 0, 1, 1], [], []>} : vector<1x96xf32>, vector<96x32xf32>, vector<1x32xf32> -> vector<1x32xf32>
    %cst_181 = arith.constant 0.00520833349 : f32
    %282 = vector.broadcast %cst_181 : f32 to vector<1x32xf32>
    %283 = arith.mulf %281, %282 : vector<1x32xf32>
    %cst_182 = arith.constant dense<0.000000e+00> : vector<1x96xf32>
    %284 = tpu.matmul %283, %222, %cst_182 {dimension_numbers = #tpu.dot_dimension_numbers<[1], [0], [0], [1], [0, 0, 1, 1], [], []>} : vector<1x32xf32>, vector<32x96xf32>, vector<1x96xf32> -> vector<1x96xf32>
    %cst_183 = arith.constant dense<0.000000e+00> : vector<1x32xf32>
    %285 = tpu.matmul %280, %221, %cst_183 {dimension_numbers = #tpu.dot_dimension_numbers<[1], [0], [0], [1], [0, 0, 1, 1], [], []>} : vector<1x96xf32>, vector<96x32xf32>, vector<1x32xf32> -> vector<1x32xf32>
    %cst_184 = arith.constant 0.00520833349 : f32
    %286 = vector.broadcast %cst_184 : f32 to vector<1x32xf32>
    %287 = arith.mulf %285, %286 : vector<1x32xf32>
    %cst_185 = arith.constant dense<0.000000e+00> : vector<1x96xf32>
    %288 = tpu.matmul %287, %222, %cst_185 {dimension_numbers = #tpu.dot_dimension_numbers<[1], [0], [0], [1], [0, 0, 1, 1], [], []>} : vector<1x32xf32>, vector<32x96xf32>, vector<1x96xf32> -> vector<1x96xf32>
    %289 = arith.mulf %284, %284 : vector<1x96xf32>
    %290 = arith.subf %288, %289 : vector<1x96xf32>
    %cst_186 = arith.constant 0.000000e+00 : f32
    %291 = vector.broadcast %cst_186 : f32 to vector<1x96xf32>
    %292 = arith.maximumf %290, %291 : vector<1x96xf32>
    %cst_187 = arith.constant 9.99999974E-6 : f32
    %293 = vector.broadcast %cst_187 : f32 to vector<1x96xf32>
    %294 = arith.addf %292, %293 : vector<1x96xf32>
    %295 = math.rsqrt %294 : vector<1x96xf32>
    %296 = arith.mulf %223, %295 : vector<1x96xf32>
    %297 = arith.mulf %284, %296 : vector<1x96xf32>
    %298 = arith.subf %224, %297 : vector<1x96xf32>
    %299 = vector.broadcast %296 : vector<1x96xf32> to vector<64x96xf32>
    %300 = arith.mulf %275, %299 : vector<64x96xf32>
    %301 = vector.broadcast %298 : vector<1x96xf32> to vector<64x96xf32>
    %302 = arith.addf %300, %301 : vector<64x96xf32>
    %cst_188 = arith.constant 0.000000e+00 : f32
    %303 = vector.broadcast %cst_188 : f32 to vector<64x96xf32>
    %304 = arith.maximumf %302, %303 : vector<64x96xf32>
    %c64_189 = arith.constant 64 : index
    %c0_190 = arith.constant 0 : index
    %305 = vector.load %arg38[%c64_189, %c0_190] : memref<128x96xf32, #tpu.memory_space<vmem>>, vector<64x96xf32>
    tpu.vector_store %arg38[%c64_189, %c0_190], %304 {strides = array<i32>} : memref<128x96xf32, #tpu.memory_space<vmem>>, vector<64x96xf32>,
    %c64_191 = arith.constant 64 : index
    %c0_192 = arith.constant 0 : index
    %306 = tpu.strided_load %arg38[%c64_191, %c0_192] {strides = array<i32: 2, 1>} : memref<128x96xf32, #tpu.memory_space<vmem>>, vector<32x96xf32>
    %c65_193 = arith.constant 65 : index
    %c0_194 = arith.constant 0 : index
    %307 = tpu.strided_load %arg38[%c65_193, %c0_194] {strides = array<i32: 2, 1>} : memref<128x96xf32, #tpu.memory_space<vmem>>, vector<32x96xf32>
    %308 = arith.maximumf %306, %307 : vector<32x96xf32>
    %309 = vector.extract_strided_slice %308 {offsets = [0, 0], sizes = [4, 96], strides = [1, 1]} : vector<32x96xf32> to vector<4x96xf32>
    %310 = vector.extract_strided_slice %308 {offsets = [4, 0], sizes = [4, 96], strides = [1, 1]} : vector<32x96xf32> to vector<4x96xf32>
    %311 = arith.maximumf %309, %310 : vector<4x96xf32>
    %c31 = arith.constant 31 : index
    %c0_195 = arith.constant 0 : index
    %312 = vector.load %arg34[%c31, %c0_195] : memref<52x96xf32, #tpu.memory_space<vmem>>, vector<4x96xf32>
    tpu.vector_store %arg34[%c31, %c0_195], %311 {strides = array<i32>} : memref<52x96xf32, #tpu.memory_space<vmem>>, vector<4x96xf32>,
    %313 = vector.extract_strided_slice %308 {offsets = [8, 0], sizes = [4, 96], strides = [1, 1]} : vector<32x96xf32> to vector<4x96xf32>
    %314 = vector.extract_strided_slice %308 {offsets = [12, 0], sizes = [4, 96], strides = [1, 1]} : vector<32x96xf32> to vector<4x96xf32>
    %315 = arith.maximumf %313, %314 : vector<4x96xf32>
    %c35 = arith.constant 35 : index
    %c0_196 = arith.constant 0 : index
    %316 = vector.load %arg34[%c35, %c0_196] : memref<52x96xf32, #tpu.memory_space<vmem>>, vector<4x96xf32>
    tpu.vector_store %arg34[%c35, %c0_196], %315 {strides = array<i32>} : memref<52x96xf32, #tpu.memory_space<vmem>>, vector<4x96xf32>,
    %317 = vector.extract_strided_slice %308 {offsets = [16, 0], sizes = [4, 96], strides = [1, 1]} : vector<32x96xf32> to vector<4x96xf32>
    %318 = vector.extract_strided_slice %308 {offsets = [20, 0], sizes = [4, 96], strides = [1, 1]} : vector<32x96xf32> to vector<4x96xf32>
    %319 = arith.maximumf %317, %318 : vector<4x96xf32>
    %c39 = arith.constant 39 : index
    %c0_197 = arith.constant 0 : index
    %320 = vector.load %arg34[%c39, %c0_197] : memref<52x96xf32, #tpu.memory_space<vmem>>, vector<4x96xf32>
    tpu.vector_store %arg34[%c39, %c0_197], %319 {strides = array<i32>} : memref<52x96xf32, #tpu.memory_space<vmem>>, vector<4x96xf32>,
    %321 = vector.extract_strided_slice %308 {offsets = [24, 0], sizes = [4, 96], strides = [1, 1]} : vector<32x96xf32> to vector<4x96xf32>
    %322 = vector.extract_strided_slice %308 {offsets = [28, 0], sizes = [4, 96], strides = [1, 1]} : vector<32x96xf32> to vector<4x96xf32>
    %323 = arith.maximumf %321, %322 : vector<4x96xf32>
    %c43 = arith.constant 43 : index
    %c0_198 = arith.constant 0 : index
    %324 = vector.load %arg34[%c43, %c0_198] : memref<52x96xf32, #tpu.memory_space<vmem>>, vector<4x96xf32>
    tpu.vector_store %arg34[%c43, %c0_198], %323 {strides = array<i32>} : memref<52x96xf32, #tpu.memory_space<vmem>>, vector<4x96xf32>,
    %c0_199 = arith.constant 0 : index
    %c0_200 = arith.constant 0 : index
    %325 = vector.load %arg22[%c0_199, %c0_200] : memref<16x1xf32, #tpu.memory_space<vmem>>, vector<16x1xf32>
    %c0_201 = arith.constant 0 : index
    %c0_202 = arith.constant 0 : index
    %326 = vector.load %arg23[%c0_201, %c0_202] : memref<16x1xf32, #tpu.memory_space<vmem>>, vector<16x1xf32>
    %c0_203 = arith.constant 0 : index
    %c0_204 = arith.constant 0 : index
    %327 = vector.load %arg34[%c0_203, %c0_204] : memref<52x96xf32, #tpu.memory_space<vmem>>, vector<16x96xf32>
    %328 = vector.broadcast %325 : vector<16x1xf32> to vector<16x96xf32>
    %329 = arith.mulf %327, %328 : vector<16x96xf32>
    %c0_205 = arith.constant 0 : index
    %c0_206 = arith.constant 0 : index
    %330 = vector.load %arg36[%c0_205, %c0_206] : memref<128x1152xf32, #tpu.memory_space<vmem>>, vector<16x96xf32>
    tpu.vector_store %arg36[%c0_205, %c0_206], %329 {strides = array<i32>} : memref<128x1152xf32, #tpu.memory_space<vmem>>, vector<16x96xf32>,
    %c1_207 = arith.constant 1 : index
    %c0_208 = arith.constant 0 : index
    %331 = vector.load %arg34[%c1_207, %c0_208] : memref<52x96xf32, #tpu.memory_space<vmem>>, vector<16x96xf32>
    %c0_209 = arith.constant 0 : index
    %c128_210 = arith.constant 128 : index
    %332 = vector.load %arg36[%c0_209, %c128_210] : memref<128x1152xf32, #tpu.memory_space<vmem>>, vector<16x96xf32>
    tpu.vector_store %arg36[%c0_209, %c128_210], %331 {strides = array<i32>} : memref<128x1152xf32, #tpu.memory_space<vmem>>, vector<16x96xf32>,
    %c2_211 = arith.constant 2 : index
    %c0_212 = arith.constant 0 : index
    %333 = vector.load %arg34[%c2_211, %c0_212] : memref<52x96xf32, #tpu.memory_space<vmem>>, vector<16x96xf32>
    %334 = vector.broadcast %326 : vector<16x1xf32> to vector<16x96xf32>
    %335 = arith.mulf %333, %334 : vector<16x96xf32>
    %c0_213 = arith.constant 0 : index
    %c256_214 = arith.constant 256 : index
    %336 = vector.load %arg36[%c0_213, %c256_214] : memref<128x1152xf32, #tpu.memory_space<vmem>>, vector<16x96xf32>
    tpu.vector_store %arg36[%c0_213, %c256_214], %335 {strides = array<i32>} : memref<128x1152xf32, #tpu.memory_space<vmem>>, vector<16x96xf32>,
    %c4 = arith.constant 4 : index
    %c0_215 = arith.constant 0 : index
    %337 = vector.load %arg34[%c4, %c0_215] : memref<52x96xf32, #tpu.memory_space<vmem>>, vector<16x96xf32>
    %338 = vector.broadcast %325 : vector<16x1xf32> to vector<16x96xf32>
    %339 = arith.mulf %337, %338 : vector<16x96xf32>
    %c0_216 = arith.constant 0 : index
    %c384_217 = arith.constant 384 : index
    %340 = vector.load %arg36[%c0_216, %c384_217] : memref<128x1152xf32, #tpu.memory_space<vmem>>, vector<16x96xf32>
    tpu.vector_store %arg36[%c0_216, %c384_217], %339 {strides = array<i32>} : memref<128x1152xf32, #tpu.memory_space<vmem>>, vector<16x96xf32>,
    %c5_218 = arith.constant 5 : index
    %c0_219 = arith.constant 0 : index
    %341 = vector.load %arg34[%c5_218, %c0_219] : memref<52x96xf32, #tpu.memory_space<vmem>>, vector<16x96xf32>
    %c0_220 = arith.constant 0 : index
    %c512_221 = arith.constant 512 : index
    %342 = vector.load %arg36[%c0_220, %c512_221] : memref<128x1152xf32, #tpu.memory_space<vmem>>, vector<16x96xf32>
    tpu.vector_store %arg36[%c0_220, %c512_221], %341 {strides = array<i32>} : memref<128x1152xf32, #tpu.memory_space<vmem>>, vector<16x96xf32>,
    %c6 = arith.constant 6 : index
    %c0_222 = arith.constant 0 : index
    %343 = vector.load %arg34[%c6, %c0_222] : memref<52x96xf32, #tpu.memory_space<vmem>>, vector<16x96xf32>
    %344 = vector.broadcast %326 : vector<16x1xf32> to vector<16x96xf32>
    %345 = arith.mulf %343, %344 : vector<16x96xf32>
    %c0_223 = arith.constant 0 : index
    %c640_224 = arith.constant 640 : index
    %346 = vector.load %arg36[%c0_223, %c640_224] : memref<128x1152xf32, #tpu.memory_space<vmem>>, vector<16x96xf32>
    tpu.vector_store %arg36[%c0_223, %c640_224], %345 {strides = array<i32>} : memref<128x1152xf32, #tpu.memory_space<vmem>>, vector<16x96xf32>,
    %c8_225 = arith.constant 8 : index
    %c0_226 = arith.constant 0 : index
    %347 = vector.load %arg34[%c8_225, %c0_226] : memref<52x96xf32, #tpu.memory_space<vmem>>, vector<16x96xf32>
    %348 = vector.broadcast %325 : vector<16x1xf32> to vector<16x96xf32>
    %349 = arith.mulf %347, %348 : vector<16x96xf32>
    %c0_227 = arith.constant 0 : index
    %c768_228 = arith.constant 768 : index
    %350 = vector.load %arg36[%c0_227, %c768_228] : memref<128x1152xf32, #tpu.memory_space<vmem>>, vector<16x96xf32>
    tpu.vector_store %arg36[%c0_227, %c768_228], %349 {strides = array<i32>} : memref<128x1152xf32, #tpu.memory_space<vmem>>, vector<16x96xf32>,
    %c9_229 = arith.constant 9 : index
    %c0_230 = arith.constant 0 : index
    %351 = vector.load %arg34[%c9_229, %c0_230] : memref<52x96xf32, #tpu.memory_space<vmem>>, vector<16x96xf32>
    %c0_231 = arith.constant 0 : index
    %c896_232 = arith.constant 896 : index
    %352 = vector.load %arg36[%c0_231, %c896_232] : memref<128x1152xf32, #tpu.memory_space<vmem>>, vector<16x96xf32>
    tpu.vector_store %arg36[%c0_231, %c896_232], %351 {strides = array<i32>} : memref<128x1152xf32, #tpu.memory_space<vmem>>, vector<16x96xf32>,
    %c10_233 = arith.constant 10 : index
    %c0_234 = arith.constant 0 : index
    %353 = vector.load %arg34[%c10_233, %c0_234] : memref<52x96xf32, #tpu.memory_space<vmem>>, vector<16x96xf32>
    %354 = vector.broadcast %326 : vector<16x1xf32> to vector<16x96xf32>
    %355 = arith.mulf %353, %354 : vector<16x96xf32>
    %c0_235 = arith.constant 0 : index
    %c1024_236 = arith.constant 1024 : index
    %356 = vector.load %arg36[%c0_235, %c1024_236] : memref<128x1152xf32, #tpu.memory_space<vmem>>, vector<16x96xf32>
    tpu.vector_store %arg36[%c0_235, %c1024_236], %355 {strides = array<i32>} : memref<128x1152xf32, #tpu.memory_space<vmem>>, vector<16x96xf32>,
    %c26 = arith.constant 26 : index
    %c0_237 = arith.constant 0 : index
    %357 = vector.load %arg34[%c26, %c0_237] : memref<52x96xf32, #tpu.memory_space<vmem>>, vector<16x96xf32>
    %358 = vector.broadcast %325 : vector<16x1xf32> to vector<16x96xf32>
    %359 = arith.mulf %357, %358 : vector<16x96xf32>
    %c16_238 = arith.constant 16 : index
    %c0_239 = arith.constant 0 : index
    %360 = vector.load %arg36[%c16_238, %c0_239] : memref<128x1152xf32, #tpu.memory_space<vmem>>, vector<16x96xf32>
    tpu.vector_store %arg36[%c16_238, %c0_239], %359 {strides = array<i32>} : memref<128x1152xf32, #tpu.memory_space<vmem>>, vector<16x96xf32>,
    %c27 = arith.constant 27 : index
    %c0_240 = arith.constant 0 : index
    %361 = vector.load %arg34[%c27, %c0_240] : memref<52x96xf32, #tpu.memory_space<vmem>>, vector<16x96xf32>
    %c16_241 = arith.constant 16 : index
    %c128_242 = arith.constant 128 : index
    %362 = vector.load %arg36[%c16_241, %c128_242] : memref<128x1152xf32, #tpu.memory_space<vmem>>, vector<16x96xf32>
    tpu.vector_store %arg36[%c16_241, %c128_242], %361 {strides = array<i32>} : memref<128x1152xf32, #tpu.memory_space<vmem>>, vector<16x96xf32>,
    %c28 = arith.constant 28 : index
    %c0_243 = arith.constant 0 : index
    %363 = vector.load %arg34[%c28, %c0_243] : memref<52x96xf32, #tpu.memory_space<vmem>>, vector<16x96xf32>
    %364 = vector.broadcast %326 : vector<16x1xf32> to vector<16x96xf32>
    %365 = arith.mulf %363, %364 : vector<16x96xf32>
    %c16_244 = arith.constant 16 : index
    %c256_245 = arith.constant 256 : index
    %366 = vector.load %arg36[%c16_244, %c256_245] : memref<128x1152xf32, #tpu.memory_space<vmem>>, vector<16x96xf32>
    tpu.vector_store %arg36[%c16_244, %c256_245], %365 {strides = array<i32>} : memref<128x1152xf32, #tpu.memory_space<vmem>>, vector<16x96xf32>,
    %c30 = arith.constant 30 : index
    %c0_246 = arith.constant 0 : index
    %367 = vector.load %arg34[%c30, %c0_246] : memref<52x96xf32, #tpu.memory_space<vmem>>, vector<16x96xf32>
    %368 = vector.broadcast %325 : vector<16x1xf32> to vector<16x96xf32>
    %369 = arith.mulf %367, %368 : vector<16x96xf32>
    %c16_247 = arith.constant 16 : index
    %c384_248 = arith.constant 384 : index
    %370 = vector.load %arg36[%c16_247, %c384_248] : memref<128x1152xf32, #tpu.memory_space<vmem>>, vector<16x96xf32>
    tpu.vector_store %arg36[%c16_247, %c384_248], %369 {strides = array<i32>} : memref<128x1152xf32, #tpu.memory_space<vmem>>, vector<16x96xf32>,
    %c31_249 = arith.constant 31 : index
    %c0_250 = arith.constant 0 : index
    %371 = vector.load %arg34[%c31_249, %c0_250] : memref<52x96xf32, #tpu.memory_space<vmem>>, vector<16x96xf32>
    %c16_251 = arith.constant 16 : index
    %c512_252 = arith.constant 512 : index
    %372 = vector.load %arg36[%c16_251, %c512_252] : memref<128x1152xf32, #tpu.memory_space<vmem>>, vector<16x96xf32>
    tpu.vector_store %arg36[%c16_251, %c512_252], %371 {strides = array<i32>} : memref<128x1152xf32, #tpu.memory_space<vmem>>, vector<16x96xf32>,
    %c32 = arith.constant 32 : index
    %c0_253 = arith.constant 0 : index
    %373 = vector.load %arg34[%c32, %c0_253] : memref<52x96xf32, #tpu.memory_space<vmem>>, vector<16x96xf32>
    %374 = vector.broadcast %326 : vector<16x1xf32> to vector<16x96xf32>
    %375 = arith.mulf %373, %374 : vector<16x96xf32>
    %c16_254 = arith.constant 16 : index
    %c640_255 = arith.constant 640 : index
    %376 = vector.load %arg36[%c16_254, %c640_255] : memref<128x1152xf32, #tpu.memory_space<vmem>>, vector<16x96xf32>
    tpu.vector_store %arg36[%c16_254, %c640_255], %375 {strides = array<i32>} : memref<128x1152xf32, #tpu.memory_space<vmem>>, vector<16x96xf32>,
    %c34 = arith.constant 34 : index
    %c0_256 = arith.constant 0 : index
    %377 = vector.load %arg34[%c34, %c0_256] : memref<52x96xf32, #tpu.memory_space<vmem>>, vector<16x96xf32>
    %378 = vector.broadcast %325 : vector<16x1xf32> to vector<16x96xf32>
    %379 = arith.mulf %377, %378 : vector<16x96xf32>
    %c16_257 = arith.constant 16 : index
    %c768_258 = arith.constant 768 : index
    %380 = vector.load %arg36[%c16_257, %c768_258] : memref<128x1152xf32, #tpu.memory_space<vmem>>, vector<16x96xf32>
    tpu.vector_store %arg36[%c16_257, %c768_258], %379 {strides = array<i32>} : memref<128x1152xf32, #tpu.memory_space<vmem>>, vector<16x96xf32>,
    %c35_259 = arith.constant 35 : index
    %c0_260 = arith.constant 0 : index
    %381 = vector.load %arg34[%c35_259, %c0_260] : memref<52x96xf32, #tpu.memory_space<vmem>>, vector<16x96xf32>
    %c16_261 = arith.constant 16 : index
    %c896_262 = arith.constant 896 : index
    %382 = vector.load %arg36[%c16_261, %c896_262] : memref<128x1152xf32, #tpu.memory_space<vmem>>, vector<16x96xf32>
    tpu.vector_store %arg36[%c16_261, %c896_262], %381 {strides = array<i32>} : memref<128x1152xf32, #tpu.memory_space<vmem>>, vector<16x96xf32>,
    %c36 = arith.constant 36 : index
    %c0_263 = arith.constant 0 : index
    %383 = vector.load %arg34[%c36, %c0_263] : memref<52x96xf32, #tpu.memory_space<vmem>>, vector<16x96xf32>
    %384 = vector.broadcast %326 : vector<16x1xf32> to vector<16x96xf32>
    %385 = arith.mulf %383, %384 : vector<16x96xf32>
    %c16_264 = arith.constant 16 : index
    %c1024_265 = arith.constant 1024 : index
    %386 = vector.load %arg36[%c16_264, %c1024_265] : memref<128x1152xf32, #tpu.memory_space<vmem>>, vector<16x96xf32>
    tpu.vector_store %arg36[%c16_264, %c1024_265], %385 {strides = array<i32>} : memref<128x1152xf32, #tpu.memory_space<vmem>>, vector<16x96xf32>,
    %c0_266 = arith.constant 0 : index
    %c0_267 = arith.constant 0 : index
    %387 = vector.load %arg36[%c0_266, %c0_267] : memref<128x1152xf32, #tpu.memory_space<vmem>>, vector<32x1152xf32>
    %388 = arith.truncf %387 : vector<32x1152xf32> to vector<32x1152xbf16>
    %c0_268 = arith.constant 0 : index
    %c0_269 = arith.constant 0 : index
    %389 = vector.load %arg16[%c0_268, %c0_269] : memref<1152x128xbf16, #tpu.memory_space<vmem>>, vector<1152x128xbf16>
    %cst_270 = arith.constant dense<0.000000e+00> : vector<32x128xf32>
    %390 = tpu.matmul %388, %389, %cst_270 {dimension_numbers = #tpu.dot_dimension_numbers<[1], [0], [0], [1], [0, 0, 1, 1], [], []>} : vector<32x1152xbf16>, vector<1152x128xbf16>, vector<32x128xf32> -> vector<32x128xf32>
    %c0_271 = arith.constant 0 : index
    %c0_272 = arith.constant 0 : index
    %391 = vector.load %arg17[%c0_271, %c0_272] : memref<1x128xf32, #tpu.memory_space<vmem>>, vector<1x128xf32>
    %392 = vector.broadcast %391 : vector<1x128xf32> to vector<32x128xf32>
    %393 = arith.addf %390, %392 : vector<32x128xf32>
    %c0_273 = arith.constant 0 : index
    %c0_274 = arith.constant 0 : index
    %394 = vector.load %arg39[%c0_273, %c0_274] : memref<32x128xf32, #tpu.memory_space<vmem>>, vector<32x128xf32>
    tpu.vector_store %arg39[%c0_273, %c0_274], %393 {strides = array<i32>} : memref<32x128xf32, #tpu.memory_space<vmem>>, vector<32x128xf32>,
    %c0_275 = arith.constant 0 : index
    %c0_276 = arith.constant 0 : index
    %395 = vector.load %arg20[%c0_275, %c0_276] : memref<128x32xf32, #tpu.memory_space<vmem>>, vector<128x32xf32>
    %c0_277 = arith.constant 0 : index
    %c0_278 = arith.constant 0 : index
    %396 = vector.load %arg21[%c0_277, %c0_278] : memref<32x128xf32, #tpu.memory_space<vmem>>, vector<32x128xf32>
    %c0_279 = arith.constant 0 : index
    %c0_280 = arith.constant 0 : index
    %397 = vector.load %arg18[%c0_279, %c0_280] : memref<1x128xf32, #tpu.memory_space<vmem>>, vector<1x128xf32>
    %c0_281 = arith.constant 0 : index
    %c0_282 = arith.constant 0 : index
    %398 = vector.load %arg19[%c0_281, %c0_282] : memref<1x128xf32, #tpu.memory_space<vmem>>, vector<1x128xf32>
    %c0_283 = arith.constant 0 : index
    %c0_284 = arith.constant 0 : index
    %399 = vector.load %arg39[%c0_283, %c0_284] : memref<32x128xf32, #tpu.memory_space<vmem>>, vector<16x128xf32>
    %cst_285 = arith.constant dense<0.000000e+00> : vector<128xf32>
    %400 = vector.multi_reduction <add>, %399, %cst_285 [0] : vector<16x128xf32> to vector<128xf32>
    %401 = vector.shape_cast %400 : vector<128xf32> to vector<1x128xf32>
    %402 = arith.mulf %399, %399 : vector<16x128xf32>
    %cst_286 = arith.constant dense<0.000000e+00> : vector<128xf32>
    %403 = vector.multi_reduction <add>, %402, %cst_286 [0] : vector<16x128xf32> to vector<128xf32>
    %404 = vector.shape_cast %403 : vector<128xf32> to vector<1x128xf32>
    %cst_287 = arith.constant dense<0.000000e+00> : vector<1x32xf32>
    %405 = tpu.matmul %401, %395, %cst_287 {dimension_numbers = #tpu.dot_dimension_numbers<[1], [0], [0], [1], [0, 0, 1, 1], [], []>} : vector<1x128xf32>, vector<128x32xf32>, vector<1x32xf32> -> vector<1x32xf32>
    %cst_288 = arith.constant 1.562500e-02 : f32
    %406 = vector.broadcast %cst_288 : f32 to vector<1x32xf32>
    %407 = arith.mulf %405, %406 : vector<1x32xf32>
    %cst_289 = arith.constant dense<0.000000e+00> : vector<1x128xf32>
    %408 = tpu.matmul %407, %396, %cst_289 {dimension_numbers = #tpu.dot_dimension_numbers<[1], [0], [0], [1], [0, 0, 1, 1], [], []>} : vector<1x32xf32>, vector<32x128xf32>, vector<1x128xf32> -> vector<1x128xf32>
    %cst_290 = arith.constant dense<0.000000e+00> : vector<1x32xf32>
    %409 = tpu.matmul %404, %395, %cst_290 {dimension_numbers = #tpu.dot_dimension_numbers<[1], [0], [0], [1], [0, 0, 1, 1], [], []>} : vector<1x128xf32>, vector<128x32xf32>, vector<1x32xf32> -> vector<1x32xf32>
    %cst_291 = arith.constant 1.562500e-02 : f32
    %410 = vector.broadcast %cst_291 : f32 to vector<1x32xf32>
    %411 = arith.mulf %409, %410 : vector<1x32xf32>
    %cst_292 = arith.constant dense<0.000000e+00> : vector<1x128xf32>
    %412 = tpu.matmul %411, %396, %cst_292 {dimension_numbers = #tpu.dot_dimension_numbers<[1], [0], [0], [1], [0, 0, 1, 1], [], []>} : vector<1x32xf32>, vector<32x128xf32>, vector<1x128xf32> -> vector<1x128xf32>
    %413 = arith.mulf %408, %408 : vector<1x128xf32>
    %414 = arith.subf %412, %413 : vector<1x128xf32>
    %cst_293 = arith.constant 0.000000e+00 : f32
    %415 = vector.broadcast %cst_293 : f32 to vector<1x128xf32>
    %416 = arith.maximumf %414, %415 : vector<1x128xf32>
    %cst_294 = arith.constant 9.99999974E-6 : f32
    %417 = vector.broadcast %cst_294 : f32 to vector<1x128xf32>
    %418 = arith.addf %416, %417 : vector<1x128xf32>
    %419 = math.rsqrt %418 : vector<1x128xf32>
    %420 = arith.mulf %397, %419 : vector<1x128xf32>
    %421 = arith.mulf %408, %420 : vector<1x128xf32>
    %422 = arith.subf %398, %421 : vector<1x128xf32>
    %423 = vector.broadcast %420 : vector<1x128xf32> to vector<16x128xf32>
    %424 = arith.mulf %399, %423 : vector<16x128xf32>
    %425 = vector.broadcast %422 : vector<1x128xf32> to vector<16x128xf32>
    %426 = arith.addf %424, %425 : vector<16x128xf32>
    %cst_295 = arith.constant 0.000000e+00 : f32
    %427 = vector.broadcast %cst_295 : f32 to vector<16x128xf32>
    %428 = arith.maximumf %426, %427 : vector<16x128xf32>
    %c0_296 = arith.constant 0 : index
    %c0_297 = arith.constant 0 : index
    %429 = vector.load %arg39[%c0_296, %c0_297] : memref<32x128xf32, #tpu.memory_space<vmem>>, vector<16x128xf32>
    tpu.vector_store %arg39[%c0_296, %c0_297], %428 {strides = array<i32>} : memref<32x128xf32, #tpu.memory_space<vmem>>, vector<16x128xf32>,
    %c0_298 = arith.constant 0 : index
    %c0_299 = arith.constant 0 : index
    %430 = tpu.strided_load %arg39[%c0_298, %c0_299] {strides = array<i32: 2, 1>} : memref<32x128xf32, #tpu.memory_space<vmem>>, vector<8x128xf32>
    %c1_300 = arith.constant 1 : index
    %c0_301 = arith.constant 0 : index
    %431 = tpu.strided_load %arg39[%c1_300, %c0_301] {strides = array<i32: 2, 1>} : memref<32x128xf32, #tpu.memory_space<vmem>>, vector<8x128xf32>
    %432 = arith.maximumf %430, %431 : vector<8x128xf32>
    %433 = vector.extract_strided_slice %432 {offsets = [0, 0], sizes = [2, 128], strides = [1, 1]} : vector<8x128xf32> to vector<2x128xf32>
    %434 = vector.extract_strided_slice %432 {offsets = [2, 0], sizes = [2, 128], strides = [1, 1]} : vector<8x128xf32> to vector<2x128xf32>
    %435 = arith.maximumf %433, %434 : vector<2x128xf32>
    %c3 = arith.constant 3 : index
    %c0_302 = arith.constant 0 : index
    %436 = vector.load %arg35[%c3, %c0_302] : memref<20x128xf32, #tpu.memory_space<vmem>>, vector<2x128xf32>
    tpu.vector_store %arg35[%c3, %c0_302], %435 {strides = array<i32>} : memref<20x128xf32, #tpu.memory_space<vmem>>, vector<2x128xf32>,
    %437 = vector.extract_strided_slice %432 {offsets = [4, 0], sizes = [2, 128], strides = [1, 1]} : vector<8x128xf32> to vector<2x128xf32>
    %438 = vector.extract_strided_slice %432 {offsets = [6, 0], sizes = [2, 128], strides = [1, 1]} : vector<8x128xf32> to vector<2x128xf32>
    %439 = arith.maximumf %437, %438 : vector<2x128xf32>
    %c5_303 = arith.constant 5 : index
    %c0_304 = arith.constant 0 : index
    %440 = vector.load %arg35[%c5_303, %c0_304] : memref<20x128xf32, #tpu.memory_space<vmem>>, vector<2x128xf32>
    tpu.vector_store %arg35[%c5_303, %c0_304], %439 {strides = array<i32>} : memref<20x128xf32, #tpu.memory_space<vmem>>, vector<2x128xf32>,
    %c16_305 = arith.constant 16 : index
    %c0_306 = arith.constant 0 : index
    %441 = vector.load %arg39[%c16_305, %c0_306] : memref<32x128xf32, #tpu.memory_space<vmem>>, vector<16x128xf32>
    %cst_307 = arith.constant dense<0.000000e+00> : vector<128xf32>
    %442 = vector.multi_reduction <add>, %441, %cst_307 [0] : vector<16x128xf32> to vector<128xf32>
    %443 = vector.shape_cast %442 : vector<128xf32> to vector<1x128xf32>
    %444 = arith.mulf %441, %441 : vector<16x128xf32>
    %cst_308 = arith.constant dense<0.000000e+00> : vector<128xf32>
    %445 = vector.multi_reduction <add>, %444, %cst_308 [0] : vector<16x128xf32> to vector<128xf32>
    %446 = vector.shape_cast %445 : vector<128xf32> to vector<1x128xf32>
    %cst_309 = arith.constant dense<0.000000e+00> : vector<1x32xf32>
    %447 = tpu.matmul %443, %395, %cst_309 {dimension_numbers = #tpu.dot_dimension_numbers<[1], [0], [0], [1], [0, 0, 1, 1], [], []>} : vector<1x128xf32>, vector<128x32xf32>, vector<1x32xf32> -> vector<1x32xf32>
    %cst_310 = arith.constant 1.562500e-02 : f32
    %448 = vector.broadcast %cst_310 : f32 to vector<1x32xf32>
    %449 = arith.mulf %447, %448 : vector<1x32xf32>
    %cst_311 = arith.constant dense<0.000000e+00> : vector<1x128xf32>
    %450 = tpu.matmul %449, %396, %cst_311 {dimension_numbers = #tpu.dot_dimension_numbers<[1], [0], [0], [1], [0, 0, 1, 1], [], []>} : vector<1x32xf32>, vector<32x128xf32>, vector<1x128xf32> -> vector<1x128xf32>
    %cst_312 = arith.constant dense<0.000000e+00> : vector<1x32xf32>
    %451 = tpu.matmul %446, %395, %cst_312 {dimension_numbers = #tpu.dot_dimension_numbers<[1], [0], [0], [1], [0, 0, 1, 1], [], []>} : vector<1x128xf32>, vector<128x32xf32>, vector<1x32xf32> -> vector<1x32xf32>
    %cst_313 = arith.constant 1.562500e-02 : f32
    %452 = vector.broadcast %cst_313 : f32 to vector<1x32xf32>
    %453 = arith.mulf %451, %452 : vector<1x32xf32>
    %cst_314 = arith.constant dense<0.000000e+00> : vector<1x128xf32>
    %454 = tpu.matmul %453, %396, %cst_314 {dimension_numbers = #tpu.dot_dimension_numbers<[1], [0], [0], [1], [0, 0, 1, 1], [], []>} : vector<1x32xf32>, vector<32x128xf32>, vector<1x128xf32> -> vector<1x128xf32>
    %455 = arith.mulf %450, %450 : vector<1x128xf32>
    %456 = arith.subf %454, %455 : vector<1x128xf32>
    %cst_315 = arith.constant 0.000000e+00 : f32
    %457 = vector.broadcast %cst_315 : f32 to vector<1x128xf32>
    %458 = arith.maximumf %456, %457 : vector<1x128xf32>
    %cst_316 = arith.constant 9.99999974E-6 : f32
    %459 = vector.broadcast %cst_316 : f32 to vector<1x128xf32>
    %460 = arith.addf %458, %459 : vector<1x128xf32>
    %461 = math.rsqrt %460 : vector<1x128xf32>
    %462 = arith.mulf %397, %461 : vector<1x128xf32>
    %463 = arith.mulf %450, %462 : vector<1x128xf32>
    %464 = arith.subf %398, %463 : vector<1x128xf32>
    %465 = vector.broadcast %462 : vector<1x128xf32> to vector<16x128xf32>
    %466 = arith.mulf %441, %465 : vector<16x128xf32>
    %467 = vector.broadcast %464 : vector<1x128xf32> to vector<16x128xf32>
    %468 = arith.addf %466, %467 : vector<16x128xf32>
    %cst_317 = arith.constant 0.000000e+00 : f32
    %469 = vector.broadcast %cst_317 : f32 to vector<16x128xf32>
    %470 = arith.maximumf %468, %469 : vector<16x128xf32>
    %c16_318 = arith.constant 16 : index
    %c0_319 = arith.constant 0 : index
    %471 = vector.load %arg39[%c16_318, %c0_319] : memref<32x128xf32, #tpu.memory_space<vmem>>, vector<16x128xf32>
    tpu.vector_store %arg39[%c16_318, %c0_319], %470 {strides = array<i32>} : memref<32x128xf32, #tpu.memory_space<vmem>>, vector<16x128xf32>,
    %c16_320 = arith.constant 16 : index
    %c0_321 = arith.constant 0 : index
    %472 = tpu.strided_load %arg39[%c16_320, %c0_321] {strides = array<i32: 2, 1>} : memref<32x128xf32, #tpu.memory_space<vmem>>, vector<8x128xf32>
    %c17_322 = arith.constant 17 : index
    %c0_323 = arith.constant 0 : index
    %473 = tpu.strided_load %arg39[%c17_322, %c0_323] {strides = array<i32: 2, 1>} : memref<32x128xf32, #tpu.memory_space<vmem>>, vector<8x128xf32>
    %474 = arith.maximumf %472, %473 : vector<8x128xf32>
    %475 = vector.extract_strided_slice %474 {offsets = [0, 0], sizes = [2, 128], strides = [1, 1]} : vector<8x128xf32> to vector<2x128xf32>
    %476 = vector.extract_strided_slice %474 {offsets = [2, 0], sizes = [2, 128], strides = [1, 1]} : vector<8x128xf32> to vector<2x128xf32>
    %477 = arith.maximumf %475, %476 : vector<2x128xf32>
    %c13_324 = arith.constant 13 : index
    %c0_325 = arith.constant 0 : index
    %478 = vector.load %arg35[%c13_324, %c0_325] : memref<20x128xf32, #tpu.memory_space<vmem>>, vector<2x128xf32>
    tpu.vector_store %arg35[%c13_324, %c0_325], %477 {strides = array<i32>} : memref<20x128xf32, #tpu.memory_space<vmem>>, vector<2x128xf32>,
    %479 = vector.extract_strided_slice %474 {offsets = [4, 0], sizes = [2, 128], strides = [1, 1]} : vector<8x128xf32> to vector<2x128xf32>
    %480 = vector.extract_strided_slice %474 {offsets = [6, 0], sizes = [2, 128], strides = [1, 1]} : vector<8x128xf32> to vector<2x128xf32>
    %481 = arith.maximumf %479, %480 : vector<2x128xf32>
    %c15 = arith.constant 15 : index
    %c0_326 = arith.constant 0 : index
    %482 = vector.load %arg35[%c15, %c0_326] : memref<20x128xf32, #tpu.memory_space<vmem>>, vector<2x128xf32>
    tpu.vector_store %arg35[%c15, %c0_326], %481 {strides = array<i32>} : memref<20x128xf32, #tpu.memory_space<vmem>>, vector<2x128xf32>,
    %c0_327 = arith.constant 0 : index
    %c0_328 = arith.constant 0 : index
    %483 = vector.load %arg30[%c0_327, %c0_328] : memref<4x1xf32, #tpu.memory_space<vmem>>, vector<4x1xf32>
    %c0_329 = arith.constant 0 : index
    %c0_330 = arith.constant 0 : index
    %484 = vector.load %arg31[%c0_329, %c0_330] : memref<4x1xf32, #tpu.memory_space<vmem>>, vector<4x1xf32>
    %c0_331 = arith.constant 0 : index
    %c0_332 = arith.constant 0 : index
    %485 = vector.load %arg35[%c0_331, %c0_332] : memref<20x128xf32, #tpu.memory_space<vmem>>, vector<4x128xf32>
    %486 = vector.broadcast %483 : vector<4x1xf32> to vector<4x128xf32>
    %487 = arith.mulf %485, %486 : vector<4x128xf32>
    %c0_333 = arith.constant 0 : index
    %c0_334 = arith.constant 0 : index
    %488 = vector.load %arg36[%c0_333, %c0_334] : memref<128x1152xf32, #tpu.memory_space<vmem>>, vector<4x128xf32>
    tpu.vector_store %arg36[%c0_333, %c0_334], %487 {strides = array<i32>} : memref<128x1152xf32, #tpu.memory_space<vmem>>, vector<4x128xf32>,
    %c1_335 = arith.constant 1 : index
    %c0_336 = arith.constant 0 : index
    %489 = vector.load %arg35[%c1_335, %c0_336] : memref<20x128xf32, #tpu.memory_space<vmem>>, vector<4x128xf32>
    %c0_337 = arith.constant 0 : index
    %c128_338 = arith.constant 128 : index
    %490 = vector.load %arg36[%c0_337, %c128_338] : memref<128x1152xf32, #tpu.memory_space<vmem>>, vector<4x128xf32>
    tpu.vector_store %arg36[%c0_337, %c128_338], %489 {strides = array<i32>} : memref<128x1152xf32, #tpu.memory_space<vmem>>, vector<4x128xf32>,
    %c2_339 = arith.constant 2 : index
    %c0_340 = arith.constant 0 : index
    %491 = vector.load %arg35[%c2_339, %c0_340] : memref<20x128xf32, #tpu.memory_space<vmem>>, vector<4x128xf32>
    %492 = vector.broadcast %484 : vector<4x1xf32> to vector<4x128xf32>
    %493 = arith.mulf %491, %492 : vector<4x128xf32>
    %c0_341 = arith.constant 0 : index
    %c256_342 = arith.constant 256 : index
    %494 = vector.load %arg36[%c0_341, %c256_342] : memref<128x1152xf32, #tpu.memory_space<vmem>>, vector<4x128xf32>
    tpu.vector_store %arg36[%c0_341, %c256_342], %493 {strides = array<i32>} : memref<128x1152xf32, #tpu.memory_space<vmem>>, vector<4x128xf32>,
    %c2_343 = arith.constant 2 : index
    %c0_344 = arith.constant 0 : index
    %495 = vector.load %arg35[%c2_343, %c0_344] : memref<20x128xf32, #tpu.memory_space<vmem>>, vector<4x128xf32>
    %496 = vector.broadcast %483 : vector<4x1xf32> to vector<4x128xf32>
    %497 = arith.mulf %495, %496 : vector<4x128xf32>
    %c0_345 = arith.constant 0 : index
    %c384_346 = arith.constant 384 : index
    %498 = vector.load %arg36[%c0_345, %c384_346] : memref<128x1152xf32, #tpu.memory_space<vmem>>, vector<4x128xf32>
    tpu.vector_store %arg36[%c0_345, %c384_346], %497 {strides = array<i32>} : memref<128x1152xf32, #tpu.memory_space<vmem>>, vector<4x128xf32>,
    %c3_347 = arith.constant 3 : index
    %c0_348 = arith.constant 0 : index
    %499 = vector.load %arg35[%c3_347, %c0_348] : memref<20x128xf32, #tpu.memory_space<vmem>>, vector<4x128xf32>
    %c0_349 = arith.constant 0 : index
    %c512_350 = arith.constant 512 : index
    %500 = vector.load %arg36[%c0_349, %c512_350] : memref<128x1152xf32, #tpu.memory_space<vmem>>, vector<4x128xf32>
    tpu.vector_store %arg36[%c0_349, %c512_350], %499 {strides = array<i32>} : memref<128x1152xf32, #tpu.memory_space<vmem>>, vector<4x128xf32>,
    %c4_351 = arith.constant 4 : index
    %c0_352 = arith.constant 0 : index
    %501 = vector.load %arg35[%c4_351, %c0_352] : memref<20x128xf32, #tpu.memory_space<vmem>>, vector<4x128xf32>
    %502 = vector.broadcast %484 : vector<4x1xf32> to vector<4x128xf32>
    %503 = arith.mulf %501, %502 : vector<4x128xf32>
    %c0_353 = arith.constant 0 : index
    %c640_354 = arith.constant 640 : index
    %504 = vector.load %arg36[%c0_353, %c640_354] : memref<128x1152xf32, #tpu.memory_space<vmem>>, vector<4x128xf32>
    tpu.vector_store %arg36[%c0_353, %c640_354], %503 {strides = array<i32>} : memref<128x1152xf32, #tpu.memory_space<vmem>>, vector<4x128xf32>,
    %c4_355 = arith.constant 4 : index
    %c0_356 = arith.constant 0 : index
    %505 = vector.load %arg35[%c4_355, %c0_356] : memref<20x128xf32, #tpu.memory_space<vmem>>, vector<4x128xf32>
    %506 = vector.broadcast %483 : vector<4x1xf32> to vector<4x128xf32>
    %507 = arith.mulf %505, %506 : vector<4x128xf32>
    %c0_357 = arith.constant 0 : index
    %c768_358 = arith.constant 768 : index
    %508 = vector.load %arg36[%c0_357, %c768_358] : memref<128x1152xf32, #tpu.memory_space<vmem>>, vector<4x128xf32>
    tpu.vector_store %arg36[%c0_357, %c768_358], %507 {strides = array<i32>} : memref<128x1152xf32, #tpu.memory_space<vmem>>, vector<4x128xf32>,
    %c5_359 = arith.constant 5 : index
    %c0_360 = arith.constant 0 : index
    %509 = vector.load %arg35[%c5_359, %c0_360] : memref<20x128xf32, #tpu.memory_space<vmem>>, vector<4x128xf32>
    %c0_361 = arith.constant 0 : index
    %c896_362 = arith.constant 896 : index
    %510 = vector.load %arg36[%c0_361, %c896_362] : memref<128x1152xf32, #tpu.memory_space<vmem>>, vector<4x128xf32>
    tpu.vector_store %arg36[%c0_361, %c896_362], %509 {strides = array<i32>} : memref<128x1152xf32, #tpu.memory_space<vmem>>, vector<4x128xf32>,
    %c6_363 = arith.constant 6 : index
    %c0_364 = arith.constant 0 : index
    %511 = vector.load %arg35[%c6_363, %c0_364] : memref<20x128xf32, #tpu.memory_space<vmem>>, vector<4x128xf32>
    %512 = vector.broadcast %484 : vector<4x1xf32> to vector<4x128xf32>
    %513 = arith.mulf %511, %512 : vector<4x128xf32>
    %c0_365 = arith.constant 0 : index
    %c1024_366 = arith.constant 1024 : index
    %514 = vector.load %arg36[%c0_365, %c1024_366] : memref<128x1152xf32, #tpu.memory_space<vmem>>, vector<4x128xf32>
    tpu.vector_store %arg36[%c0_365, %c1024_366], %513 {strides = array<i32>} : memref<128x1152xf32, #tpu.memory_space<vmem>>, vector<4x128xf32>,
    %c10_367 = arith.constant 10 : index
    %c0_368 = arith.constant 0 : index
    %515 = vector.load %arg35[%c10_367, %c0_368] : memref<20x128xf32, #tpu.memory_space<vmem>>, vector<4x128xf32>
    %516 = vector.broadcast %483 : vector<4x1xf32> to vector<4x128xf32>
    %517 = arith.mulf %515, %516 : vector<4x128xf32>
    %c4_369 = arith.constant 4 : index
    %c0_370 = arith.constant 0 : index
    %518 = vector.load %arg36[%c4_369, %c0_370] : memref<128x1152xf32, #tpu.memory_space<vmem>>, vector<4x128xf32>
    tpu.vector_store %arg36[%c4_369, %c0_370], %517 {strides = array<i32>} : memref<128x1152xf32, #tpu.memory_space<vmem>>, vector<4x128xf32>,
    %c11 = arith.constant 11 : index
    %c0_371 = arith.constant 0 : index
    %519 = vector.load %arg35[%c11, %c0_371] : memref<20x128xf32, #tpu.memory_space<vmem>>, vector<4x128xf32>
    %c4_372 = arith.constant 4 : index
    %c128_373 = arith.constant 128 : index
    %520 = vector.load %arg36[%c4_372, %c128_373] : memref<128x1152xf32, #tpu.memory_space<vmem>>, vector<4x128xf32>
    tpu.vector_store %arg36[%c4_372, %c128_373], %519 {strides = array<i32>} : memref<128x1152xf32, #tpu.memory_space<vmem>>, vector<4x128xf32>,
    %c12 = arith.constant 12 : index
    %c0_374 = arith.constant 0 : index
    %521 = vector.load %arg35[%c12, %c0_374] : memref<20x128xf32, #tpu.memory_space<vmem>>, vector<4x128xf32>
    %522 = vector.broadcast %484 : vector<4x1xf32> to vector<4x128xf32>
    %523 = arith.mulf %521, %522 : vector<4x128xf32>
    %c4_375 = arith.constant 4 : index
    %c256_376 = arith.constant 256 : index
    %524 = vector.load %arg36[%c4_375, %c256_376] : memref<128x1152xf32, #tpu.memory_space<vmem>>, vector<4x128xf32>
    tpu.vector_store %arg36[%c4_375, %c256_376], %523 {strides = array<i32>} : memref<128x1152xf32, #tpu.memory_space<vmem>>, vector<4x128xf32>,
    %c12_377 = arith.constant 12 : index
    %c0_378 = arith.constant 0 : index
    %525 = vector.load %arg35[%c12_377, %c0_378] : memref<20x128xf32, #tpu.memory_space<vmem>>, vector<4x128xf32>
    %526 = vector.broadcast %483 : vector<4x1xf32> to vector<4x128xf32>
    %527 = arith.mulf %525, %526 : vector<4x128xf32>
    %c4_379 = arith.constant 4 : index
    %c384_380 = arith.constant 384 : index
    %528 = vector.load %arg36[%c4_379, %c384_380] : memref<128x1152xf32, #tpu.memory_space<vmem>>, vector<4x128xf32>
    tpu.vector_store %arg36[%c4_379, %c384_380], %527 {strides = array<i32>} : memref<128x1152xf32, #tpu.memory_space<vmem>>, vector<4x128xf32>,
    %c13_381 = arith.constant 13 : index
    %c0_382 = arith.constant 0 : index
    %529 = vector.load %arg35[%c13_381, %c0_382] : memref<20x128xf32, #tpu.memory_space<vmem>>, vector<4x128xf32>
    %c4_383 = arith.constant 4 : index
    %c512_384 = arith.constant 512 : index
    %530 = vector.load %arg36[%c4_383, %c512_384] : memref<128x1152xf32, #tpu.memory_space<vmem>>, vector<4x128xf32>
    tpu.vector_store %arg36[%c4_383, %c512_384], %529 {strides = array<i32>} : memref<128x1152xf32, #tpu.memory_space<vmem>>, vector<4x128xf32>,
    %c14 = arith.constant 14 : index
    %c0_385 = arith.constant 0 : index
    %531 = vector.load %arg35[%c14, %c0_385] : memref<20x128xf32, #tpu.memory_space<vmem>>, vector<4x128xf32>
    %532 = vector.broadcast %484 : vector<4x1xf32> to vector<4x128xf32>
    %533 = arith.mulf %531, %532 : vector<4x128xf32>
    %c4_386 = arith.constant 4 : index
    %c640_387 = arith.constant 640 : index
    %534 = vector.load %arg36[%c4_386, %c640_387] : memref<128x1152xf32, #tpu.memory_space<vmem>>, vector<4x128xf32>
    tpu.vector_store %arg36[%c4_386, %c640_387], %533 {strides = array<i32>} : memref<128x1152xf32, #tpu.memory_space<vmem>>, vector<4x128xf32>,
    %c14_388 = arith.constant 14 : index
    %c0_389 = arith.constant 0 : index
    %535 = vector.load %arg35[%c14_388, %c0_389] : memref<20x128xf32, #tpu.memory_space<vmem>>, vector<4x128xf32>
    %536 = vector.broadcast %483 : vector<4x1xf32> to vector<4x128xf32>
    %537 = arith.mulf %535, %536 : vector<4x128xf32>
    %c4_390 = arith.constant 4 : index
    %c768_391 = arith.constant 768 : index
    %538 = vector.load %arg36[%c4_390, %c768_391] : memref<128x1152xf32, #tpu.memory_space<vmem>>, vector<4x128xf32>
    tpu.vector_store %arg36[%c4_390, %c768_391], %537 {strides = array<i32>} : memref<128x1152xf32, #tpu.memory_space<vmem>>, vector<4x128xf32>,
    %c15_392 = arith.constant 15 : index
    %c0_393 = arith.constant 0 : index
    %539 = vector.load %arg35[%c15_392, %c0_393] : memref<20x128xf32, #tpu.memory_space<vmem>>, vector<4x128xf32>
    %c4_394 = arith.constant 4 : index
    %c896_395 = arith.constant 896 : index
    %540 = vector.load %arg36[%c4_394, %c896_395] : memref<128x1152xf32, #tpu.memory_space<vmem>>, vector<4x128xf32>
    tpu.vector_store %arg36[%c4_394, %c896_395], %539 {strides = array<i32>} : memref<128x1152xf32, #tpu.memory_space<vmem>>, vector<4x128xf32>,
    %c16_396 = arith.constant 16 : index
    %c0_397 = arith.constant 0 : index
    %541 = vector.load %arg35[%c16_396, %c0_397] : memref<20x128xf32, #tpu.memory_space<vmem>>, vector<4x128xf32>
    %542 = vector.broadcast %484 : vector<4x1xf32> to vector<4x128xf32>
    %543 = arith.mulf %541, %542 : vector<4x128xf32>
    %c4_398 = arith.constant 4 : index
    %c1024_399 = arith.constant 1024 : index
    %544 = vector.load %arg36[%c4_398, %c1024_399] : memref<128x1152xf32, #tpu.memory_space<vmem>>, vector<4x128xf32>
    tpu.vector_store %arg36[%c4_398, %c1024_399], %543 {strides = array<i32>} : memref<128x1152xf32, #tpu.memory_space<vmem>>, vector<4x128xf32>,
    %c0_400 = arith.constant 0 : index
    %c0_401 = arith.constant 0 : index
    %545 = vector.load %arg36[%c0_400, %c0_401] : memref<128x1152xf32, #tpu.memory_space<vmem>>, vector<8x1152xf32>
    %546 = arith.truncf %545 : vector<8x1152xf32> to vector<8x1152xbf16>
    %c0_402 = arith.constant 0 : index
    %c0_403 = arith.constant 0 : index
    %547 = vector.load %arg24[%c0_402, %c0_403] : memref<1152x256xbf16, #tpu.memory_space<vmem>>, vector<1152x256xbf16>
    %cst_404 = arith.constant dense<0.000000e+00> : vector<8x256xf32>
    %548 = tpu.matmul %546, %547, %cst_404 {dimension_numbers = #tpu.dot_dimension_numbers<[1], [0], [0], [1], [0, 0, 1, 1], [], []>} : vector<8x1152xbf16>, vector<1152x256xbf16>, vector<8x256xf32> -> vector<8x256xf32>
    %c0_405 = arith.constant 0 : index
    %c0_406 = arith.constant 0 : index
    %549 = vector.load %arg25[%c0_405, %c0_406] : memref<1x256xf32, #tpu.memory_space<vmem>>, vector<1x256xf32>
    %550 = vector.broadcast %549 : vector<1x256xf32> to vector<8x256xf32>
    %551 = arith.addf %548, %550 : vector<8x256xf32>
    %c0_407 = arith.constant 0 : index
    %c0_408 = arith.constant 0 : index
    %552 = vector.load %arg40[%c0_407, %c0_408] : memref<8x256xf32, #tpu.memory_space<vmem>>, vector<8x256xf32>
    tpu.vector_store %arg40[%c0_407, %c0_408], %551 {strides = array<i32>} : memref<8x256xf32, #tpu.memory_space<vmem>>, vector<8x256xf32>,
    %c0_409 = arith.constant 0 : index
    %c0_410 = arith.constant 0 : index
    %553 = vector.load %arg28[%c0_409, %c0_410] : memref<256x32xf32, #tpu.memory_space<vmem>>, vector<256x32xf32>
    %c0_411 = arith.constant 0 : index
    %c0_412 = arith.constant 0 : index
    %554 = vector.load %arg29[%c0_411, %c0_412] : memref<32x256xf32, #tpu.memory_space<vmem>>, vector<32x256xf32>
    %c0_413 = arith.constant 0 : index
    %c0_414 = arith.constant 0 : index
    %555 = vector.load %arg26[%c0_413, %c0_414] : memref<1x256xf32, #tpu.memory_space<vmem>>, vector<1x256xf32>
    %c0_415 = arith.constant 0 : index
    %c0_416 = arith.constant 0 : index
    %556 = vector.load %arg27[%c0_415, %c0_416] : memref<1x256xf32, #tpu.memory_space<vmem>>, vector<1x256xf32>
    %c0_417 = arith.constant 0 : index
    %c0_418 = arith.constant 0 : index
    %557 = vector.load %arg40[%c0_417, %c0_418] : memref<8x256xf32, #tpu.memory_space<vmem>>, vector<4x256xf32>
    %cst_419 = arith.constant dense<0.000000e+00> : vector<256xf32>
    %558 = vector.multi_reduction <add>, %557, %cst_419 [0] : vector<4x256xf32> to vector<256xf32>
    %559 = vector.shape_cast %558 : vector<256xf32> to vector<1x256xf32>
    %560 = arith.mulf %557, %557 : vector<4x256xf32>
    %cst_420 = arith.constant dense<0.000000e+00> : vector<256xf32>
    %561 = vector.multi_reduction <add>, %560, %cst_420 [0] : vector<4x256xf32> to vector<256xf32>
    %562 = vector.shape_cast %561 : vector<256xf32> to vector<1x256xf32>
    %cst_421 = arith.constant dense<0.000000e+00> : vector<1x32xf32>
    %563 = tpu.matmul %559, %553, %cst_421 {dimension_numbers = #tpu.dot_dimension_numbers<[1], [0], [0], [1], [0, 0, 1, 1], [], []>} : vector<1x256xf32>, vector<256x32xf32>, vector<1x32xf32> -> vector<1x32xf32>
    %cst_422 = arith.constant 3.125000e-02 : f32
    %564 = vector.broadcast %cst_422 : f32 to vector<1x32xf32>
    %565 = arith.mulf %563, %564 : vector<1x32xf32>
    %cst_423 = arith.constant dense<0.000000e+00> : vector<1x256xf32>
    %566 = tpu.matmul %565, %554, %cst_423 {dimension_numbers = #tpu.dot_dimension_numbers<[1], [0], [0], [1], [0, 0, 1, 1], [], []>} : vector<1x32xf32>, vector<32x256xf32>, vector<1x256xf32> -> vector<1x256xf32>
    %cst_424 = arith.constant dense<0.000000e+00> : vector<1x32xf32>
    %567 = tpu.matmul %562, %553, %cst_424 {dimension_numbers = #tpu.dot_dimension_numbers<[1], [0], [0], [1], [0, 0, 1, 1], [], []>} : vector<1x256xf32>, vector<256x32xf32>, vector<1x32xf32> -> vector<1x32xf32>
    %cst_425 = arith.constant 3.125000e-02 : f32
    %568 = vector.broadcast %cst_425 : f32 to vector<1x32xf32>
    %569 = arith.mulf %567, %568 : vector<1x32xf32>
    %cst_426 = arith.constant dense<0.000000e+00> : vector<1x256xf32>
    %570 = tpu.matmul %569, %554, %cst_426 {dimension_numbers = #tpu.dot_dimension_numbers<[1], [0], [0], [1], [0, 0, 1, 1], [], []>} : vector<1x32xf32>, vector<32x256xf32>, vector<1x256xf32> -> vector<1x256xf32>
    %571 = arith.mulf %566, %566 : vector<1x256xf32>
    %572 = arith.subf %570, %571 : vector<1x256xf32>
    %cst_427 = arith.constant 0.000000e+00 : f32
    %573 = vector.broadcast %cst_427 : f32 to vector<1x256xf32>
    %574 = arith.maximumf %572, %573 : vector<1x256xf32>
    %cst_428 = arith.constant 9.99999974E-6 : f32
    %575 = vector.broadcast %cst_428 : f32 to vector<1x256xf32>
    %576 = arith.addf %574, %575 : vector<1x256xf32>
    %577 = math.rsqrt %576 : vector<1x256xf32>
    %578 = arith.mulf %555, %577 : vector<1x256xf32>
    %579 = arith.mulf %566, %578 : vector<1x256xf32>
    %580 = arith.subf %556, %579 : vector<1x256xf32>
    %581 = vector.broadcast %578 : vector<1x256xf32> to vector<4x256xf32>
    %582 = arith.mulf %557, %581 : vector<4x256xf32>
    %583 = vector.broadcast %580 : vector<1x256xf32> to vector<4x256xf32>
    %584 = arith.addf %582, %583 : vector<4x256xf32>
    %cst_429 = arith.constant 0.000000e+00 : f32
    %585 = vector.broadcast %cst_429 : f32 to vector<4x256xf32>
    %586 = arith.maximumf %584, %585 : vector<4x256xf32>
    %c0_430 = arith.constant 0 : index
    %c0_431 = arith.constant 0 : index
    %587 = vector.load %arg32[%c0_430, %c0_431] : memref<8x256xf32, #tpu.memory_space<vmem>>, vector<4x256xf32>
    tpu.vector_store %arg32[%c0_430, %c0_431], %586 {strides = array<i32>} : memref<8x256xf32, #tpu.memory_space<vmem>>, vector<4x256xf32>,
    %c4_432 = arith.constant 4 : index
    %c0_433 = arith.constant 0 : index
    %588 = vector.load %arg40[%c4_432, %c0_433] : memref<8x256xf32, #tpu.memory_space<vmem>>, vector<4x256xf32>
    %cst_434 = arith.constant dense<0.000000e+00> : vector<256xf32>
    %589 = vector.multi_reduction <add>, %588, %cst_434 [0] : vector<4x256xf32> to vector<256xf32>
    %590 = vector.shape_cast %589 : vector<256xf32> to vector<1x256xf32>
    %591 = arith.mulf %588, %588 : vector<4x256xf32>
    %cst_435 = arith.constant dense<0.000000e+00> : vector<256xf32>
    %592 = vector.multi_reduction <add>, %591, %cst_435 [0] : vector<4x256xf32> to vector<256xf32>
    %593 = vector.shape_cast %592 : vector<256xf32> to vector<1x256xf32>
    %cst_436 = arith.constant dense<0.000000e+00> : vector<1x32xf32>
    %594 = tpu.matmul %590, %553, %cst_436 {dimension_numbers = #tpu.dot_dimension_numbers<[1], [0], [0], [1], [0, 0, 1, 1], [], []>} : vector<1x256xf32>, vector<256x32xf32>, vector<1x32xf32> -> vector<1x32xf32>
    %cst_437 = arith.constant 3.125000e-02 : f32
    %595 = vector.broadcast %cst_437 : f32 to vector<1x32xf32>
    %596 = arith.mulf %594, %595 : vector<1x32xf32>
    %cst_438 = arith.constant dense<0.000000e+00> : vector<1x256xf32>
    %597 = tpu.matmul %596, %554, %cst_438 {dimension_numbers = #tpu.dot_dimension_numbers<[1], [0], [0], [1], [0, 0, 1, 1], [], []>} : vector<1x32xf32>, vector<32x256xf32>, vector<1x256xf32> -> vector<1x256xf32>
    %cst_439 = arith.constant dense<0.000000e+00> : vector<1x32xf32>
    %598 = tpu.matmul %593, %553, %cst_439 {dimension_numbers = #tpu.dot_dimension_numbers<[1], [0], [0], [1], [0, 0, 1, 1], [], []>} : vector<1x256xf32>, vector<256x32xf32>, vector<1x32xf32> -> vector<1x32xf32>
    %cst_440 = arith.constant 3.125000e-02 : f32
    %599 = vector.broadcast %cst_440 : f32 to vector<1x32xf32>
    %600 = arith.mulf %598, %599 : vector<1x32xf32>
    %cst_441 = arith.constant dense<0.000000e+00> : vector<1x256xf32>
    %601 = tpu.matmul %600, %554, %cst_441 {dimension_numbers = #tpu.dot_dimension_numbers<[1], [0], [0], [1], [0, 0, 1, 1], [], []>} : vector<1x32xf32>, vector<32x256xf32>, vector<1x256xf32> -> vector<1x256xf32>
    %602 = arith.mulf %597, %597 : vector<1x256xf32>
    %603 = arith.subf %601, %602 : vector<1x256xf32>
    %cst_442 = arith.constant 0.000000e+00 : f32
    %604 = vector.broadcast %cst_442 : f32 to vector<1x256xf32>
    %605 = arith.maximumf %603, %604 : vector<1x256xf32>
    %cst_443 = arith.constant 9.99999974E-6 : f32
    %606 = vector.broadcast %cst_443 : f32 to vector<1x256xf32>
    %607 = arith.addf %605, %606 : vector<1x256xf32>
    %608 = math.rsqrt %607 : vector<1x256xf32>
    %609 = arith.mulf %555, %608 : vector<1x256xf32>
    %610 = arith.mulf %597, %609 : vector<1x256xf32>
    %611 = arith.subf %556, %610 : vector<1x256xf32>
    %612 = vector.broadcast %609 : vector<1x256xf32> to vector<4x256xf32>
    %613 = arith.mulf %588, %612 : vector<4x256xf32>
    %614 = vector.broadcast %611 : vector<1x256xf32> to vector<4x256xf32>
    %615 = arith.addf %613, %614 : vector<4x256xf32>
    %cst_444 = arith.constant 0.000000e+00 : f32
    %616 = vector.broadcast %cst_444 : f32 to vector<4x256xf32>
    %617 = arith.maximumf %615, %616 : vector<4x256xf32>
    %c4_445 = arith.constant 4 : index
    %c0_446 = arith.constant 0 : index
    %618 = vector.load %arg32[%c4_445, %c0_446] : memref<8x256xf32, #tpu.memory_space<vmem>>, vector<4x256xf32>
    tpu.vector_store %arg32[%c4_445, %c0_446], %617 {strides = array<i32>} : memref<8x256xf32, #tpu.memory_space<vmem>>, vector<4x256xf32>,
    return
  }
  func.func @transform_0(%arg0: i32) -> (i32, i32) {
    %c0_i32 = arith.constant 0 : i32
    %c0_i32_0 = arith.constant 0 : i32
    return %arg0, %c0_i32 : i32, i32
  }
  func.func @transform_1(%arg0: i32) -> (i32, i32) {
    %c0_i32 = arith.constant 0 : i32
    %c0_i32_0 = arith.constant 0 : i32
    %c0_i32_1 = arith.constant 0 : i32
    return %c0_i32, %c0_i32_0 : i32, i32
  }
  func.func @transform_2(%arg0: i32) -> (i32, i32) {
    %c0_i32 = arith.constant 0 : i32
    %c0_i32_0 = arith.constant 0 : i32
    %c0_i32_1 = arith.constant 0 : i32
    return %c0_i32, %c0_i32_0 : i32, i32
  }
  func.func @transform_3(%arg0: i32) -> (i32, i32) {
    %c0_i32 = arith.constant 0 : i32
    %c0_i32_0 = arith.constant 0 : i32
    %c0_i32_1 = arith.constant 0 : i32
    return %c0_i32, %c0_i32_0 : i32, i32
  }
  func.func @transform_4(%arg0: i32) -> (i32, i32) {
    %c0_i32 = arith.constant 0 : i32
    %c0_i32_0 = arith.constant 0 : i32
    %c0_i32_1 = arith.constant 0 : i32
    return %c0_i32, %c0_i32_0 : i32, i32
  }
  func.func @transform_5(%arg0: i32) -> (i32, i32) {
    %c0_i32 = arith.constant 0 : i32
    %c0_i32_0 = arith.constant 0 : i32
    %c0_i32_1 = arith.constant 0 : i32
    return %c0_i32, %c0_i32_0 : i32, i32
  }
  func.func @transform_6(%arg0: i32) -> (i32, i32) {
    %c0_i32 = arith.constant 0 : i32
    %c0_i32_0 = arith.constant 0 : i32
    %c0_i32_1 = arith.constant 0 : i32
    return %c0_i32, %c0_i32_0 : i32, i32
  }
  func.func @transform_7(%arg0: i32) -> (i32, i32) {
    %c0_i32 = arith.constant 0 : i32
    %c0_i32_0 = arith.constant 0 : i32
    %c0_i32_1 = arith.constant 0 : i32
    return %c0_i32, %c0_i32_0 : i32, i32
  }
  func.func @transform_8(%arg0: i32) -> (i32, i32) {
    %c0_i32 = arith.constant 0 : i32
    %c0_i32_0 = arith.constant 0 : i32
    %c0_i32_1 = arith.constant 0 : i32
    return %c0_i32, %c0_i32_0 : i32, i32
  }
  func.func @transform_9(%arg0: i32) -> (i32, i32) {
    %c0_i32 = arith.constant 0 : i32
    %c0_i32_0 = arith.constant 0 : i32
    %c0_i32_1 = arith.constant 0 : i32
    return %c0_i32, %c0_i32_0 : i32, i32
  }
  func.func @transform_10(%arg0: i32) -> (i32, i32) {
    %c0_i32 = arith.constant 0 : i32
    %c0_i32_0 = arith.constant 0 : i32
    %c0_i32_1 = arith.constant 0 : i32
    return %c0_i32, %c0_i32_0 : i32, i32
  }
  func.func @transform_11(%arg0: i32) -> (i32, i32) {
    %c0_i32 = arith.constant 0 : i32
    %c0_i32_0 = arith.constant 0 : i32
    %c0_i32_1 = arith.constant 0 : i32
    return %c0_i32, %c0_i32_0 : i32, i32
  }
  func.func @transform_12(%arg0: i32) -> (i32, i32) {
    %c0_i32 = arith.constant 0 : i32
    %c0_i32_0 = arith.constant 0 : i32
    %c0_i32_1 = arith.constant 0 : i32
    return %c0_i32, %c0_i32_0 : i32, i32
  }
  func.func @transform_13(%arg0: i32) -> (i32, i32) {
    %c0_i32 = arith.constant 0 : i32
    %c0_i32_0 = arith.constant 0 : i32
    %c0_i32_1 = arith.constant 0 : i32
    return %c0_i32, %c0_i32_0 : i32, i32
  }
  func.func @transform_14(%arg0: i32) -> (i32, i32) {
    %c0_i32 = arith.constant 0 : i32
    %c0_i32_0 = arith.constant 0 : i32
    %c0_i32_1 = arith.constant 0 : i32
    return %c0_i32, %c0_i32_0 : i32, i32
  }
  func.func @transform_15(%arg0: i32) -> (i32, i32) {
    %c0_i32 = arith.constant 0 : i32
    %c0_i32_0 = arith.constant 0 : i32
    %c0_i32_1 = arith.constant 0 : i32
    return %c0_i32, %c0_i32_0 : i32, i32
  }
  func.func @transform_16(%arg0: i32) -> (i32, i32) {
    %c0_i32 = arith.constant 0 : i32
    %c0_i32_0 = arith.constant 0 : i32
    %c0_i32_1 = arith.constant 0 : i32
    return %c0_i32, %c0_i32_0 : i32, i32
  }
  func.func @transform_17(%arg0: i32) -> (i32, i32) {
    %c0_i32 = arith.constant 0 : i32
    %c0_i32_0 = arith.constant 0 : i32
    %c0_i32_1 = arith.constant 0 : i32
    return %c0_i32, %c0_i32_0 : i32, i32
  }
  func.func @transform_18(%arg0: i32) -> (i32, i32) {
    %c0_i32 = arith.constant 0 : i32
    %c0_i32_0 = arith.constant 0 : i32
    %c0_i32_1 = arith.constant 0 : i32
    return %c0_i32, %c0_i32_0 : i32, i32
  }
  func.func @transform_19(%arg0: i32) -> (i32, i32) {
    %c0_i32 = arith.constant 0 : i32
    %c0_i32_0 = arith.constant 0 : i32
    %c0_i32_1 = arith.constant 0 : i32
    return %c0_i32, %c0_i32_0 : i32, i32
  }
  func.func @transform_20(%arg0: i32) -> (i32, i32) {
    %c0_i32 = arith.constant 0 : i32
    %c0_i32_0 = arith.constant 0 : i32
    %c0_i32_1 = arith.constant 0 : i32
    return %c0_i32, %c0_i32_0 : i32, i32
  }
  func.func @transform_21(%arg0: i32) -> (i32, i32) {
    %c0_i32 = arith.constant 0 : i32
    %c0_i32_0 = arith.constant 0 : i32
    %c0_i32_1 = arith.constant 0 : i32
    return %c0_i32, %c0_i32_0 : i32, i32
  }
  func.func @transform_22(%arg0: i32) -> (i32, i32) {
    %c0_i32 = arith.constant 0 : i32
    %c0_i32_0 = arith.constant 0 : i32
    %c0_i32_1 = arith.constant 0 : i32
    return %c0_i32, %c0_i32_0 : i32, i32
  }
  func.func @transform_23(%arg0: i32) -> (i32, i32) {
    %c0_i32 = arith.constant 0 : i32
    %c0_i32_0 = arith.constant 0 : i32
    %c0_i32_1 = arith.constant 0 : i32
    return %c0_i32, %c0_i32_0 : i32, i32
  }
  func.func @transform_24(%arg0: i32) -> (i32, i32) {
    %c0_i32 = arith.constant 0 : i32
    %c0_i32_0 = arith.constant 0 : i32
    %c0_i32_1 = arith.constant 0 : i32
    return %c0_i32, %c0_i32_0 : i32, i32
  }
  func.func @transform_25(%arg0: i32) -> (i32, i32) {
    %c0_i32 = arith.constant 0 : i32
    %c0_i32_0 = arith.constant 0 : i32
    %c0_i32_1 = arith.constant 0 : i32
    return %c0_i32, %c0_i32_0 : i32, i32
  }
  func.func @transform_26(%arg0: i32) -> (i32, i32) {
    %c0_i32 = arith.constant 0 : i32
    %c0_i32_0 = arith.constant 0 : i32
    %c0_i32_1 = arith.constant 0 : i32
    return %c0_i32, %c0_i32_0 : i32, i32
  }
  func.func @transform_27(%arg0: i32) -> (i32, i32) {
    %c0_i32 = arith.constant 0 : i32
    %c0_i32_0 = arith.constant 0 : i32
    %c0_i32_1 = arith.constant 0 : i32
    return %c0_i32, %c0_i32_0 : i32, i32
  }
  func.func @transform_28(%arg0: i32) -> (i32, i32) {
    %c0_i32 = arith.constant 0 : i32
    %c0_i32_0 = arith.constant 0 : i32
    %c0_i32_1 = arith.constant 0 : i32
    return %c0_i32, %c0_i32_0 : i32, i32
  }
  func.func @transform_29(%arg0: i32) -> (i32, i32) {
    %c0_i32 = arith.constant 0 : i32
    %c0_i32_0 = arith.constant 0 : i32
    %c0_i32_1 = arith.constant 0 : i32
    return %c0_i32, %c0_i32_0 : i32, i32
  }
  func.func @transform_30(%arg0: i32) -> (i32, i32) {
    %c0_i32 = arith.constant 0 : i32
    %c0_i32_0 = arith.constant 0 : i32
    %c0_i32_1 = arith.constant 0 : i32
    return %c0_i32, %c0_i32_0 : i32, i32
  }
  func.func @transform_31(%arg0: i32) -> (i32, i32) {
    %c0_i32 = arith.constant 0 : i32
    %c0_i32_0 = arith.constant 0 : i32
    return %arg0, %c0_i32 : i32, i32
  }
}

</mosaic_0001>

<llo_original>
// kernel: simple_cnn_forward.1
$region0: #{simple_cnn_forward.1}
  #allocation0 [shape = 'u32[]', space=smem, size = 0x4, offset = 0x4, fixed_abs, tag = 'smem constant byte address 0x4 - core index']
  #allocation1 [shape = 'u32[72,128]{1,0:T(1,128)}', space=vmem, size = 0x9000, scoped, tag = 'internal scratch']
  #allocation2 [shape = 'f32[164,64]{1,0:T(8,128)}', space=vmem, size = 0x15000, scoped, tag = 'scratch operand']
  #allocation3 [shape = 'f32[52,96]{1,0:T(8,128)}', space=vmem, size = 0x7000, scoped, tag = 'scratch operand']
  #allocation4 [shape = 'f32[20,128]{1,0:T(8,128)}', space=vmem, size = 0x3000, scoped, tag = 'scratch operand']
  #allocation5 [shape = 'f32[128,1152]{1,0:T(8,128)}', space=vmem, size = 0x90000, scoped, tag = 'scratch operand']
  #allocation6 [shape = 'f32[512,64]{1,0:T(8,128)}', space=vmem, size = 0x40000, scoped, tag = 'scratch operand']
  #allocation7 [shape = 'f32[128,96]{1,0:T(8,128)}', space=vmem, size = 0x10000, scoped, tag = 'scratch operand']
  #allocation8 [shape = 'f32[32,128]{1,0:T(8,128)}', space=vmem, size = 0x4000, scoped, tag = 'scratch operand']
  #allocation9 [shape = 'f32[8,256]{1,0:T(8,128)}', space=vmem, size = 0x2000, scoped, tag = 'scratch operand']
  %s0 = inlined_call_operand.smem [shape: u32[32], index: -1, kind: input, shape index: {}]
  %s1 = sld [smem:[%s0]]
  %s2 = scalar_lea.smem %s0, 1
  %s3 = sld [smem:[%s2]]
  %s4 = scalar_lea.smem %s0, 2
  %s5 = sld [smem:[%s4]]
  %s6 = scalar_lea.smem %s0, 3
  %s7 = sld [smem:[%s6]]
  %s8 = scalar_lea.smem %s0, 4
  %s9 = sld [smem:[%s8]]
  %s10 = scalar_lea.smem %s0, 5
  %s11 = sld [smem:[%s10]]
  %s12 = scalar_lea.smem %s0, 6
  %s13 = sld [smem:[%s12]]
  %s14 = scalar_lea.smem %s0, 7
  %s15 = sld [smem:[%s14]]
  %s16 = scalar_lea.smem %s0, 8
  %s17 = sld [smem:[%s16]]
  %s18 = scalar_lea.smem %s0, 9
  %s19 = sld [smem:[%s18]]
  %s20 = scalar_lea.smem %s0, 10
  %s21 = sld [smem:[%s20]]
  %s22 = scalar_lea.smem %s0, 11
  %s23 = sld [smem:[%s22]]
  %s24 = scalar_lea.smem %s0, 12
  %s25 = sld [smem:[%s24]]
  %s26 = scalar_lea.smem %s0, 13
  %s27 = sld [smem:[%s26]]
  %s28 = scalar_lea.smem %s0, 14
  %s29 = sld [smem:[%s28]]
  %s30 = scalar_lea.smem %s0, 15
  %s31 = sld [smem:[%s30]]
  %s32 = scalar_lea.smem %s0, 16
  %s33 = sld [smem:[%s32]]
  %s34 = scalar_lea.smem %s0, 17
  %s35 = sld [smem:[%s34]]
  %s36 = scalar_lea.smem %s0, 18
  %s37 = sld [smem:[%s36]]
  %s38 = scalar_lea.smem %s0, 19
  %s39 = sld [smem:[%s38]]
  %s40 = scalar_lea.smem %s0, 20
  %s41 = sld [smem:[%s40]]
  %s42 = scalar_lea.smem %s0, 21
  %s43 = sld [smem:[%s42]]
  %s44 = scalar_lea.smem %s0, 22
  %s45 = sld [smem:[%s44]]
  %s46 = scalar_lea.smem %s0, 23
  %s47 = sld [smem:[%s46]]
  %s48 = scalar_lea.smem %s0, 24
  %s49 = sld [smem:[%s48]]
  %s50 = scalar_lea.smem %s0, 25
  %s51 = sld [smem:[%s50]]
  %s52 = scalar_lea.smem %s0, 26
  %s53 = sld [smem:[%s52]]
  %s54 = scalar_lea.smem %s0, 27
  %s55 = sld [smem:[%s54]]
  %s56 = scalar_lea.smem %s0, 28
  %s57 = sld [smem:[%s56]]
  %s58 = scalar_lea.smem %s0, 29
  %s59 = sld [smem:[%s58]]
  %s60 = scalar_lea.smem %s0, 30
  %s61 = sld [smem:[%s60]]
  %s62 = scalar_lea.smem %s0, 31
  %s63 = sld [smem:[%s62]]
  %s64 = sld [smem:[#allocation0]]
  $region134: #{simple_cnn_forward.1} parent=0
    _
  %s66 = ssub.s32 1, %s64
  %s67 = scalar_select 0, %s66, %s64
  // Predicated region
  $region2: #{simple_cnn_forward.1} parent=0 // pred_check
    _
  $region3: #{simple_cnn_forward.1} parent=0 // pred_check_branch
    %69 = sbr.rel (0) target = $region5
  $region4: #{simple_cnn_forward.1} parent=0 // pred_region
    _
  $region5: #{simple_cnn_forward.1} parent=0 // pred_fallthru
    _
  // Predicated region
  $region6: #{simple_cnn_forward.1} parent=0 // pred_check
    _
  $region7: #{simple_cnn_forward.1} parent=0 // pred_check_branch
    %71 = sbr.rel (0) target = $region9
  $region8: #{simple_cnn_forward.1} parent=0 // pred_region
    _
  $region9: #{simple_cnn_forward.1} parent=0 // pred_fallthru
    _
  // Predicated region
  $region10: #{simple_cnn_forward.1} parent=0 // pred_check
    _
  $region11: #{simple_cnn_forward.1} parent=0 // pred_check_branch
    %73 = sbr.rel (0) target = $region13
  $region12: #{simple_cnn_forward.1} parent=0 // pred_region
    _
  $region13: #{simple_cnn_forward.1} parent=0 // pred_fallthru
    _
  // Predicated region
  $region14: #{simple_cnn_forward.1} parent=0 // pred_check
    _
  $region15: #{simple_cnn_forward.1} parent=0 // pred_check_branch
    %75 = sbr.rel (0) target = $region17
  $region16: #{simple_cnn_forward.1} parent=0 // pred_region
    _
  $region17: #{simple_cnn_forward.1} parent=0 // pred_fallthru
    _
  // Predicated region
  $region18: #{simple_cnn_forward.1} parent=0 // pred_check
    _
  $region19: #{simple_cnn_forward.1} parent=0 // pred_check_branch
    %77 = sbr.rel (0) target = $region21
  $region20: #{simple_cnn_forward.1} parent=0 // pred_region
    _
  $region21: #{simple_cnn_forward.1} parent=0 // pred_fallthru
    _
  // Predicated region
  $region22: #{simple_cnn_forward.1} parent=0 // pred_check
    _
  $region23: #{simple_cnn_forward.1} parent=0 // pred_check_branch
    %79 = sbr.rel (0) target = $region25
  $region24: #{simple_cnn_forward.1} parent=0 // pred_region
    _
  $region25: #{simple_cnn_forward.1} parent=0 // pred_fallthru
    _
  // Predicated region
  $region26: #{simple_cnn_forward.1} parent=0 // pred_check
    _
  $region27: #{simple_cnn_forward.1} parent=0 // pred_check_branch
    %81 = sbr.rel (0) target = $region29
  $region28: #{simple_cnn_forward.1} parent=0 // pred_region
    _
  $region29: #{simple_cnn_forward.1} parent=0 // pred_fallthru
    _
  // Predicated region
  $region30: #{simple_cnn_forward.1} parent=0 // pred_check
    _
  $region31: #{simple_cnn_forward.1} parent=0 // pred_check_branch
    %83 = sbr.rel (0) target = $region33
  $region32: #{simple_cnn_forward.1} parent=0 // pred_region
    _
  $region33: #{simple_cnn_forward.1} parent=0 // pred_fallthru
    _
  // Predicated region
  $region34: #{simple_cnn_forward.1} parent=0 // pred_check
    _
  $region35: #{simple_cnn_forward.1} parent=0 // pred_check_branch
    %85 = sbr.rel (0) target = $region37
  $region36: #{simple_cnn_forward.1} parent=0 // pred_region
    _
  $region37: #{simple_cnn_forward.1} parent=0 // pred_fallthru
    _
  // Predicated region
  $region38: #{simple_cnn_forward.1} parent=0 // pred_check
    _
  $region39: #{simple_cnn_forward.1} parent=0 // pred_check_branch
    %87 = sbr.rel (0) target = $region41
  $region40: #{simple_cnn_forward.1} parent=0 // pred_region
    _
  $region41: #{simple_cnn_forward.1} parent=0 // pred_fallthru
    _
  // Predicated region
  $region42: #{simple_cnn_forward.1} parent=0 // pred_check
    _
  $region43: #{simple_cnn_forward.1} parent=0 // pred_check_branch
    %89 = sbr.rel (0) target = $region45
  $region44: #{simple_cnn_forward.1} parent=0 // pred_region
    _
  $region45: #{simple_cnn_forward.1} parent=0 // pred_fallthru
    _
  // Predicated region
  $region46: #{simple_cnn_forward.1} parent=0 // pred_check
    _
  $region47: #{simple_cnn_forward.1} parent=0 // pred_check_branch
    %91 = sbr.rel (0) target = $region49
  $region48: #{simple_cnn_forward.1} parent=0 // pred_region
    _
  $region49: #{simple_cnn_forward.1} parent=0 // pred_fallthru
    _
  // Predicated region
  $region50: #{simple_cnn_forward.1} parent=0 // pred_check
    _
  $region51: #{simple_cnn_forward.1} parent=0 // pred_check_branch
    %93 = sbr.rel (0) target = $region53
  $region52: #{simple_cnn_forward.1} parent=0 // pred_region
    _
  $region53: #{simple_cnn_forward.1} parent=0 // pred_fallthru
    _
  // Predicated region
  $region54: #{simple_cnn_forward.1} parent=0 // pred_check
    _
  $region55: #{simple_cnn_forward.1} parent=0 // pred_check_branch
    %95 = sbr.rel (0) target = $region57
  $region56: #{simple_cnn_forward.1} parent=0 // pred_region
    _
  $region57: #{simple_cnn_forward.1} parent=0 // pred_fallthru
    _
  // Predicated region
  $region58: #{simple_cnn_forward.1} parent=0 // pred_check
    _
  $region59: #{simple_cnn_forward.1} parent=0 // pred_check_branch
    %97 = sbr.rel (0) target = $region61
  $region60: #{simple_cnn_forward.1} parent=0 // pred_region
    _
  $region61: #{simple_cnn_forward.1} parent=0 // pred_fallthru
    _
  // Predicated region
  $region62: #{simple_cnn_forward.1} parent=0 // pred_check
    _
  $region63: #{simple_cnn_forward.1} parent=0 // pred_check_branch
    %99 = sbr.rel (0) target = $region65
  $region64: #{simple_cnn_forward.1} parent=0 // pred_region
    _
  $region65: #{simple_cnn_forward.1} parent=0 // pred_fallthru
    _
  // Predicated region
  $region66: #{simple_cnn_forward.1} parent=0 // pred_check
    _
  $region67: #{simple_cnn_forward.1} parent=0 // pred_check_branch
    %101 = sbr.rel (0) target = $region69
  $region68: #{simple_cnn_forward.1} parent=0 // pred_region
    _
  $region69: #{simple_cnn_forward.1} parent=0 // pred_fallthru
    _
  // Predicated region
  $region70: #{simple_cnn_forward.1} parent=0 // pred_check
    _
  $region71: #{simple_cnn_forward.1} parent=0 // pred_check_branch
    %103 = sbr.rel (0) target = $region73
  $region72: #{simple_cnn_forward.1} parent=0 // pred_region
    _
  $region73: #{simple_cnn_forward.1} parent=0 // pred_fallthru
    _
  // Predicated region
  $region74: #{simple_cnn_forward.1} parent=0 // pred_check
    _
  $region75: #{simple_cnn_forward.1} parent=0 // pred_check_branch
    %105 = sbr.rel (0) target = $region77
  $region76: #{simple_cnn_forward.1} parent=0 // pred_region
    _
  $region77: #{simple_cnn_forward.1} parent=0 // pred_fallthru
    _
  // Predicated region
  $region78: #{simple_cnn_forward.1} parent=0 // pred_check
    _
  $region79: #{simple_cnn_forward.1} parent=0 // pred_check_branch
    %107 = sbr.rel (0) target = $region81
  $region80: #{simple_cnn_forward.1} parent=0 // pred_region
    _
  $region81: #{simple_cnn_forward.1} parent=0 // pred_fallthru
    _
  // Predicated region
  $region82: #{simple_cnn_forward.1} parent=0 // pred_check
    _
  $region83: #{simple_cnn_forward.1} parent=0 // pred_check_branch
    %109 = sbr.rel (0) target = $region85
  $region84: #{simple_cnn_forward.1} parent=0 // pred_region
    _
  $region85: #{simple_cnn_forward.1} parent=0 // pred_fallthru
    _
  // Predicated region
  $region86: #{simple_cnn_forward.1} parent=0 // pred_check
    _
  $region87: #{simple_cnn_forward.1} parent=0 // pred_check_branch
    %111 = sbr.rel (0) target = $region89
  $region88: #{simple_cnn_forward.1} parent=0 // pred_region
    _
  $region89: #{simple_cnn_forward.1} parent=0 // pred_fallthru
    _
  // Predicated region
  $region90: #{simple_cnn_forward.1} parent=0 // pred_check
    _
  $region91: #{simple_cnn_forward.1} parent=0 // pred_check_branch
    %113 = sbr.rel (0) target = $region93
  $region92: #{simple_cnn_forward.1} parent=0 // pred_region
    _
  $region93: #{simple_cnn_forward.1} parent=0 // pred_fallthru
    _
  // Predicated region
  $region94: #{simple_cnn_forward.1} parent=0 // pred_check
    _
  $region95: #{simple_cnn_forward.1} parent=0 // pred_check_branch
    %115 = sbr.rel (0) target = $region97
  $region96: #{simple_cnn_forward.1} parent=0 // pred_region
    _
  $region97: #{simple_cnn_forward.1} parent=0 // pred_fallthru
    _
  // Predicated region
  $region98: #{simple_cnn_forward.1} parent=0 // pred_check
    _
  $region99: #{simple_cnn_forward.1} parent=0 // pred_check_branch
    %117 = sbr.rel (0) target = $region101
  $region100: #{simple_cnn_forward.1} parent=0 // pred_region
    _
  $region101: #{simple_cnn_forward.1} parent=0 // pred_fallthru
    _
  // Predicated region
  $region102: #{simple_cnn_forward.1} parent=0 // pred_check
    _
  $region103: #{simple_cnn_forward.1} parent=0 // pred_check_branch
    %119 = sbr.rel (0) target = $region105
  $region104: #{simple_cnn_forward.1} parent=0 // pred_region
    _
  $region105: #{simple_cnn_forward.1} parent=0 // pred_fallthru
    _
  // Predicated region
  $region106: #{simple_cnn_forward.1} parent=0 // pred_check
    _
  $region107: #{simple_cnn_forward.1} parent=0 // pred_check_branch
    %121 = sbr.rel (0) target = $region109
  $region108: #{simple_cnn_forward.1} parent=0 // pred_region
    _
  $region109: #{simple_cnn_forward.1} parent=0 // pred_fallthru
    _
  // Predicated region
  $region110: #{simple_cnn_forward.1} parent=0 // pred_check
    _
  $region111: #{simple_cnn_forward.1} parent=0 // pred_check_branch
    %123 = sbr.rel (0) target = $region113
  $region112: #{simple_cnn_forward.1} parent=0 // pred_region
    _
  $region113: #{simple_cnn_forward.1} parent=0 // pred_fallthru
    _
  // Predicated region
  $region114: #{simple_cnn_forward.1} parent=0 // pred_check
    _
  $region115: #{simple_cnn_forward.1} parent=0 // pred_check_branch
    %125 = sbr.rel (0) target = $region117
  $region116: #{simple_cnn_forward.1} parent=0 // pred_region
    _
  $region117: #{simple_cnn_forward.1} parent=0 // pred_fallthru
    _
  // Predicated region
  $region118: #{simple_cnn_forward.1} parent=0 // pred_check
    _
  $region119: #{simple_cnn_forward.1} parent=0 // pred_check_branch
    %127 = sbr.rel (0) target = $region121
  $region120: #{simple_cnn_forward.1} parent=0 // pred_region
    _
  $region121: #{simple_cnn_forward.1} parent=0 // pred_fallthru
    _
  // Predicated region
  $region122: #{simple_cnn_forward.1} parent=0 // pred_check
    _
  $region123: #{simple_cnn_forward.1} parent=0 // pred_check_branch
    %129 = sbr.rel (0) target = $region125
  $region124: #{simple_cnn_forward.1} parent=0 // pred_region
    _
  $region125: #{simple_cnn_forward.1} parent=0 // pred_fallthru
    _
  %vm131 = vcmask 523264
  %132 = vst.msk [vmem:[#allocation2] sm:$0xff] %vm131, 0.0
  %133 = vst.msk [vmem:[#allocation2 + $0x8] sm:$0xff] %vm131, 0.0
  %134 = vst.msk [vmem:[#allocation2 + $0x10] sm:$0xff] %vm131, 0.0
  %135 = vst.msk [vmem:[#allocation2 + $0x18] sm:$0xff] %vm131, 0.0
  %136 = vst.msk [vmem:[#allocation2 + $0x20] sm:$0xff] %vm131, 0.0
  %137 = vst.msk [vmem:[#allocation2 + $0x28] sm:$0xff] %vm131, 0.0
  %138 = vst.msk [vmem:[#allocation2 + $0x30] sm:$0xff] %vm131, 0.0
  %139 = vst.msk [vmem:[#allocation2 + $0x38] sm:$0xff] %vm131, 0.0
  %140 = vst.msk [vmem:[#allocation2 + $0x40] sm:$0xff] %vm131, 0.0
  %141 = vst.msk [vmem:[#allocation2 + $0x48] sm:$0xff] %vm131, 0.0
  %142 = vst.msk [vmem:[#allocation2 + $0x50] sm:$0xff] %vm131, 0.0
  %143 = vst.msk [vmem:[#allocation2 + $0x58] sm:$0xff] %vm131, 0.0
  %144 = vst.msk [vmem:[#allocation2 + $0x60] sm:$0xff] %vm131, 0.0
  %145 = vst.msk [vmem:[#allocation2 + $0x68] sm:$0xff] %vm131, 0.0
  %146 = vst.msk [vmem:[#allocation2 + $0x70] sm:$0xff] %vm131, 0.0
  %147 = vst.msk [vmem:[#allocation2 + $0x78] sm:$0xff] %vm131, 0.0
  %148 = vst.msk [vmem:[#allocation2 + $0x80] sm:$0xff] %vm131, 0.0
  %149 = vst.msk [vmem:[#allocation2 + $0x88] sm:$0xff] %vm131, 0.0
  %150 = vst.msk [vmem:[#allocation2 + $0x90] sm:$0xff] %vm131, 0.0
  %151 = vst.msk [vmem:[#allocation2 + $0x98] sm:$0xff] %vm131, 0.0
  %vm152 = vcmask 519168
  %153 = vst.msk [vmem:[#allocation2 + $0xa0] sm:$0xf] %vm152, 0.0
  %vm154 = vcmask 785408
  %155 = vst.msk [vmem:[#allocation3] sm:$0xff] %vm154, 0.0
  %156 = vst.msk [vmem:[#allocation3 + $0x8] sm:$0xff] %vm154, 0.0
  %157 = vst.msk [vmem:[#allocation3 + $0x10] sm:$0xff] %vm154, 0.0
  %158 = vst.msk [vmem:[#allocation3 + $0x18] sm:$0xff] %vm154, 0.0
  %159 = vst.msk [vmem:[#allocation3 + $0x20] sm:$0xff] %vm154, 0.0
  %160 = vst.msk [vmem:[#allocation3 + $0x28] sm:$0xff] %vm154, 0.0
  %vm161 = vcmask 781312
  %162 = vst.msk [vmem:[#allocation3 + $0x30] sm:$0xf] %vm161, 0.0
  %163 = vst [vmem:[#allocation4] sm:$0xff] 0.0
  %164 = vst [vmem:[#allocation4 + $0x8] sm:$0xff] 0.0
  %165 = vst [vmem:[#allocation4 + $0x10] sm:$0xf] 0.0
  %166 = vst [vmem:[#allocation5] sm:$0xff] 0.0
  %167 = vst [vmem:[#allocation5 + $0x8] sm:$0xff] 0.0
  %168 = vst [vmem:[#allocation5 + $0x10] sm:$0xff] 0.0
  %169 = vst [vmem:[#allocation5 + $0x18] sm:$0xff] 0.0
  %170 = vst [vmem:[#allocation5 + $0x20] sm:$0xff] 0.0
  %171 = vst [vmem:[#allocation5 + $0x28] sm:$0xff] 0.0
  %172 = vst [vmem:[#allocation5 + $0x30] sm:$0xff] 0.0
  %173 = vst [vmem:[#allocation5 + $0x38] sm:$0xff] 0.0
  %174 = vst [vmem:[#allocation5 + $0x40] sm:$0xff] 0.0
  %175 = vst [vmem:[#allocation5 + $0x48] sm:$0xff] 0.0
  %176 = vst [vmem:[#allocation5 + $0x50] sm:$0xff] 0.0
  %177 = vst [vmem:[#allocation5 + $0x58] sm:$0xff] 0.0
  %178 = vst [vmem:[#allocation5 + $0x60] sm:$0xff] 0.0
  %179 = vst [vmem:[#allocation5 + $0x68] sm:$0xff] 0.0
  %180 = vst [vmem:[#allocation5 + $0x70] sm:$0xff] 0.0
  %181 = vst [vmem:[#allocation5 + $0x78] sm:$0xff] 0.0
  %182 = vst [vmem:[#allocation5 + $0x80] sm:$0xff] 0.0
  %183 = vst [vmem:[#allocation5 + $0x88] sm:$0xff] 0.0
  %184 = vst [vmem:[#allocation5 + $0x90] sm:$0xff] 0.0
  %185 = vst [vmem:[#allocation5 + $0x98] sm:$0xff] 0.0
  %186 = vst [vmem:[#allocation5 + $0xa0] sm:$0xff] 0.0
  %187 = vst [vmem:[#allocation5 + $0xa8] sm:$0xff] 0.0
  %188 = vst [vmem:[#allocation5 + $0xb0] sm:$0xff] 0.0
  %189 = vst [vmem:[#allocation5 + $0xb8] sm:$0xff] 0.0
  %190 = vst [vmem:[#allocation5 + $0xc0] sm:$0xff] 0.0
  %191 = vst [vmem:[#allocation5 + $0xc8] sm:$0xff] 0.0
  %192 = vst [vmem:[#allocation5 + $0xd0] sm:$0xff] 0.0
  %193 = vst [vmem:[#allocation5 + $0xd8] sm:$0xff] 0.0
  %194 = vst [vmem:[#allocation5 + $0xe0] sm:$0xff] 0.0
  %195 = vst [vmem:[#allocation5 + $0xe8] sm:$0xff] 0.0
  %196 = vst [vmem:[#allocation5 + $0xf0] sm:$0xff] 0.0
  %197 = vst [vmem:[#allocation5 + $0xf8] sm:$0xff] 0.0
  %198 = vst [vmem:[#allocation5 + $0x100] sm:$0xff] 0.0
  %199 = vst [vmem:[#allocation5 + $0x108] sm:$0xff] 0.0
  %200 = vst [vmem:[#allocation5 + $0x110] sm:$0xff] 0.0
  %201 = vst [vmem:[#allocation5 + $0x118] sm:$0xff] 0.0
  %202 = vst [vmem:[#allocation5 + $0x120] sm:$0xff] 0.0
  %203 = vst [vmem:[#allocation5 + $0x128] sm:$0xff] 0.0
  %204 = vst [vmem:[#allocation5 + $0x130] sm:$0xff] 0.0
  %205 = vst [vmem:[#allocation5 + $0x138] sm:$0xff] 0.0
  %206 = vst [vmem:[#allocation5 + $0x140] sm:$0xff] 0.0
  %207 = vst [vmem:[#allocation5 + $0x148] sm:$0xff] 0.0
  %208 = vst [vmem:[#allocation5 + $0x150] sm:$0xff] 0.0
  %209 = vst [vmem:[#allocation5 + $0x158] sm:$0xff] 0.0
  %210 = vst [vmem:[#allocation5 + $0x160] sm:$0xff] 0.0
  %211 = vst [vmem:[#allocation5 + $0x168] sm:$0xff] 0.0
  %212 = vst [vmem:[#allocation5 + $0x170] sm:$0xff] 0.0
  %213 = vst [vmem:[#allocation5 + $0x178] sm:$0xff] 0.0
  %214 = vst [vmem:[#allocation5 + $0x180] sm:$0xff] 0.0
  %215 = vst [vmem:[#allocation5 + $0x188] sm:$0xff] 0.0
  %216 = vst [vmem:[#allocation5 + $0x190] sm:$0xff] 0.0
  %217 = vst [vmem:[#allocation5 + $0x198] sm:$0xff] 0.0
  %218 = vst [vmem:[#allocation5 + $0x1a0] sm:$0xff] 0.0
  %219 = vst [vmem:[#allocation5 + $0x1a8] sm:$0xff] 0.0
  %220 = vst [vmem:[#allocation5 + $0x1b0] sm:$0xff] 0.0
  %221 = vst [vmem:[#allocation5 + $0x1b8] sm:$0xff] 0.0
  %222 = vst [vmem:[#allocation5 + $0x1c0] sm:$0xff] 0.0
  %223 = vst [vmem:[#allocation5 + $0x1c8] sm:$0xff] 0.0
  %224 = vst [vmem:[#allocation5 + $0x1d0] sm:$0xff] 0.0
  %225 = vst [vmem:[#allocation5 + $0x1d8] sm:$0xff] 0.0
  %226 = vst [vmem:[#allocation5 + $0x1e0] sm:$0xff] 0.0
  %227 = vst [vmem:[#allocation5 + $0x1e8] sm:$0xff] 0.0
  %228 = vst [vmem:[#allocation5 + $0x1f0] sm:$0xff] 0.0
  %229 = vst [vmem:[#allocation5 + $0x1f8] sm:$0xff] 0.0
  %230 = vst [vmem:[#allocation5 + $0x200] sm:$0xff] 0.0
  %231 = vst [vmem:[#allocation5 + $0x208] sm:$0xff] 0.0
  %232 = vst [vmem:[#allocation5 + $0x210] sm:$0xff] 0.0
  %233 = vst [vmem:[#allocation5 + $0x218] sm:$0xff] 0.0
  %234 = vst [vmem:[#allocation5 + $0x220] sm:$0xff] 0.0
  %235 = vst [vmem:[#allocation5 + $0x228] sm:$0xff] 0.0
  %236 = vst [vmem:[#allocation5 + $0x230] sm:$0xff] 0.0
  %237 = vst [vmem:[#allocation5 + $0x238] sm:$0xff] 0.0
  %238 = vst [vmem:[#allocation5 + $0x240] sm:$0xff] 0.0
  %239 = vst [vmem:[#allocation5 + $0x248] sm:$0xff] 0.0
  %240 = vst [vmem:[#allocation5 + $0x250] sm:$0xff] 0.0
  %241 = vst [vmem:[#allocation5 + $0x258] sm:$0xff] 0.0
  %242 = vst [vmem:[#allocation5 + $0x260] sm:$0xff] 0.0
  %243 = vst [vmem:[#allocation5 + $0x268] sm:$0xff] 0.0
  %244 = vst [vmem:[#allocation5 + $0x270] sm:$0xff] 0.0
  %245 = vst [vmem:[#allocation5 + $0x278] sm:$0xff] 0.0
  %246 = vst [vmem:[#allocation5 + $0x280] sm:$0xff] 0.0
  %247 = vst [vmem:[#allocation5 + $0x288] sm:$0xff] 0.0
  %248 = vst [vmem:[#allocation5 + $0x290] sm:$0xff] 0.0
  %249 = vst [vmem:[#allocation5 + $0x298] sm:$0xff] 0.0
  %250 = vst [vmem:[#allocation5 + $0x2a0] sm:$0xff] 0.0
  %251 = vst [vmem:[#allocation5 + $0x2a8] sm:$0xff] 0.0
  %252 = vst [vmem:[#allocation5 + $0x2b0] sm:$0xff] 0.0
  %253 = vst [vmem:[#allocation5 + $0x2b8] sm:$0xff] 0.0
  %254 = vst [vmem:[#allocation5 + $0x2c0] sm:$0xff] 0.0
  %255 = vst [vmem:[#allocation5 + $0x2c8] sm:$0xff] 0.0
  %256 = vst [vmem:[#allocation5 + $0x2d0] sm:$0xff] 0.0
  %257 = vst [vmem:[#allocation5 + $0x2d8] sm:$0xff] 0.0
  %258 = vst [vmem:[#allocation5 + $0x2e0] sm:$0xff] 0.0
  %259 = vst [vmem:[#allocation5 + $0x2e8] sm:$0xff] 0.0
  %260 = vst [vmem:[#allocation5 + $0x2f0] sm:$0xff] 0.0
  %261 = vst [vmem:[#allocation5 + $0x2f8] sm:$0xff] 0.0
  %262 = vst [vmem:[#allocation5 + $0x300] sm:$0xff] 0.0
  %263 = vst [vmem:[#allocation5 + $0x308] sm:$0xff] 0.0
  %264 = vst [vmem:[#allocation5 + $0x310] sm:$0xff] 0.0
  %265 = vst [vmem:[#allocation5 + $0x318] sm:$0xff] 0.0
  %266 = vst [vmem:[#allocation5 + $0x320] sm:$0xff] 0.0
  %267 = vst [vmem:[#allocation5 + $0x328] sm:$0xff] 0.0
  %268 = vst [vmem:[#allocation5 + $0x330] sm:$0xff] 0.0
  %269 = vst [vmem:[#allocation5 + $0x338] sm:$0xff] 0.0
  %270 = vst [vmem:[#allocation5 + $0x340] sm:$0xff] 0.0
  %271 = vst [vmem:[#allocation5 + $0x348] sm:$0xff] 0.0
  %272 = vst [vmem:[#allocation5 + $0x350] sm:$0xff] 0.0
  %273 = vst [vmem:[#allocation5 + $0x358] sm:$0xff] 0.0
  %274 = vst [vmem:[#allocation5 + $0x360] sm:$0xff] 0.0
  %275 = vst [vmem:[#allocation5 + $0x368] sm:$0xff] 0.0
  %276 = vst [vmem:[#allocation5 + $0x370] sm:$0xff] 0.0
  %277 = vst [vmem:[#allocation5 + $0x378] sm:$0xff] 0.0
  %278 = vst [vmem:[#allocation5 + $0x380] sm:$0xff] 0.0
  %279 = vst [vmem:[#allocation5 + $0x388] sm:$0xff] 0.0
  %280 = vst [vmem:[#allocation5 + $0x390] sm:$0xff] 0.0
  %281 = vst [vmem:[#allocation5 + $0x398] sm:$0xff] 0.0
  %282 = vst [vmem:[#allocation5 + $0x3a0] sm:$0xff] 0.0
  %283 = vst [vmem:[#allocation5 + $0x3a8] sm:$0xff] 0.0
  %284 = vst [vmem:[#allocation5 + $0x3b0] sm:$0xff] 0.0
  %285 = vst [vmem:[#allocation5 + $0x3b8] sm:$0xff] 0.0
  %286 = vst [vmem:[#allocation5 + $0x3c0] sm:$0xff] 0.0
  %287 = vst [vmem:[#allocation5 + $0x3c8] sm:$0xff] 0.0
  %288 = vst [vmem:[#allocation5 + $0x3d0] sm:$0xff] 0.0
  %289 = vst [vmem:[#allocation5 + $0x3d8] sm:$0xff] 0.0
  %290 = vst [vmem:[#allocation5 + $0x3e0] sm:$0xff] 0.0
  %291 = vst [vmem:[#allocation5 + $0x3e8] sm:$0xff] 0.0
  %292 = vst [vmem:[#allocation5 + $0x3f0] sm:$0xff] 0.0
  %293 = vst [vmem:[#allocation5 + $0x3f8] sm:$0xff] 0.0
  %294 = vst [vmem:[#allocation5 + $0x400] sm:$0xff] 0.0
  %295 = vst [vmem:[#allocation5 + $0x408] sm:$0xff] 0.0
  %296 = vst [vmem:[#allocation5 + $0x410] sm:$0xff] 0.0
  %297 = vst [vmem:[#allocation5 + $0x418] sm:$0xff] 0.0
  %298 = vst [vmem:[#allocation5 + $0x420] sm:$0xff] 0.0
  %299 = vst [vmem:[#allocation5 + $0x428] sm:$0xff] 0.0
  %300 = vst [vmem:[#allocation5 + $0x430] sm:$0xff] 0.0
  %301 = vst [vmem:[#allocation5 + $0x438] sm:$0xff] 0.0
  %302 = vst [vmem:[#allocation5 + $0x440] sm:$0xff] 0.0
  %303 = vst [vmem:[#allocation5 + $0x448] sm:$0xff] 0.0
  %304 = vst [vmem:[#allocation5 + $0x450] sm:$0xff] 0.0
  %305 = vst [vmem:[#allocation5 + $0x458] sm:$0xff] 0.0
  %306 = vst [vmem:[#allocation5 + $0x460] sm:$0xff] 0.0
  %307 = vst [vmem:[#allocation5 + $0x468] sm:$0xff] 0.0
  %308 = vst [vmem:[#allocation5 + $0x470] sm:$0xff] 0.0
  %309 = vst [vmem:[#allocation5 + $0x478] sm:$0xff] 0.0
  %v310 = vld [vmem:[%s1] sm:$0xf]
  %v311 = vld [vmem:[%s1 + $0x4] sm:$0xf]
  %v312 = vld [vmem:[%s1 + $0x8] sm:$0xf]
  %v313 = vld [vmem:[%s1 + $0xc] sm:$0xf]
  %v314 = vld [vmem:[%s1 + $0x10] sm:$0xf]
  %v315 = vld [vmem:[%s1 + $0x14] sm:$0xf]
  %v316 = vld [vmem:[%s1 + $0x18] sm:$0xf]
  %v317 = vld [vmem:[%s1 + $0x1c] sm:$0xf]
  %v318 = vld [vmem:[%s1 + $0x20] sm:$0xf]
  %v319 = vld [vmem:[%s1 + $0x24] sm:$0xf]
  %v320 = vld [vmem:[%s1 + $0x28] sm:$0xf]
  %v321 = vld [vmem:[%s1 + $0x2c] sm:$0xf]
  %v322 = vld [vmem:[%s1 + $0x30] sm:$0xf]
  %v323 = vld [vmem:[%s1 + $0x34] sm:$0xf]
  %v324 = vld [vmem:[%s1 + $0x38] sm:$0xf]
  %v325 = vld [vmem:[%s1 + $0x3c] sm:$0xf]
  %v326 = vld [vmem:[%s1 + $0x40] sm:$0xf]
  %v327 = vld [vmem:[%s1 + $0x44] sm:$0xf]
  %v328 = vld [vmem:[%s1 + $0x48] sm:$0xf]
  %v329 = vld [vmem:[%s1 + $0x4c] sm:$0xf]
  %v330 = vld [vmem:[%s1 + $0x50] sm:$0xf]
  %v331 = vld [vmem:[%s1 + $0x54] sm:$0xf]
  %v332 = vld [vmem:[%s1 + $0x58] sm:$0xf]
  %v333 = vld [vmem:[%s1 + $0x5c] sm:$0xf]
  %v334 = vld [vmem:[%s1 + $0x60] sm:$0xf]
  %v335 = vld [vmem:[%s1 + $0x64] sm:$0xf]
  %v336 = vld [vmem:[%s1 + $0x68] sm:$0xf]
  %v337 = vld [vmem:[%s1 + $0x6c] sm:$0xf]
  %v338 = vld [vmem:[%s1 + $0x70] sm:$0xf]
  %v339 = vld [vmem:[%s1 + $0x74] sm:$0xf]
  %v340 = vld [vmem:[%s1 + $0x78] sm:$0xf]
  %v341 = vld [vmem:[%s1 + $0x7c] sm:$0xf]
  %v342 = vld [vmem:[%s1 + $0x80] sm:$0xf]
  %v343 = vld [vmem:[%s1 + $0x84] sm:$0xf]
  %v344 = vld [vmem:[%s1 + $0x88] sm:$0xf]
  %v345 = vld [vmem:[%s1 + $0x8c] sm:$0xf]
  %v346 = vld [vmem:[%s1 + $0x90] sm:$0xf]
  %v347 = vld [vmem:[%s1 + $0x94] sm:$0xf]
  %v348 = vld [vmem:[%s1 + $0x98] sm:$0xf]
  %v349 = vld [vmem:[%s1 + $0x9c] sm:$0xf]
  %v350 = vld [vmem:[%s1 + $0xa0] sm:$0xf]
  %v351 = vld [vmem:[%s1 + $0xa4] sm:$0xf]
  %v352 = vld [vmem:[%s1 + $0xa8] sm:$0xf]
  %v353 = vld [vmem:[%s1 + $0xac] sm:$0xf]
  %v354 = vld [vmem:[%s1 + $0xb0] sm:$0xf]
  %v355 = vld [vmem:[%s1 + $0xb4] sm:$0xf]
  %v356 = vld [vmem:[%s1 + $0xb8] sm:$0xf]
  %v357 = vld [vmem:[%s1 + $0xbc] sm:$0xf]
  %v358 = vld [vmem:[%s1 + $0xc0] sm:$0xf]
  %v359 = vld [vmem:[%s1 + $0xc4] sm:$0xf]
  %v360 = vld [vmem:[%s1 + $0xc8] sm:$0xf]
  %v361 = vld [vmem:[%s1 + $0xcc] sm:$0xf]
  %v362 = vld [vmem:[%s1 + $0xd0] sm:$0xf]
  %v363 = vld [vmem:[%s1 + $0xd4] sm:$0xf]
  %v364 = vld [vmem:[%s1 + $0xd8] sm:$0xf]
  %v365 = vld [vmem:[%s1 + $0xdc] sm:$0xf]
  %v366 = vld [vmem:[%s1 + $0xe0] sm:$0xf]
  %v367 = vld [vmem:[%s1 + $0xe4] sm:$0xf]
  %v368 = vld [vmem:[%s1 + $0xe8] sm:$0xf]
  %v369 = vld [vmem:[%s1 + $0xec] sm:$0xf]
  %v370 = vld [vmem:[%s1 + $0xf0] sm:$0xf]
  %v371 = vld [vmem:[%s1 + $0xf4] sm:$0xf]
  %v372 = vld [vmem:[%s1 + $0xf8] sm:$0xf]
  %v373 = vld [vmem:[%s1 + $0xfc] sm:$0xf]
  %v374 = vld [vmem:[%s3] sm:$0xf]
  %v375 = vld [vmem:[%s3 + $0x4] sm:$0xf]
  %v376 = vld [vmem:[%s3 + $0x8] sm:$0xf]
  %v377 = vld [vmem:[%s3 + $0xc] sm:$0x3]
  %v378 = vld [vmem:[%s5] sm:$0x1]
  %v380 = vperm.slane %v378, 0
  %v446 = vunpack.c.l.b16 %v310
  %v447 = vunpack.c.l.b16 %v311
  %v448 = vunpack.c.l.b16 %v312
  %v449 = vunpack.c.l.b16 %v313
  %v450 = vunpack.c.l.b16 %v314
  %v451 = vunpack.c.l.b16 %v315
  %v452 = vunpack.c.l.b16 %v316
  %v453 = vunpack.c.l.b16 %v317
  %v454 = vunpack.c.l.b16 %v318
  %v455 = vunpack.c.l.b16 %v319
  %v456 = vunpack.c.l.b16 %v320
  %v457 = vunpack.c.l.b16 %v321
  %v458 = vunpack.c.l.b16 %v322
  %v459 = vunpack.c.l.b16 %v323
  %v460 = vunpack.c.l.b16 %v324
  %v461 = vunpack.c.l.b16 %v325
  %v462 = vunpack.c.l.b16 %v326
  %v463 = vunpack.c.l.b16 %v327
  %v464 = vunpack.c.l.b16 %v328
  %v465 = vunpack.c.l.b16 %v329
  %v466 = vunpack.c.l.b16 %v330
  %v467 = vunpack.c.l.b16 %v331
  %v468 = vunpack.c.l.b16 %v332
  %v469 = vunpack.c.l.b16 %v333
  %v470 = vunpack.c.l.b16 %v334
  %v471 = vunpack.c.l.b16 %v335
  %v472 = vunpack.c.l.b16 %v336
  %v473 = vunpack.c.l.b16 %v337
  %v474 = vunpack.c.l.b16 %v338
  %v475 = vunpack.c.l.b16 %v339
  %v476 = vunpack.c.l.b16 %v340
  %v477 = vunpack.c.l.b16 %v341
  %v478 = vunpack.c.l.b16 %v342
  %v479 = vunpack.c.l.b16 %v343
  %v480 = vunpack.c.l.b16 %v344
  %v481 = vunpack.c.l.b16 %v345
  %v482 = vunpack.c.l.b16 %v346
  %v483 = vunpack.c.l.b16 %v347
  %v484 = vunpack.c.l.b16 %v348
  %v485 = vunpack.c.l.b16 %v349
  %v486 = vunpack.c.l.b16 %v350
  %v487 = vunpack.c.l.b16 %v351
  %v488 = vunpack.c.l.b16 %v352
  %v489 = vunpack.c.l.b16 %v353
  %v490 = vunpack.c.l.b16 %v354
  %v491 = vunpack.c.l.b16 %v355
  %v492 = vunpack.c.l.b16 %v356
  %v493 = vunpack.c.l.b16 %v357
  %v494 = vunpack.c.l.b16 %v358
  %v495 = vunpack.c.l.b16 %v359
  %v496 = vunpack.c.l.b16 %v360
  %v497 = vunpack.c.l.b16 %v361
  %v498 = vunpack.c.l.b16 %v362
  %v499 = vunpack.c.l.b16 %v363
  %v500 = vunpack.c.l.b16 %v364
  %v501 = vunpack.c.l.b16 %v365
  %v502 = vunpack.c.l.b16 %v366
  %v503 = vunpack.c.l.b16 %v367
  %v504 = vunpack.c.l.b16 %v368
  %v505 = vunpack.c.l.b16 %v369
  %v506 = vunpack.c.l.b16 %v370
  %v507 = vunpack.c.l.b16 %v371
  %v508 = vunpack.c.l.b16 %v372
  %v509 = vunpack.c.l.b16 %v373
  %v510 = vpack.c.b16 %v447, %v446
  %v511 = vpack.c.b16 %v449, %v448
  %v512 = vpack.c.b16 %v451, %v450
  %v513 = vpack.c.b16 %v453, %v452
  %v514 = vpack.c.b16 %v455, %v454
  %v515 = vpack.c.b16 %v457, %v456
  %v516 = vpack.c.b16 %v459, %v458
  %v517 = vpack.c.b16 %v461, %v460
  %v518 = vpack.c.b16 %v463, %v462
  %v519 = vpack.c.b16 %v465, %v464
  %v520 = vpack.c.b16 %v467, %v466
  %v521 = vpack.c.b16 %v469, %v468
  %v522 = vpack.c.b16 %v471, %v470
  %v523 = vpack.c.b16 %v473, %v472
  %v524 = vpack.c.b16 %v475, %v474
  %v525 = vpack.c.b16 %v477, %v476
  %v526 = vpack.c.b16 %v479, %v478
  %v527 = vpack.c.b16 %v481, %v480
  %v528 = vpack.c.b16 %v483, %v482
  %v529 = vpack.c.b16 %v485, %v484
  %v530 = vpack.c.b16 %v487, %v486
  %v531 = vpack.c.b16 %v489, %v488
  %v532 = vpack.c.b16 %v491, %v490
  %v533 = vpack.c.b16 %v493, %v492
  %v534 = vpack.c.b16 %v495, %v494
  %v535 = vpack.c.b16 %v497, %v496
  %v536 = vpack.c.b16 %v499, %v498
  %v537 = vpack.c.b16 %v501, %v500
  %v538 = vpack.c.b16 %v503, %v502
  %v539 = vpack.c.b16 %v505, %v504
  %v540 = vpack.c.b16 %v507, %v506
  %v541 = vpack.c.b16 %v509, %v508
  %v546 = vunpack.c.l.b16 %v374
  %v547 = vunpack.c.l.b16 %v375
  %v548 = vunpack.c.l.b16 %v376
  %v549 = vunpack.c.l.b16 %v377
  %v550 = vpack.c.b16 %v547, %v546
  %v551 = vpack.c.b16 %v549, %v548
  %vm553 = vcmask 220160
  %v555 = vsel %vm553, %v510, 0
  %v558 = vsel %vm553, %v511, 0
  %v561 = vsel %vm553, %v512, 0
  %v564 = vsel %vm553, %v513, 0
  %v567 = vsel %vm553, %v514, 0
  %v570 = vsel %vm553, %v515, 0
  %v573 = vsel %vm553, %v516, 0
  %v576 = vsel %vm553, %v517, 0
  %v579 = vsel %vm553, %v518, 0
  %v582 = vsel %vm553, %v519, 0
  %v585 = vsel %vm553, %v520, 0
  %v588 = vsel %vm553, %v521, 0
  %v591 = vsel %vm553, %v522, 0
  %v594 = vsel %vm553, %v523, 0
  %v597 = vsel %vm553, %v524, 0
  %v600 = vsel %vm553, %v525, 0
  %v603 = vsel %vm553, %v526, 0
  %v606 = vsel %vm553, %v527, 0
  %v609 = vsel %vm553, %v528, 0
  %v612 = vsel %vm553, %v529, 0
  %v615 = vsel %vm553, %v530, 0
  %v618 = vsel %vm553, %v531, 0
  %v621 = vsel %vm553, %v532, 0
  %v624 = vsel %vm553, %v533, 0
  %v627 = vsel %vm553, %v534, 0
  %v630 = vsel %vm553, %v535, 0
  %v633 = vsel %vm553, %v536, 0
  %v636 = vsel %vm553, %v537, 0
  %v639 = vsel %vm553, %v538, 0
  %v642 = vsel %vm553, %v539, 0
  %v645 = vsel %vm553, %v540, 0
  %v648 = vsel %vm553, %v541, 0
  %vm650 = vcmask 1044480
  %vm651 = vcmask 1045504
  %v652 = vsel %vm650, 4294967295, 65535
  %v653 = vsel %vm651, %v652, 0
  %v655 = vand.u32 %v551, %v653
  %657 = vmatpush.bf16.msra.mxu0 0
  %658 = vmatpush.bf16.msra.mxu0 0
  %659 = vmatpush.bf16.msra.mxu0 0
  %660 = vmatpush.bf16.msra.mxu0 0
  %661 = vmatpush.bf16.msra.mxu0 0
  %662 = vmatpush.bf16.msra.mxu0 0
  %663 = vmatpush.bf16.msra.mxu0 %v655
  %664 = vmatpush.bf16.msra.mxu0 %v550
  %665 = vmatmul.bf16.gmra.mxu0 %v555
  %v666 = vpop.f32.mrf.mxu0
  %v667 = vadd.f32 %v380, %v666
  %v668 = vpop.f32.mrf.mxu0
  %v669 = vadd.f32 %v380, %v668
  %670 = vmatmul.bf16.gmra.mxu0 %v558
  %v671 = vpop.f32.mrf.mxu0
  %v672 = vadd.f32 %v380, %v671
  %v673 = vpop.f32.mrf.mxu0
  %v674 = vadd.f32 %v380, %v673
  %675 = vmatmul.bf16.gmra.mxu0 %v561
  %v676 = vpop.f32.mrf.mxu0
  %v677 = vadd.f32 %v380, %v676
  %v678 = vpop.f32.mrf.mxu0
  %v679 = vadd.f32 %v380, %v678
  %680 = vmatmul.bf16.gmra.mxu0 %v564
  %v681 = vpop.f32.mrf.mxu0
  %v682 = vadd.f32 %v380, %v681
  %v683 = vpop.f32.mrf.mxu0
  %v684 = vadd.f32 %v380, %v683
  %685 = vmatmul.bf16.gmra.mxu0 %v567
  %v686 = vpop.f32.mrf.mxu0
  %v687 = vadd.f32 %v380, %v686
  %v688 = vpop.f32.mrf.mxu0
  %v689 = vadd.f32 %v380, %v688
  %690 = vmatmul.bf16.gmra.mxu0 %v570
  %v691 = vpop.f32.mrf.mxu0
  %v692 = vadd.f32 %v380, %v691
  %v693 = vpop.f32.mrf.mxu0
  %v694 = vadd.f32 %v380, %v693
  %695 = vmatmul.bf16.gmra.mxu0 %v573
  %v696 = vpop.f32.mrf.mxu0
  %v697 = vadd.f32 %v380, %v696
  %v698 = vpop.f32.mrf.mxu0
  %v699 = vadd.f32 %v380, %v698
  %700 = vmatmul.bf16.gmra.mxu0 %v576
  %v701 = vpop.f32.mrf.mxu0
  %v702 = vadd.f32 %v380, %v701
  %v703 = vpop.f32.mrf.mxu0
  %v704 = vadd.f32 %v380, %v703
  %705 = vmatmul.bf16.gmra.mxu0 %v579
  %v706 = vpop.f32.mrf.mxu0
  %v707 = vadd.f32 %v380, %v706
  %v708 = vpop.f32.mrf.mxu0
  %v709 = vadd.f32 %v380, %v708
  %710 = vmatmul.bf16.gmra.mxu0 %v582
  %v711 = vpop.f32.mrf.mxu0
  %v712 = vadd.f32 %v380, %v711
  %v713 = vpop.f32.mrf.mxu0
  %v714 = vadd.f32 %v380, %v713
  %715 = vmatmul.bf16.gmra.mxu0 %v585
  %v716 = vpop.f32.mrf.mxu0
  %v717 = vadd.f32 %v380, %v716
  %v718 = vpop.f32.mrf.mxu0
  %v719 = vadd.f32 %v380, %v718
  %720 = vmatmul.bf16.gmra.mxu0 %v588
  %v721 = vpop.f32.mrf.mxu0
  %v722 = vadd.f32 %v380, %v721
  %v723 = vpop.f32.mrf.mxu0
  %v724 = vadd.f32 %v380, %v723
  %725 = vmatmul.bf16.gmra.mxu0 %v591
  %v726 = vpop.f32.mrf.mxu0
  %v727 = vadd.f32 %v380, %v726
  %v728 = vpop.f32.mrf.mxu0
  %v729 = vadd.f32 %v380, %v728
  %730 = vmatmul.bf16.gmra.mxu0 %v594
  %v731 = vpop.f32.mrf.mxu0
  %v732 = vadd.f32 %v380, %v731
  %v733 = vpop.f32.mrf.mxu0
  %v734 = vadd.f32 %v380, %v733
  %735 = vmatmul.bf16.gmra.mxu0 %v597
  %v736 = vpop.f32.mrf.mxu0
  %v737 = vadd.f32 %v380, %v736
  %v738 = vpop.f32.mrf.mxu0
  %v739 = vadd.f32 %v380, %v738
  %740 = vmatmul.bf16.gmra.mxu0 %v600
  %v741 = vpop.f32.mrf.mxu0
  %v742 = vadd.f32 %v380, %v741
  %v743 = vpop.f32.mrf.mxu0
  %v744 = vadd.f32 %v380, %v743
  %745 = vmatmul.bf16.gmra.mxu0 %v603
  %v746 = vpop.f32.mrf.mxu0
  %v747 = vadd.f32 %v380, %v746
  %v748 = vpop.f32.mrf.mxu0
  %v749 = vadd.f32 %v380, %v748
  %750 = vmatmul.bf16.gmra.mxu0 %v606
  %v751 = vpop.f32.mrf.mxu0
  %v752 = vadd.f32 %v380, %v751
  %v753 = vpop.f32.mrf.mxu0
  %v754 = vadd.f32 %v380, %v753
  %755 = vmatmul.bf16.gmra.mxu0 %v609
  %v756 = vpop.f32.mrf.mxu0
  %v757 = vadd.f32 %v380, %v756
  %v758 = vpop.f32.mrf.mxu0
  %v759 = vadd.f32 %v380, %v758
  %760 = vmatmul.bf16.gmra.mxu0 %v612
  %v761 = vpop.f32.mrf.mxu0
  %v762 = vadd.f32 %v380, %v761
  %v763 = vpop.f32.mrf.mxu0
  %v764 = vadd.f32 %v380, %v763
  %765 = vmatmul.bf16.gmra.mxu0 %v615
  %v766 = vpop.f32.mrf.mxu0
  %v767 = vadd.f32 %v380, %v766
  %v768 = vpop.f32.mrf.mxu0
  %v769 = vadd.f32 %v380, %v768
  %770 = vmatmul.bf16.gmra.mxu0 %v618
  %v771 = vpop.f32.mrf.mxu0
  %v772 = vadd.f32 %v380, %v771
  %v773 = vpop.f32.mrf.mxu0
  %v774 = vadd.f32 %v380, %v773
  %775 = vmatmul.bf16.gmra.mxu0 %v621
  %v776 = vpop.f32.mrf.mxu0
  %v777 = vadd.f32 %v380, %v776
  %v778 = vpop.f32.mrf.mxu0
  %v779 = vadd.f32 %v380, %v778
  %780 = vmatmul.bf16.gmra.mxu0 %v624
  %v781 = vpop.f32.mrf.mxu0
  %v782 = vadd.f32 %v380, %v781
  %v783 = vpop.f32.mrf.mxu0
  %v784 = vadd.f32 %v380, %v783
  %785 = vmatmul.bf16.gmra.mxu0 %v627
  %v786 = vpop.f32.mrf.mxu0
  %v787 = vadd.f32 %v380, %v786
  %v788 = vpop.f32.mrf.mxu0
  %v789 = vadd.f32 %v380, %v788
  %790 = vmatmul.bf16.gmra.mxu0 %v630
  %v791 = vpop.f32.mrf.mxu0
  %v792 = vadd.f32 %v380, %v791
  %v793 = vpop.f32.mrf.mxu0
  %v794 = vadd.f32 %v380, %v793
  %795 = vmatmul.bf16.gmra.mxu0 %v633
  %v796 = vpop.f32.mrf.mxu0
  %v797 = vadd.f32 %v380, %v796
  %v798 = vpop.f32.mrf.mxu0
  %v799 = vadd.f32 %v380, %v798
  %800 = vmatmul.bf16.gmra.mxu0 %v636
  %v801 = vpop.f32.mrf.mxu0
  %v802 = vadd.f32 %v380, %v801
  %v803 = vpop.f32.mrf.mxu0
  %v804 = vadd.f32 %v380, %v803
  %805 = vmatmul.bf16.gmra.mxu0 %v639
  %v806 = vpop.f32.mrf.mxu0
  %v807 = vadd.f32 %v380, %v806
  %v808 = vpop.f32.mrf.mxu0
  %v809 = vadd.f32 %v380, %v808
  %810 = vmatmul.bf16.gmra.mxu0 %v642
  %v811 = vpop.f32.mrf.mxu0
  %v812 = vadd.f32 %v380, %v811
  %v813 = vpop.f32.mrf.mxu0
  %v814 = vadd.f32 %v380, %v813
  %815 = vmatmul.bf16.gmra.mxu0 %v645
  %v816 = vpop.f32.mrf.mxu0
  %v817 = vadd.f32 %v380, %v816
  %v818 = vpop.f32.mrf.mxu0
  %v819 = vadd.f32 %v380, %v818
  %820 = vmatmul.bf16.gmra.mxu0 %v648
  %v821 = vpop.f32.mrf.mxu0
  %v822 = vadd.f32 %v380, %v821
  %v823 = vpop.f32.mrf.mxu0
  %v824 = vadd.f32 %v380, %v823
  %825 = vdwg.mxu0
  %826 = vst.msk [vmem:[#allocation6] sm:$0xff] %vm131, %v667
  %827 = vst.msk [vmem:[#allocation6 + $0x8] sm:$0xff] %vm131, %v669
  %828 = vst.msk [vmem:[#allocation6 + $0x10] sm:$0xff] %vm131, %v672
  %829 = vst.msk [vmem:[#allocation6 + $0x18] sm:$0xff] %vm131, %v674
  %830 = vst.msk [vmem:[#allocation6 + $0x20] sm:$0xff] %vm131, %v677
  %831 = vst.msk [vmem:[#allocation6 + $0x28] sm:$0xff] %vm131, %v679
  %832 = vst.msk [vmem:[#allocation6 + $0x30] sm:$0xff] %vm131, %v682
  %833 = vst.msk [vmem:[#allocation6 + $0x38] sm:$0xff] %vm131, %v684
  %834 = vst.msk [vmem:[#allocation6 + $0x40] sm:$0xff] %vm131, %v687
  %835 = vst.msk [vmem:[#allocation6 + $0x48] sm:$0xff] %vm131, %v689
  %836 = vst.msk [vmem:[#allocation6 + $0x50] sm:$0xff] %vm131, %v692
  %837 = vst.msk [vmem:[#allocation6 + $0x58] sm:$0xff] %vm131, %v694
  %838 = vst.msk [vmem:[#allocation6 + $0x60] sm:$0xff] %vm131, %v697
  %839 = vst.msk [vmem:[#allocation6 + $0x68] sm:$0xff] %vm131, %v699
  %840 = vst.msk [vmem:[#allocation6 + $0x70] sm:$0xff] %vm131, %v702
  %841 = vst.msk [vmem:[#allocation6 + $0x78] sm:$0xff] %vm131, %v704
  %842 = vst.msk [vmem:[#allocation6 + $0x80] sm:$0xff] %vm131, %v707
  %843 = vst.msk [vmem:[#allocation6 + $0x88] sm:$0xff] %vm131, %v709
  %844 = vst.msk [vmem:[#allocation6 + $0x90] sm:$0xff] %vm131, %v712
  %845 = vst.msk [vmem:[#allocation6 + $0x98] sm:$0xff] %vm131, %v714
  %846 = vst.msk [vmem:[#allocation6 + $0xa0] sm:$0xff] %vm131, %v717
  %847 = vst.msk [vmem:[#allocation6 + $0xa8] sm:$0xff] %vm131, %v719
  %848 = vst.msk [vmem:[#allocation6 + $0xb0] sm:$0xff] %vm131, %v722
  %849 = vst.msk [vmem:[#allocation6 + $0xb8] sm:$0xff] %vm131, %v724
  %850 = vst.msk [vmem:[#allocation6 + $0xc0] sm:$0xff] %vm131, %v727
  %851 = vst.msk [vmem:[#allocation6 + $0xc8] sm:$0xff] %vm131, %v729
  %852 = vst.msk [vmem:[#allocation6 + $0xd0] sm:$0xff] %vm131, %v732
  %853 = vst.msk [vmem:[#allocation6 + $0xd8] sm:$0xff] %vm131, %v734
  %854 = vst.msk [vmem:[#allocation6 + $0xe0] sm:$0xff] %vm131, %v737
  %855 = vst.msk [vmem:[#allocation6 + $0xe8] sm:$0xff] %vm131, %v739
  %856 = vst.msk [vmem:[#allocation6 + $0xf0] sm:$0xff] %vm131, %v742
  %857 = vst.msk [vmem:[#allocation6 + $0xf8] sm:$0xff] %vm131, %v744
  %858 = vst.msk [vmem:[#allocation6 + $0x100] sm:$0xff] %vm131, %v747
  %859 = vst.msk [vmem:[#allocation6 + $0x108] sm:$0xff] %vm131, %v749
  %860 = vst.msk [vmem:[#allocation6 + $0x110] sm:$0xff] %vm131, %v752
  %861 = vst.msk [vmem:[#allocation6 + $0x118] sm:$0xff] %vm131, %v754
  %862 = vst.msk [vmem:[#allocation6 + $0x120] sm:$0xff] %vm131, %v757
  %863 = vst.msk [vmem:[#allocation6 + $0x128] sm:$0xff] %vm131, %v759
  %864 = vst.msk [vmem:[#allocation6 + $0x130] sm:$0xff] %vm131, %v762
  %865 = vst.msk [vmem:[#allocation6 + $0x138] sm:$0xff] %vm131, %v764
  %866 = vst.msk [vmem:[#allocation6 + $0x140] sm:$0xff] %vm131, %v767
  %867 = vst.msk [vmem:[#allocation6 + $0x148] sm:$0xff] %vm131, %v769
  %868 = vst.msk [vmem:[#allocation6 + $0x150] sm:$0xff] %vm131, %v772
  %869 = vst.msk [vmem:[#allocation6 + $0x158] sm:$0xff] %vm131, %v774
  %870 = vst.msk [vmem:[#allocation6 + $0x160] sm:$0xff] %vm131, %v777
  %871 = vst.msk [vmem:[#allocation6 + $0x168] sm:$0xff] %vm131, %v779
  %872 = vst.msk [vmem:[#allocation6 + $0x170] sm:$0xff] %vm131, %v782
  %873 = vst.msk [vmem:[#allocation6 + $0x178] sm:$0xff] %vm131, %v784
  %874 = vst.msk [vmem:[#allocation6 + $0x180] sm:$0xff] %vm131, %v787
  %875 = vst.msk [vmem:[#allocation6 + $0x188] sm:$0xff] %vm131, %v789
  %876 = vst.msk [vmem:[#allocation6 + $0x190] sm:$0xff] %vm131, %v792
  %877 = vst.msk [vmem:[#allocation6 + $0x198] sm:$0xff] %vm131, %v794
  %878 = vst.msk [vmem:[#allocation6 + $0x1a0] sm:$0xff] %vm131, %v797
  %879 = vst.msk [vmem:[#allocation6 + $0x1a8] sm:$0xff] %vm131, %v799
  %880 = vst.msk [vmem:[#allocation6 + $0x1b0] sm:$0xff] %vm131, %v802
  %881 = vst.msk [vmem:[#allocation6 + $0x1b8] sm:$0xff] %vm131, %v804
  %882 = vst.msk [vmem:[#allocation6 + $0x1c0] sm:$0xff] %vm131, %v807
  %883 = vst.msk [vmem:[#allocation6 + $0x1c8] sm:$0xff] %vm131, %v809
  %884 = vst.msk [vmem:[#allocation6 + $0x1d0] sm:$0xff] %vm131, %v812
  %885 = vst.msk [vmem:[#allocation6 + $0x1d8] sm:$0xff] %vm131, %v814
  %886 = vst.msk [vmem:[#allocation6 + $0x1e0] sm:$0xff] %vm131, %v817
  %887 = vst.msk [vmem:[#allocation6 + $0x1e8] sm:$0xff] %vm131, %v819
  %888 = vst.msk [vmem:[#allocation6 + $0x1f0] sm:$0xff] %vm131, %v822
  %889 = vst.msk [vmem:[#allocation6 + $0x1f8] sm:$0xff] %vm131, %v824
  %v890 = vld [vmem:[%s11] sm:$0xff]
  %v891 = vld [vmem:[%s11 + $0x8] sm:$0xff]
  %v892 = vld [vmem:[%s11 + $0x10] sm:$0xff]
  %v893 = vld [vmem:[%s11 + $0x18] sm:$0xff]
  %v894 = vld [vmem:[%s11 + $0x20] sm:$0xff]
  %v895 = vld [vmem:[%s11 + $0x28] sm:$0xff]
  %v896 = vld [vmem:[%s11 + $0x30] sm:$0xff]
  %v897 = vld [vmem:[%s11 + $0x38] sm:$0xff]
  %v898 = vld [vmem:[%s13] sm:$0xff]
  %v899 = vld [vmem:[%s13 + $0x8] sm:$0xff]
  %v900 = vld [vmem:[%s13 + $0x10] sm:$0xff]
  %v901 = vld [vmem:[%s13 + $0x18] sm:$0xff]
  %v902 = vld [vmem:[%s7] sm:$0x1]
  %v903 = vld [vmem:[%s9] sm:$0x1]
  %v904 = vld [vmem:[#allocation6] sm:$0xff]
  %v905 = vld [vmem:[#allocation6 + $0x8] sm:$0xff]
  %v906 = vld [vmem:[#allocation6 + $0x10] sm:$0xff]
  %v907 = vld [vmem:[#allocation6 + $0x18] sm:$0xff]
  %v908 = vld [vmem:[#allocation6 + $0x20] sm:$0xff]
  %v909 = vld [vmem:[#allocation6 + $0x28] sm:$0xff]
  %v910 = vld [vmem:[#allocation6 + $0x30] sm:$0xff]
  %v911 = vld [vmem:[#allocation6 + $0x38] sm:$0xff]
  %v912 = vld [vmem:[#allocation6 + $0x40] sm:$0xff]
  %v913 = vld [vmem:[#allocation6 + $0x48] sm:$0xff]
  %v914 = vld [vmem:[#allocation6 + $0x50] sm:$0xff]
  %v915 = vld [vmem:[#allocation6 + $0x58] sm:$0xff]
  %v916 = vld [vmem:[#allocation6 + $0x60] sm:$0xff]
  %v917 = vld [vmem:[#allocation6 + $0x68] sm:$0xff]
  %v918 = vld [vmem:[#allocation6 + $0x70] sm:$0xff]
  %v919 = vld [vmem:[#allocation6 + $0x78] sm:$0xff]
  %v920 = vld [vmem:[#allocation6 + $0x80] sm:$0xff]
  %v921 = vld [vmem:[#allocation6 + $0x88] sm:$0xff]
  %v922 = vld [vmem:[#allocation6 + $0x90] sm:$0xff]
  %v923 = vld [vmem:[#allocation6 + $0x98] sm:$0xff]
  %v924 = vld [vmem:[#allocation6 + $0xa0] sm:$0xff]
  %v925 = vld [vmem:[#allocation6 + $0xa8] sm:$0xff]
  %v926 = vld [vmem:[#allocation6 + $0xb0] sm:$0xff]
  %v927 = vld [vmem:[#allocation6 + $0xb8] sm:$0xff]
  %v928 = vld [vmem:[#allocation6 + $0xc0] sm:$0xff]
  %v929 = vld [vmem:[#allocation6 + $0xc8] sm:$0xff]
  %v930 = vld [vmem:[#allocation6 + $0xd0] sm:$0xff]
  %v931 = vld [vmem:[#allocation6 + $0xd8] sm:$0xff]
  %v932 = vld [vmem:[#allocation6 + $0xe0] sm:$0xff]
  %v933 = vld [vmem:[#allocation6 + $0xe8] sm:$0xff]
  %v934 = vld [vmem:[#allocation6 + $0xf0] sm:$0xff]
  %v935 = vld [vmem:[#allocation6 + $0xf8] sm:$0xff]
  %v936 = vsel %vm131, %v904, 0.0
  %v937 = vsel %vm131, %v905, 0.0
  %v938 = vadd.f32 %v936, %v937
  %v939 = vsel %vm131, %v906, 0.0
  %v940 = vadd.f32 %v938, %v939
  %v941 = vsel %vm131, %v907, 0.0
  %v942 = vadd.f32 %v940, %v941
  %v943 = vsel %vm131, %v908, 0.0
  %v944 = vadd.f32 %v942, %v943
  %v945 = vsel %vm131, %v909, 0.0
  %v946 = vadd.f32 %v944, %v945
  %v947 = vsel %vm131, %v910, 0.0
  %v948 = vadd.f32 %v946, %v947
  %v949 = vsel %vm131, %v911, 0.0
  %v950 = vadd.f32 %v948, %v949
  %v951 = vsel %vm131, %v912, 0.0
  %v952 = vadd.f32 %v950, %v951
  %v953 = vsel %vm131, %v913, 0.0
  %v954 = vadd.f32 %v952, %v953
  %v955 = vsel %vm131, %v914, 0.0
  %v956 = vadd.f32 %v954, %v955
  %v957 = vsel %vm131, %v915, 0.0
  %v958 = vadd.f32 %v956, %v957
  %v959 = vsel %vm131, %v916, 0.0
  %v960 = vadd.f32 %v958, %v959
  %v961 = vsel %vm131, %v917, 0.0
  %v962 = vadd.f32 %v960, %v961
  %v963 = vsel %vm131, %v918, 0.0
  %v964 = vadd.f32 %v962, %v963
  %v965 = vsel %vm131, %v919, 0.0
  %v966 = vadd.f32 %v964, %v965
  %v967 = vsel %vm131, %v920, 0.0
  %v968 = vadd.f32 %v966, %v967
  %v969 = vsel %vm131, %v921, 0.0
  %v970 = vadd.f32 %v968, %v969
  %v971 = vsel %vm131, %v922, 0.0
  %v972 = vadd.f32 %v970, %v971
  %v973 = vsel %vm131, %v923, 0.0
  %v974 = vadd.f32 %v972, %v973
  %v975 = vsel %vm131, %v924, 0.0
  %v976 = vadd.f32 %v974, %v975
  %v977 = vsel %vm131, %v925, 0.0
  %v978 = vadd.f32 %v976, %v977
  %v979 = vsel %vm131, %v926, 0.0
  %v980 = vadd.f32 %v978, %v979
  %v981 = vsel %vm131, %v927, 0.0
  %v982 = vadd.f32 %v980, %v981
  %v983 = vsel %vm131, %v928, 0.0
  %v984 = vadd.f32 %v982, %v983
  %v985 = vsel %vm131, %v929, 0.0
  %v986 = vadd.f32 %v984, %v985
  %v987 = vsel %vm131, %v930, 0.0
  %v988 = vadd.f32 %v986, %v987
  %v989 = vsel %vm131, %v931, 0.0
  %v990 = vadd.f32 %v988, %v989
  %v991 = vsel %vm131, %v932, 0.0
  %v992 = vadd.f32 %v990, %v991
  %v993 = vsel %vm131, %v933, 0.0
  %v994 = vadd.f32 %v992, %v993
  %v995 = vsel %vm131, %v934, 0.0
  %v996 = vadd.f32 %v994, %v995
  %v997 = vsel %vm131, %v935, 0.0
  %v998 = vadd.f32 %v996, %v997
  %v999 = vrot.slane %v998, 4
  %v1000 = vadd.f32 %v998, %v999
  %v1001 = vrot.slane %v1000, 2
  %v1002 = vadd.f32 %v1000, %v1001
  %v1003 = vrot.slane %v1002, 1
  %v1004 = vadd.f32 %v1002, %v1003
  %v1005 = vmul.f32 %v904, %v904
  %v1006 = vmul.f32 %v905, %v905
  %v1007 = vmul.f32 %v906, %v906
  %v1008 = vmul.f32 %v907, %v907
  %v1009 = vmul.f32 %v908, %v908
  %v1010 = vmul.f32 %v909, %v909
  %v1011 = vmul.f32 %v910, %v910
  %v1012 = vmul.f32 %v911, %v911
  %v1013 = vmul.f32 %v912, %v912
  %v1014 = vmul.f32 %v913, %v913
  %v1015 = vmul.f32 %v914, %v914
  %v1016 = vmul.f32 %v915, %v915
  %v1017 = vmul.f32 %v916, %v916
  %v1018 = vmul.f32 %v917, %v917
  %v1019 = vmul.f32 %v918, %v918
  %v1020 = vmul.f32 %v919, %v919
  %v1021 = vmul.f32 %v920, %v920
  %v1022 = vmul.f32 %v921, %v921
  %v1023 = vmul.f32 %v922, %v922
  %v1024 = vmul.f32 %v923, %v923
  %v1025 = vmul.f32 %v924, %v924
  %v1026 = vmul.f32 %v925, %v925
  %v1027 = vmul.f32 %v926, %v926
  %v1028 = vmul.f32 %v927, %v927
  %v1029 = vmul.f32 %v928, %v928
  %v1030 = vmul.f32 %v929, %v929
  %v1031 = vmul.f32 %v930, %v930
  %v1032 = vmul.f32 %v931, %v931
  %v1033 = vmul.f32 %v932, %v932
  %v1034 = vmul.f32 %v933, %v933
  %v1035 = vmul.f32 %v934, %v934
  %v1036 = vmul.f32 %v935, %v935
  %v1037 = vsel %vm131, %v1005, 0.0
  %v1038 = vsel %vm131, %v1006, 0.0
  %v1039 = vadd.f32 %v1037, %v1038
  %v1040 = vsel %vm131, %v1007, 0.0
  %v1041 = vadd.f32 %v1039, %v1040
  %v1042 = vsel %vm131, %v1008, 0.0
  %v1043 = vadd.f32 %v1041, %v1042
  %v1044 = vsel %vm131, %v1009, 0.0
  %v1045 = vadd.f32 %v1043, %v1044
  %v1046 = vsel %vm131, %v1010, 0.0
  %v1047 = vadd.f32 %v1045, %v1046
  %v1048 = vsel %vm131, %v1011, 0.0
  %v1049 = vadd.f32 %v1047, %v1048
  %v1050 = vsel %vm131, %v1012, 0.0
  %v1051 = vadd.f32 %v1049, %v1050
  %v1052 = vsel %vm131, %v1013, 0.0
  %v1053 = vadd.f32 %v1051, %v1052
  %v1054 = vsel %vm131, %v1014, 0.0
  %v1055 = vadd.f32 %v1053, %v1054
  %v1056 = vsel %vm131, %v1015, 0.0
  %v1057 = vadd.f32 %v1055, %v1056
  %v1058 = vsel %vm131, %v1016, 0.0
  %v1059 = vadd.f32 %v1057, %v1058
  %v1060 = vsel %vm131, %v1017, 0.0
  %v1061 = vadd.f32 %v1059, %v1060
  %v1062 = vsel %vm131, %v1018, 0.0
  %v1063 = vadd.f32 %v1061, %v1062
  %v1064 = vsel %vm131, %v1019, 0.0
  %v1065 = vadd.f32 %v1063, %v1064
  %v1066 = vsel %vm131, %v1020, 0.0
  %v1067 = vadd.f32 %v1065, %v1066
  %v1068 = vsel %vm131, %v1021, 0.0
  %v1069 = vadd.f32 %v1067, %v1068
  %v1070 = vsel %vm131, %v1022, 0.0
  %v1071 = vadd.f32 %v1069, %v1070
  %v1072 = vsel %vm131, %v1023, 0.0
  %v1073 = vadd.f32 %v1071, %v1072
  %v1074 = vsel %vm131, %v1024, 0.0
  %v1075 = vadd.f32 %v1073, %v1074
  %v1076 = vsel %vm131, %v1025, 0.0
  %v1077 = vadd.f32 %v1075, %v1076
  %v1078 = vsel %vm131, %v1026, 0.0
  %v1079 = vadd.f32 %v1077, %v1078
  %v1080 = vsel %vm131, %v1027, 0.0
  %v1081 = vadd.f32 %v1079, %v1080
  %v1082 = vsel %vm131, %v1028, 0.0
  %v1083 = vadd.f32 %v1081, %v1082
  %v1084 = vsel %vm131, %v1029, 0.0
  %v1085 = vadd.f32 %v1083, %v1084
  %v1086 = vsel %vm131, %v1030, 0.0
  %v1087 = vadd.f32 %v1085, %v1086
  %v1088 = vsel %vm131, %v1031, 0.0
  %v1089 = vadd.f32 %v1087, %v1088
  %v1090 = vsel %vm131, %v1032, 0.0
  %v1091 = vadd.f32 %v1089, %v1090
  %v1092 = vsel %vm131, %v1033, 0.0
  %v1093 = vadd.f32 %v1091, %v1092
  %v1094 = vsel %vm131, %v1034, 0.0
  %v1095 = vadd.f32 %v1093, %v1094
  %v1096 = vsel %vm131, %v1035, 0.0
  %v1097 = vadd.f32 %v1095, %v1096
  %v1098 = vsel %vm131, %v1036, 0.0
  %v1099 = vadd.f32 %v1097, %v1098
  %v1100 = vrot.slane %v1099, 4
  %v1101 = vadd.f32 %v1099, %v1100
  %v1102 = vrot.slane %v1101, 2
  %v1103 = vadd.f32 %v1101, %v1102
  %v1104 = vrot.slane %v1103, 1
  %v1105 = vadd.f32 %v1103, %v1104
  %v1107 = vsel %vm131, %v1004, 0
  %1109 = vmatpush.msra.mxu0 0.0
  %1110 = vmatpush.msra.mxu0 0.0
  %1111 = vmatpush.msra.mxu0 0.0
  %1112 = vmatpush.msra.mxu0 0.0
  %1113 = vmatpush.msra.mxu0 0.0
  %1114 = vmatpush.msra.mxu0 0.0
  %1115 = vmatpush.msra.mxu0 0.0
  %1116 = vmatpush.msra.mxu0 0.0
  %1117 = vmatpush.msra.mxu0 %v897
  %1118 = vmatpush.msra.mxu0 %v896
  %1119 = vmatpush.msra.mxu0 %v895
  %1120 = vmatpush.msra.mxu0 %v894
  %1121 = vmatpush.msra.mxu0 %v893
  %1122 = vmatpush.msra.mxu0 %v892
  %1123 = vmatpush.msra.mxu0 %v891
  %1124 = vmatpush.msra.mxu0 %v890
  %1125 = vmatmul.f32.gmra.mxu0 %v1107
  %v1126 = vpop.f32.mrf.mxu0
  %v1127 = vadd.f32 0.0, %v1126
  %1128 = vdwg.mxu0
  %v1129 = vmul.f32 %v1127, 0.001953125
  %vm1130 = vcmask 261120
  %v1132 = vsel %vm1130, %v1129, 0
  %1134 = vmatpush.msra.mxu0 0.0
  %1135 = vmatpush.msra.mxu0 0.0
  %1136 = vmatpush.msra.mxu0 0.0
  %1137 = vmatpush.msra.mxu0 0.0
  %1138 = vmatpush.msra.mxu0 0.0
  %1139 = vmatpush.msra.mxu0 0.0
  %1140 = vmatpush.msra.mxu0 0.0
  %1141 = vmatpush.msra.mxu0 0.0
  %1142 = vmatpush.msra.mxu0 0.0
  %1143 = vmatpush.msra.mxu0 0.0
  %1144 = vmatpush.msra.mxu0 0.0
  %1145 = vmatpush.msra.mxu0 0.0
  %1146 = vmatpush.msra.mxu0 %v901
  %1147 = vmatpush.msra.mxu0 %v900
  %1148 = vmatpush.msra.mxu0 %v899
  %1149 = vmatpush.msra.mxu0 %v898
  %1150 = vmatmul.f32.gmra.mxu0 %v1132
  %v1151 = vpop.f32.mrf.mxu0
  %v1152 = vadd.f32 0.0, %v1151
  %1153 = vdwg.mxu0
  %v1155 = vsel %vm131, %v1105, 0
  %1157 = vmatpush.msra.mxu0 0.0
  %1158 = vmatpush.msra.mxu0 0.0
  %1159 = vmatpush.msra.mxu0 0.0
  %1160 = vmatpush.msra.mxu0 0.0
  %1161 = vmatpush.msra.mxu0 0.0
  %1162 = vmatpush.msra.mxu0 0.0
  %1163 = vmatpush.msra.mxu0 0.0
  %1164 = vmatpush.msra.mxu0 0.0
  %1165 = vmatpush.msra.mxu0 %v897
  %1166 = vmatpush.msra.mxu0 %v896
  %1167 = vmatpush.msra.mxu0 %v895
  %1168 = vmatpush.msra.mxu0 %v894
  %1169 = vmatpush.msra.mxu0 %v893
  %1170 = vmatpush.msra.mxu0 %v892
  %1171 = vmatpush.msra.mxu0 %v891
  %1172 = vmatpush.msra.mxu0 %v890
  %1173 = vmatmul.f32.gmra.mxu0 %v1155
  %v1174 = vpop.f32.mrf.mxu0
  %v1175 = vadd.f32 0.0, %v1174
  %1176 = vdwg.mxu0
  %v1177 = vmul.f32 %v1175, 0.001953125
  %v1179 = vsel %vm1130, %v1177, 0
  %1181 = vmatpush.msra.mxu0 0.0
  %1182 = vmatpush.msra.mxu0 0.0
  %1183 = vmatpush.msra.mxu0 0.0
  %1184 = vmatpush.msra.mxu0 0.0
  %1185 = vmatpush.msra.mxu0 0.0
  %1186 = vmatpush.msra.mxu0 0.0
  %1187 = vmatpush.msra.mxu0 0.0
  %1188 = vmatpush.msra.mxu0 0.0
  %1189 = vmatpush.msra.mxu0 0.0
  %1190 = vmatpush.msra.mxu0 0.0
  %1191 = vmatpush.msra.mxu0 0.0
  %1192 = vmatpush.msra.mxu0 0.0
  %1193 = vmatpush.msra.mxu0 %v901
  %1194 = vmatpush.msra.mxu0 %v900
  %1195 = vmatpush.msra.mxu0 %v899
  %1196 = vmatpush.msra.mxu0 %v898
  %1197 = vmatmul.f32.gmra.mxu0 %v1179
  %v1198 = vpop.f32.mrf.mxu0
  %v1199 = vadd.f32 0.0, %v1198
  %1200 = vdwg.mxu0
  %v1201 = vmul.f32 %v1152, %v1152
  %v1202 = vsub.f32 %v1199, %v1201
  %v1203 = vmax.f32 %v1202, 0.0
  %v1204 = vadd.f32 %v1203, 1e-05
  %v1205 = vrsqrt.pop %v1204
  %v1206 = vmul.f32 %v1205, %v1204
  %v1207 = vmul.f32 %v1206, %v1205
  %v1208 = vmul.f32 0.5, %v1207
  %v1209 = vsub.f32 1.5, %v1208
  %v1210 = vmul.f32 %v1205, %v1209
  %vm1211 = vweird.f32 %v1204
  %vm1212 = vweird.f32 %v1205
  %vm1213 = vmor %vm1211, %vm1212
  %v1214 = vsel %vm1213, %v1205, %v1210
  %v1215 = vmul.f32 %v902, %v1214
  %v1216 = vmul.f32 %v1152, %v1215
  %v1217 = vsub.f32 %v903, %v1216
  %v1219 = vperm.slane %v1215, 0
  %v1221 = vmul.f32 %v904, %v1219
  %v1222 = vmul.f32 %v905, %v1219
  %v1223 = vmul.f32 %v906, %v1219
  %v1224 = vmul.f32 %v907, %v1219
  %v1225 = vmul.f32 %v908, %v1219
  %v1226 = vmul.f32 %v909, %v1219
  %v1227 = vmul.f32 %v910, %v1219
  %v1228 = vmul.f32 %v911, %v1219
  %v1229 = vmul.f32 %v912, %v1219
  %v1230 = vmul.f32 %v913, %v1219
  %v1231 = vmul.f32 %v914, %v1219
  %v1232 = vmul.f32 %v915, %v1219
  %v1233 = vmul.f32 %v916, %v1219
  %v1234 = vmul.f32 %v917, %v1219
  %v1235 = vmul.f32 %v918, %v1219
  %v1236 = vmul.f32 %v919, %v1219
  %v1237 = vmul.f32 %v920, %v1219
  %v1238 = vmul.f32 %v921, %v1219
  %v1239 = vmul.f32 %v922, %v1219
  %v1240 = vmul.f32 %v923, %v1219
  %v1241 = vmul.f32 %v924, %v1219
  %v1242 = vmul.f32 %v925, %v1219
  %v1243 = vmul.f32 %v926, %v1219
  %v1244 = vmul.f32 %v927, %v1219
  %v1245 = vmul.f32 %v928, %v1219
  %v1246 = vmul.f32 %v929, %v1219
  %v1247 = vmul.f32 %v930, %v1219
  %v1248 = vmul.f32 %v931, %v1219
  %v1249 = vmul.f32 %v932, %v1219
  %v1250 = vmul.f32 %v933, %v1219
  %v1251 = vmul.f32 %v934, %v1219
  %v1252 = vmul.f32 %v935, %v1219
  %v1254 = vperm.slane %v1217, 0
  %v1256 = vadd.f32 %v1221, %v1254
  %v1257 = vadd.f32 %v1222, %v1254
  %v1258 = vadd.f32 %v1223, %v1254
  %v1259 = vadd.f32 %v1224, %v1254
  %v1260 = vadd.f32 %v1225, %v1254
  %v1261 = vadd.f32 %v1226, %v1254
  %v1262 = vadd.f32 %v1227, %v1254
  %v1263 = vadd.f32 %v1228, %v1254
  %v1264 = vadd.f32 %v1229, %v1254
  %v1265 = vadd.f32 %v1230, %v1254
  %v1266 = vadd.f32 %v1231, %v1254
  %v1267 = vadd.f32 %v1232, %v1254
  %v1268 = vadd.f32 %v1233, %v1254
  %v1269 = vadd.f32 %v1234, %v1254
  %v1270 = vadd.f32 %v1235, %v1254
  %v1271 = vadd.f32 %v1236, %v1254
  %v1272 = vadd.f32 %v1237, %v1254
  %v1273 = vadd.f32 %v1238, %v1254
  %v1274 = vadd.f32 %v1239, %v1254
  %v1275 = vadd.f32 %v1240, %v1254
  %v1276 = vadd.f32 %v1241, %v1254
  %v1277 = vadd.f32 %v1242, %v1254
  %v1278 = vadd.f32 %v1243, %v1254
  %v1279 = vadd.f32 %v1244, %v1254
  %v1280 = vadd.f32 %v1245, %v1254
  %v1281 = vadd.f32 %v1246, %v1254
  %v1282 = vadd.f32 %v1247, %v1254
  %v1283 = vadd.f32 %v1248, %v1254
  %v1284 = vadd.f32 %v1249, %v1254
  %v1285 = vadd.f32 %v1250, %v1254
  %v1286 = vadd.f32 %v1251, %v1254
  %v1287 = vadd.f32 %v1252, %v1254
  %v1288 = vmax.f32 %v1256, 0.0
  %v1289 = vmax.f32 %v1257, 0.0
  %v1290 = vmax.f32 %v1258, 0.0
  %v1291 = vmax.f32 %v1259, 0.0
  %v1292 = vmax.f32 %v1260, 0.0
  %v1293 = vmax.f32 %v1261, 0.0
  %v1294 = vmax.f32 %v1262, 0.0
  %v1295 = vmax.f32 %v1263, 0.0
  %v1296 = vmax.f32 %v1264, 0.0
  %v1297 = vmax.f32 %v1265, 0.0
  %v1298 = vmax.f32 %v1266, 0.0
  %v1299 = vmax.f32 %v1267, 0.0
  %v1300 = vmax.f32 %v1268, 0.0
  %v1301 = vmax.f32 %v1269, 0.0
  %v1302 = vmax.f32 %v1270, 0.0
  %v1303 = vmax.f32 %v1271, 0.0
  %v1304 = vmax.f32 %v1272, 0.0
  %v1305 = vmax.f32 %v1273, 0.0
  %v1306 = vmax.f32 %v1274, 0.0
  %v1307 = vmax.f32 %v1275, 0.0
  %v1308 = vmax.f32 %v1276, 0.0
  %v1309 = vmax.f32 %v1277, 0.0
  %v1310 = vmax.f32 %v1278, 0.0
  %v1311 = vmax.f32 %v1279, 0.0
  %v1312 = vmax.f32 %v1280, 0.0
  %v1313 = vmax.f32 %v1281, 0.0
  %v1314 = vmax.f32 %v1282, 0.0
  %v1315 = vmax.f32 %v1283, 0.0
  %v1316 = vmax.f32 %v1284, 0.0
  %v1317 = vmax.f32 %v1285, 0.0
  %v1318 = vmax.f32 %v1286, 0.0
  %v1319 = vmax.f32 %v1287, 0.0
  %1320 = vst.msk [vmem:[#allocation6] sm:$0xff] %vm131, %v1288
  %1321 = vst.msk [vmem:[#allocation6 + $0x8] sm:$0xff] %vm131, %v1289
  %1322 = vst.msk [vmem:[#allocation6 + $0x10] sm:$0xff] %vm131, %v1290
  %1323 = vst.msk [vmem:[#allocation6 + $0x18] sm:$0xff] %vm131, %v1291
  %1324 = vst.msk [vmem:[#allocation6 + $0x20] sm:$0xff] %vm131, %v1292
  %1325 = vst.msk [vmem:[#allocation6 + $0x28] sm:$0xff] %vm131, %v1293
  %1326 = vst.msk [vmem:[#allocation6 + $0x30] sm:$0xff] %vm131, %v1294
  %1327 = vst.msk [vmem:[#allocation6 + $0x38] sm:$0xff] %vm131, %v1295
  %1328 = vst.msk [vmem:[#allocation6 + $0x40] sm:$0xff] %vm131, %v1296
  %1329 = vst.msk [vmem:[#allocation6 + $0x48] sm:$0xff] %vm131, %v1297
  %1330 = vst.msk [vmem:[#allocation6 + $0x50] sm:$0xff] %vm131, %v1298
  %1331 = vst.msk [vmem:[#allocation6 + $0x58] sm:$0xff] %vm131, %v1299
  %1332 = vst.msk [vmem:[#allocation6 + $0x60] sm:$0xff] %vm131, %v1300
  %1333 = vst.msk [vmem:[#allocation6 + $0x68] sm:$0xff] %vm131, %v1301
  %1334 = vst.msk [vmem:[#allocation6 + $0x70] sm:$0xff] %vm131, %v1302
  %1335 = vst.msk [vmem:[#allocation6 + $0x78] sm:$0xff] %vm131, %v1303
  %1336 = vst.msk [vmem:[#allocation6 + $0x80] sm:$0xff] %vm131, %v1304
  %1337 = vst.msk [vmem:[#allocation6 + $0x88] sm:$0xff] %vm131, %v1305
  %1338 = vst.msk [vmem:[#allocation6 + $0x90] sm:$0xff] %vm131, %v1306
  %1339 = vst.msk [vmem:[#allocation6 + $0x98] sm:$0xff] %vm131, %v1307
  %1340 = vst.msk [vmem:[#allocation6 + $0xa0] sm:$0xff] %vm131, %v1308
  %1341 = vst.msk [vmem:[#allocation6 + $0xa8] sm:$0xff] %vm131, %v1309
  %1342 = vst.msk [vmem:[#allocation6 + $0xb0] sm:$0xff] %vm131, %v1310
  %1343 = vst.msk [vmem:[#allocation6 + $0xb8] sm:$0xff] %vm131, %v1311
  %1344 = vst.msk [vmem:[#allocation6 + $0xc0] sm:$0xff] %vm131, %v1312
  %1345 = vst.msk [vmem:[#allocation6 + $0xc8] sm:$0xff] %vm131, %v1313
  %1346 = vst.msk [vmem:[#allocation6 + $0xd0] sm:$0xff] %vm131, %v1314
  %1347 = vst.msk [vmem:[#allocation6 + $0xd8] sm:$0xff] %vm131, %v1315
  %1348 = vst.msk [vmem:[#allocation6 + $0xe0] sm:$0xff] %vm131, %v1316
  %1349 = vst.msk [vmem:[#allocation6 + $0xe8] sm:$0xff] %vm131, %v1317
  %1350 = vst.msk [vmem:[#allocation6 + $0xf0] sm:$0xff] %vm131, %v1318
  %1351 = vst.msk [vmem:[#allocation6 + $0xf8] sm:$0xff] %vm131, %v1319
  %v1352 = vld [vmem:[#allocation6] ss:$2 sm:$0xff]
  %s1353 = scalar_lea.vmem [#allocation6], 16
  %v1354 = vld [vmem:[%s1353] ss:$2 sm:$0xff]
  %s1355 = scalar_lea.vmem [#allocation6], 32
  %v1356 = vld [vmem:[%s1355] ss:$2 sm:$0xff]
  %s1357 = scalar_lea.vmem [#allocation6], 48
  %v1358 = vld [vmem:[%s1357] ss:$2 sm:$0xff]
  %s1359 = scalar_lea.vmem [#allocation6], 64
  %v1360 = vld [vmem:[%s1359] ss:$2 sm:$0xff]
  %s1361 = scalar_lea.vmem [#allocation6], 80
  %v1362 = vld [vmem:[%s1361] ss:$2 sm:$0xff]
  %s1363 = scalar_lea.vmem [#allocation6], 96
  %v1364 = vld [vmem:[%s1363] ss:$2 sm:$0xff]
  %s1365 = scalar_lea.vmem [#allocation6], 112
  %v1366 = vld [vmem:[%s1365] ss:$2 sm:$0xff]
  %s1367 = scalar_lea.vmem [#allocation6], 128
  %v1368 = vld [vmem:[%s1367] ss:$2 sm:$0xff]
  %s1369 = scalar_lea.vmem [#allocation6], 144
  %v1370 = vld [vmem:[%s1369] ss:$2 sm:$0xff]
  %s1371 = scalar_lea.vmem [#allocation6], 160
  %v1372 = vld [vmem:[%s1371] ss:$2 sm:$0xff]
  %s1373 = scalar_lea.vmem [#allocation6], 176
  %v1374 = vld [vmem:[%s1373] ss:$2 sm:$0xff]
  %s1375 = scalar_lea.vmem [#allocation6], 192
  %v1376 = vld [vmem:[%s1375] ss:$2 sm:$0xff]
  %s1377 = scalar_lea.vmem [#allocation6], 208
  %v1378 = vld [vmem:[%s1377] ss:$2 sm:$0xff]
  %s1379 = scalar_lea.vmem [#allocation6], 224
  %v1380 = vld [vmem:[%s1379] ss:$2 sm:$0xff]
  %s1381 = scalar_lea.vmem [#allocation6], 240
  %v1382 = vld [vmem:[%s1381] ss:$2 sm:$0xff]
  %s1383 = scalar_lea.vmem [#allocation6], 1
  %v1384 = vld [vmem:[%s1383] ss:$2 sm:$0xff]
  %s1385 = scalar_lea.vmem [#allocation6], 17
  %v1386 = vld [vmem:[%s1385] ss:$2 sm:$0xff]
  %s1387 = scalar_lea.vmem [#allocation6], 33
  %v1388 = vld [vmem:[%s1387] ss:$2 sm:$0xff]
  %s1389 = scalar_lea.vmem [#allocation6], 49
  %v1390 = vld [vmem:[%s1389] ss:$2 sm:$0xff]
  %s1391 = scalar_lea.vmem [#allocation6], 65
  %v1392 = vld [vmem:[%s1391] ss:$2 sm:$0xff]
  %s1393 = scalar_lea.vmem [#allocation6], 81
  %v1394 = vld [vmem:[%s1393] ss:$2 sm:$0xff]
  %s1395 = scalar_lea.vmem [#allocation6], 97
  %v1396 = vld [vmem:[%s1395] ss:$2 sm:$0xff]
  %s1397 = scalar_lea.vmem [#allocation6], 113
  %v1398 = vld [vmem:[%s1397] ss:$2 sm:$0xff]
  %s1399 = scalar_lea.vmem [#allocation6], 129
  %v1400 = vld [vmem:[%s1399] ss:$2 sm:$0xff]
  %s1401 = scalar_lea.vmem [#allocation6], 145
  %v1402 = vld [vmem:[%s1401] ss:$2 sm:$0xff]
  %s1403 = scalar_lea.vmem [#allocation6], 161
  %v1404 = vld [vmem:[%s1403] ss:$2 sm:$0xff]
  %s1405 = scalar_lea.vmem [#allocation6], 177
  %v1406 = vld [vmem:[%s1405] ss:$2 sm:$0xff]
  %s1407 = scalar_lea.vmem [#allocation6], 193
  %v1408 = vld [vmem:[%s1407] ss:$2 sm:$0xff]
  %s1409 = scalar_lea.vmem [#allocation6], 209
  %v1410 = vld [vmem:[%s1409] ss:$2 sm:$0xff]
  %s1411 = scalar_lea.vmem [#allocation6], 225
  %v1412 = vld [vmem:[%s1411] ss:$2 sm:$0xff]
  %s1413 = scalar_lea.vmem [#allocation6], 241
  %v1414 = vld [vmem:[%s1413] ss:$2 sm:$0xff]
  %v1415 = vmax.f32 %v1352, %v1384
  %v1416 = vmax.f32 %v1354, %v1386
  %v1417 = vmax.f32 %v1356, %v1388
  %v1418 = vmax.f32 %v1358, %v1390
  %v1419 = vmax.f32 %v1360, %v1392
  %v1420 = vmax.f32 %v1362, %v1394
  %v1421 = vmax.f32 %v1364, %v1396
  %v1422 = vmax.f32 %v1366, %v1398
  %v1423 = vmax.f32 %v1368, %v1400
  %v1424 = vmax.f32 %v1370, %v1402
  %v1425 = vmax.f32 %v1372, %v1404
  %v1426 = vmax.f32 %v1374, %v1406
  %v1427 = vmax.f32 %v1376, %v1408
  %v1428 = vmax.f32 %v1378, %v1410
  %v1429 = vmax.f32 %v1380, %v1412
  %v1430 = vmax.f32 %v1382, %v1414
  %v1431 = vmax.f32 %v1415, %v1416
  %1432 = vst.msk [vmem:[#allocation2 + $0x9] sm:$0xff] %vm131, %v1431
  %v1433 = vmax.f32 %v1417, %v1418
  %1434 = vst.msk [vmem:[#allocation2 + $0x11] sm:$0xff] %vm131, %v1433
  %v1435 = vmax.f32 %v1419, %v1420
  %1436 = vst.msk [vmem:[#allocation2 + $0x19] sm:$0xff] %vm131, %v1435
  %v1437 = vmax.f32 %v1421, %v1422
  %1438 = vst.msk [vmem:[#allocation2 + $0x21] sm:$0xff] %vm131, %v1437
  %v1439 = vmax.f32 %v1423, %v1424
  %1440 = vst.msk [vmem:[#allocation2 + $0x29] sm:$0xff] %vm131, %v1439
  %v1441 = vmax.f32 %v1425, %v1426
  %1442 = vst.msk [vmem:[#allocation2 + $0x31] sm:$0xff] %vm131, %v1441
  %v1443 = vmax.f32 %v1427, %v1428
  %1444 = vst.msk [vmem:[#allocation2 + $0x39] sm:$0xff] %vm131, %v1443
  %v1445 = vmax.f32 %v1429, %v1430
  %1446 = vst.msk [vmem:[#allocation2 + $0x41] sm:$0xff] %vm131, %v1445
  %v1447 = vld [vmem:[#allocation6 + $0x100] sm:$0xff]
  %v1448 = vld [vmem:[#allocation6 + $0x108] sm:$0xff]
  %v1449 = vld [vmem:[#allocation6 + $0x110] sm:$0xff]
  %v1450 = vld [vmem:[#allocation6 + $0x118] sm:$0xff]
  %v1451 = vld [vmem:[#allocation6 + $0x120] sm:$0xff]
  %v1452 = vld [vmem:[#allocation6 + $0x128] sm:$0xff]
  %v1453 = vld [vmem:[#allocation6 + $0x130] sm:$0xff]
  %v1454 = vld [vmem:[#allocation6 + $0x138] sm:$0xff]
  %v1455 = vld [vmem:[#allocation6 + $0x140] sm:$0xff]
  %v1456 = vld [vmem:[#allocation6 + $0x148] sm:$0xff]
  %v1457 = vld [vmem:[#allocation6 + $0x150] sm:$0xff]
  %v1458 = vld [vmem:[#allocation6 + $0x158] sm:$0xff]
  %v1459 = vld [vmem:[#allocation6 + $0x160] sm:$0xff]
  %v1460 = vld [vmem:[#allocation6 + $0x168] sm:$0xff]
  %v1461 = vld [vmem:[#allocation6 + $0x170] sm:$0xff]
  %v1462 = vld [vmem:[#allocation6 + $0x178] sm:$0xff]
  %v1463 = vld [vmem:[#allocation6 + $0x180] sm:$0xff]
  %v1464 = vld [vmem:[#allocation6 + $0x188] sm:$0xff]
  %v1465 = vld [vmem:[#allocation6 + $0x190] sm:$0xff]
  %v1466 = vld [vmem:[#allocation6 + $0x198] sm:$0xff]
  %v1467 = vld [vmem:[#allocation6 + $0x1a0] sm:$0xff]
  %v1468 = vld [vmem:[#allocation6 + $0x1a8] sm:$0xff]
  %v1469 = vld [vmem:[#allocation6 + $0x1b0] sm:$0xff]
  %v1470 = vld [vmem:[#allocation6 + $0x1b8] sm:$0xff]
  %v1471 = vld [vmem:[#allocation6 + $0x1c0] sm:$0xff]
  %v1472 = vld [vmem:[#allocation6 + $0x1c8] sm:$0xff]
  %v1473 = vld [vmem:[#allocation6 + $0x1d0] sm:$0xff]
  %v1474 = vld [vmem:[#allocation6 + $0x1d8] sm:$0xff]
  %v1475 = vld [vmem:[#allocation6 + $0x1e0] sm:$0xff]
  %v1476 = vld [vmem:[#allocation6 + $0x1e8] sm:$0xff]
  %v1477 = vld [vmem:[#allocation6 + $0x1f0] sm:$0xff]
  %v1478 = vld [vmem:[#allocation6 + $0x1f8] sm:$0xff]
  %v1479 = vsel %vm131, %v1447, 0.0
  %v1480 = vsel %vm131, %v1448, 0.0
  %v1481 = vadd.f32 %v1479, %v1480
  %v1482 = vsel %vm131, %v1449, 0.0
  %v1483 = vadd.f32 %v1481, %v1482
  %v1484 = vsel %vm131, %v1450, 0.0
  %v1485 = vadd.f32 %v1483, %v1484
  %v1486 = vsel %vm131, %v1451, 0.0
  %v1487 = vadd.f32 %v1485, %v1486
  %v1488 = vsel %vm131, %v1452, 0.0
  %v1489 = vadd.f32 %v1487, %v1488
  %v1490 = vsel %vm131, %v1453, 0.0
  %v1491 = vadd.f32 %v1489, %v1490
  %v1492 = vsel %vm131, %v1454, 0.0
  %v1493 = vadd.f32 %v1491, %v1492
  %v1494 = vsel %vm131, %v1455, 0.0
  %v1495 = vadd.f32 %v1493, %v1494
  %v1496 = vsel %vm131, %v1456, 0.0
  %v1497 = vadd.f32 %v1495, %v1496
  %v1498 = vsel %vm131, %v1457, 0.0
  %v1499 = vadd.f32 %v1497, %v1498
  %v1500 = vsel %vm131, %v1458, 0.0
  %v1501 = vadd.f32 %v1499, %v1500
  %v1502 = vsel %vm131, %v1459, 0.0
  %v1503 = vadd.f32 %v1501, %v1502
  %v1504 = vsel %vm131, %v1460, 0.0
  %v1505 = vadd.f32 %v1503, %v1504
  %v1506 = vsel %vm131, %v1461, 0.0
  %v1507 = vadd.f32 %v1505, %v1506
  %v1508 = vsel %vm131, %v1462, 0.0
  %v1509 = vadd.f32 %v1507, %v1508
  %v1510 = vsel %vm131, %v1463, 0.0
  %v1511 = vadd.f32 %v1509, %v1510
  %v1512 = vsel %vm131, %v1464, 0.0
  %v1513 = vadd.f32 %v1511, %v1512
  %v1514 = vsel %vm131, %v1465, 0.0
  %v1515 = vadd.f32 %v1513, %v1514
  %v1516 = vsel %vm131, %v1466, 0.0
  %v1517 = vadd.f32 %v1515, %v1516
  %v1518 = vsel %vm131, %v1467, 0.0
  %v1519 = vadd.f32 %v1517, %v1518
  %v1520 = vsel %vm131, %v1468, 0.0
  %v1521 = vadd.f32 %v1519, %v1520
  %v1522 = vsel %vm131, %v1469, 0.0
  %v1523 = vadd.f32 %v1521, %v1522
  %v1524 = vsel %vm131, %v1470, 0.0
  %v1525 = vadd.f32 %v1523, %v1524
  %v1526 = vsel %vm131, %v1471, 0.0
  %v1527 = vadd.f32 %v1525, %v1526
  %v1528 = vsel %vm131, %v1472, 0.0
  %v1529 = vadd.f32 %v1527, %v1528
  %v1530 = vsel %vm131, %v1473, 0.0
  %v1531 = vadd.f32 %v1529, %v1530
  %v1532 = vsel %vm131, %v1474, 0.0
  %v1533 = vadd.f32 %v1531, %v1532
  %v1534 = vsel %vm131, %v1475, 0.0
  %v1535 = vadd.f32 %v1533, %v1534
  %v1536 = vsel %vm131, %v1476, 0.0
  %v1537 = vadd.f32 %v1535, %v1536
  %v1538 = vsel %vm131, %v1477, 0.0
  %v1539 = vadd.f32 %v1537, %v1538
  %v1540 = vsel %vm131, %v1478, 0.0
  %v1541 = vadd.f32 %v1539, %v1540
  %v1542 = vrot.slane %v1541, 4
  %v1543 = vadd.f32 %v1541, %v1542
  %v1544 = vrot.slane %v1543, 2
  %v1545 = vadd.f32 %v1543, %v1544
  %v1546 = vrot.slane %v1545, 1
  %v1547 = vadd.f32 %v1545, %v1546
  %v1548 = vmul.f32 %v1447, %v1447
  %v1549 = vmul.f32 %v1448, %v1448
  %v1550 = vmul.f32 %v1449, %v1449
  %v1551 = vmul.f32 %v1450, %v1450
  %v1552 = vmul.f32 %v1451, %v1451
  %v1553 = vmul.f32 %v1452, %v1452
  %v1554 = vmul.f32 %v1453, %v1453
  %v1555 = vmul.f32 %v1454, %v1454
  %v1556 = vmul.f32 %v1455, %v1455
  %v1557 = vmul.f32 %v1456, %v1456
  %v1558 = vmul.f32 %v1457, %v1457
  %v1559 = vmul.f32 %v1458, %v1458
  %v1560 = vmul.f32 %v1459, %v1459
  %v1561 = vmul.f32 %v1460, %v1460
  %v1562 = vmul.f32 %v1461, %v1461
  %v1563 = vmul.f32 %v1462, %v1462
  %v1564 = vmul.f32 %v1463, %v1463
  %v1565 = vmul.f32 %v1464, %v1464
  %v1566 = vmul.f32 %v1465, %v1465
  %v1567 = vmul.f32 %v1466, %v1466
  %v1568 = vmul.f32 %v1467, %v1467
  %v1569 = vmul.f32 %v1468, %v1468
  %v1570 = vmul.f32 %v1469, %v1469
  %v1571 = vmul.f32 %v1470, %v1470
  %v1572 = vmul.f32 %v1471, %v1471
  %v1573 = vmul.f32 %v1472, %v1472
  %v1574 = vmul.f32 %v1473, %v1473
  %v1575 = vmul.f32 %v1474, %v1474
  %v1576 = vmul.f32 %v1475, %v1475
  %v1577 = vmul.f32 %v1476, %v1476
  %v1578 = vmul.f32 %v1477, %v1477
  %v1579 = vmul.f32 %v1478, %v1478
  %v1580 = vsel %vm131, %v1548, 0.0
  %v1581 = vsel %vm131, %v1549, 0.0
  %v1582 = vadd.f32 %v1580, %v1581
  %v1583 = vsel %vm131, %v1550, 0.0
  %v1584 = vadd.f32 %v1582, %v1583
  %v1585 = vsel %vm131, %v1551, 0.0
  %v1586 = vadd.f32 %v1584, %v1585
  %v1587 = vsel %vm131, %v1552, 0.0
  %v1588 = vadd.f32 %v1586, %v1587
  %v1589 = vsel %vm131, %v1553, 0.0
  %v1590 = vadd.f32 %v1588, %v1589
  %v1591 = vsel %vm131, %v1554, 0.0
  %v1592 = vadd.f32 %v1590, %v1591
  %v1593 = vsel %vm131, %v1555, 0.0
  %v1594 = vadd.f32 %v1592, %v1593
  %v1595 = vsel %vm131, %v1556, 0.0
  %v1596 = vadd.f32 %v1594, %v1595
  %v1597 = vsel %vm131, %v1557, 0.0
  %v1598 = vadd.f32 %v1596, %v1597
  %v1599 = vsel %vm131, %v1558, 0.0
  %v1600 = vadd.f32 %v1598, %v1599
  %v1601 = vsel %vm131, %v1559, 0.0
  %v1602 = vadd.f32 %v1600, %v1601
  %v1603 = vsel %vm131, %v1560, 0.0
  %v1604 = vadd.f32 %v1602, %v1603
  %v1605 = vsel %vm131, %v1561, 0.0
  %v1606 = vadd.f32 %v1604, %v1605
  %v1607 = vsel %vm131, %v1562, 0.0
  %v1608 = vadd.f32 %v1606, %v1607
  %v1609 = vsel %vm131, %v1563, 0.0
  %v1610 = vadd.f32 %v1608, %v1609
  %v1611 = vsel %vm131, %v1564, 0.0
  %v1612 = vadd.f32 %v1610, %v1611
  %v1613 = vsel %vm131, %v1565, 0.0
  %v1614 = vadd.f32 %v1612, %v1613
  %v1615 = vsel %vm131, %v1566, 0.0
  %v1616 = vadd.f32 %v1614, %v1615
  %v1617 = vsel %vm131, %v1567, 0.0
  %v1618 = vadd.f32 %v1616, %v1617
  %v1619 = vsel %vm131, %v1568, 0.0
  %v1620 = vadd.f32 %v1618, %v1619
  %v1621 = vsel %vm131, %v1569, 0.0
  %v1622 = vadd.f32 %v1620, %v1621
  %v1623 = vsel %vm131, %v1570, 0.0
  %v1624 = vadd.f32 %v1622, %v1623
  %v1625 = vsel %vm131, %v1571, 0.0
  %v1626 = vadd.f32 %v1624, %v1625
  %v1627 = vsel %vm131, %v1572, 0.0
  %v1628 = vadd.f32 %v1626, %v1627
  %v1629 = vsel %vm131, %v1573, 0.0
  %v1630 = vadd.f32 %v1628, %v1629
  %v1631 = vsel %vm131, %v1574, 0.0
  %v1632 = vadd.f32 %v1630, %v1631
  %v1633 = vsel %vm131, %v1575, 0.0
  %v1634 = vadd.f32 %v1632, %v1633
  %v1635 = vsel %vm131, %v1576, 0.0
  %v1636 = vadd.f32 %v1634, %v1635
  %v1637 = vsel %vm131, %v1577, 0.0
  %v1638 = vadd.f32 %v1636, %v1637
  %v1639 = vsel %vm131, %v1578, 0.0
  %v1640 = vadd.f32 %v1638, %v1639
  %v1641 = vsel %vm131, %v1579, 0.0
  %v1642 = vadd.f32 %v1640, %v1641
  %v1643 = vrot.slane %v1642, 4
  %v1644 = vadd.f32 %v1642, %v1643
  %v1645 = vrot.slane %v1644, 2
  %v1646 = vadd.f32 %v1644, %v1645
  %v1647 = vrot.slane %v1646, 1
  %v1648 = vadd.f32 %v1646, %v1647
  %v1650 = vsel %vm131, %v1547, 0
  %1652 = vmatpush.msra.mxu0 0.0
  %1653 = vmatpush.msra.mxu0 0.0
  %1654 = vmatpush.msra.mxu0 0.0
  %1655 = vmatpush.msra.mxu0 0.0
  %1656 = vmatpush.msra.mxu0 0.0
  %1657 = vmatpush.msra.mxu0 0.0
  %1658 = vmatpush.msra.mxu0 0.0
  %1659 = vmatpush.msra.mxu0 0.0
  %1660 = vmatpush.msra.mxu0 %v897
  %1661 = vmatpush.msra.mxu0 %v896
  %1662 = vmatpush.msra.mxu0 %v895
  %1663 = vmatpush.msra.mxu0 %v894
  %1664 = vmatpush.msra.mxu0 %v893
  %1665 = vmatpush.msra.mxu0 %v892
  %1666 = vmatpush.msra.mxu0 %v891
  %1667 = vmatpush.msra.mxu0 %v890
  %1668 = vmatmul.f32.gmra.mxu0 %v1650
  %v1669 = vpop.f32.mrf.mxu0
  %v1670 = vadd.f32 0.0, %v1669
  %1671 = vdwg.mxu0
  %v1672 = vmul.f32 %v1670, 0.001953125
  %v1674 = vsel %vm1130, %v1672, 0
  %1676 = vmatpush.msra.mxu0 0.0
  %1677 = vmatpush.msra.mxu0 0.0
  %1678 = vmatpush.msra.mxu0 0.0
  %1679 = vmatpush.msra.mxu0 0.0
  %1680 = vmatpush.msra.mxu0 0.0
  %1681 = vmatpush.msra.mxu0 0.0
  %1682 = vmatpush.msra.mxu0 0.0
  %1683 = vmatpush.msra.mxu0 0.0
  %1684 = vmatpush.msra.mxu0 0.0
  %1685 = vmatpush.msra.mxu0 0.0
  %1686 = vmatpush.msra.mxu0 0.0
  %1687 = vmatpush.msra.mxu0 0.0
  %1688 = vmatpush.msra.mxu0 %v901
  %1689 = vmatpush.msra.mxu0 %v900
  %1690 = vmatpush.msra.mxu0 %v899
  %1691 = vmatpush.msra.mxu0 %v898
  %1692 = vmatmul.f32.gmra.mxu0 %v1674
  %v1693 = vpop.f32.mrf.mxu0
  %v1694 = vadd.f32 0.0, %v1693
  %1695 = vdwg.mxu0
  %v1697 = vsel %vm131, %v1648, 0
  %1699 = vmatpush.msra.mxu0 0.0
  %1700 = vmatpush.msra.mxu0 0.0
  %1701 = vmatpush.msra.mxu0 0.0
  %1702 = vmatpush.msra.mxu0 0.0
  %1703 = vmatpush.msra.mxu0 0.0
  %1704 = vmatpush.msra.mxu0 0.0
  %1705 = vmatpush.msra.mxu0 0.0
  %1706 = vmatpush.msra.mxu0 0.0
  %1707 = vmatpush.msra.mxu0 %v897
  %1708 = vmatpush.msra.mxu0 %v896
  %1709 = vmatpush.msra.mxu0 %v895
  %1710 = vmatpush.msra.mxu0 %v894
  %1711 = vmatpush.msra.mxu0 %v893
  %1712 = vmatpush.msra.mxu0 %v892
  %1713 = vmatpush.msra.mxu0 %v891
  %1714 = vmatpush.msra.mxu0 %v890
  %1715 = vmatmul.f32.gmra.mxu0 %v1697
  %v1716 = vpop.f32.mrf.mxu0
  %v1717 = vadd.f32 0.0, %v1716
  %1718 = vdwg.mxu0
  %v1719 = vmul.f32 %v1717, 0.001953125
  %v1721 = vsel %vm1130, %v1719, 0
  %1723 = vmatpush.msra.mxu0 0.0
  %1724 = vmatpush.msra.mxu0 0.0
  %1725 = vmatpush.msra.mxu0 0.0
  %1726 = vmatpush.msra.mxu0 0.0
  %1727 = vmatpush.msra.mxu0 0.0
  %1728 = vmatpush.msra.mxu0 0.0
  %1729 = vmatpush.msra.mxu0 0.0
  %1730 = vmatpush.msra.mxu0 0.0
  %1731 = vmatpush.msra.mxu0 0.0
  %1732 = vmatpush.msra.mxu0 0.0
  %1733 = vmatpush.msra.mxu0 0.0
  %1734 = vmatpush.msra.mxu0 0.0
  %1735 = vmatpush.msra.mxu0 %v901
  %1736 = vmatpush.msra.mxu0 %v900
  %1737 = vmatpush.msra.mxu0 %v899
  %1738 = vmatpush.msra.mxu0 %v898
  %1739 = vmatmul.f32.gmra.mxu0 %v1721
  %v1740 = vpop.f32.mrf.mxu0
  %v1741 = vadd.f32 0.0, %v1740
  %1742 = vdwg.mxu0
  %v1743 = vmul.f32 %v1694, %v1694
  %v1744 = vsub.f32 %v1741, %v1743
  %v1745 = vmax.f32 %v1744, 0.0
  %v1746 = vadd.f32 %v1745, 1e-05
  %v1747 = vrsqrt.pop %v1746
  %v1748 = vmul.f32 %v1747, %v1746
  %v1749 = vmul.f32 %v1748, %v1747
  %v1750 = vmul.f32 0.5, %v1749
  %v1751 = vsub.f32 1.5, %v1750
  %v1752 = vmul.f32 %v1747, %v1751
  %vm1753 = vweird.f32 %v1746
  %vm1754 = vweird.f32 %v1747
  %vm1755 = vmor %vm1753, %vm1754
  %v1756 = vsel %vm1755, %v1747, %v1752
  %v1757 = vmul.f32 %v902, %v1756
  %v1758 = vmul.f32 %v1694, %v1757
  %v1759 = vsub.f32 %v903, %v1758
  %v1761 = vperm.slane %v1757, 0
  %v1763 = vmul.f32 %v1447, %v1761
  %v1764 = vmul.f32 %v1448, %v1761
  %v1765 = vmul.f32 %v1449, %v1761
  %v1766 = vmul.f32 %v1450, %v1761
  %v1767 = vmul.f32 %v1451, %v1761
  %v1768 = vmul.f32 %v1452, %v1761
  %v1769 = vmul.f32 %v1453, %v1761
  %v1770 = vmul.f32 %v1454, %v1761
  %v1771 = vmul.f32 %v1455, %v1761
  %v1772 = vmul.f32 %v1456, %v1761
  %v1773 = vmul.f32 %v1457, %v1761
  %v1774 = vmul.f32 %v1458, %v1761
  %v1775 = vmul.f32 %v1459, %v1761
  %v1776 = vmul.f32 %v1460, %v1761
  %v1777 = vmul.f32 %v1461, %v1761
  %v1778 = vmul.f32 %v1462, %v1761
  %v1779 = vmul.f32 %v1463, %v1761
  %v1780 = vmul.f32 %v1464, %v1761
  %v1781 = vmul.f32 %v1465, %v1761
  %v1782 = vmul.f32 %v1466, %v1761
  %v1783 = vmul.f32 %v1467, %v1761
  %v1784 = vmul.f32 %v1468, %v1761
  %v1785 = vmul.f32 %v1469, %v1761
  %v1786 = vmul.f32 %v1470, %v1761
  %v1787 = vmul.f32 %v1471, %v1761
  %v1788 = vmul.f32 %v1472, %v1761
  %v1789 = vmul.f32 %v1473, %v1761
  %v1790 = vmul.f32 %v1474, %v1761
  %v1791 = vmul.f32 %v1475, %v1761
  %v1792 = vmul.f32 %v1476, %v1761
  %v1793 = vmul.f32 %v1477, %v1761
  %v1794 = vmul.f32 %v1478, %v1761
  %v1796 = vperm.slane %v1759, 0
  %v1798 = vadd.f32 %v1763, %v1796
  %v1799 = vadd.f32 %v1764, %v1796
  %v1800 = vadd.f32 %v1765, %v1796
  %v1801 = vadd.f32 %v1766, %v1796
  %v1802 = vadd.f32 %v1767, %v1796
  %v1803 = vadd.f32 %v1768, %v1796
  %v1804 = vadd.f32 %v1769, %v1796
  %v1805 = vadd.f32 %v1770, %v1796
  %v1806 = vadd.f32 %v1771, %v1796
  %v1807 = vadd.f32 %v1772, %v1796
  %v1808 = vadd.f32 %v1773, %v1796
  %v1809 = vadd.f32 %v1774, %v1796
  %v1810 = vadd.f32 %v1775, %v1796
  %v1811 = vadd.f32 %v1776, %v1796
  %v1812 = vadd.f32 %v1777, %v1796
  %v1813 = vadd.f32 %v1778, %v1796
  %v1814 = vadd.f32 %v1779, %v1796
  %v1815 = vadd.f32 %v1780, %v1796
  %v1816 = vadd.f32 %v1781, %v1796
  %v1817 = vadd.f32 %v1782, %v1796
  %v1818 = vadd.f32 %v1783, %v1796
  %v1819 = vadd.f32 %v1784, %v1796
  %v1820 = vadd.f32 %v1785, %v1796
  %v1821 = vadd.f32 %v1786, %v1796
  %v1822 = vadd.f32 %v1787, %v1796
  %v1823 = vadd.f32 %v1788, %v1796
  %v1824 = vadd.f32 %v1789, %v1796
  %v1825 = vadd.f32 %v1790, %v1796
  %v1826 = vadd.f32 %v1791, %v1796
  %v1827 = vadd.f32 %v1792, %v1796
  %v1828 = vadd.f32 %v1793, %v1796
  %v1829 = vadd.f32 %v1794, %v1796
  %v1830 = vmax.f32 %v1798, 0.0
  %v1831 = vmax.f32 %v1799, 0.0
  %v1832 = vmax.f32 %v1800, 0.0
  %v1833 = vmax.f32 %v1801, 0.0
  %v1834 = vmax.f32 %v1802, 0.0
  %v1835 = vmax.f32 %v1803, 0.0
  %v1836 = vmax.f32 %v1804, 0.0
  %v1837 = vmax.f32 %v1805, 0.0
  %v1838 = vmax.f32 %v1806, 0.0
  %v1839 = vmax.f32 %v1807, 0.0
  %v1840 = vmax.f32 %v1808, 0.0
  %v1841 = vmax.f32 %v1809, 0.0
  %v1842 = vmax.f32 %v1810, 0.0
  %v1843 = vmax.f32 %v1811, 0.0
  %v1844 = vmax.f32 %v1812, 0.0
  %v1845 = vmax.f32 %v1813, 0.0
  %v1846 = vmax.f32 %v1814, 0.0
  %v1847 = vmax.f32 %v1815, 0.0
  %v1848 = vmax.f32 %v1816, 0.0
  %v1849 = vmax.f32 %v1817, 0.0
  %v1850 = vmax.f32 %v1818, 0.0
  %v1851 = vmax.f32 %v1819, 0.0
  %v1852 = vmax.f32 %v1820, 0.0
  %v1853 = vmax.f32 %v1821, 0.0
  %v1854 = vmax.f32 %v1822, 0.0
  %v1855 = vmax.f32 %v1823, 0.0
  %v1856 = vmax.f32 %v1824, 0.0
  %v1857 = vmax.f32 %v1825, 0.0
  %v1858 = vmax.f32 %v1826, 0.0
  %v1859 = vmax.f32 %v1827, 0.0
  %v1860 = vmax.f32 %v1828, 0.0
  %v1861 = vmax.f32 %v1829, 0.0
  %1862 = vst.msk [vmem:[#allocation6 + $0x100] sm:$0xff] %vm131, %v1830
  %1863 = vst.msk [vmem:[#allocation6 + $0x108] sm:$0xff] %vm131, %v1831
  %1864 = vst.msk [vmem:[#allocation6 + $0x110] sm:$0xff] %vm131, %v1832
  %1865 = vst.msk [vmem:[#allocation6 + $0x118] sm:$0xff] %vm131, %v1833
  %1866 = vst.msk [vmem:[#allocation6 + $0x120] sm:$0xff] %vm131, %v1834
  %1867 = vst.msk [vmem:[#allocation6 + $0x128] sm:$0xff] %vm131, %v1835
  %1868 = vst.msk [vmem:[#allocation6 + $0x130] sm:$0xff] %vm131, %v1836
  %1869 = vst.msk [vmem:[#allocation6 + $0x138] sm:$0xff] %vm131, %v1837
  %1870 = vst.msk [vmem:[#allocation6 + $0x140] sm:$0xff] %vm131, %v1838
  %1871 = vst.msk [vmem:[#allocation6 + $0x148] sm:$0xff] %vm131, %v1839
  %1872 = vst.msk [vmem:[#allocation6 + $0x150] sm:$0xff] %vm131, %v1840
  %1873 = vst.msk [vmem:[#allocation6 + $0x158] sm:$0xff] %vm131, %v1841
  %1874 = vst.msk [vmem:[#allocation6 + $0x160] sm:$0xff] %vm131, %v1842
  %1875 = vst.msk [vmem:[#allocation6 + $0x168] sm:$0xff] %vm131, %v1843
  %1876 = vst.msk [vmem:[#allocation6 + $0x170] sm:$0xff] %vm131, %v1844
  %1877 = vst.msk [vmem:[#allocation6 + $0x178] sm:$0xff] %vm131, %v1845
  %1878 = vst.msk [vmem:[#allocation6 + $0x180] sm:$0xff] %vm131, %v1846
  %1879 = vst.msk [vmem:[#allocation6 + $0x188] sm:$0xff] %vm131, %v1847
  %1880 = vst.msk [vmem:[#allocation6 + $0x190] sm:$0xff] %vm131, %v1848
  %1881 = vst.msk [vmem:[#allocation6 + $0x198] sm:$0xff] %vm131, %v1849
  %1882 = vst.msk [vmem:[#allocation6 + $0x1a0] sm:$0xff] %vm131, %v1850
  %1883 = vst.msk [vmem:[#allocation6 + $0x1a8] sm:$0xff] %vm131, %v1851
  %1884 = vst.msk [vmem:[#allocation6 + $0x1b0] sm:$0xff] %vm131, %v1852
  %1885 = vst.msk [vmem:[#allocation6 + $0x1b8] sm:$0xff] %vm131, %v1853
  %1886 = vst.msk [vmem:[#allocation6 + $0x1c0] sm:$0xff] %vm131, %v1854
  %1887 = vst.msk [vmem:[#allocation6 + $0x1c8] sm:$0xff] %vm131, %v1855
  %1888 = vst.msk [vmem:[#allocation6 + $0x1d0] sm:$0xff] %vm131, %v1856
  %1889 = vst.msk [vmem:[#allocation6 + $0x1d8] sm:$0xff] %vm131, %v1857
  %1890 = vst.msk [vmem:[#allocation6 + $0x1e0] sm:$0xff] %vm131, %v1858
  %1891 = vst.msk [vmem:[#allocation6 + $0x1e8] sm:$0xff] %vm131, %v1859
  %1892 = vst.msk [vmem:[#allocation6 + $0x1f0] sm:$0xff] %vm131, %v1860
  %1893 = vst.msk [vmem:[#allocation6 + $0x1f8] sm:$0xff] %vm131, %v1861
  %s1894 = scalar_lea.vmem [#allocation6], 256
  %v1895 = vld [vmem:[%s1894] ss:$2 sm:$0xff]
  %s1896 = scalar_lea.vmem [#allocation6], 272
  %v1897 = vld [vmem:[%s1896] ss:$2 sm:$0xff]
  %s1898 = scalar_lea.vmem [#allocation6], 288
  %v1899 = vld [vmem:[%s1898] ss:$2 sm:$0xff]
  %s1900 = scalar_lea.vmem [#allocation6], 304
  %v1901 = vld [vmem:[%s1900] ss:$2 sm:$0xff]
  %s1902 = scalar_lea.vmem [#allocation6], 320
  %v1903 = vld [vmem:[%s1902] ss:$2 sm:$0xff]
  %s1904 = scalar_lea.vmem [#allocation6], 336
  %v1905 = vld [vmem:[%s1904] ss:$2 sm:$0xff]
  %s1906 = scalar_lea.vmem [#allocation6], 352
  %v1907 = vld [vmem:[%s1906] ss:$2 sm:$0xff]
  %s1908 = scalar_lea.vmem [#allocation6], 368
  %v1909 = vld [vmem:[%s1908] ss:$2 sm:$0xff]
  %s1910 = scalar_lea.vmem [#allocation6], 384
  %v1911 = vld [vmem:[%s1910] ss:$2 sm:$0xff]
  %s1912 = scalar_lea.vmem [#allocation6], 400
  %v1913 = vld [vmem:[%s1912] ss:$2 sm:$0xff]
  %s1914 = scalar_lea.vmem [#allocation6], 416
  %v1915 = vld [vmem:[%s1914] ss:$2 sm:$0xff]
  %s1916 = scalar_lea.vmem [#allocation6], 432
  %v1917 = vld [vmem:[%s1916] ss:$2 sm:$0xff]
  %s1918 = scalar_lea.vmem [#allocation6], 448
  %v1919 = vld [vmem:[%s1918] ss:$2 sm:$0xff]
  %s1920 = scalar_lea.vmem [#allocation6], 464
  %v1921 = vld [vmem:[%s1920] ss:$2 sm:$0xff]
  %s1922 = scalar_lea.vmem [#allocation6], 480
  %v1923 = vld [vmem:[%s1922] ss:$2 sm:$0xff]
  %s1924 = scalar_lea.vmem [#allocation6], 496
  %v1925 = vld [vmem:[%s1924] ss:$2 sm:$0xff]
  %s1926 = scalar_lea.vmem [#allocation6], 257
  %v1927 = vld [vmem:[%s1926] ss:$2 sm:$0xff]
  %s1928 = scalar_lea.vmem [#allocation6], 273
  %v1929 = vld [vmem:[%s1928] ss:$2 sm:$0xff]
  %s1930 = scalar_lea.vmem [#allocation6], 289
  %v1931 = vld [vmem:[%s1930] ss:$2 sm:$0xff]
  %s1932 = scalar_lea.vmem [#allocation6], 305
  %v1933 = vld [vmem:[%s1932] ss:$2 sm:$0xff]
  %s1934 = scalar_lea.vmem [#allocation6], 321
  %v1935 = vld [vmem:[%s1934] ss:$2 sm:$0xff]
  %s1936 = scalar_lea.vmem [#allocation6], 337
  %v1937 = vld [vmem:[%s1936] ss:$2 sm:$0xff]
  %s1938 = scalar_lea.vmem [#allocation6], 353
  %v1939 = vld [vmem:[%s1938] ss:$2 sm:$0xff]
  %s1940 = scalar_lea.vmem [#allocation6], 369
  %v1941 = vld [vmem:[%s1940] ss:$2 sm:$0xff]
  %s1942 = scalar_lea.vmem [#allocation6], 385
  %v1943 = vld [vmem:[%s1942] ss:$2 sm:$0xff]
  %s1944 = scalar_lea.vmem [#allocation6], 401
  %v1945 = vld [vmem:[%s1944] ss:$2 sm:$0xff]
  %s1946 = scalar_lea.vmem [#allocation6], 417
  %v1947 = vld [vmem:[%s1946] ss:$2 sm:$0xff]
  %s1948 = scalar_lea.vmem [#allocation6], 433
  %v1949 = vld [vmem:[%s1948] ss:$2 sm:$0xff]
  %s1950 = scalar_lea.vmem [#allocation6], 449
  %v1951 = vld [vmem:[%s1950] ss:$2 sm:$0xff]
  %s1952 = scalar_lea.vmem [#allocation6], 465
  %v1953 = vld [vmem:[%s1952] ss:$2 sm:$0xff]
  %s1954 = scalar_lea.vmem [#allocation6], 481
  %v1955 = vld [vmem:[%s1954] ss:$2 sm:$0xff]
  %s1956 = scalar_lea.vmem [#allocation6], 497
  %v1957 = vld [vmem:[%s1956] ss:$2 sm:$0xff]
  %v1958 = vmax.f32 %v1895, %v1927
  %v1959 = vmax.f32 %v1897, %v1929
  %v1960 = vmax.f32 %v1899, %v1931
  %v1961 = vmax.f32 %v1901, %v1933
  %v1962 = vmax.f32 %v1903, %v1935
  %v1963 = vmax.f32 %v1905, %v1937
  %v1964 = vmax.f32 %v1907, %v1939
  %v1965 = vmax.f32 %v1909, %v1941
  %v1966 = vmax.f32 %v1911, %v1943
  %v1967 = vmax.f32 %v1913, %v1945
  %v1968 = vmax.f32 %v1915, %v1947
  %v1969 = vmax.f32 %v1917, %v1949
  %v1970 = vmax.f32 %v1919, %v1951
  %v1971 = vmax.f32 %v1921, %v1953
  %v1972 = vmax.f32 %v1923, %v1955
  %v1973 = vmax.f32 %v1925, %v1957
  %v1974 = vmax.f32 %v1958, %v1959
  %1975 = vst.msk [vmem:[#allocation2 + $0x5b] sm:$0xff] %vm131, %v1974
  %v1976 = vmax.f32 %v1960, %v1961
  %1977 = vst.msk [vmem:[#allocation2 + $0x63] sm:$0xff] %vm131, %v1976
  %v1978 = vmax.f32 %v1962, %v1963
  %1979 = vst.msk [vmem:[#allocation2 + $0x6b] sm:$0xff] %vm131, %v1978
  %v1980 = vmax.f32 %v1964, %v1965
  %1981 = vst.msk [vmem:[#allocation2 + $0x73] sm:$0xff] %vm131, %v1980
  %v1982 = vmax.f32 %v1966, %v1967
  %1983 = vst.msk [vmem:[#allocation2 + $0x7b] sm:$0xff] %vm131, %v1982
  %v1984 = vmax.f32 %v1968, %v1969
  %1985 = vst.msk [vmem:[#allocation2 + $0x83] sm:$0xff] %vm131, %v1984
  %v1986 = vmax.f32 %v1970, %v1971
  %1987 = vst.msk [vmem:[#allocation2 + $0x8b] sm:$0xff] %vm131, %v1986
  %v1988 = vmax.f32 %v1972, %v1973
  %1989 = vst.msk [vmem:[#allocation2 + $0x93] sm:$0xff] %vm131, %v1988
  %v1990 = vld [vmem:[%s27] sm:$0xff]
  %v1991 = vld [vmem:[%s27 + $0x8] sm:$0xff]
  %v1992 = vld [vmem:[%s27 + $0x10] sm:$0xff]
  %v1993 = vld [vmem:[%s27 + $0x18] sm:$0xff]
  %v1994 = vld [vmem:[%s27 + $0x20] sm:$0xff]
  %v1995 = vld [vmem:[%s27 + $0x28] sm:$0xff]
  %v1996 = vld [vmem:[%s27 + $0x30] sm:$0xff]
  %v1997 = vld [vmem:[%s27 + $0x38] sm:$0xff]
  %v1998 = vld [vmem:[%s29] sm:$0xff]
  %v1999 = vld [vmem:[%s29 + $0x8] sm:$0xff]
  %v2000 = vld [vmem:[%s29 + $0x10] sm:$0xff]
  %v2001 = vld [vmem:[%s29 + $0x18] sm:$0xff]
  %v2002 = vld [vmem:[%s29 + $0x20] sm:$0xff]
  %v2003 = vld [vmem:[%s29 + $0x28] sm:$0xff]
  %v2004 = vld [vmem:[%s29 + $0x30] sm:$0xff]
  %v2005 = vld [vmem:[%s29 + $0x38] sm:$0xff]
  %v2006 = vld [vmem:[#allocation2] sm:$0xff]
  %v2007 = vld [vmem:[#allocation2 + $0x8] sm:$0xff]
  %v2008 = vld [vmem:[#allocation2 + $0x10] sm:$0xff]
  %v2009 = vld [vmem:[#allocation2 + $0x18] sm:$0xff]
  %v2010 = vld [vmem:[#allocation2 + $0x20] sm:$0xff]
  %v2011 = vld [vmem:[#allocation2 + $0x28] sm:$0xff]
  %v2012 = vld [vmem:[#allocation2 + $0x30] sm:$0xff]
  %v2013 = vld [vmem:[#allocation2 + $0x38] sm:$0xff]
  %2015 = vset.pattern.permute.xlu0 0
  %2016 = vperm.xlu0 %2015, %v1990
  %v2017 = vpop.permute.xlu0 %2016
  %2020 = vset.pattern.permute.xlu0 0
  %2021 = vperm.xlu0 %2020, %v1991
  %v2022 = vpop.permute.xlu0 %2021
  %2025 = vset.pattern.permute.xlu0 0
  %2026 = vperm.xlu0 %2025, %v1992
  %v2027 = vpop.permute.xlu0 %2026
  %2030 = vset.pattern.permute.xlu0 0
  %2031 = vperm.xlu0 %2030, %v1993
  %v2032 = vpop.permute.xlu0 %2031
  %2035 = vset.pattern.permute.xlu0 0
  %2036 = vperm.xlu0 %2035, %v1994
  %v2037 = vpop.permute.xlu0 %2036
  %2040 = vset.pattern.permute.xlu0 0
  %2041 = vperm.xlu0 %2040, %v1995
  %v2042 = vpop.permute.xlu0 %2041
  %2045 = vset.pattern.permute.xlu0 0
  %2046 = vperm.xlu0 %2045, %v1996
  %v2047 = vpop.permute.xlu0 %2046
  %2050 = vset.pattern.permute.xlu0 0
  %2051 = vperm.xlu0 %2050, %v1997
  %v2052 = vpop.permute.xlu0 %2051
  %v2054 = vmul.f32 %v2006, %v2017
  %v2055 = vmul.f32 %v2007, %v2022
  %v2056 = vmul.f32 %v2008, %v2027
  %v2057 = vmul.f32 %v2009, %v2032
  %v2058 = vmul.f32 %v2010, %v2037
  %v2059 = vmul.f32 %v2011, %v2042
  %v2060 = vmul.f32 %v2012, %v2047
  %v2061 = vmul.f32 %v2013, %v2052
  %2062 = vst.msk [vmem:[#allocation5] sm:$0xff] %vm131, %v2054
  %2063 = vst.msk [vmem:[#allocation5 + $0x48] sm:$0xff] %vm131, %v2055
  %2064 = vst.msk [vmem:[#allocation5 + $0x90] sm:$0xff] %vm131, %v2056
  %2065 = vst.msk [vmem:[#allocation5 + $0xd8] sm:$0xff] %vm131, %v2057
  %2066 = vst.msk [vmem:[#allocation5 + $0x120] sm:$0xff] %vm131, %v2058
  %2067 = vst.msk [vmem:[#allocation5 + $0x168] sm:$0xff] %vm131, %v2059
  %2068 = vst.msk [vmem:[#allocation5 + $0x1b0] sm:$0xff] %vm131, %v2060
  %2069 = vst.msk [vmem:[#allocation5 + $0x1f8] sm:$0xff] %vm131, %v2061
  %v2070 = vld [vmem:[#allocation2 + $0x1] sm:$0xff]
  %v2071 = vld [vmem:[#allocation2 + $0x9] sm:$0xff]
  %v2072 = vld [vmem:[#allocation2 + $0x11] sm:$0xff]
  %v2073 = vld [vmem:[#allocation2 + $0x19] sm:$0xff]
  %v2074 = vld [vmem:[#allocation2 + $0x21] sm:$0xff]
  %v2075 = vld [vmem:[#allocation2 + $0x29] sm:$0xff]
  %v2076 = vld [vmem:[#allocation2 + $0x31] sm:$0xff]
  %v2077 = vld [vmem:[#allocation2 + $0x39] sm:$0xff]
  %2078 = vst.msk [vmem:[#allocation5 + $0x8] sm:$0xff] %vm131, %v2070
  %2079 = vst.msk [vmem:[#allocation5 + $0x50] sm:$0xff] %vm131, %v2071
  %2080 = vst.msk [vmem:[#allocation5 + $0x98] sm:$0xff] %vm131, %v2072
  %2081 = vst.msk [vmem:[#allocation5 + $0xe0] sm:$0xff] %vm131, %v2073
  %2082 = vst.msk [vmem:[#allocation5 + $0x128] sm:$0xff] %vm131, %v2074
  %2083 = vst.msk [vmem:[#allocation5 + $0x170] sm:$0xff] %vm131, %v2075
  %2084 = vst.msk [vmem:[#allocation5 + $0x1b8] sm:$0xff] %vm131, %v2076
  %2085 = vst.msk [vmem:[#allocation5 + $0x200] sm:$0xff] %vm131, %v2077
  %v2086 = vld [vmem:[#allocation2 + $0x2] sm:$0xff]
  %v2087 = vld [vmem:[#allocation2 + $0xa] sm:$0xff]
  %v2088 = vld [vmem:[#allocation2 + $0x12] sm:$0xff]
  %v2089 = vld [vmem:[#allocation2 + $0x1a] sm:$0xff]
  %v2090 = vld [vmem:[#allocation2 + $0x22] sm:$0xff]
  %v2091 = vld [vmem:[#allocation2 + $0x2a] sm:$0xff]
  %v2092 = vld [vmem:[#allocation2 + $0x32] sm:$0xff]
  %v2093 = vld [vmem:[#allocation2 + $0x3a] sm:$0xff]
  %2095 = vset.pattern.permute.xlu0 0
  %2096 = vperm.xlu0 %2095, %v1998
  %v2097 = vpop.permute.xlu0 %2096
  %2100 = vset.pattern.permute.xlu0 0
  %2101 = vperm.xlu0 %2100, %v1999
  %v2102 = vpop.permute.xlu0 %2101
  %2105 = vset.pattern.permute.xlu0 0
  %2106 = vperm.xlu0 %2105, %v2000
  %v2107 = vpop.permute.xlu0 %2106
  %2110 = vset.pattern.permute.xlu0 0
  %2111 = vperm.xlu0 %2110, %v2001
  %v2112 = vpop.permute.xlu0 %2111
  %2115 = vset.pattern.permute.xlu0 0
  %2116 = vperm.xlu0 %2115, %v2002
  %v2117 = vpop.permute.xlu0 %2116
  %2120 = vset.pattern.permute.xlu0 0
  %2121 = vperm.xlu0 %2120, %v2003
  %v2122 = vpop.permute.xlu0 %2121
  %2125 = vset.pattern.permute.xlu0 0
  %2126 = vperm.xlu0 %2125, %v2004
  %v2127 = vpop.permute.xlu0 %2126
  %2130 = vset.pattern.permute.xlu0 0
  %2131 = vperm.xlu0 %2130, %v2005
  %v2132 = vpop.permute.xlu0 %2131
  %v2134 = vmul.f32 %v2086, %v2097
  %v2135 = vmul.f32 %v2087, %v2102
  %v2136 = vmul.f32 %v2088, %v2107
  %v2137 = vmul.f32 %v2089, %v2112
  %v2138 = vmul.f32 %v2090, %v2117
  %v2139 = vmul.f32 %v2091, %v2122
  %v2140 = vmul.f32 %v2092, %v2127
  %v2141 = vmul.f32 %v2093, %v2132
  %2142 = vst.msk [vmem:[#allocation5 + $0x10] sm:$0xff] %vm131, %v2134
  %2143 = vst.msk [vmem:[#allocation5 + $0x58] sm:$0xff] %vm131, %v2135
  %2144 = vst.msk [vmem:[#allocation5 + $0xa0] sm:$0xff] %vm131, %v2136
  %2145 = vst.msk [vmem:[#allocation5 + $0xe8] sm:$0xff] %vm131, %v2137
  %2146 = vst.msk [vmem:[#allocation5 + $0x130] sm:$0xff] %vm131, %v2138
  %2147 = vst.msk [vmem:[#allocation5 + $0x178] sm:$0xff] %vm131, %v2139
  %2148 = vst.msk [vmem:[#allocation5 + $0x1c0] sm:$0xff] %vm131, %v2140
  %2149 = vst.msk [vmem:[#allocation5 + $0x208] sm:$0xff] %vm131, %v2141
  %v2150 = vld [vmem:[#allocation2 + $0x8] sm:$0xff]
  %v2151 = vld [vmem:[#allocation2 + $0x10] sm:$0xff]
  %v2152 = vld [vmem:[#allocation2 + $0x18] sm:$0xff]
  %v2153 = vld [vmem:[#allocation2 + $0x20] sm:$0xff]
  %v2154 = vld [vmem:[#allocation2 + $0x28] sm:$0xff]
  %v2155 = vld [vmem:[#allocation2 + $0x30] sm:$0xff]
  %v2156 = vld [vmem:[#allocation2 + $0x38] sm:$0xff]
  %v2157 = vld [vmem:[#allocation2 + $0x40] sm:$0xff]
  %v2158 = vmul.f32 %v2150, %v2017
  %v2159 = vmul.f32 %v2151, %v2022
  %v2160 = vmul.f32 %v2152, %v2027
  %v2161 = vmul.f32 %v2153, %v2032
  %v2162 = vmul.f32 %v2154, %v2037
  %v2163 = vmul.f32 %v2155, %v2042
  %v2164 = vmul.f32 %v2156, %v2047
  %v2165 = vmul.f32 %v2157, %v2052
  %2166 = vst.msk [vmem:[#allocation5 + $0x18] sm:$0xff] %vm131, %v2158
  %2167 = vst.msk [vmem:[#allocation5 + $0x60] sm:$0xff] %vm131, %v2159
  %2168 = vst.msk [vmem:[#allocation5 + $0xa8] sm:$0xff] %vm131, %v2160
  %2169 = vst.msk [vmem:[#allocation5 + $0xf0] sm:$0xff] %vm131, %v2161
  %2170 = vst.msk [vmem:[#allocation5 + $0x138] sm:$0xff] %vm131, %v2162
  %2171 = vst.msk [vmem:[#allocation5 + $0x180] sm:$0xff] %vm131, %v2163
  %2172 = vst.msk [vmem:[#allocation5 + $0x1c8] sm:$0xff] %vm131, %v2164
  %2173 = vst.msk [vmem:[#allocation5 + $0x210] sm:$0xff] %vm131, %v2165
  %v2174 = vld [vmem:[#allocation2 + $0x9] sm:$0xff]
  %v2175 = vld [vmem:[#allocation2 + $0x11] sm:$0xff]
  %v2176 = vld [vmem:[#allocation2 + $0x19] sm:$0xff]
  %v2177 = vld [vmem:[#allocation2 + $0x21] sm:$0xff]
  %v2178 = vld [vmem:[#allocation2 + $0x29] sm:$0xff]
  %v2179 = vld [vmem:[#allocation2 + $0x31] sm:$0xff]
  %v2180 = vld [vmem:[#allocation2 + $0x39] sm:$0xff]
  %v2181 = vld [vmem:[#allocation2 + $0x41] sm:$0xff]
  %2182 = vst.msk [vmem:[#allocation5 + $0x20] sm:$0xff] %vm131, %v2174
  %2183 = vst.msk [vmem:[#allocation5 + $0x68] sm:$0xff] %vm131, %v2175
  %2184 = vst.msk [vmem:[#allocation5 + $0xb0] sm:$0xff] %vm131, %v2176
  %2185 = vst.msk [vmem:[#allocation5 + $0xf8] sm:$0xff] %vm131, %v2177
  %2186 = vst.msk [vmem:[#allocation5 + $0x140] sm:$0xff] %vm131, %v2178
  %2187 = vst.msk [vmem:[#allocation5 + $0x188] sm:$0xff] %vm131, %v2179
  %2188 = vst.msk [vmem:[#allocation5 + $0x1d0] sm:$0xff] %vm131, %v2180
  %2189 = vst.msk [vmem:[#allocation5 + $0x218] sm:$0xff] %vm131, %v2181
  %v2190 = vld [vmem:[#allocation2 + $0xa] sm:$0xff]
  %v2191 = vld [vmem:[#allocation2 + $0x12] sm:$0xff]
  %v2192 = vld [vmem:[#allocation2 + $0x1a] sm:$0xff]
  %v2193 = vld [vmem:[#allocation2 + $0x22] sm:$0xff]
  %v2194 = vld [vmem:[#allocation2 + $0x2a] sm:$0xff]
  %v2195 = vld [vmem:[#allocation2 + $0x32] sm:$0xff]
  %v2196 = vld [vmem:[#allocation2 + $0x3a] sm:$0xff]
  %v2197 = vld [vmem:[#allocation2 + $0x42] sm:$0xff]
  %v2198 = vmul.f32 %v2190, %v2097
  %v2199 = vmul.f32 %v2191, %v2102
  %v2200 = vmul.f32 %v2192, %v2107
  %v2201 = vmul.f32 %v2193, %v2112
  %v2202 = vmul.f32 %v2194, %v2117
  %v2203 = vmul.f32 %v2195, %v2122
  %v2204 = vmul.f32 %v2196, %v2127
  %v2205 = vmul.f32 %v2197, %v2132
  %2206 = vst.msk [vmem:[#allocation5 + $0x28] sm:$0xff] %vm131, %v2198
  %2207 = vst.msk [vmem:[#allocation5 + $0x70] sm:$0xff] %vm131, %v2199
  %2208 = vst.msk [vmem:[#allocation5 + $0xb8] sm:$0xff] %vm131, %v2200
  %2209 = vst.msk [vmem:[#allocation5 + $0x100] sm:$0xff] %vm131, %v2201
  %2210 = vst.msk [vmem:[#allocation5 + $0x148] sm:$0xff] %vm131, %v2202
  %2211 = vst.msk [vmem:[#allocation5 + $0x190] sm:$0xff] %vm131, %v2203
  %2212 = vst.msk [vmem:[#allocation5 + $0x1d8] sm:$0xff] %vm131, %v2204
  %2213 = vst.msk [vmem:[#allocation5 + $0x220] sm:$0xff] %vm131, %v2205
  %v2214 = vld [vmem:[#allocation2 + $0x10] sm:$0xff]
  %v2215 = vld [vmem:[#allocation2 + $0x18] sm:$0xff]
  %v2216 = vld [vmem:[#allocation2 + $0x20] sm:$0xff]
  %v2217 = vld [vmem:[#allocation2 + $0x28] sm:$0xff]
  %v2218 = vld [vmem:[#allocation2 + $0x30] sm:$0xff]
  %v2219 = vld [vmem:[#allocation2 + $0x38] sm:$0xff]
  %v2220 = vld [vmem:[#allocation2 + $0x40] sm:$0xff]
  %v2221 = vld [vmem:[#allocation2 + $0x48] sm:$0xff]
  %v2222 = vmul.f32 %v2214, %v2017
  %v2223 = vmul.f32 %v2215, %v2022
  %v2224 = vmul.f32 %v2216, %v2027
  %v2225 = vmul.f32 %v2217, %v2032
  %v2226 = vmul.f32 %v2218, %v2037
  %v2227 = vmul.f32 %v2219, %v2042
  %v2228 = vmul.f32 %v2220, %v2047
  %v2229 = vmul.f32 %v2221, %v2052
  %2230 = vst.msk [vmem:[#allocation5 + $0x30] sm:$0xff] %vm131, %v2222
  %2231 = vst.msk [vmem:[#allocation5 + $0x78] sm:$0xff] %vm131, %v2223
  %2232 = vst.msk [vmem:[#allocation5 + $0xc0] sm:$0xff] %vm131, %v2224
  %2233 = vst.msk [vmem:[#allocation5 + $0x108] sm:$0xff] %vm131, %v2225
  %2234 = vst.msk [vmem:[#allocation5 + $0x150] sm:$0xff] %vm131, %v2226
  %2235 = vst.msk [vmem:[#allocation5 + $0x198] sm:$0xff] %vm131, %v2227
  %2236 = vst.msk [vmem:[#allocation5 + $0x1e0] sm:$0xff] %vm131, %v2228
  %2237 = vst.msk [vmem:[#allocation5 + $0x228] sm:$0xff] %vm131, %v2229
  %v2238 = vld [vmem:[#allocation2 + $0x11] sm:$0xff]
  %v2239 = vld [vmem:[#allocation2 + $0x19] sm:$0xff]
  %v2240 = vld [vmem:[#allocation2 + $0x21] sm:$0xff]
  %v2241 = vld [vmem:[#allocation2 + $0x29] sm:$0xff]
  %v2242 = vld [vmem:[#allocation2 + $0x31] sm:$0xff]
  %v2243 = vld [vmem:[#allocation2 + $0x39] sm:$0xff]
  %v2244 = vld [vmem:[#allocation2 + $0x41] sm:$0xff]
  %v2245 = vld [vmem:[#allocation2 + $0x49] sm:$0xff]
  %2246 = vst.msk [vmem:[#allocation5 + $0x38] sm:$0xff] %vm131, %v2238
  %2247 = vst.msk [vmem:[#allocation5 + $0x80] sm:$0xff] %vm131, %v2239
  %2248 = vst.msk [vmem:[#allocation5 + $0xc8] sm:$0xff] %vm131, %v2240
  %2249 = vst.msk [vmem:[#allocation5 + $0x110] sm:$0xff] %vm131, %v2241
  %2250 = vst.msk [vmem:[#allocation5 + $0x158] sm:$0xff] %vm131, %v2242
  %2251 = vst.msk [vmem:[#allocation5 + $0x1a0] sm:$0xff] %vm131, %v2243
  %2252 = vst.msk [vmem:[#allocation5 + $0x1e8] sm:$0xff] %vm131, %v2244
  %2253 = vst.msk [vmem:[#allocation5 + $0x230] sm:$0xff] %vm131, %v2245
  %v2254 = vld [vmem:[#allocation2 + $0x12] sm:$0xff]
  %v2255 = vld [vmem:[#allocation2 + $0x1a] sm:$0xff]
  %v2256 = vld [vmem:[#allocation2 + $0x22] sm:$0xff]
  %v2257 = vld [vmem:[#allocation2 + $0x2a] sm:$0xff]
  %v2258 = vld [vmem:[#allocation2 + $0x32] sm:$0xff]
  %v2259 = vld [vmem:[#allocation2 + $0x3a] sm:$0xff]
  %v2260 = vld [vmem:[#allocation2 + $0x42] sm:$0xff]
  %v2261 = vld [vmem:[#allocation2 + $0x4a] sm:$0xff]
  %v2262 = vmul.f32 %v2254, %v2097
  %v2263 = vmul.f32 %v2255, %v2102
  %v2264 = vmul.f32 %v2256, %v2107
  %v2265 = vmul.f32 %v2257, %v2112
  %v2266 = vmul.f32 %v2258, %v2117
  %v2267 = vmul.f32 %v2259, %v2122
  %v2268 = vmul.f32 %v2260, %v2127
  %v2269 = vmul.f32 %v2261, %v2132
  %2270 = vst.msk [vmem:[#allocation5 + $0x40] sm:$0xff] %vm131, %v2262
  %2271 = vst.msk [vmem:[#allocation5 + $0x88] sm:$0xff] %vm131, %v2263
  %2272 = vst.msk [vmem:[#allocation5 + $0xd0] sm:$0xff] %vm131, %v2264
  %2273 = vst.msk [vmem:[#allocation5 + $0x118] sm:$0xff] %vm131, %v2265
  %2274 = vst.msk [vmem:[#allocation5 + $0x160] sm:$0xff] %vm131, %v2266
  %2275 = vst.msk [vmem:[#allocation5 + $0x1a8] sm:$0xff] %vm131, %v2267
  %2276 = vst.msk [vmem:[#allocation5 + $0x1f0] sm:$0xff] %vm131, %v2268
  %2277 = vst.msk [vmem:[#allocation5 + $0x238] sm:$0xff] %vm131, %v2269
  %v2278 = vld [vmem:[#allocation2 + $0x52] sm:$0xff]
  %v2279 = vld [vmem:[#allocation2 + $0x5a] sm:$0xff]
  %v2280 = vld [vmem:[#allocation2 + $0x62] sm:$0xff]
  %v2281 = vld [vmem:[#allocation2 + $0x6a] sm:$0xff]
  %v2282 = vld [vmem:[#allocation2 + $0x72] sm:$0xff]
  %v2283 = vld [vmem:[#allocation2 + $0x7a] sm:$0xff]
  %v2284 = vld [vmem:[#allocation2 + $0x82] sm:$0xff]
  %v2285 = vld [vmem:[#allocation2 + $0x8a] sm:$0xff]
  %v2286 = vmul.f32 %v2278, %v2017
  %v2287 = vmul.f32 %v2279, %v2022
  %v2288 = vmul.f32 %v2280, %v2027
  %v2289 = vmul.f32 %v2281, %v2032
  %v2290 = vmul.f32 %v2282, %v2037
  %v2291 = vmul.f32 %v2283, %v2042
  %v2292 = vmul.f32 %v2284, %v2047
  %v2293 = vmul.f32 %v2285, %v2052
  %2294 = vst.msk [vmem:[#allocation5 + $0x240] sm:$0xff] %vm131, %v2286
  %2295 = vst.msk [vmem:[#allocation5 + $0x288] sm:$0xff] %vm131, %v2287
  %2296 = vst.msk [vmem:[#allocation5 + $0x2d0] sm:$0xff] %vm131, %v2288
  %2297 = vst.msk [vmem:[#allocation5 + $0x318] sm:$0xff] %vm131, %v2289
  %2298 = vst.msk [vmem:[#allocation5 + $0x360] sm:$0xff] %vm131, %v2290
  %2299 = vst.msk [vmem:[#allocation5 + $0x3a8] sm:$0xff] %vm131, %v2291
  %2300 = vst.msk [vmem:[#allocation5 + $0x3f0] sm:$0xff] %vm131, %v2292
  %2301 = vst.msk [vmem:[#allocation5 + $0x438] sm:$0xff] %vm131, %v2293
  %v2302 = vld [vmem:[#allocation2 + $0x53] sm:$0xff]
  %v2303 = vld [vmem:[#allocation2 + $0x5b] sm:$0xff]
  %v2304 = vld [vmem:[#allocation2 + $0x63] sm:$0xff]
  %v2305 = vld [vmem:[#allocation2 + $0x6b] sm:$0xff]
  %v2306 = vld [vmem:[#allocation2 + $0x73] sm:$0xff]
  %v2307 = vld [vmem:[#allocation2 + $0x7b] sm:$0xff]
  %v2308 = vld [vmem:[#allocation2 + $0x83] sm:$0xff]
  %v2309 = vld [vmem:[#allocation2 + $0x8b] sm:$0xff]
  %2310 = vst.msk [vmem:[#allocation5 + $0x248] sm:$0xff] %vm131, %v2302
  %2311 = vst.msk [vmem:[#allocation5 + $0x290] sm:$0xff] %vm131, %v2303
  %2312 = vst.msk [vmem:[#allocation5 + $0x2d8] sm:$0xff] %vm131, %v2304
  %2313 = vst.msk [vmem:[#allocation5 + $0x320] sm:$0xff] %vm131, %v2305
  %2314 = vst.msk [vmem:[#allocation5 + $0x368] sm:$0xff] %vm131, %v2306
  %2315 = vst.msk [vmem:[#allocation5 + $0x3b0] sm:$0xff] %vm131, %v2307
  %2316 = vst.msk [vmem:[#allocation5 + $0x3f8] sm:$0xff] %vm131, %v2308
  %2317 = vst.msk [vmem:[#allocation5 + $0x440] sm:$0xff] %vm131, %v2309
  %v2318 = vld [vmem:[#allocation2 + $0x54] sm:$0xff]
  %v2319 = vld [vmem:[#allocation2 + $0x5c] sm:$0xff]
  %v2320 = vld [vmem:[#allocation2 + $0x64] sm:$0xff]
  %v2321 = vld [vmem:[#allocation2 + $0x6c] sm:$0xff]
  %v2322 = vld [vmem:[#allocation2 + $0x74] sm:$0xff]
  %v2323 = vld [vmem:[#allocation2 + $0x7c] sm:$0xff]
  %v2324 = vld [vmem:[#allocation2 + $0x84] sm:$0xff]
  %v2325 = vld [vmem:[#allocation2 + $0x8c] sm:$0xff]
  %v2326 = vmul.f32 %v2318, %v2097
  %v2327 = vmul.f32 %v2319, %v2102
  %v2328 = vmul.f32 %v2320, %v2107
  %v2329 = vmul.f32 %v2321, %v2112
  %v2330 = vmul.f32 %v2322, %v2117
  %v2331 = vmul.f32 %v2323, %v2122
  %v2332 = vmul.f32 %v2324, %v2127
  %v2333 = vmul.f32 %v2325, %v2132
  %2334 = vst.msk [vmem:[#allocation5 + $0x250] sm:$0xff] %vm131, %v2326
  %2335 = vst.msk [vmem:[#allocation5 + $0x298] sm:$0xff] %vm131, %v2327
  %2336 = vst.msk [vmem:[#allocation5 + $0x2e0] sm:$0xff] %vm131, %v2328
  %2337 = vst.msk [vmem:[#allocation5 + $0x328] sm:$0xff] %vm131, %v2329
  %2338 = vst.msk [vmem:[#allocation5 + $0x370] sm:$0xff] %vm131, %v2330
  %2339 = vst.msk [vmem:[#allocation5 + $0x3b8] sm:$0xff] %vm131, %v2331
  %2340 = vst.msk [vmem:[#allocation5 + $0x400] sm:$0xff] %vm131, %v2332
  %2341 = vst.msk [vmem:[#allocation5 + $0x448] sm:$0xff] %vm131, %v2333
  %v2342 = vld [vmem:[#allocation2 + $0x5a] sm:$0xff]
  %v2343 = vld [vmem:[#allocation2 + $0x62] sm:$0xff]
  %v2344 = vld [vmem:[#allocation2 + $0x6a] sm:$0xff]
  %v2345 = vld [vmem:[#allocation2 + $0x72] sm:$0xff]
  %v2346 = vld [vmem:[#allocation2 + $0x7a] sm:$0xff]
  %v2347 = vld [vmem:[#allocation2 + $0x82] sm:$0xff]
  %v2348 = vld [vmem:[#allocation2 + $0x8a] sm:$0xff]
  %v2349 = vld [vmem:[#allocation2 + $0x92] sm:$0xff]
  %v2350 = vmul.f32 %v2342, %v2017
  %v2351 = vmul.f32 %v2343, %v2022
  %v2352 = vmul.f32 %v2344, %v2027
  %v2353 = vmul.f32 %v2345, %v2032
  %v2354 = vmul.f32 %v2346, %v2037
  %v2355 = vmul.f32 %v2347, %v2042
  %v2356 = vmul.f32 %v2348, %v2047
  %v2357 = vmul.f32 %v2349, %v2052
  %2358 = vst.msk [vmem:[#allocation5 + $0x258] sm:$0xff] %vm131, %v2350
  %2359 = vst.msk [vmem:[#allocation5 + $0x2a0] sm:$0xff] %vm131, %v2351
  %2360 = vst.msk [vmem:[#allocation5 + $0x2e8] sm:$0xff] %vm131, %v2352
  %2361 = vst.msk [vmem:[#allocation5 + $0x330] sm:$0xff] %vm131, %v2353
  %2362 = vst.msk [vmem:[#allocation5 + $0x378] sm:$0xff] %vm131, %v2354
  %2363 = vst.msk [vmem:[#allocation5 + $0x3c0] sm:$0xff] %vm131, %v2355
  %2364 = vst.msk [vmem:[#allocation5 + $0x408] sm:$0xff] %vm131, %v2356
  %2365 = vst.msk [vmem:[#allocation5 + $0x450] sm:$0xff] %vm131, %v2357
  %v2366 = vld [vmem:[#allocation2 + $0x5b] sm:$0xff]
  %v2367 = vld [vmem:[#allocation2 + $0x63] sm:$0xff]
  %v2368 = vld [vmem:[#allocation2 + $0x6b] sm:$0xff]
  %v2369 = vld [vmem:[#allocation2 + $0x73] sm:$0xff]
  %v2370 = vld [vmem:[#allocation2 + $0x7b] sm:$0xff]
  %v2371 = vld [vmem:[#allocation2 + $0x83] sm:$0xff]
  %v2372 = vld [vmem:[#allocation2 + $0x8b] sm:$0xff]
  %v2373 = vld [vmem:[#allocation2 + $0x93] sm:$0xff]
  %2374 = vst.msk [vmem:[#allocation5 + $0x260] sm:$0xff] %vm131, %v2366
  %2375 = vst.msk [vmem:[#allocation5 + $0x2a8] sm:$0xff] %vm131, %v2367
  %2376 = vst.msk [vmem:[#allocation5 + $0x2f0] sm:$0xff] %vm131, %v2368
  %2377 = vst.msk [vmem:[#allocation5 + $0x338] sm:$0xff] %vm131, %v2369
  %2378 = vst.msk [vmem:[#allocation5 + $0x380] sm:$0xff] %vm131, %v2370
  %2379 = vst.msk [vmem:[#allocation5 + $0x3c8] sm:$0xff] %vm131, %v2371
  %2380 = vst.msk [vmem:[#allocation5 + $0x410] sm:$0xff] %vm131, %v2372
  %2381 = vst.msk [vmem:[#allocation5 + $0x458] sm:$0xff] %vm131, %v2373
  %v2382 = vld [vmem:[#allocation2 + $0x5c] sm:$0xff]
  %v2383 = vld [vmem:[#allocation2 + $0x64] sm:$0xff]
  %v2384 = vld [vmem:[#allocation2 + $0x6c] sm:$0xff]
  %v2385 = vld [vmem:[#allocation2 + $0x74] sm:$0xff]
  %v2386 = vld [vmem:[#allocation2 + $0x7c] sm:$0xff]
  %v2387 = vld [vmem:[#allocation2 + $0x84] sm:$0xff]
  %v2388 = vld [vmem:[#allocation2 + $0x8c] sm:$0xff]
  %v2389 = vld [vmem:[#allocation2 + $0x94] sm:$0xff]
  %v2390 = vmul.f32 %v2382, %v2097
  %v2391 = vmul.f32 %v2383, %v2102
  %v2392 = vmul.f32 %v2384, %v2107
  %v2393 = vmul.f32 %v2385, %v2112
  %v2394 = vmul.f32 %v2386, %v2117
  %v2395 = vmul.f32 %v2387, %v2122
  %v2396 = vmul.f32 %v2388, %v2127
  %v2397 = vmul.f32 %v2389, %v2132
  %2398 = vst.msk [vmem:[#allocation5 + $0x268] sm:$0xff] %vm131, %v2390
  %2399 = vst.msk [vmem:[#allocation5 + $0x2b0] sm:$0xff] %vm131, %v2391
  %2400 = vst.msk [vmem:[#allocation5 + $0x2f8] sm:$0xff] %vm131, %v2392
  %2401 = vst.msk [vmem:[#allocation5 + $0x340] sm:$0xff] %vm131, %v2393
  %2402 = vst.msk [vmem:[#allocation5 + $0x388] sm:$0xff] %vm131, %v2394
  %2403 = vst.msk [vmem:[#allocation5 + $0x3d0] sm:$0xff] %vm131, %v2395
  %2404 = vst.msk [vmem:[#allocation5 + $0x418] sm:$0xff] %vm131, %v2396
  %2405 = vst.msk [vmem:[#allocation5 + $0x460] sm:$0xff] %vm131, %v2397
  %v2406 = vld [vmem:[#allocation2 + $0x62] sm:$0xff]
  %v2407 = vld [vmem:[#allocation2 + $0x6a] sm:$0xff]
  %v2408 = vld [vmem:[#allocation2 + $0x72] sm:$0xff]
  %v2409 = vld [vmem:[#allocation2 + $0x7a] sm:$0xff]
  %v2410 = vld [vmem:[#allocation2 + $0x82] sm:$0xff]
  %v2411 = vld [vmem:[#allocation2 + $0x8a] sm:$0xff]
  %v2412 = vld [vmem:[#allocation2 + $0x92] sm:$0xff]
  %v2413 = vld [vmem:[#allocation2 + $0x9a] sm:$0xff]
  %v2414 = vmul.f32 %v2406, %v2017
  %v2415 = vmul.f32 %v2407, %v2022
  %v2416 = vmul.f32 %v2408, %v2027
  %v2417 = vmul.f32 %v2409, %v2032
  %v2418 = vmul.f32 %v2410, %v2037
  %v2419 = vmul.f32 %v2411, %v2042
  %v2420 = vmul.f32 %v2412, %v2047
  %v2421 = vmul.f32 %v2413, %v2052
  %2422 = vst.msk [vmem:[#allocation5 + $0x270] sm:$0xff] %vm131, %v2414
  %2423 = vst.msk [vmem:[#allocation5 + $0x2b8] sm:$0xff] %vm131, %v2415
  %2424 = vst.msk [vmem:[#allocation5 + $0x300] sm:$0xff] %vm131, %v2416
  %2425 = vst.msk [vmem:[#allocation5 + $0x348] sm:$0xff] %vm131, %v2417
  %2426 = vst.msk [vmem:[#allocation5 + $0x390] sm:$0xff] %vm131, %v2418
  %2427 = vst.msk [vmem:[#allocation5 + $0x3d8] sm:$0xff] %vm131, %v2419
  %2428 = vst.msk [vmem:[#allocation5 + $0x420] sm:$0xff] %vm131, %v2420
  %2429 = vst.msk [vmem:[#allocation5 + $0x468] sm:$0xff] %vm131, %v2421
  %v2430 = vld [vmem:[#allocation2 + $0x63] sm:$0xff]
  %v2431 = vld [vmem:[#allocation2 + $0x6b] sm:$0xff]
  %v2432 = vld [vmem:[#allocation2 + $0x73] sm:$0xff]
  %v2433 = vld [vmem:[#allocation2 + $0x7b] sm:$0xff]
  %v2434 = vld [vmem:[#allocation2 + $0x83] sm:$0xff]
  %v2435 = vld [vmem:[#allocation2 + $0x8b] sm:$0xff]
  %v2436 = vld [vmem:[#allocation2 + $0x93] sm:$0xff]
  %v2437 = vld [vmem:[#allocation2 + $0x9b] sm:$0xff]
  %2438 = vst.msk [vmem:[#allocation5 + $0x278] sm:$0xff] %vm131, %v2430
  %2439 = vst.msk [vmem:[#allocation5 + $0x2c0] sm:$0xff] %vm131, %v2431
  %2440 = vst.msk [vmem:[#allocation5 + $0x308] sm:$0xff] %vm131, %v2432
  %2441 = vst.msk [vmem:[#allocation5 + $0x350] sm:$0xff] %vm131, %v2433
  %2442 = vst.msk [vmem:[#allocation5 + $0x398] sm:$0xff] %vm131, %v2434
  %2443 = vst.msk [vmem:[#allocation5 + $0x3e0] sm:$0xff] %vm131, %v2435
  %2444 = vst.msk [vmem:[#allocation5 + $0x428] sm:$0xff] %vm131, %v2436
  %2445 = vst.msk [vmem:[#allocation5 + $0x470] sm:$0xff] %vm131, %v2437
  %v2446 = vld [vmem:[#allocation2 + $0x64] sm:$0xff]
  %v2447 = vld [vmem:[#allocation2 + $0x6c] sm:$0xff]
  %v2448 = vld [vmem:[#allocation2 + $0x74] sm:$0xff]
  %v2449 = vld [vmem:[#allocation2 + $0x7c] sm:$0xff]
  %v2450 = vld [vmem:[#allocation2 + $0x84] sm:$0xff]
  %v2451 = vld [vmem:[#allocation2 + $0x8c] sm:$0xff]
  %v2452 = vld [vmem:[#allocation2 + $0x94] sm:$0xff]
  %v2453 = vld [vmem:[#allocation2 + $0x9c] sm:$0xff]
  %v2454 = vmul.f32 %v2446, %v2097
  %v2455 = vmul.f32 %v2447, %v2102
  %v2456 = vmul.f32 %v2448, %v2107
  %v2457 = vmul.f32 %v2449, %v2112
  %v2458 = vmul.f32 %v2450, %v2117
  %v2459 = vmul.f32 %v2451, %v2122
  %v2460 = vmul.f32 %v2452, %v2127
  %v2461 = vmul.f32 %v2453, %v2132
  %2462 = vst.msk [vmem:[#allocation5 + $0x280] sm:$0xff] %vm131, %v2454
  %2463 = vst.msk [vmem:[#allocation5 + $0x2c8] sm:$0xff] %vm131, %v2455
  %2464 = vst.msk [vmem:[#allocation5 + $0x310] sm:$0xff] %vm131, %v2456
  %2465 = vst.msk [vmem:[#allocation5 + $0x358] sm:$0xff] %vm131, %v2457
  %2466 = vst.msk [vmem:[#allocation5 + $0x3a0] sm:$0xff] %vm131, %v2458
  %2467 = vst.msk [vmem:[#allocation5 + $0x3e8] sm:$0xff] %vm131, %v2459
  %2468 = vst.msk [vmem:[#allocation5 + $0x430] sm:$0xff] %vm131, %v2460
  %2469 = vst.msk [vmem:[#allocation5 + $0x478] sm:$0xff] %vm131, %v2461
  %v2470 = vld [vmem:[#allocation5] sm:$0xff]
  %v2471 = vld [vmem:[#allocation5 + $0x8] sm:$0xff]
  %v2472 = vld [vmem:[#allocation5 + $0x10] sm:$0xff]
  %v2473 = vld [vmem:[#allocation5 + $0x18] sm:$0xff]
  %v2474 = vld [vmem:[#allocation5 + $0x20] sm:$0xff]
  %v2475 = vld [vmem:[#allocation5 + $0x28] sm:$0xff]
  %v2476 = vld [vmem:[#allocation5 + $0x30] sm:$0xff]
  %v2477 = vld [vmem:[#allocation5 + $0x38] sm:$0xff]
  %v2478 = vld [vmem:[#allocation5 + $0x40] sm:$0xff]
  %v2479 = vld [vmem:[#allocation5 + $0x48] sm:$0xff]
  %v2480 = vld [vmem:[#allocation5 + $0x50] sm:$0xff]
  %v2481 = vld [vmem:[#allocation5 + $0x58] sm:$0xff]
  %v2482 = vld [vmem:[#allocation5 + $0x60] sm:$0xff]
  %v2483 = vld [vmem:[#allocation5 + $0x68] sm:$0xff]
  %v2484 = vld [vmem:[#allocation5 + $0x70] sm:$0xff]
  %v2485 = vld [vmem:[#allocation5 + $0x78] sm:$0xff]
  %v2486 = vld [vmem:[#allocation5 + $0x80] sm:$0xff]
  %v2487 = vld [vmem:[#allocation5 + $0x88] sm:$0xff]
  %v2488 = vld [vmem:[#allocation5 + $0x90] sm:$0xff]
  %v2489 = vld [vmem:[#allocation5 + $0x98] sm:$0xff]
  %v2490 = vld [vmem:[#allocation5 + $0xa0] sm:$0xff]
  %v2491 = vld [vmem:[#allocation5 + $0xa8] sm:$0xff]
  %v2492 = vld [vmem:[#allocation5 + $0xb0] sm:$0xff]
  %v2493 = vld [vmem:[#allocation5 + $0xb8] sm:$0xff]
  %v2494 = vld [vmem:[#allocation5 + $0xc0] sm:$0xff]
  %v2495 = vld [vmem:[#allocation5 + $0xc8] sm:$0xff]
  %v2496 = vld [vmem:[#allocation5 + $0xd0] sm:$0xff]
  %v2497 = vld [vmem:[#allocation5 + $0xd8] sm:$0xff]
  %v2498 = vld [vmem:[#allocation5 + $0xe0] sm:$0xff]
  %v2499 = vld [vmem:[#allocation5 + $0xe8] sm:$0xff]
  %v2500 = vld [vmem:[#allocation5 + $0xf0] sm:$0xff]
  %v2501 = vld [vmem:[#allocation5 + $0xf8] sm:$0xff]
  %v2502 = vld [vmem:[#allocation5 + $0x100] sm:$0xff]
  %v2503 = vld [vmem:[#allocation5 + $0x108] sm:$0xff]
  %v2504 = vld [vmem:[#allocation5 + $0x110] sm:$0xff]
  %v2505 = vld [vmem:[#allocation5 + $0x118] sm:$0xff]
  %v2506 = vld [vmem:[#allocation5 + $0x120] sm:$0xff]
  %v2507 = vld [vmem:[#allocation5 + $0x128] sm:$0xff]
  %v2508 = vld [vmem:[#allocation5 + $0x130] sm:$0xff]
  %v2509 = vld [vmem:[#allocation5 + $0x138] sm:$0xff]
  %v2510 = vld [vmem:[#allocation5 + $0x140] sm:$0xff]
  %v2511 = vld [vmem:[#allocation5 + $0x148] sm:$0xff]
  %v2512 = vld [vmem:[#allocation5 + $0x150] sm:$0xff]
  %v2513 = vld [vmem:[#allocation5 + $0x158] sm:$0xff]
  %v2514 = vld [vmem:[#allocation5 + $0x160] sm:$0xff]
  %v2515 = vld [vmem:[#allocation5 + $0x168] sm:$0xff]
  %v2516 = vld [vmem:[#allocation5 + $0x170] sm:$0xff]
  %v2517 = vld [vmem:[#allocation5 + $0x178] sm:$0xff]
  %v2518 = vld [vmem:[#allocation5 + $0x180] sm:$0xff]
  %v2519 = vld [vmem:[#allocation5 + $0x188] sm:$0xff]
  %v2520 = vld [vmem:[#allocation5 + $0x190] sm:$0xff]
  %v2521 = vld [vmem:[#allocation5 + $0x198] sm:$0xff]
  %v2522 = vld [vmem:[#allocation5 + $0x1a0] sm:$0xff]
  %v2523 = vld [vmem:[#allocation5 + $0x1a8] sm:$0xff]
  %v2524 = vld [vmem:[#allocation5 + $0x1b0] sm:$0xff]
  %v2525 = vld [vmem:[#allocation5 + $0x1b8] sm:$0xff]
  %v2526 = vld [vmem:[#allocation5 + $0x1c0] sm:$0xff]
  %v2527 = vld [vmem:[#allocation5 + $0x1c8] sm:$0xff]
  %v2528 = vld [vmem:[#allocation5 + $0x1d0] sm:$0xff]
  %v2529 = vld [vmem:[#allocation5 + $0x1d8] sm:$0xff]
  %v2530 = vld [vmem:[#allocation5 + $0x1e0] sm:$0xff]
  %v2531 = vld [vmem:[#allocation5 + $0x1e8] sm:$0xff]
  %v2532 = vld [vmem:[#allocation5 + $0x1f0] sm:$0xff]
  %v2533 = vld [vmem:[#allocation5 + $0x1f8] sm:$0xff]
  %v2534 = vld [vmem:[#allocation5 + $0x200] sm:$0xff]
  %v2535 = vld [vmem:[#allocation5 + $0x208] sm:$0xff]
  %v2536 = vld [vmem:[#allocation5 + $0x210] sm:$0xff]
  %v2537 = vld [vmem:[#allocation5 + $0x218] sm:$0xff]
  %v2538 = vld [vmem:[#allocation5 + $0x220] sm:$0xff]
  %v2539 = vld [vmem:[#allocation5 + $0x228] sm:$0xff]
  %v2540 = vld [vmem:[#allocation5 + $0x230] sm:$0xff]
  %v2541 = vld [vmem:[#allocation5 + $0x238] sm:$0xff]
  %v2542 = vld [vmem:[#allocation5 + $0x240] sm:$0xff]
  %v2543 = vld [vmem:[#allocation5 + $0x248] sm:$0xff]
  %v2544 = vld [vmem:[#allocation5 + $0x250] sm:$0xff]
  %v2545 = vld [vmem:[#allocation5 + $0x258] sm:$0xff]
  %v2546 = vld [vmem:[#allocation5 + $0x260] sm:$0xff]
  %v2547 = vld [vmem:[#allocation5 + $0x268] sm:$0xff]
  %v2548 = vld [vmem:[#allocation5 + $0x270] sm:$0xff]
  %v2549 = vld [vmem:[#allocation5 + $0x278] sm:$0xff]
  %v2550 = vld [vmem:[#allocation5 + $0x280] sm:$0xff]
  %v2551 = vld [vmem:[#allocation5 + $0x288] sm:$0xff]
  %v2552 = vld [vmem:[#allocation5 + $0x290] sm:$0xff]
  %v2553 = vld [vmem:[#allocation5 + $0x298] sm:$0xff]
  %v2554 = vld [vmem:[#allocation5 + $0x2a0] sm:$0xff]
  %v2555 = vld [vmem:[#allocation5 + $0x2a8] sm:$0xff]
  %v2556 = vld [vmem:[#allocation5 + $0x2b0] sm:$0xff]
  %v2557 = vld [vmem:[#allocation5 + $0x2b8] sm:$0xff]
  %v2558 = vld [vmem:[#allocation5 + $0x2c0] sm:$0xff]
  %v2559 = vld [vmem:[#allocation5 + $0x2c8] sm:$0xff]
  %v2560 = vld [vmem:[#allocation5 + $0x2d0] sm:$0xff]
  %v2561 = vld [vmem:[#allocation5 + $0x2d8] sm:$0xff]
  %v2562 = vld [vmem:[#allocation5 + $0x2e0] sm:$0xff]
  %v2563 = vld [vmem:[#allocation5 + $0x2e8] sm:$0xff]
  %v2564 = vld [vmem:[#allocation5 + $0x2f0] sm:$0xff]
  %v2565 = vld [vmem:[#allocation5 + $0x2f8] sm:$0xff]
  %v2566 = vld [vmem:[#allocation5 + $0x300] sm:$0xff]
  %v2567 = vld [vmem:[#allocation5 + $0x308] sm:$0xff]
  %v2568 = vld [vmem:[#allocation5 + $0x310] sm:$0xff]
  %v2569 = vld [vmem:[#allocation5 + $0x318] sm:$0xff]
  %v2570 = vld [vmem:[#allocation5 + $0x320] sm:$0xff]
  %v2571 = vld [vmem:[#allocation5 + $0x328] sm:$0xff]
  %v2572 = vld [vmem:[#allocation5 + $0x330] sm:$0xff]
  %v2573 = vld [vmem:[#allocation5 + $0x338] sm:$0xff]
  %v2574 = vld [vmem:[#allocation5 + $0x340] sm:$0xff]
  %v2575 = vld [vmem:[#allocation5 + $0x348] sm:$0xff]
  %v2576 = vld [vmem:[#allocation5 + $0x350] sm:$0xff]
  %v2577 = vld [vmem:[#allocation5 + $0x358] sm:$0xff]
  %v2578 = vld [vmem:[#allocation5 + $0x360] sm:$0xff]
  %v2579 = vld [vmem:[#allocation5 + $0x368] sm:$0xff]
  %v2580 = vld [vmem:[#allocation5 + $0x370] sm:$0xff]
  %v2581 = vld [vmem:[#allocation5 + $0x378] sm:$0xff]
  %v2582 = vld [vmem:[#allocation5 + $0x380] sm:$0xff]
  %v2583 = vld [vmem:[#allocation5 + $0x388] sm:$0xff]
  %v2584 = vld [vmem:[#allocation5 + $0x390] sm:$0xff]
  %v2585 = vld [vmem:[#allocation5 + $0x398] sm:$0xff]
  %v2586 = vld [vmem:[#allocation5 + $0x3a0] sm:$0xff]
  %v2587 = vld [vmem:[#allocation5 + $0x3a8] sm:$0xff]
  %v2588 = vld [vmem:[#allocation5 + $0x3b0] sm:$0xff]
  %v2589 = vld [vmem:[#allocation5 + $0x3b8] sm:$0xff]
  %v2590 = vld [vmem:[#allocation5 + $0x3c0] sm:$0xff]
  %v2591 = vld [vmem:[#allocation5 + $0x3c8] sm:$0xff]
  %v2592 = vld [vmem:[#allocation5 + $0x3d0] sm:$0xff]
  %v2593 = vld [vmem:[#allocation5 + $0x3d8] sm:$0xff]
  %v2594 = vld [vmem:[#allocation5 + $0x3e0] sm:$0xff]
  %v2595 = vld [vmem:[#allocation5 + $0x3e8] sm:$0xff]
  %v2596 = vld [vmem:[#allocation5 + $0x3f0] sm:$0xff]
  %v2597 = vld [vmem:[#allocation5 + $0x3f8] sm:$0xff]
  %v2598 = vld [vmem:[#allocation5 + $0x400] sm:$0xff]
  %v2599 = vld [vmem:[#allocation5 + $0x408] sm:$0xff]
  %v2600 = vld [vmem:[#allocation5 + $0x410] sm:$0xff]
  %v2601 = vld [vmem:[#allocation5 + $0x418] sm:$0xff]
  %v2602 = vld [vmem:[#allocation5 + $0x420] sm:$0xff]
  %v2603 = vld [vmem:[#allocation5 + $0x428] sm:$0xff]
  %v2604 = vld [vmem:[#allocation5 + $0x430] sm:$0xff]
  %v2605 = vld [vmem:[#allocation5 + $0x438] sm:$0xff]
  %v2606 = vld [vmem:[#allocation5 + $0x440] sm:$0xff]
  %v2607 = vld [vmem:[#allocation5 + $0x448] sm:$0xff]
  %v2608 = vld [vmem:[#allocation5 + $0x450] sm:$0xff]
  %v2609 = vld [vmem:[#allocation5 + $0x458] sm:$0xff]
  %v2610 = vld [vmem:[#allocation5 + $0x460] sm:$0xff]
  %v2611 = vld [vmem:[#allocation5 + $0x468] sm:$0xff]
  %v2612 = vld [vmem:[#allocation5 + $0x470] sm:$0xff]
  %v2613 = vld [vmem:[#allocation5 + $0x478] sm:$0xff]
  %v2614 = vpack.c.bf16 %v2479, %v2470
  %v2615 = vpack.c.bf16 %v2480, %v2471
  %v2616 = vpack.c.bf16 %v2481, %v2472
  %v2617 = vpack.c.bf16 %v2482, %v2473
  %v2618 = vpack.c.bf16 %v2483, %v2474
  %v2619 = vpack.c.bf16 %v2484, %v2475
  %v2620 = vpack.c.bf16 %v2485, %v2476
  %v2621 = vpack.c.bf16 %v2486, %v2477
  %v2622 = vpack.c.bf16 %v2487, %v2478
  %v2623 = vpack.c.bf16 %v2497, %v2488
  %v2624 = vpack.c.bf16 %v2498, %v2489
  %v2625 = vpack.c.bf16 %v2499, %v2490
  %v2626 = vpack.c.bf16 %v2500, %v2491
  %v2627 = vpack.c.bf16 %v2501, %v2492
  %v2628 = vpack.c.bf16 %v2502, %v2493
  %v2629 = vpack.c.bf16 %v2503, %v2494
  %v2630 = vpack.c.bf16 %v2504, %v2495
  %v2631 = vpack.c.bf16 %v2505, %v2496
  %v2632 = vpack.c.bf16 %v2515, %v2506
  %v2633 = vpack.c.bf16 %v2516, %v2507
  %v2634 = vpack.c.bf16 %v2517, %v2508
  %v2635 = vpack.c.bf16 %v2518, %v2509
  %v2636 = vpack.c.bf16 %v2519, %v2510
  %v2637 = vpack.c.bf16 %v2520, %v2511
  %v2638 = vpack.c.bf16 %v2521, %v2512
  %v2639 = vpack.c.bf16 %v2522, %v2513
  %v2640 = vpack.c.bf16 %v2523, %v2514
  %v2641 = vpack.c.bf16 %v2533, %v2524
  %v2642 = vpack.c.bf16 %v2534, %v2525
  %v2643 = vpack.c.bf16 %v2535, %v2526
  %v2644 = vpack.c.bf16 %v2536, %v2527
  %v2645 = vpack.c.bf16 %v2537, %v2528
  %v2646 = vpack.c.bf16 %v2538, %v2529
  %v2647 = vpack.c.bf16 %v2539, %v2530
  %v2648 = vpack.c.bf16 %v2540, %v2531
  %v2649 = vpack.c.bf16 %v2541, %v2532
  %v2650 = vpack.c.bf16 %v2551, %v2542
  %v2651 = vpack.c.bf16 %v2552, %v2543
  %v2652 = vpack.c.bf16 %v2553, %v2544
  %v2653 = vpack.c.bf16 %v2554, %v2545
  %v2654 = vpack.c.bf16 %v2555, %v2546
  %v2655 = vpack.c.bf16 %v2556, %v2547
  %v2656 = vpack.c.bf16 %v2557, %v2548
  %v2657 = vpack.c.bf16 %v2558, %v2549
  %v2658 = vpack.c.bf16 %v2559, %v2550
  %v2659 = vpack.c.bf16 %v2569, %v2560
  %v2660 = vpack.c.bf16 %v2570, %v2561
  %v2661 = vpack.c.bf16 %v2571, %v2562
  %v2662 = vpack.c.bf16 %v2572, %v2563
  %v2663 = vpack.c.bf16 %v2573, %v2564
  %v2664 = vpack.c.bf16 %v2574, %v2565
  %v2665 = vpack.c.bf16 %v2575, %v2566
  %v2666 = vpack.c.bf16 %v2576, %v2567
  %v2667 = vpack.c.bf16 %v2577, %v2568
  %v2668 = vpack.c.bf16 %v2587, %v2578
  %v2669 = vpack.c.bf16 %v2588, %v2579
  %v2670 = vpack.c.bf16 %v2589, %v2580
  %v2671 = vpack.c.bf16 %v2590, %v2581
  %v2672 = vpack.c.bf16 %v2591, %v2582
  %v2673 = vpack.c.bf16 %v2592, %v2583
  %v2674 = vpack.c.bf16 %v2593, %v2584
  %v2675 = vpack.c.bf16 %v2594, %v2585
  %v2676 = vpack.c.bf16 %v2595, %v2586
  %v2677 = vpack.c.bf16 %v2605, %v2596
  %v2678 = vpack.c.bf16 %v2606, %v2597
  %v2679 = vpack.c.bf16 %v2607, %v2598
  %v2680 = vpack.c.bf16 %v2608, %v2599
  %v2681 = vpack.c.bf16 %v2609, %v2600
  %v2682 = vpack.c.bf16 %v2610, %v2601
  %v2683 = vpack.c.bf16 %v2611, %v2602
  %v2684 = vpack.c.bf16 %v2612, %v2603
  %v2685 = vpack.c.bf16 %v2613, %v2604
  %v2686 = vld [vmem:[%s15] sm:$0xf]
  %v2687 = vld [vmem:[%s15 + $0x4] sm:$0xf]
  %v2688 = vld [vmem:[%s15 + $0x8] sm:$0xf]
  %v2689 = vld [vmem:[%s15 + $0xc] sm:$0xf]
  %v2690 = vld [vmem:[%s15 + $0x10] sm:$0xf]
  %v2691 = vld [vmem:[%s15 + $0x14] sm:$0xf]
  %v2692 = vld [vmem:[%s15 + $0x18] sm:$0xf]
  %v2693 = vld [vmem:[%s15 + $0x1c] sm:$0xf]
  %v2694 = vld [vmem:[%s15 + $0x20] sm:$0xf]
  %v2695 = vld [vmem:[%s15 + $0x24] sm:$0xf]
  %v2696 = vld [vmem:[%s15 + $0x28] sm:$0xf]
  %v2697 = vld [vmem:[%s15 + $0x2c] sm:$0xf]
  %v2698 = vld [vmem:[%s15 + $0x30] sm:$0xf]
  %v2699 = vld [vmem:[%s15 + $0x34] sm:$0xf]
  %v2700 = vld [vmem:[%s15 + $0x38] sm:$0xf]
  %v2701 = vld [vmem:[%s15 + $0x3c] sm:$0xf]
  %v2702 = vld [vmem:[%s15 + $0x40] sm:$0xf]
  %v2703 = vld [vmem:[%s15 + $0x44] sm:$0xf]
  %v2704 = vld [vmem:[%s15 + $0x48] sm:$0xf]
  %v2705 = vld [vmem:[%s15 + $0x4c] sm:$0xf]
  %v2706 = vld [vmem:[%s15 + $0x50] sm:$0xf]
  %v2707 = vld [vmem:[%s15 + $0x54] sm:$0xf]
  %v2708 = vld [vmem:[%s15 + $0x58] sm:$0xf]
  %v2709 = vld [vmem:[%s15 + $0x5c] sm:$0xf]
  %v2710 = vld [vmem:[%s15 + $0x60] sm:$0xf]
  %v2711 = vld [vmem:[%s15 + $0x64] sm:$0xf]
  %v2712 = vld [vmem:[%s15 + $0x68] sm:$0xf]
  %v2713 = vld [vmem:[%s15 + $0x6c] sm:$0xf]
  %v2714 = vld [vmem:[%s15 + $0x70] sm:$0xf]
  %v2715 = vld [vmem:[%s15 + $0x74] sm:$0xf]
  %v2716 = vld [vmem:[%s15 + $0x78] sm:$0xf]
  %v2717 = vld [vmem:[%s15 + $0x7c] sm:$0xf]
  %v2718 = vld [vmem:[%s15 + $0x80] sm:$0xf]
  %v2719 = vld [vmem:[%s15 + $0x84] sm:$0xf]
  %v2720 = vld [vmem:[%s15 + $0x88] sm:$0xf]
  %v2721 = vld [vmem:[%s15 + $0x8c] sm:$0xf]
  %v2722 = vld [vmem:[%s15 + $0x90] sm:$0xf]
  %v2723 = vld [vmem:[%s15 + $0x94] sm:$0xf]
  %v2724 = vld [vmem:[%s15 + $0x98] sm:$0xf]
  %v2725 = vld [vmem:[%s15 + $0x9c] sm:$0xf]
  %v2726 = vld [vmem:[%s15 + $0xa0] sm:$0xf]
  %v2727 = vld [vmem:[%s15 + $0xa4] sm:$0xf]
  %v2728 = vld [vmem:[%s15 + $0xa8] sm:$0xf]
  %v2729 = vld [vmem:[%s15 + $0xac] sm:$0xf]
  %v2730 = vld [vmem:[%s15 + $0xb0] sm:$0xf]
  %v2731 = vld [vmem:[%s15 + $0xb4] sm:$0xf]
  %v2732 = vld [vmem:[%s15 + $0xb8] sm:$0xf]
  %v2733 = vld [vmem:[%s15 + $0xbc] sm:$0xf]
  %v2734 = vld [vmem:[%s15 + $0xc0] sm:$0xf]
  %v2735 = vld [vmem:[%s15 + $0xc4] sm:$0xf]
  %v2736 = vld [vmem:[%s15 + $0xc8] sm:$0xf]
  %v2737 = vld [vmem:[%s15 + $0xcc] sm:$0xf]
  %v2738 = vld [vmem:[%s15 + $0xd0] sm:$0xf]
  %v2739 = vld [vmem:[%s15 + $0xd4] sm:$0xf]
  %v2740 = vld [vmem:[%s15 + $0xd8] sm:$0xf]
  %v2741 = vld [vmem:[%s15 + $0xdc] sm:$0xf]
  %v2742 = vld [vmem:[%s15 + $0xe0] sm:$0xf]
  %v2743 = vld [vmem:[%s15 + $0xe4] sm:$0xf]
  %v2744 = vld [vmem:[%s15 + $0xe8] sm:$0xf]
  %v2745 = vld [vmem:[%s15 + $0xec] sm:$0xf]
  %v2746 = vld [vmem:[%s15 + $0xf0] sm:$0xf]
  %v2747 = vld [vmem:[%s15 + $0xf4] sm:$0xf]
  %v2748 = vld [vmem:[%s15 + $0xf8] sm:$0xf]
  %v2749 = vld [vmem:[%s15 + $0xfc] sm:$0xf]
  %v2750 = vld [vmem:[%s15 + $0x100] sm:$0xf]
  %v2751 = vld [vmem:[%s15 + $0x104] sm:$0xf]
  %v2752 = vld [vmem:[%s15 + $0x108] sm:$0xf]
  %v2753 = vld [vmem:[%s15 + $0x10c] sm:$0xf]
  %v2754 = vld [vmem:[%s15 + $0x110] sm:$0xf]
  %v2755 = vld [vmem:[%s15 + $0x114] sm:$0xf]
  %v2756 = vld [vmem:[%s15 + $0x118] sm:$0xf]
  %v2757 = vld [vmem:[%s15 + $0x11c] sm:$0xf]
  %v2758 = vld [vmem:[%s15 + $0x120] sm:$0xf]
  %v2759 = vld [vmem:[%s15 + $0x124] sm:$0xf]
  %v2760 = vld [vmem:[%s15 + $0x128] sm:$0xf]
  %v2761 = vld [vmem:[%s15 + $0x12c] sm:$0xf]
  %v2762 = vld [vmem:[%s15 + $0x130] sm:$0xf]
  %v2763 = vld [vmem:[%s15 + $0x134] sm:$0xf]
  %v2764 = vld [vmem:[%s15 + $0x138] sm:$0xf]
  %v2765 = vld [vmem:[%s15 + $0x13c] sm:$0xf]
  %v2766 = vld [vmem:[%s15 + $0x140] sm:$0xf]
  %v2767 = vld [vmem:[%s15 + $0x144] sm:$0xf]
  %v2768 = vld [vmem:[%s15 + $0x148] sm:$0xf]
  %v2769 = vld [vmem:[%s15 + $0x14c] sm:$0xf]
  %v2770 = vld [vmem:[%s15 + $0x150] sm:$0xf]
  %v2771 = vld [vmem:[%s15 + $0x154] sm:$0xf]
  %v2772 = vld [vmem:[%s15 + $0x158] sm:$0xf]
  %v2773 = vld [vmem:[%s15 + $0x15c] sm:$0xf]
  %v2774 = vld [vmem:[%s15 + $0x160] sm:$0xf]
  %v2775 = vld [vmem:[%s15 + $0x164] sm:$0xf]
  %v2776 = vld [vmem:[%s15 + $0x168] sm:$0xf]
  %v2777 = vld [vmem:[%s15 + $0x16c] sm:$0xf]
  %v2778 = vld [vmem:[%s15 + $0x170] sm:$0xf]
  %v2779 = vld [vmem:[%s15 + $0x174] sm:$0xf]
  %v2780 = vld [vmem:[%s15 + $0x178] sm:$0xf]
  %v2781 = vld [vmem:[%s15 + $0x17c] sm:$0xf]
  %v2782 = vld [vmem:[%s15 + $0x180] sm:$0xf]
  %v2783 = vld [vmem:[%s15 + $0x184] sm:$0xf]
  %v2784 = vld [vmem:[%s15 + $0x188] sm:$0xf]
  %v2785 = vld [vmem:[%s15 + $0x18c] sm:$0xf]
  %v2786 = vld [vmem:[%s15 + $0x190] sm:$0xf]
  %v2787 = vld [vmem:[%s15 + $0x194] sm:$0xf]
  %v2788 = vld [vmem:[%s15 + $0x198] sm:$0xf]
  %v2789 = vld [vmem:[%s15 + $0x19c] sm:$0xf]
  %v2790 = vld [vmem:[%s15 + $0x1a0] sm:$0xf]
  %v2791 = vld [vmem:[%s15 + $0x1a4] sm:$0xf]
  %v2792 = vld [vmem:[%s15 + $0x1a8] sm:$0xf]
  %v2793 = vld [vmem:[%s15 + $0x1ac] sm:$0xf]
  %v2794 = vld [vmem:[%s15 + $0x1b0] sm:$0xf]
  %v2795 = vld [vmem:[%s15 + $0x1b4] sm:$0xf]
  %v2796 = vld [vmem:[%s15 + $0x1b8] sm:$0xf]
  %v2797 = vld [vmem:[%s15 + $0x1bc] sm:$0xf]
  %v2798 = vld [vmem:[%s15 + $0x1c0] sm:$0xf]
  %v2799 = vld [vmem:[%s15 + $0x1c4] sm:$0xf]
  %v2800 = vld [vmem:[%s15 + $0x1c8] sm:$0xf]
  %v2801 = vld [vmem:[%s15 + $0x1cc] sm:$0xf]
  %v2802 = vld [vmem:[%s15 + $0x1d0] sm:$0xf]
  %v2803 = vld [vmem:[%s15 + $0x1d4] sm:$0xf]
  %v2804 = vld [vmem:[%s15 + $0x1d8] sm:$0xf]
  %v2805 = vld [vmem:[%s15 + $0x1dc] sm:$0xf]
  %v2806 = vld [vmem:[%s15 + $0x1e0] sm:$0xf]
  %v2807 = vld [vmem:[%s15 + $0x1e4] sm:$0xf]
  %v2808 = vld [vmem:[%s15 + $0x1e8] sm:$0xf]
  %v2809 = vld [vmem:[%s15 + $0x1ec] sm:$0xf]
  %v2810 = vld [vmem:[%s15 + $0x1f0] sm:$0xf]
  %v2811 = vld [vmem:[%s15 + $0x1f4] sm:$0xf]
  %v2812 = vld [vmem:[%s15 + $0x1f8] sm:$0xf]
  %v2813 = vld [vmem:[%s15 + $0x1fc] sm:$0xf]
  %v2814 = vld [vmem:[%s15 + $0x200] sm:$0xf]
  %v2815 = vld [vmem:[%s15 + $0x204] sm:$0xf]
  %v2816 = vld [vmem:[%s15 + $0x208] sm:$0xf]
  %v2817 = vld [vmem:[%s15 + $0x20c] sm:$0xf]
  %v2818 = vld [vmem:[%s15 + $0x210] sm:$0xf]
  %v2819 = vld [vmem:[%s15 + $0x214] sm:$0xf]
  %v2820 = vld [vmem:[%s15 + $0x218] sm:$0xf]
  %v2821 = vld [vmem:[%s15 + $0x21c] sm:$0xf]
  %v2822 = vld [vmem:[%s15 + $0x220] sm:$0xf]
  %v2823 = vld [vmem:[%s15 + $0x224] sm:$0xf]
  %v2824 = vld [vmem:[%s15 + $0x228] sm:$0xf]
  %v2825 = vld [vmem:[%s15 + $0x22c] sm:$0xf]
  %v2826 = vld [vmem:[%s15 + $0x230] sm:$0xf]
  %v2827 = vld [vmem:[%s15 + $0x234] sm:$0xf]
  %v2828 = vld [vmem:[%s15 + $0x238] sm:$0xf]
  %v2829 = vld [vmem:[%s15 + $0x23c] sm:$0xf]
  %v2830 = vld [vmem:[%s17] sm:$0x1]
  %v2832 = vperm.slane %v2830, 0
  %v2978 = vunpack.c.l.b16 %v2686
  %v2979 = vunpack.c.l.b16 %v2687
  %v2980 = vunpack.c.l.b16 %v2688
  %v2981 = vunpack.c.l.b16 %v2689
  %v2982 = vunpack.c.l.b16 %v2690
  %v2983 = vunpack.c.l.b16 %v2691
  %v2984 = vunpack.c.l.b16 %v2692
  %v2985 = vunpack.c.l.b16 %v2693
  %v2986 = vunpack.c.l.b16 %v2694
  %v2987 = vunpack.c.l.b16 %v2695
  %v2988 = vunpack.c.l.b16 %v2696
  %v2989 = vunpack.c.l.b16 %v2697
  %v2990 = vunpack.c.l.b16 %v2698
  %v2991 = vunpack.c.l.b16 %v2699
  %v2992 = vunpack.c.l.b16 %v2700
  %v2993 = vunpack.c.l.b16 %v2701
  %v2994 = vunpack.c.l.b16 %v2702
  %v2995 = vunpack.c.l.b16 %v2703
  %v2996 = vunpack.c.l.b16 %v2704
  %v2997 = vunpack.c.l.b16 %v2705
  %v2998 = vunpack.c.l.b16 %v2706
  %v2999 = vunpack.c.l.b16 %v2707
  %v3000 = vunpack.c.l.b16 %v2708
  %v3001 = vunpack.c.l.b16 %v2709
  %v3002 = vunpack.c.l.b16 %v2710
  %v3003 = vunpack.c.l.b16 %v2711
  %v3004 = vunpack.c.l.b16 %v2712
  %v3005 = vunpack.c.l.b16 %v2713
  %v3006 = vunpack.c.l.b16 %v2714
  %v3007 = vunpack.c.l.b16 %v2715
  %v3008 = vunpack.c.l.b16 %v2716
  %v3009 = vunpack.c.l.b16 %v2717
  %v3010 = vunpack.c.l.b16 %v2718
  %v3011 = vunpack.c.l.b16 %v2719
  %v3012 = vunpack.c.l.b16 %v2720
  %v3013 = vunpack.c.l.b16 %v2721
  %v3014 = vunpack.c.l.b16 %v2722
  %v3015 = vunpack.c.l.b16 %v2723
  %v3016 = vunpack.c.l.b16 %v2724
  %v3017 = vunpack.c.l.b16 %v2725
  %v3018 = vunpack.c.l.b16 %v2726
  %v3019 = vunpack.c.l.b16 %v2727
  %v3020 = vunpack.c.l.b16 %v2728
  %v3021 = vunpack.c.l.b16 %v2729
  %v3022 = vunpack.c.l.b16 %v2730
  %v3023 = vunpack.c.l.b16 %v2731
  %v3024 = vunpack.c.l.b16 %v2732
  %v3025 = vunpack.c.l.b16 %v2733
  %v3026 = vunpack.c.l.b16 %v2734
  %v3027 = vunpack.c.l.b16 %v2735
  %v3028 = vunpack.c.l.b16 %v2736
  %v3029 = vunpack.c.l.b16 %v2737
  %v3030 = vunpack.c.l.b16 %v2738
  %v3031 = vunpack.c.l.b16 %v2739
  %v3032 = vunpack.c.l.b16 %v2740
  %v3033 = vunpack.c.l.b16 %v2741
  %v3034 = vunpack.c.l.b16 %v2742
  %v3035 = vunpack.c.l.b16 %v2743
  %v3036 = vunpack.c.l.b16 %v2744
  %v3037 = vunpack.c.l.b16 %v2745
  %v3038 = vunpack.c.l.b16 %v2746
  %v3039 = vunpack.c.l.b16 %v2747
  %v3040 = vunpack.c.l.b16 %v2748
  %v3041 = vunpack.c.l.b16 %v2749
  %v3042 = vunpack.c.l.b16 %v2750
  %v3043 = vunpack.c.l.b16 %v2751
  %v3044 = vunpack.c.l.b16 %v2752
  %v3045 = vunpack.c.l.b16 %v2753
  %v3046 = vunpack.c.l.b16 %v2754
  %v3047 = vunpack.c.l.b16 %v2755
  %v3048 = vunpack.c.l.b16 %v2756
  %v3049 = vunpack.c.l.b16 %v2757
  %v3050 = vunpack.c.l.b16 %v2758
  %v3051 = vunpack.c.l.b16 %v2759
  %v3052 = vunpack.c.l.b16 %v2760
  %v3053 = vunpack.c.l.b16 %v2761
  %v3054 = vunpack.c.l.b16 %v2762
  %v3055 = vunpack.c.l.b16 %v2763
  %v3056 = vunpack.c.l.b16 %v2764
  %v3057 = vunpack.c.l.b16 %v2765
  %v3058 = vunpack.c.l.b16 %v2766
  %v3059 = vunpack.c.l.b16 %v2767
  %v3060 = vunpack.c.l.b16 %v2768
  %v3061 = vunpack.c.l.b16 %v2769
  %v3062 = vunpack.c.l.b16 %v2770
  %v3063 = vunpack.c.l.b16 %v2771
  %v3064 = vunpack.c.l.b16 %v2772
  %v3065 = vunpack.c.l.b16 %v2773
  %v3066 = vunpack.c.l.b16 %v2774
  %v3067 = vunpack.c.l.b16 %v2775
  %v3068 = vunpack.c.l.b16 %v2776
  %v3069 = vunpack.c.l.b16 %v2777
  %v3070 = vunpack.c.l.b16 %v2778
  %v3071 = vunpack.c.l.b16 %v2779
  %v3072 = vunpack.c.l.b16 %v2780
  %v3073 = vunpack.c.l.b16 %v2781
  %v3074 = vunpack.c.l.b16 %v2782
  %v3075 = vunpack.c.l.b16 %v2783
  %v3076 = vunpack.c.l.b16 %v2784
  %v3077 = vunpack.c.l.b16 %v2785
  %v3078 = vunpack.c.l.b16 %v2786
  %v3079 = vunpack.c.l.b16 %v2787
  %v3080 = vunpack.c.l.b16 %v2788
  %v3081 = vunpack.c.l.b16 %v2789
  %v3082 = vunpack.c.l.b16 %v2790
  %v3083 = vunpack.c.l.b16 %v2791
  %v3084 = vunpack.c.l.b16 %v2792
  %v3085 = vunpack.c.l.b16 %v2793
  %v3086 = vunpack.c.l.b16 %v2794
  %v3087 = vunpack.c.l.b16 %v2795
  %v3088 = vunpack.c.l.b16 %v2796
  %v3089 = vunpack.c.l.b16 %v2797
  %v3090 = vunpack.c.l.b16 %v2798
  %v3091 = vunpack.c.l.b16 %v2799
  %v3092 = vunpack.c.l.b16 %v2800
  %v3093 = vunpack.c.l.b16 %v2801
  %v3094 = vunpack.c.l.b16 %v2802
  %v3095 = vunpack.c.l.b16 %v2803
  %v3096 = vunpack.c.l.b16 %v2804
  %v3097 = vunpack.c.l.b16 %v2805
  %v3098 = vunpack.c.l.b16 %v2806
  %v3099 = vunpack.c.l.b16 %v2807
  %v3100 = vunpack.c.l.b16 %v2808
  %v3101 = vunpack.c.l.b16 %v2809
  %v3102 = vunpack.c.l.b16 %v2810
  %v3103 = vunpack.c.l.b16 %v2811
  %v3104 = vunpack.c.l.b16 %v2812
  %v3105 = vunpack.c.l.b16 %v2813
  %v3106 = vunpack.c.l.b16 %v2814
  %v3107 = vunpack.c.l.b16 %v2815
  %v3108 = vunpack.c.l.b16 %v2816
  %v3109 = vunpack.c.l.b16 %v2817
  %v3110 = vunpack.c.l.b16 %v2818
  %v3111 = vunpack.c.l.b16 %v2819
  %v3112 = vunpack.c.l.b16 %v2820
  %v3113 = vunpack.c.l.b16 %v2821
  %v3114 = vunpack.c.l.b16 %v2822
  %v3115 = vunpack.c.l.b16 %v2823
  %v3116 = vunpack.c.l.b16 %v2824
  %v3117 = vunpack.c.l.b16 %v2825
  %v3118 = vunpack.c.l.b16 %v2826
  %v3119 = vunpack.c.l.b16 %v2827
  %v3120 = vunpack.c.l.b16 %v2828
  %v3121 = vunpack.c.l.b16 %v2829
  %v3122 = vpack.c.b16 %v2979, %v2978
  %v3123 = vpack.c.b16 %v2981, %v2980
  %v3124 = vpack.c.b16 %v2983, %v2982
  %v3125 = vpack.c.b16 %v2985, %v2984
  %v3126 = vpack.c.b16 %v2987, %v2986
  %v3127 = vpack.c.b16 %v2989, %v2988
  %v3128 = vpack.c.b16 %v2991, %v2990
  %v3129 = vpack.c.b16 %v2993, %v2992
  %v3130 = vpack.c.b16 %v2995, %v2994
  %v3131 = vpack.c.b16 %v2997, %v2996
  %v3132 = vpack.c.b16 %v2999, %v2998
  %v3133 = vpack.c.b16 %v3001, %v3000
  %v3134 = vpack.c.b16 %v3003, %v3002
  %v3135 = vpack.c.b16 %v3005, %v3004
  %v3136 = vpack.c.b16 %v3007, %v3006
  %v3137 = vpack.c.b16 %v3009, %v3008
  %v3138 = vpack.c.b16 %v3011, %v3010
  %v3139 = vpack.c.b16 %v3013, %v3012
  %v3140 = vpack.c.b16 %v3015, %v3014
  %v3141 = vpack.c.b16 %v3017, %v3016
  %v3142 = vpack.c.b16 %v3019, %v3018
  %v3143 = vpack.c.b16 %v3021, %v3020
  %v3144 = vpack.c.b16 %v3023, %v3022
  %v3145 = vpack.c.b16 %v3025, %v3024
  %v3146 = vpack.c.b16 %v3027, %v3026
  %v3147 = vpack.c.b16 %v3029, %v3028
  %v3148 = vpack.c.b16 %v3031, %v3030
  %v3149 = vpack.c.b16 %v3033, %v3032
  %v3150 = vpack.c.b16 %v3035, %v3034
  %v3151 = vpack.c.b16 %v3037, %v3036
  %v3152 = vpack.c.b16 %v3039, %v3038
  %v3153 = vpack.c.b16 %v3041, %v3040
  %v3154 = vpack.c.b16 %v3043, %v3042
  %v3155 = vpack.c.b16 %v3045, %v3044
  %v3156 = vpack.c.b16 %v3047, %v3046
  %v3157 = vpack.c.b16 %v3049, %v3048
  %v3158 = vpack.c.b16 %v3051, %v3050
  %v3159 = vpack.c.b16 %v3053, %v3052
  %v3160 = vpack.c.b16 %v3055, %v3054
  %v3161 = vpack.c.b16 %v3057, %v3056
  %v3162 = vpack.c.b16 %v3059, %v3058
  %v3163 = vpack.c.b16 %v3061, %v3060
  %v3164 = vpack.c.b16 %v3063, %v3062
  %v3165 = vpack.c.b16 %v3065, %v3064
  %v3166 = vpack.c.b16 %v3067, %v3066
  %v3167 = vpack.c.b16 %v3069, %v3068
  %v3168 = vpack.c.b16 %v3071, %v3070
  %v3169 = vpack.c.b16 %v3073, %v3072
  %v3170 = vpack.c.b16 %v3075, %v3074
  %v3171 = vpack.c.b16 %v3077, %v3076
  %v3172 = vpack.c.b16 %v3079, %v3078
  %v3173 = vpack.c.b16 %v3081, %v3080
  %v3174 = vpack.c.b16 %v3083, %v3082
  %v3175 = vpack.c.b16 %v3085, %v3084
  %v3176 = vpack.c.b16 %v3087, %v3086
  %v3177 = vpack.c.b16 %v3089, %v3088
  %v3178 = vpack.c.b16 %v3091, %v3090
  %v3179 = vpack.c.b16 %v3093, %v3092
  %v3180 = vpack.c.b16 %v3095, %v3094
  %v3181 = vpack.c.b16 %v3097, %v3096
  %v3182 = vpack.c.b16 %v3099, %v3098
  %v3183 = vpack.c.b16 %v3101, %v3100
  %v3184 = vpack.c.b16 %v3103, %v3102
  %v3185 = vpack.c.b16 %v3105, %v3104
  %v3186 = vpack.c.b16 %v3107, %v3106
  %v3187 = vpack.c.b16 %v3109, %v3108
  %v3188 = vpack.c.b16 %v3111, %v3110
  %v3189 = vpack.c.b16 %v3113, %v3112
  %v3190 = vpack.c.b16 %v3115, %v3114
  %v3191 = vpack.c.b16 %v3117, %v3116
  %v3192 = vpack.c.b16 %v3119, %v3118
  %v3193 = vpack.c.b16 %v3121, %v3120
  %3266 = vmatpush.bf16.msra.mxu0 %v3129
  %3267 = vmatpush.bf16.msra.mxu0 %v3128
  %3268 = vmatpush.bf16.msra.mxu0 %v3127
  %3269 = vmatpush.bf16.msra.mxu0 %v3126
  %3270 = vmatpush.bf16.msra.mxu0 %v3125
  %3271 = vmatpush.bf16.msra.mxu0 %v3124
  %3272 = vmatpush.bf16.msra.mxu0 %v3123
  %3273 = vmatpush.bf16.msra.mxu0 %v3122
  %3274 = vmatmul.bf16.gmra.mxu0 %v2614
  %v3275 = vpop.f32.mrf.mxu0
  %v3276 = vadd.f32 %v2832, %v3275
  %v3277 = vpop.f32.mrf.mxu0
  %v3278 = vadd.f32 %v2832, %v3277
  %3279 = vmatmul.bf16.gmra.mxu0 %v2623
  %v3280 = vpop.f32.mrf.mxu0
  %v3281 = vadd.f32 %v2832, %v3280
  %v3282 = vpop.f32.mrf.mxu0
  %v3283 = vadd.f32 %v2832, %v3282
  %3284 = vmatmul.bf16.gmra.mxu0 %v2632
  %v3285 = vpop.f32.mrf.mxu0
  %v3286 = vadd.f32 %v2832, %v3285
  %v3287 = vpop.f32.mrf.mxu0
  %v3288 = vadd.f32 %v2832, %v3287
  %3289 = vmatmul.bf16.gmra.mxu0 %v2641
  %v3290 = vpop.f32.mrf.mxu0
  %v3291 = vadd.f32 %v2832, %v3290
  %v3292 = vpop.f32.mrf.mxu0
  %v3293 = vadd.f32 %v2832, %v3292
  %3294 = vmatmul.bf16.gmra.mxu0 %v2650
  %v3295 = vpop.f32.mrf.mxu0
  %v3296 = vadd.f32 %v2832, %v3295
  %v3297 = vpop.f32.mrf.mxu0
  %v3298 = vadd.f32 %v2832, %v3297
  %3299 = vmatmul.bf16.gmra.mxu0 %v2659
  %v3300 = vpop.f32.mrf.mxu0
  %v3301 = vadd.f32 %v2832, %v3300
  %v3302 = vpop.f32.mrf.mxu0
  %v3303 = vadd.f32 %v2832, %v3302
  %3304 = vmatmul.bf16.gmra.mxu0 %v2668
  %v3305 = vpop.f32.mrf.mxu0
  %v3306 = vadd.f32 %v2832, %v3305
  %v3307 = vpop.f32.mrf.mxu0
  %v3308 = vadd.f32 %v2832, %v3307
  %3309 = vmatmul.bf16.gmra.mxu0 %v2677
  %v3310 = vpop.f32.mrf.mxu0
  %v3311 = vadd.f32 %v2832, %v3310
  %v3312 = vpop.f32.mrf.mxu0
  %v3313 = vadd.f32 %v2832, %v3312
  %3314 = vdwg.mxu0
  %3315 = vmatpush.bf16.msra.mxu0 %v3137
  %3316 = vmatpush.bf16.msra.mxu0 %v3136
  %3317 = vmatpush.bf16.msra.mxu0 %v3135
  %3318 = vmatpush.bf16.msra.mxu0 %v3134
  %3319 = vmatpush.bf16.msra.mxu0 %v3133
  %3320 = vmatpush.bf16.msra.mxu0 %v3132
  %3321 = vmatpush.bf16.msra.mxu0 %v3131
  %3322 = vmatpush.bf16.msra.mxu0 %v3130
  %3323 = vmatmul.bf16.gmra.mxu0 %v2615
  %v3324 = vpop.f32.mrf.mxu0
  %v3325 = vadd.f32 %v3276, %v3324
  %v3326 = vpop.f32.mrf.mxu0
  %v3327 = vadd.f32 %v3278, %v3326
  %3328 = vmatmul.bf16.gmra.mxu0 %v2624
  %v3329 = vpop.f32.mrf.mxu0
  %v3330 = vadd.f32 %v3281, %v3329
  %v3331 = vpop.f32.mrf.mxu0
  %v3332 = vadd.f32 %v3283, %v3331
  %3333 = vmatmul.bf16.gmra.mxu0 %v2633
  %v3334 = vpop.f32.mrf.mxu0
  %v3335 = vadd.f32 %v3286, %v3334
  %v3336 = vpop.f32.mrf.mxu0
  %v3337 = vadd.f32 %v3288, %v3336
  %3338 = vmatmul.bf16.gmra.mxu0 %v2642
  %v3339 = vpop.f32.mrf.mxu0
  %v3340 = vadd.f32 %v3291, %v3339
  %v3341 = vpop.f32.mrf.mxu0
  %v3342 = vadd.f32 %v3293, %v3341
  %3343 = vmatmul.bf16.gmra.mxu0 %v2651
  %v3344 = vpop.f32.mrf.mxu0
  %v3345 = vadd.f32 %v3296, %v3344
  %v3346 = vpop.f32.mrf.mxu0
  %v3347 = vadd.f32 %v3298, %v3346
  %3348 = vmatmul.bf16.gmra.mxu0 %v2660
  %v3349 = vpop.f32.mrf.mxu0
  %v3350 = vadd.f32 %v3301, %v3349
  %v3351 = vpop.f32.mrf.mxu0
  %v3352 = vadd.f32 %v3303, %v3351
  %3353 = vmatmul.bf16.gmra.mxu0 %v2669
  %v3354 = vpop.f32.mrf.mxu0
  %v3355 = vadd.f32 %v3306, %v3354
  %v3356 = vpop.f32.mrf.mxu0
  %v3357 = vadd.f32 %v3308, %v3356
  %3358 = vmatmul.bf16.gmra.mxu0 %v2678
  %v3359 = vpop.f32.mrf.mxu0
  %v3360 = vadd.f32 %v3311, %v3359
  %v3361 = vpop.f32.mrf.mxu0
  %v3362 = vadd.f32 %v3313, %v3361
  %3363 = vdwg.mxu0
  %3364 = vmatpush.bf16.msra.mxu0 %v3145
  %3365 = vmatpush.bf16.msra.mxu0 %v3144
  %3366 = vmatpush.bf16.msra.mxu0 %v3143
  %3367 = vmatpush.bf16.msra.mxu0 %v3142
  %3368 = vmatpush.bf16.msra.mxu0 %v3141
  %3369 = vmatpush.bf16.msra.mxu0 %v3140
  %3370 = vmatpush.bf16.msra.mxu0 %v3139
  %3371 = vmatpush.bf16.msra.mxu0 %v3138
  %3372 = vmatmul.bf16.gmra.mxu0 %v2616
  %v3373 = vpop.f32.mrf.mxu0
  %v3374 = vadd.f32 %v3325, %v3373
  %v3375 = vpop.f32.mrf.mxu0
  %v3376 = vadd.f32 %v3327, %v3375
  %3377 = vmatmul.bf16.gmra.mxu0 %v2625
  %v3378 = vpop.f32.mrf.mxu0
  %v3379 = vadd.f32 %v3330, %v3378
  %v3380 = vpop.f32.mrf.mxu0
  %v3381 = vadd.f32 %v3332, %v3380
  %3382 = vmatmul.bf16.gmra.mxu0 %v2634
  %v3383 = vpop.f32.mrf.mxu0
  %v3384 = vadd.f32 %v3335, %v3383
  %v3385 = vpop.f32.mrf.mxu0
  %v3386 = vadd.f32 %v3337, %v3385
  %3387 = vmatmul.bf16.gmra.mxu0 %v2643
  %v3388 = vpop.f32.mrf.mxu0
  %v3389 = vadd.f32 %v3340, %v3388
  %v3390 = vpop.f32.mrf.mxu0
  %v3391 = vadd.f32 %v3342, %v3390
  %3392 = vmatmul.bf16.gmra.mxu0 %v2652
  %v3393 = vpop.f32.mrf.mxu0
  %v3394 = vadd.f32 %v3345, %v3393
  %v3395 = vpop.f32.mrf.mxu0
  %v3396 = vadd.f32 %v3347, %v3395
  %3397 = vmatmul.bf16.gmra.mxu0 %v2661
  %v3398 = vpop.f32.mrf.mxu0
  %v3399 = vadd.f32 %v3350, %v3398
  %v3400 = vpop.f32.mrf.mxu0
  %v3401 = vadd.f32 %v3352, %v3400
  %3402 = vmatmul.bf16.gmra.mxu0 %v2670
  %v3403 = vpop.f32.mrf.mxu0
  %v3404 = vadd.f32 %v3355, %v3403
  %v3405 = vpop.f32.mrf.mxu0
  %v3406 = vadd.f32 %v3357, %v3405
  %3407 = vmatmul.bf16.gmra.mxu0 %v2679
  %v3408 = vpop.f32.mrf.mxu0
  %v3409 = vadd.f32 %v3360, %v3408
  %v3410 = vpop.f32.mrf.mxu0
  %v3411 = vadd.f32 %v3362, %v3410
  %3412 = vdwg.mxu0
  %3413 = vmatpush.bf16.msra.mxu0 %v3153
  %3414 = vmatpush.bf16.msra.mxu0 %v3152
  %3415 = vmatpush.bf16.msra.mxu0 %v3151
  %3416 = vmatpush.bf16.msra.mxu0 %v3150
  %3417 = vmatpush.bf16.msra.mxu0 %v3149
  %3418 = vmatpush.bf16.msra.mxu0 %v3148
  %3419 = vmatpush.bf16.msra.mxu0 %v3147
  %3420 = vmatpush.bf16.msra.mxu0 %v3146
  %3421 = vmatmul.bf16.gmra.mxu0 %v2617
  %v3422 = vpop.f32.mrf.mxu0
  %v3423 = vadd.f32 %v3374, %v3422
  %v3424 = vpop.f32.mrf.mxu0
  %v3425 = vadd.f32 %v3376, %v3424
  %3426 = vmatmul.bf16.gmra.mxu0 %v2626
  %v3427 = vpop.f32.mrf.mxu0
  %v3428 = vadd.f32 %v3379, %v3427
  %v3429 = vpop.f32.mrf.mxu0
  %v3430 = vadd.f32 %v3381, %v3429
  %3431 = vmatmul.bf16.gmra.mxu0 %v2635
  %v3432 = vpop.f32.mrf.mxu0
  %v3433 = vadd.f32 %v3384, %v3432
  %v3434 = vpop.f32.mrf.mxu0
  %v3435 = vadd.f32 %v3386, %v3434
  %3436 = vmatmul.bf16.gmra.mxu0 %v2644
  %v3437 = vpop.f32.mrf.mxu0
  %v3438 = vadd.f32 %v3389, %v3437
  %v3439 = vpop.f32.mrf.mxu0
  %v3440 = vadd.f32 %v3391, %v3439
  %3441 = vmatmul.bf16.gmra.mxu0 %v2653
  %v3442 = vpop.f32.mrf.mxu0
  %v3443 = vadd.f32 %v3394, %v3442
  %v3444 = vpop.f32.mrf.mxu0
  %v3445 = vadd.f32 %v3396, %v3444
  %3446 = vmatmul.bf16.gmra.mxu0 %v2662
  %v3447 = vpop.f32.mrf.mxu0
  %v3448 = vadd.f32 %v3399, %v3447
  %v3449 = vpop.f32.mrf.mxu0
  %v3450 = vadd.f32 %v3401, %v3449
  %3451 = vmatmul.bf16.gmra.mxu0 %v2671
  %v3452 = vpop.f32.mrf.mxu0
  %v3453 = vadd.f32 %v3404, %v3452
  %v3454 = vpop.f32.mrf.mxu0
  %v3455 = vadd.f32 %v3406, %v3454
  %3456 = vmatmul.bf16.gmra.mxu0 %v2680
  %v3457 = vpop.f32.mrf.mxu0
  %v3458 = vadd.f32 %v3409, %v3457
  %v3459 = vpop.f32.mrf.mxu0
  %v3460 = vadd.f32 %v3411, %v3459
  %3461 = vdwg.mxu0
  %3462 = vmatpush.bf16.msra.mxu0 %v3161
  %3463 = vmatpush.bf16.msra.mxu0 %v3160
  %3464 = vmatpush.bf16.msra.mxu0 %v3159
  %3465 = vmatpush.bf16.msra.mxu0 %v3158
  %3466 = vmatpush.bf16.msra.mxu0 %v3157
  %3467 = vmatpush.bf16.msra.mxu0 %v3156
  %3468 = vmatpush.bf16.msra.mxu0 %v3155
  %3469 = vmatpush.bf16.msra.mxu0 %v3154
  %3470 = vmatmul.bf16.gmra.mxu0 %v2618
  %v3471 = vpop.f32.mrf.mxu0
  %v3472 = vadd.f32 %v3423, %v3471
  %v3473 = vpop.f32.mrf.mxu0
  %v3474 = vadd.f32 %v3425, %v3473
  %3475 = vmatmul.bf16.gmra.mxu0 %v2627
  %v3476 = vpop.f32.mrf.mxu0
  %v3477 = vadd.f32 %v3428, %v3476
  %v3478 = vpop.f32.mrf.mxu0
  %v3479 = vadd.f32 %v3430, %v3478
  %3480 = vmatmul.bf16.gmra.mxu0 %v2636
  %v3481 = vpop.f32.mrf.mxu0
  %v3482 = vadd.f32 %v3433, %v3481
  %v3483 = vpop.f32.mrf.mxu0
  %v3484 = vadd.f32 %v3435, %v3483
  %3485 = vmatmul.bf16.gmra.mxu0 %v2645
  %v3486 = vpop.f32.mrf.mxu0
  %v3487 = vadd.f32 %v3438, %v3486
  %v3488 = vpop.f32.mrf.mxu0
  %v3489 = vadd.f32 %v3440, %v3488
  %3490 = vmatmul.bf16.gmra.mxu0 %v2654
  %v3491 = vpop.f32.mrf.mxu0
  %v3492 = vadd.f32 %v3443, %v3491
  %v3493 = vpop.f32.mrf.mxu0
  %v3494 = vadd.f32 %v3445, %v3493
  %3495 = vmatmul.bf16.gmra.mxu0 %v2663
  %v3496 = vpop.f32.mrf.mxu0
  %v3497 = vadd.f32 %v3448, %v3496
  %v3498 = vpop.f32.mrf.mxu0
  %v3499 = vadd.f32 %v3450, %v3498
  %3500 = vmatmul.bf16.gmra.mxu0 %v2672
  %v3501 = vpop.f32.mrf.mxu0
  %v3502 = vadd.f32 %v3453, %v3501
  %v3503 = vpop.f32.mrf.mxu0
  %v3504 = vadd.f32 %v3455, %v3503
  %3505 = vmatmul.bf16.gmra.mxu0 %v2681
  %v3506 = vpop.f32.mrf.mxu0
  %v3507 = vadd.f32 %v3458, %v3506
  %v3508 = vpop.f32.mrf.mxu0
  %v3509 = vadd.f32 %v3460, %v3508
  %3510 = vdwg.mxu0
  %3511 = vmatpush.bf16.msra.mxu0 %v3169
  %3512 = vmatpush.bf16.msra.mxu0 %v3168
  %3513 = vmatpush.bf16.msra.mxu0 %v3167
  %3514 = vmatpush.bf16.msra.mxu0 %v3166
  %3515 = vmatpush.bf16.msra.mxu0 %v3165
  %3516 = vmatpush.bf16.msra.mxu0 %v3164
  %3517 = vmatpush.bf16.msra.mxu0 %v3163
  %3518 = vmatpush.bf16.msra.mxu0 %v3162
  %3519 = vmatmul.bf16.gmra.mxu0 %v2619
  %v3520 = vpop.f32.mrf.mxu0
  %v3521 = vadd.f32 %v3472, %v3520
  %v3522 = vpop.f32.mrf.mxu0
  %v3523 = vadd.f32 %v3474, %v3522
  %3524 = vmatmul.bf16.gmra.mxu0 %v2628
  %v3525 = vpop.f32.mrf.mxu0
  %v3526 = vadd.f32 %v3477, %v3525
  %v3527 = vpop.f32.mrf.mxu0
  %v3528 = vadd.f32 %v3479, %v3527
  %3529 = vmatmul.bf16.gmra.mxu0 %v2637
  %v3530 = vpop.f32.mrf.mxu0
  %v3531 = vadd.f32 %v3482, %v3530
  %v3532 = vpop.f32.mrf.mxu0
  %v3533 = vadd.f32 %v3484, %v3532
  %3534 = vmatmul.bf16.gmra.mxu0 %v2646
  %v3535 = vpop.f32.mrf.mxu0
  %v3536 = vadd.f32 %v3487, %v3535
  %v3537 = vpop.f32.mrf.mxu0
  %v3538 = vadd.f32 %v3489, %v3537
  %3539 = vmatmul.bf16.gmra.mxu0 %v2655
  %v3540 = vpop.f32.mrf.mxu0
  %v3541 = vadd.f32 %v3492, %v3540
  %v3542 = vpop.f32.mrf.mxu0
  %v3543 = vadd.f32 %v3494, %v3542
  %3544 = vmatmul.bf16.gmra.mxu0 %v2664
  %v3545 = vpop.f32.mrf.mxu0
  %v3546 = vadd.f32 %v3497, %v3545
  %v3547 = vpop.f32.mrf.mxu0
  %v3548 = vadd.f32 %v3499, %v3547
  %3549 = vmatmul.bf16.gmra.mxu0 %v2673
  %v3550 = vpop.f32.mrf.mxu0
  %v3551 = vadd.f32 %v3502, %v3550
  %v3552 = vpop.f32.mrf.mxu0
  %v3553 = vadd.f32 %v3504, %v3552
  %3554 = vmatmul.bf16.gmra.mxu0 %v2682
  %v3555 = vpop.f32.mrf.mxu0
  %v3556 = vadd.f32 %v3507, %v3555
  %v3557 = vpop.f32.mrf.mxu0
  %v3558 = vadd.f32 %v3509, %v3557
  %3559 = vdwg.mxu0
  %3560 = vmatpush.bf16.msra.mxu0 %v3177
  %3561 = vmatpush.bf16.msra.mxu0 %v3176
  %3562 = vmatpush.bf16.msra.mxu0 %v3175
  %3563 = vmatpush.bf16.msra.mxu0 %v3174
  %3564 = vmatpush.bf16.msra.mxu0 %v3173
  %3565 = vmatpush.bf16.msra.mxu0 %v3172
  %3566 = vmatpush.bf16.msra.mxu0 %v3171
  %3567 = vmatpush.bf16.msra.mxu0 %v3170
  %3568 = vmatmul.bf16.gmra.mxu0 %v2620
  %v3569 = vpop.f32.mrf.mxu0
  %v3570 = vadd.f32 %v3521, %v3569
  %v3571 = vpop.f32.mrf.mxu0
  %v3572 = vadd.f32 %v3523, %v3571
  %3573 = vmatmul.bf16.gmra.mxu0 %v2629
  %v3574 = vpop.f32.mrf.mxu0
  %v3575 = vadd.f32 %v3526, %v3574
  %v3576 = vpop.f32.mrf.mxu0
  %v3577 = vadd.f32 %v3528, %v3576
  %3578 = vmatmul.bf16.gmra.mxu0 %v2638
  %v3579 = vpop.f32.mrf.mxu0
  %v3580 = vadd.f32 %v3531, %v3579
  %v3581 = vpop.f32.mrf.mxu0
  %v3582 = vadd.f32 %v3533, %v3581
  %3583 = vmatmul.bf16.gmra.mxu0 %v2647
  %v3584 = vpop.f32.mrf.mxu0
  %v3585 = vadd.f32 %v3536, %v3584
  %v3586 = vpop.f32.mrf.mxu0
  %v3587 = vadd.f32 %v3538, %v3586
  %3588 = vmatmul.bf16.gmra.mxu0 %v2656
  %v3589 = vpop.f32.mrf.mxu0
  %v3590 = vadd.f32 %v3541, %v3589
  %v3591 = vpop.f32.mrf.mxu0
  %v3592 = vadd.f32 %v3543, %v3591
  %3593 = vmatmul.bf16.gmra.mxu0 %v2665
  %v3594 = vpop.f32.mrf.mxu0
  %v3595 = vadd.f32 %v3546, %v3594
  %v3596 = vpop.f32.mrf.mxu0
  %v3597 = vadd.f32 %v3548, %v3596
  %3598 = vmatmul.bf16.gmra.mxu0 %v2674
  %v3599 = vpop.f32.mrf.mxu0
  %v3600 = vadd.f32 %v3551, %v3599
  %v3601 = vpop.f32.mrf.mxu0
  %v3602 = vadd.f32 %v3553, %v3601
  %3603 = vmatmul.bf16.gmra.mxu0 %v2683
  %v3604 = vpop.f32.mrf.mxu0
  %v3605 = vadd.f32 %v3556, %v3604
  %v3606 = vpop.f32.mrf.mxu0
  %v3607 = vadd.f32 %v3558, %v3606
  %3608 = vdwg.mxu0
  %3609 = vmatpush.bf16.msra.mxu0 %v3185
  %3610 = vmatpush.bf16.msra.mxu0 %v3184
  %3611 = vmatpush.bf16.msra.mxu0 %v3183
  %3612 = vmatpush.bf16.msra.mxu0 %v3182
  %3613 = vmatpush.bf16.msra.mxu0 %v3181
  %3614 = vmatpush.bf16.msra.mxu0 %v3180
  %3615 = vmatpush.bf16.msra.mxu0 %v3179
  %3616 = vmatpush.bf16.msra.mxu0 %v3178
  %3617 = vmatmul.bf16.gmra.mxu0 %v2621
  %v3618 = vpop.f32.mrf.mxu0
  %v3619 = vadd.f32 %v3570, %v3618
  %v3620 = vpop.f32.mrf.mxu0
  %v3621 = vadd.f32 %v3572, %v3620
  %3622 = vmatmul.bf16.gmra.mxu0 %v2630
  %v3623 = vpop.f32.mrf.mxu0
  %v3624 = vadd.f32 %v3575, %v3623
  %v3625 = vpop.f32.mrf.mxu0
  %v3626 = vadd.f32 %v3577, %v3625
  %3627 = vmatmul.bf16.gmra.mxu0 %v2639
  %v3628 = vpop.f32.mrf.mxu0
  %v3629 = vadd.f32 %v3580, %v3628
  %v3630 = vpop.f32.mrf.mxu0
  %v3631 = vadd.f32 %v3582, %v3630
  %3632 = vmatmul.bf16.gmra.mxu0 %v2648
  %v3633 = vpop.f32.mrf.mxu0
  %v3634 = vadd.f32 %v3585, %v3633
  %v3635 = vpop.f32.mrf.mxu0
  %v3636 = vadd.f32 %v3587, %v3635
  %3637 = vmatmul.bf16.gmra.mxu0 %v2657
  %v3638 = vpop.f32.mrf.mxu0
  %v3639 = vadd.f32 %v3590, %v3638
  %v3640 = vpop.f32.mrf.mxu0
  %v3641 = vadd.f32 %v3592, %v3640
  %3642 = vmatmul.bf16.gmra.mxu0 %v2666
  %v3643 = vpop.f32.mrf.mxu0
  %v3644 = vadd.f32 %v3595, %v3643
  %v3645 = vpop.f32.mrf.mxu0
  %v3646 = vadd.f32 %v3597, %v3645
  %3647 = vmatmul.bf16.gmra.mxu0 %v2675
  %v3648 = vpop.f32.mrf.mxu0
  %v3649 = vadd.f32 %v3600, %v3648
  %v3650 = vpop.f32.mrf.mxu0
  %v3651 = vadd.f32 %v3602, %v3650
  %3652 = vmatmul.bf16.gmra.mxu0 %v2684
  %v3653 = vpop.f32.mrf.mxu0
  %v3654 = vadd.f32 %v3605, %v3653
  %v3655 = vpop.f32.mrf.mxu0
  %v3656 = vadd.f32 %v3607, %v3655
  %3657 = vdwg.mxu0
  %3658 = vmatpush.bf16.msra.mxu0 %v3193
  %3659 = vmatpush.bf16.msra.mxu0 %v3192
  %3660 = vmatpush.bf16.msra.mxu0 %v3191
  %3661 = vmatpush.bf16.msra.mxu0 %v3190
  %3662 = vmatpush.bf16.msra.mxu0 %v3189
  %3663 = vmatpush.bf16.msra.mxu0 %v3188
  %3664 = vmatpush.bf16.msra.mxu0 %v3187
  %3665 = vmatpush.bf16.msra.mxu0 %v3186
  %3666 = vmatmul.bf16.gmra.mxu0 %v2622
  %v3667 = vpop.f32.mrf.mxu0
  %v3668 = vadd.f32 %v3619, %v3667
  %v3669 = vpop.f32.mrf.mxu0
  %v3670 = vadd.f32 %v3621, %v3669
  %3671 = vmatmul.bf16.gmra.mxu0 %v2631
  %v3672 = vpop.f32.mrf.mxu0
  %v3673 = vadd.f32 %v3624, %v3672
  %v3674 = vpop.f32.mrf.mxu0
  %v3675 = vadd.f32 %v3626, %v3674
  %3676 = vmatmul.bf16.gmra.mxu0 %v2640
  %v3677 = vpop.f32.mrf.mxu0
  %v3678 = vadd.f32 %v3629, %v3677
  %v3679 = vpop.f32.mrf.mxu0
  %v3680 = vadd.f32 %v3631, %v3679
  %3681 = vmatmul.bf16.gmra.mxu0 %v2649
  %v3682 = vpop.f32.mrf.mxu0
  %v3683 = vadd.f32 %v3634, %v3682
  %v3684 = vpop.f32.mrf.mxu0
  %v3685 = vadd.f32 %v3636, %v3684
  %3686 = vmatmul.bf16.gmra.mxu0 %v2658
  %v3687 = vpop.f32.mrf.mxu0
  %v3688 = vadd.f32 %v3639, %v3687
  %v3689 = vpop.f32.mrf.mxu0
  %v3690 = vadd.f32 %v3641, %v3689
  %3691 = vmatmul.bf16.gmra.mxu0 %v2667
  %v3692 = vpop.f32.mrf.mxu0
  %v3693 = vadd.f32 %v3644, %v3692
  %v3694 = vpop.f32.mrf.mxu0
  %v3695 = vadd.f32 %v3646, %v3694
  %3696 = vmatmul.bf16.gmra.mxu0 %v2676
  %v3697 = vpop.f32.mrf.mxu0
  %v3698 = vadd.f32 %v3649, %v3697
  %v3699 = vpop.f32.mrf.mxu0
  %v3700 = vadd.f32 %v3651, %v3699
  %3701 = vmatmul.bf16.gmra.mxu0 %v2685
  %v3702 = vpop.f32.mrf.mxu0
  %v3703 = vadd.f32 %v3654, %v3702
  %v3704 = vpop.f32.mrf.mxu0
  %v3705 = vadd.f32 %v3656, %v3704
  %3706 = vdwg.mxu0
  %3707 = vst.msk [vmem:[#allocation7] sm:$0xff] %vm154, %v3668
  %3708 = vst.msk [vmem:[#allocation7 + $0x8] sm:$0xff] %vm154, %v3670
  %3709 = vst.msk [vmem:[#allocation7 + $0x10] sm:$0xff] %vm154, %v3673
  %3710 = vst.msk [vmem:[#allocation7 + $0x18] sm:$0xff] %vm154, %v3675
  %3711 = vst.msk [vmem:[#allocation7 + $0x20] sm:$0xff] %vm154, %v3678
  %3712 = vst.msk [vmem:[#allocation7 + $0x28] sm:$0xff] %vm154, %v3680
  %3713 = vst.msk [vmem:[#allocation7 + $0x30] sm:$0xff] %vm154, %v3683
  %3714 = vst.msk [vmem:[#allocation7 + $0x38] sm:$0xff] %vm154, %v3685
  %3715 = vst.msk [vmem:[#allocation7 + $0x40] sm:$0xff] %vm154, %v3688
  %3716 = vst.msk [vmem:[#allocation7 + $0x48] sm:$0xff] %vm154, %v3690
  %3717 = vst.msk [vmem:[#allocation7 + $0x50] sm:$0xff] %vm154, %v3693
  %3718 = vst.msk [vmem:[#allocation7 + $0x58] sm:$0xff] %vm154, %v3695
  %3719 = vst.msk [vmem:[#allocation7 + $0x60] sm:$0xff] %vm154, %v3698
  %3720 = vst.msk [vmem:[#allocation7 + $0x68] sm:$0xff] %vm154, %v3700
  %3721 = vst.msk [vmem:[#allocation7 + $0x70] sm:$0xff] %vm154, %v3703
  %3722 = vst.msk [vmem:[#allocation7 + $0x78] sm:$0xff] %vm154, %v3705
  %v3723 = vld [vmem:[%s23] sm:$0xff]
  %v3724 = vld [vmem:[%s23 + $0x8] sm:$0xff]
  %v3725 = vld [vmem:[%s23 + $0x10] sm:$0xff]
  %v3726 = vld [vmem:[%s23 + $0x18] sm:$0xff]
  %v3727 = vld [vmem:[%s23 + $0x20] sm:$0xff]
  %v3728 = vld [vmem:[%s23 + $0x28] sm:$0xff]
  %v3729 = vld [vmem:[%s23 + $0x30] sm:$0xff]
  %v3730 = vld [vmem:[%s23 + $0x38] sm:$0xff]
  %v3731 = vld [vmem:[%s23 + $0x40] sm:$0xff]
  %v3732 = vld [vmem:[%s23 + $0x48] sm:$0xff]
  %v3733 = vld [vmem:[%s23 + $0x50] sm:$0xff]
  %v3734 = vld [vmem:[%s23 + $0x58] sm:$0xff]
  %v3735 = vld [vmem:[%s25] sm:$0xff]
  %v3736 = vld [vmem:[%s25 + $0x8] sm:$0xff]
  %v3737 = vld [vmem:[%s25 + $0x10] sm:$0xff]
  %v3738 = vld [vmem:[%s25 + $0x18] sm:$0xff]
  %v3739 = vld [vmem:[%s19] sm:$0x1]
  %v3740 = vld [vmem:[%s21] sm:$0x1]
  %v3741 = vld [vmem:[#allocation7] sm:$0xff]
  %v3742 = vld [vmem:[#allocation7 + $0x8] sm:$0xff]
  %v3743 = vld [vmem:[#allocation7 + $0x10] sm:$0xff]
  %v3744 = vld [vmem:[#allocation7 + $0x18] sm:$0xff]
  %v3745 = vld [vmem:[#allocation7 + $0x20] sm:$0xff]
  %v3746 = vld [vmem:[#allocation7 + $0x28] sm:$0xff]
  %v3747 = vld [vmem:[#allocation7 + $0x30] sm:$0xff]
  %v3748 = vld [vmem:[#allocation7 + $0x38] sm:$0xff]
  %v3749 = vsel %vm154, %v3741, 0.0
  %v3750 = vsel %vm154, %v3742, 0.0
  %v3751 = vadd.f32 %v3749, %v3750
  %v3752 = vsel %vm154, %v3743, 0.0
  %v3753 = vadd.f32 %v3751, %v3752
  %v3754 = vsel %vm154, %v3744, 0.0
  %v3755 = vadd.f32 %v3753, %v3754
  %v3756 = vsel %vm154, %v3745, 0.0
  %v3757 = vadd.f32 %v3755, %v3756
  %v3758 = vsel %vm154, %v3746, 0.0
  %v3759 = vadd.f32 %v3757, %v3758
  %v3760 = vsel %vm154, %v3747, 0.0
  %v3761 = vadd.f32 %v3759, %v3760
  %v3762 = vsel %vm154, %v3748, 0.0
  %v3763 = vadd.f32 %v3761, %v3762
  %v3764 = vrot.slane %v3763, 4
  %v3765 = vadd.f32 %v3763, %v3764
  %v3766 = vrot.slane %v3765, 2
  %v3767 = vadd.f32 %v3765, %v3766
  %v3768 = vrot.slane %v3767, 1
  %v3769 = vadd.f32 %v3767, %v3768
  %v3770 = vmul.f32 %v3741, %v3741
  %v3771 = vmul.f32 %v3742, %v3742
  %v3772 = vmul.f32 %v3743, %v3743
  %v3773 = vmul.f32 %v3744, %v3744
  %v3774 = vmul.f32 %v3745, %v3745
  %v3775 = vmul.f32 %v3746, %v3746
  %v3776 = vmul.f32 %v3747, %v3747
  %v3777 = vmul.f32 %v3748, %v3748
  %v3778 = vsel %vm154, %v3770, 0.0
  %v3779 = vsel %vm154, %v3771, 0.0
  %v3780 = vadd.f32 %v3778, %v3779
  %v3781 = vsel %vm154, %v3772, 0.0
  %v3782 = vadd.f32 %v3780, %v3781
  %v3783 = vsel %vm154, %v3773, 0.0
  %v3784 = vadd.f32 %v3782, %v3783
  %v3785 = vsel %vm154, %v3774, 0.0
  %v3786 = vadd.f32 %v3784, %v3785
  %v3787 = vsel %vm154, %v3775, 0.0
  %v3788 = vadd.f32 %v3786, %v3787
  %v3789 = vsel %vm154, %v3776, 0.0
  %v3790 = vadd.f32 %v3788, %v3789
  %v3791 = vsel %vm154, %v3777, 0.0
  %v3792 = vadd.f32 %v3790, %v3791
  %v3793 = vrot.slane %v3792, 4
  %v3794 = vadd.f32 %v3792, %v3793
  %v3795 = vrot.slane %v3794, 2
  %v3796 = vadd.f32 %v3794, %v3795
  %v3797 = vrot.slane %v3796, 1
  %v3798 = vadd.f32 %v3796, %v3797
  %v3800 = vsel %vm154, %v3769, 0
  %3802 = vmatpush.msra.mxu0 0.0
  %3803 = vmatpush.msra.mxu0 0.0
  %3804 = vmatpush.msra.mxu0 0.0
  %3805 = vmatpush.msra.mxu0 0.0
  %3806 = vmatpush.msra.mxu0 %v3734
  %3807 = vmatpush.msra.mxu0 %v3733
  %3808 = vmatpush.msra.mxu0 %v3732
  %3809 = vmatpush.msra.mxu0 %v3731
  %3810 = vmatpush.msra.mxu0 %v3730
  %3811 = vmatpush.msra.mxu0 %v3729
  %3812 = vmatpush.msra.mxu0 %v3728
  %3813 = vmatpush.msra.mxu0 %v3727
  %3814 = vmatpush.msra.mxu0 %v3726
  %3815 = vmatpush.msra.mxu0 %v3725
  %3816 = vmatpush.msra.mxu0 %v3724
  %3817 = vmatpush.msra.mxu0 %v3723
  %3818 = vmatmul.f32.gmra.mxu0 %v3800
  %v3819 = vpop.f32.mrf.mxu0
  %v3820 = vadd.f32 0.0, %v3819
  %3821 = vdwg.mxu0
  %v3822 = vmul.f32 %v3820, 0.0052083335
  %v3824 = vsel %vm1130, %v3822, 0
  %3826 = vmatpush.msra.mxu0 0.0
  %3827 = vmatpush.msra.mxu0 0.0
  %3828 = vmatpush.msra.mxu0 0.0
  %3829 = vmatpush.msra.mxu0 0.0
  %3830 = vmatpush.msra.mxu0 0.0
  %3831 = vmatpush.msra.mxu0 0.0
  %3832 = vmatpush.msra.mxu0 0.0
  %3833 = vmatpush.msra.mxu0 0.0
  %3834 = vmatpush.msra.mxu0 0.0
  %3835 = vmatpush.msra.mxu0 0.0
  %3836 = vmatpush.msra.mxu0 0.0
  %3837 = vmatpush.msra.mxu0 0.0
  %3838 = vmatpush.msra.mxu0 %v3738
  %3839 = vmatpush.msra.mxu0 %v3737
  %3840 = vmatpush.msra.mxu0 %v3736
  %3841 = vmatpush.msra.mxu0 %v3735
  %3842 = vmatmul.f32.gmra.mxu0 %v3824
  %v3843 = vpop.f32.mrf.mxu0
  %v3844 = vadd.f32 0.0, %v3843
  %3845 = vdwg.mxu0
  %v3847 = vsel %vm154, %v3798, 0
  %3849 = vmatpush.msra.mxu0 0.0
  %3850 = vmatpush.msra.mxu0 0.0
  %3851 = vmatpush.msra.mxu0 0.0
  %3852 = vmatpush.msra.mxu0 0.0
  %3853 = vmatpush.msra.mxu0 %v3734
  %3854 = vmatpush.msra.mxu0 %v3733
  %3855 = vmatpush.msra.mxu0 %v3732
  %3856 = vmatpush.msra.mxu0 %v3731
  %3857 = vmatpush.msra.mxu0 %v3730
  %3858 = vmatpush.msra.mxu0 %v3729
  %3859 = vmatpush.msra.mxu0 %v3728
  %3860 = vmatpush.msra.mxu0 %v3727
  %3861 = vmatpush.msra.mxu0 %v3726
  %3862 = vmatpush.msra.mxu0 %v3725
  %3863 = vmatpush.msra.mxu0 %v3724
  %3864 = vmatpush.msra.mxu0 %v3723
  %3865 = vmatmul.f32.gmra.mxu0 %v3847
  %v3866 = vpop.f32.mrf.mxu0
  %v3867 = vadd.f32 0.0, %v3866
  %3868 = vdwg.mxu0
  %v3869 = vmul.f32 %v3867, 0.0052083335
  %v3871 = vsel %vm1130, %v3869, 0
  %3873 = vmatpush.msra.mxu0 0.0
  %3874 = vmatpush.msra.mxu0 0.0
  %3875 = vmatpush.msra.mxu0 0.0
  %3876 = vmatpush.msra.mxu0 0.0
  %3877 = vmatpush.msra.mxu0 0.0
  %3878 = vmatpush.msra.mxu0 0.0
  %3879 = vmatpush.msra.mxu0 0.0
  %3880 = vmatpush.msra.mxu0 0.0
  %3881 = vmatpush.msra.mxu0 0.0
  %3882 = vmatpush.msra.mxu0 0.0
  %3883 = vmatpush.msra.mxu0 0.0
  %3884 = vmatpush.msra.mxu0 0.0
  %3885 = vmatpush.msra.mxu0 %v3738
  %3886 = vmatpush.msra.mxu0 %v3737
  %3887 = vmatpush.msra.mxu0 %v3736
  %3888 = vmatpush.msra.mxu0 %v3735
  %3889 = vmatmul.f32.gmra.mxu0 %v3871
  %v3890 = vpop.f32.mrf.mxu0
  %v3891 = vadd.f32 0.0, %v3890
  %3892 = vdwg.mxu0
  %v3893 = vmul.f32 %v3844, %v3844
  %v3894 = vsub.f32 %v3891, %v3893
  %v3895 = vmax.f32 %v3894, 0.0
  %v3896 = vadd.f32 %v3895, 1e-05
  %v3897 = vrsqrt.pop %v3896
  %v3898 = vmul.f32 %v3897, %v3896
  %v3899 = vmul.f32 %v3898, %v3897
  %v3900 = vmul.f32 0.5, %v3899
  %v3901 = vsub.f32 1.5, %v3900
  %v3902 = vmul.f32 %v3897, %v3901
  %vm3903 = vweird.f32 %v3896
  %vm3904 = vweird.f32 %v3897
  %vm3905 = vmor %vm3903, %vm3904
  %v3906 = vsel %vm3905, %v3897, %v3902
  %v3907 = vmul.f32 %v3739, %v3906
  %v3908 = vmul.f32 %v3844, %v3907
  %v3909 = vsub.f32 %v3740, %v3908
  %v3911 = vperm.slane %v3907, 0
  %v3913 = vmul.f32 %v3741, %v3911
  %v3914 = vmul.f32 %v3742, %v3911
  %v3915 = vmul.f32 %v3743, %v3911
  %v3916 = vmul.f32 %v3744, %v3911
  %v3917 = vmul.f32 %v3745, %v3911
  %v3918 = vmul.f32 %v3746, %v3911
  %v3919 = vmul.f32 %v3747, %v3911
  %v3920 = vmul.f32 %v3748, %v3911
  %v3922 = vperm.slane %v3909, 0
  %v3924 = vadd.f32 %v3913, %v3922
  %v3925 = vadd.f32 %v3914, %v3922
  %v3926 = vadd.f32 %v3915, %v3922
  %v3927 = vadd.f32 %v3916, %v3922
  %v3928 = vadd.f32 %v3917, %v3922
  %v3929 = vadd.f32 %v3918, %v3922
  %v3930 = vadd.f32 %v3919, %v3922
  %v3931 = vadd.f32 %v3920, %v3922
  %v3932 = vmax.f32 %v3924, 0.0
  %v3933 = vmax.f32 %v3925, 0.0
  %v3934 = vmax.f32 %v3926, 0.0
  %v3935 = vmax.f32 %v3927, 0.0
  %v3936 = vmax.f32 %v3928, 0.0
  %v3937 = vmax.f32 %v3929, 0.0
  %v3938 = vmax.f32 %v3930, 0.0
  %v3939 = vmax.f32 %v3931, 0.0
  %3940 = vst.msk [vmem:[#allocation7] sm:$0xff] %vm154, %v3932
  %3941 = vst.msk [vmem:[#allocation7 + $0x8] sm:$0xff] %vm154, %v3933
  %3942 = vst.msk [vmem:[#allocation7 + $0x10] sm:$0xff] %vm154, %v3934
  %3943 = vst.msk [vmem:[#allocation7 + $0x18] sm:$0xff] %vm154, %v3935
  %3944 = vst.msk [vmem:[#allocation7 + $0x20] sm:$0xff] %vm154, %v3936
  %3945 = vst.msk [vmem:[#allocation7 + $0x28] sm:$0xff] %vm154, %v3937
  %3946 = vst.msk [vmem:[#allocation7 + $0x30] sm:$0xff] %vm154, %v3938
  %3947 = vst.msk [vmem:[#allocation7 + $0x38] sm:$0xff] %vm154, %v3939
  %v3948 = vld [vmem:[#allocation7] ss:$2 sm:$0xff]
  %s3949 = scalar_lea.vmem [#allocation7], 16
  %v3950 = vld [vmem:[%s3949] ss:$2 sm:$0xff]
  %s3951 = scalar_lea.vmem [#allocation7], 32
  %v3952 = vld [vmem:[%s3951] ss:$2 sm:$0xff]
  %s3953 = scalar_lea.vmem [#allocation7], 48
  %v3954 = vld [vmem:[%s3953] ss:$2 sm:$0xff]
  %s3955 = scalar_lea.vmem [#allocation7], 1
  %v3956 = vld [vmem:[%s3955] ss:$2 sm:$0xff]
  %s3957 = scalar_lea.vmem [#allocation7], 17
  %v3958 = vld [vmem:[%s3957] ss:$2 sm:$0xff]
  %s3959 = scalar_lea.vmem [#allocation7], 33
  %v3960 = vld [vmem:[%s3959] ss:$2 sm:$0xff]
  %s3961 = scalar_lea.vmem [#allocation7], 49
  %v3962 = vld [vmem:[%s3961] ss:$2 sm:$0xff]
  %v3963 = vmax.f32 %v3948, %v3956
  %v3964 = vmax.f32 %v3950, %v3958
  %v3965 = vmax.f32 %v3952, %v3960
  %v3966 = vmax.f32 %v3954, %v3962
  %v3968 = vrot.slane %v3963, 4
  %v3970 = vmax.f32 %v3963, %v3968
  %3971 = vst.msk [vmem:[#allocation3 + $0x5] sm:$0xf] %vm161, %v3970
  %v3973 = vrot.slane %v3964, 4
  %v3975 = vmax.f32 %v3964, %v3973
  %3976 = vst.msk [vmem:[#allocation3 + $0x9] sm:$0xf] %vm161, %v3975
  %v3978 = vrot.slane %v3965, 4
  %v3980 = vmax.f32 %v3965, %v3978
  %3981 = vst.msk [vmem:[#allocation3 + $0xd] sm:$0xf] %vm161, %v3980
  %v3983 = vrot.slane %v3966, 4
  %v3985 = vmax.f32 %v3966, %v3983
  %3986 = vst.msk [vmem:[#allocation3 + $0x11] sm:$0xf] %vm161, %v3985
  %v3987 = vld [vmem:[#allocation7 + $0x40] sm:$0xff]
  %v3988 = vld [vmem:[#allocation7 + $0x48] sm:$0xff]
  %v3989 = vld [vmem:[#allocation7 + $0x50] sm:$0xff]
  %v3990 = vld [vmem:[#allocation7 + $0x58] sm:$0xff]
  %v3991 = vld [vmem:[#allocation7 + $0x60] sm:$0xff]
  %v3992 = vld [vmem:[#allocation7 + $0x68] sm:$0xff]
  %v3993 = vld [vmem:[#allocation7 + $0x70] sm:$0xff]
  %v3994 = vld [vmem:[#allocation7 + $0x78] sm:$0xff]
  %v3995 = vsel %vm154, %v3987, 0.0
  %v3996 = vsel %vm154, %v3988, 0.0
  %v3997 = vadd.f32 %v3995, %v3996
  %v3998 = vsel %vm154, %v3989, 0.0
  %v3999 = vadd.f32 %v3997, %v3998
  %v4000 = vsel %vm154, %v3990, 0.0
  %v4001 = vadd.f32 %v3999, %v4000
  %v4002 = vsel %vm154, %v3991, 0.0
  %v4003 = vadd.f32 %v4001, %v4002
  %v4004 = vsel %vm154, %v3992, 0.0
  %v4005 = vadd.f32 %v4003, %v4004
  %v4006 = vsel %vm154, %v3993, 0.0
  %v4007 = vadd.f32 %v4005, %v4006
  %v4008 = vsel %vm154, %v3994, 0.0
  %v4009 = vadd.f32 %v4007, %v4008
  %v4010 = vrot.slane %v4009, 4
  %v4011 = vadd.f32 %v4009, %v4010
  %v4012 = vrot.slane %v4011, 2
  %v4013 = vadd.f32 %v4011, %v4012
  %v4014 = vrot.slane %v4013, 1
  %v4015 = vadd.f32 %v4013, %v4014
  %v4016 = vmul.f32 %v3987, %v3987
  %v4017 = vmul.f32 %v3988, %v3988
  %v4018 = vmul.f32 %v3989, %v3989
  %v4019 = vmul.f32 %v3990, %v3990
  %v4020 = vmul.f32 %v3991, %v3991
  %v4021 = vmul.f32 %v3992, %v3992
  %v4022 = vmul.f32 %v3993, %v3993
  %v4023 = vmul.f32 %v3994, %v3994
  %v4024 = vsel %vm154, %v4016, 0.0
  %v4025 = vsel %vm154, %v4017, 0.0
  %v4026 = vadd.f32 %v4024, %v4025
  %v4027 = vsel %vm154, %v4018, 0.0
  %v4028 = vadd.f32 %v4026, %v4027
  %v4029 = vsel %vm154, %v4019, 0.0
  %v4030 = vadd.f32 %v4028, %v4029
  %v4031 = vsel %vm154, %v4020, 0.0
  %v4032 = vadd.f32 %v4030, %v4031
  %v4033 = vsel %vm154, %v4021, 0.0
  %v4034 = vadd.f32 %v4032, %v4033
  %v4035 = vsel %vm154, %v4022, 0.0
  %v4036 = vadd.f32 %v4034, %v4035
  %v4037 = vsel %vm154, %v4023, 0.0
  %v4038 = vadd.f32 %v4036, %v4037
  %v4039 = vrot.slane %v4038, 4
  %v4040 = vadd.f32 %v4038, %v4039
  %v4041 = vrot.slane %v4040, 2
  %v4042 = vadd.f32 %v4040, %v4041
  %v4043 = vrot.slane %v4042, 1
  %v4044 = vadd.f32 %v4042, %v4043
  %v4046 = vsel %vm154, %v4015, 0
  %4048 = vmatpush.msra.mxu0 0.0
  %4049 = vmatpush.msra.mxu0 0.0
  %4050 = vmatpush.msra.mxu0 0.0
  %4051 = vmatpush.msra.mxu0 0.0
  %4052 = vmatpush.msra.mxu0 %v3734
  %4053 = vmatpush.msra.mxu0 %v3733
  %4054 = vmatpush.msra.mxu0 %v3732
  %4055 = vmatpush.msra.mxu0 %v3731
  %4056 = vmatpush.msra.mxu0 %v3730
  %4057 = vmatpush.msra.mxu0 %v3729
  %4058 = vmatpush.msra.mxu0 %v3728
  %4059 = vmatpush.msra.mxu0 %v3727
  %4060 = vmatpush.msra.mxu0 %v3726
  %4061 = vmatpush.msra.mxu0 %v3725
  %4062 = vmatpush.msra.mxu0 %v3724
  %4063 = vmatpush.msra.mxu0 %v3723
  %4064 = vmatmul.f32.gmra.mxu0 %v4046
  %v4065 = vpop.f32.mrf.mxu0
  %v4066 = vadd.f32 0.0, %v4065
  %4067 = vdwg.mxu0
  %v4068 = vmul.f32 %v4066, 0.0052083335
  %v4070 = vsel %vm1130, %v4068, 0
  %4072 = vmatpush.msra.mxu0 0.0
  %4073 = vmatpush.msra.mxu0 0.0
  %4074 = vmatpush.msra.mxu0 0.0
  %4075 = vmatpush.msra.mxu0 0.0
  %4076 = vmatpush.msra.mxu0 0.0
  %4077 = vmatpush.msra.mxu0 0.0
  %4078 = vmatpush.msra.mxu0 0.0
  %4079 = vmatpush.msra.mxu0 0.0
  %4080 = vmatpush.msra.mxu0 0.0
  %4081 = vmatpush.msra.mxu0 0.0
  %4082 = vmatpush.msra.mxu0 0.0
  %4083 = vmatpush.msra.mxu0 0.0
  %4084 = vmatpush.msra.mxu0 %v3738
  %4085 = vmatpush.msra.mxu0 %v3737
  %4086 = vmatpush.msra.mxu0 %v3736
  %4087 = vmatpush.msra.mxu0 %v3735
  %4088 = vmatmul.f32.gmra.mxu0 %v4070
  %v4089 = vpop.f32.mrf.mxu0
  %v4090 = vadd.f32 0.0, %v4089
  %4091 = vdwg.mxu0
  %v4093 = vsel %vm154, %v4044, 0
  %4095 = vmatpush.msra.mxu0 0.0
  %4096 = vmatpush.msra.mxu0 0.0
  %4097 = vmatpush.msra.mxu0 0.0
  %4098 = vmatpush.msra.mxu0 0.0
  %4099 = vmatpush.msra.mxu0 %v3734
  %4100 = vmatpush.msra.mxu0 %v3733
  %4101 = vmatpush.msra.mxu0 %v3732
  %4102 = vmatpush.msra.mxu0 %v3731
  %4103 = vmatpush.msra.mxu0 %v3730
  %4104 = vmatpush.msra.mxu0 %v3729
  %4105 = vmatpush.msra.mxu0 %v3728
  %4106 = vmatpush.msra.mxu0 %v3727
  %4107 = vmatpush.msra.mxu0 %v3726
  %4108 = vmatpush.msra.mxu0 %v3725
  %4109 = vmatpush.msra.mxu0 %v3724
  %4110 = vmatpush.msra.mxu0 %v3723
  %4111 = vmatmul.f32.gmra.mxu0 %v4093
  %v4112 = vpop.f32.mrf.mxu0
  %v4113 = vadd.f32 0.0, %v4112
  %4114 = vdwg.mxu0
  %v4115 = vmul.f32 %v4113, 0.0052083335
  %v4117 = vsel %vm1130, %v4115, 0
  %4119 = vmatpush.msra.mxu0 0.0
  %4120 = vmatpush.msra.mxu0 0.0
  %4121 = vmatpush.msra.mxu0 0.0
  %4122 = vmatpush.msra.mxu0 0.0
  %4123 = vmatpush.msra.mxu0 0.0
  %4124 = vmatpush.msra.mxu0 0.0
  %4125 = vmatpush.msra.mxu0 0.0
  %4126 = vmatpush.msra.mxu0 0.0
  %4127 = vmatpush.msra.mxu0 0.0
  %4128 = vmatpush.msra.mxu0 0.0
  %4129 = vmatpush.msra.mxu0 0.0
  %4130 = vmatpush.msra.mxu0 0.0
  %4131 = vmatpush.msra.mxu0 %v3738
  %4132 = vmatpush.msra.mxu0 %v3737
  %4133 = vmatpush.msra.mxu0 %v3736
  %4134 = vmatpush.msra.mxu0 %v3735
  %4135 = vmatmul.f32.gmra.mxu0 %v4117
  %v4136 = vpop.f32.mrf.mxu0
  %v4137 = vadd.f32 0.0, %v4136
  %4138 = vdwg.mxu0
  %v4139 = vmul.f32 %v4090, %v4090
  %v4140 = vsub.f32 %v4137, %v4139
  %v4141 = vmax.f32 %v4140, 0.0
  %v4142 = vadd.f32 %v4141, 1e-05
  %v4143 = vrsqrt.pop %v4142
  %v4144 = vmul.f32 %v4143, %v4142
  %v4145 = vmul.f32 %v4144, %v4143
  %v4146 = vmul.f32 0.5, %v4145
  %v4147 = vsub.f32 1.5, %v4146
  %v4148 = vmul.f32 %v4143, %v4147
  %vm4149 = vweird.f32 %v4142
  %vm4150 = vweird.f32 %v4143
  %vm4151 = vmor %vm4149, %vm4150
  %v4152 = vsel %vm4151, %v4143, %v4148
  %v4153 = vmul.f32 %v3739, %v4152
  %v4154 = vmul.f32 %v4090, %v4153
  %v4155 = vsub.f32 %v3740, %v4154
  %v4157 = vperm.slane %v4153, 0
  %v4159 = vmul.f32 %v3987, %v4157
  %v4160 = vmul.f32 %v3988, %v4157
  %v4161 = vmul.f32 %v3989, %v4157
  %v4162 = vmul.f32 %v3990, %v4157
  %v4163 = vmul.f32 %v3991, %v4157
  %v4164 = vmul.f32 %v3992, %v4157
  %v4165 = vmul.f32 %v3993, %v4157
  %v4166 = vmul.f32 %v3994, %v4157
  %v4168 = vperm.slane %v4155, 0
  %v4170 = vadd.f32 %v4159, %v4168
  %v4171 = vadd.f32 %v4160, %v4168
  %v4172 = vadd.f32 %v4161, %v4168
  %v4173 = vadd.f32 %v4162, %v4168
  %v4174 = vadd.f32 %v4163, %v4168
  %v4175 = vadd.f32 %v4164, %v4168
  %v4176 = vadd.f32 %v4165, %v4168
  %v4177 = vadd.f32 %v4166, %v4168
  %v4178 = vmax.f32 %v4170, 0.0
  %v4179 = vmax.f32 %v4171, 0.0
  %v4180 = vmax.f32 %v4172, 0.0
  %v4181 = vmax.f32 %v4173, 0.0
  %v4182 = vmax.f32 %v4174, 0.0
  %v4183 = vmax.f32 %v4175, 0.0
  %v4184 = vmax.f32 %v4176, 0.0
  %v4185 = vmax.f32 %v4177, 0.0
  %4186 = vst.msk [vmem:[#allocation7 + $0x40] sm:$0xff] %vm154, %v4178
  %4187 = vst.msk [vmem:[#allocation7 + $0x48] sm:$0xff] %vm154, %v4179
  %4188 = vst.msk [vmem:[#allocation7 + $0x50] sm:$0xff] %vm154, %v4180
  %4189 = vst.msk [vmem:[#allocation7 + $0x58] sm:$0xff] %vm154, %v4181
  %4190 = vst.msk [vmem:[#allocation7 + $0x60] sm:$0xff] %vm154, %v4182
  %4191 = vst.msk [vmem:[#allocation7 + $0x68] sm:$0xff] %vm154, %v4183
  %4192 = vst.msk [vmem:[#allocation7 + $0x70] sm:$0xff] %vm154, %v4184
  %4193 = vst.msk [vmem:[#allocation7 + $0x78] sm:$0xff] %vm154, %v4185
  %s4194 = scalar_lea.vmem [#allocation7], 64
  %v4195 = vld [vmem:[%s4194] ss:$2 sm:$0xff]
  %s4196 = scalar_lea.vmem [#allocation7], 80
  %v4197 = vld [vmem:[%s4196] ss:$2 sm:$0xff]
  %s4198 = scalar_lea.vmem [#allocation7], 96
  %v4199 = vld [vmem:[%s4198] ss:$2 sm:$0xff]
  %s4200 = scalar_lea.vmem [#allocation7], 112
  %v4201 = vld [vmem:[%s4200] ss:$2 sm:$0xff]
  %s4202 = scalar_lea.vmem [#allocation7], 65
  %v4203 = vld [vmem:[%s4202] ss:$2 sm:$0xff]
  %s4204 = scalar_lea.vmem [#allocation7], 81
  %v4205 = vld [vmem:[%s4204] ss:$2 sm:$0xff]
  %s4206 = scalar_lea.vmem [#allocation7], 97
  %v4207 = vld [vmem:[%s4206] ss:$2 sm:$0xff]
  %s4208 = scalar_lea.vmem [#allocation7], 113
  %v4209 = vld [vmem:[%s4208] ss:$2 sm:$0xff]
  %v4210 = vmax.f32 %v4195, %v4203
  %v4211 = vmax.f32 %v4197, %v4205
  %v4212 = vmax.f32 %v4199, %v4207
  %v4213 = vmax.f32 %v4201, %v4209
  %v4215 = vrot.slane %v4210, 4
  %v4217 = vmax.f32 %v4210, %v4215
  %4218 = vst.msk [vmem:[#allocation3 + $0x1f] sm:$0xf] %vm161, %v4217
  %v4220 = vrot.slane %v4211, 4
  %v4222 = vmax.f32 %v4211, %v4220
  %4223 = vst.msk [vmem:[#allocation3 + $0x23] sm:$0xf] %vm161, %v4222
  %v4225 = vrot.slane %v4212, 4
  %v4227 = vmax.f32 %v4212, %v4225
  %4228 = vst.msk [vmem:[#allocation3 + $0x27] sm:$0xf] %vm161, %v4227
  %v4230 = vrot.slane %v4213, 4
  %v4232 = vmax.f32 %v4213, %v4230
  %4233 = vst.msk [vmem:[#allocation3 + $0x2b] sm:$0xf] %vm161, %v4232
  %v4234 = vld [vmem:[%s43] sm:$0xff]
  %v4235 = vld [vmem:[%s43 + $0x8] sm:$0xff]
  %v4236 = vld [vmem:[%s45] sm:$0xff]
  %v4237 = vld [vmem:[%s45 + $0x8] sm:$0xff]
  %v4238 = vld [vmem:[#allocation3] sm:$0xff]
  %v4239 = vld [vmem:[#allocation3 + $0x8] sm:$0xff]
  %4241 = vset.pattern.permute.xlu0 0
  %4242 = vperm.xlu0 %4241, %v4234
  %v4243 = vpop.permute.xlu0 %4242
  %4246 = vset.pattern.permute.xlu0 0
  %4247 = vperm.xlu0 %4246, %v4235
  %v4248 = vpop.permute.xlu0 %4247
  %v4250 = vmul.f32 %v4238, %v4243
  %v4251 = vmul.f32 %v4239, %v4248
  %4252 = vst.msk [vmem:[#allocation5] sm:$0xff] %vm154, %v4250
  %4253 = vst.msk [vmem:[#allocation5 + $0x48] sm:$0xff] %vm154, %v4251
  %v4254 = vld [vmem:[#allocation3 + $0x1] sm:$0xff]
  %v4255 = vld [vmem:[#allocation3 + $0x9] sm:$0xff]
  %4256 = vst.msk [vmem:[#allocation5 + $0x8] sm:$0xff] %vm154, %v4254
  %4257 = vst.msk [vmem:[#allocation5 + $0x50] sm:$0xff] %vm154, %v4255
  %v4258 = vld [vmem:[#allocation3 + $0x2] sm:$0xff]
  %v4259 = vld [vmem:[#allocation3 + $0xa] sm:$0xff]
  %4261 = vset.pattern.permute.xlu0 0
  %4262 = vperm.xlu0 %4261, %v4236
  %v4263 = vpop.permute.xlu0 %4262
  %4266 = vset.pattern.permute.xlu0 0
  %4267 = vperm.xlu0 %4266, %v4237
  %v4268 = vpop.permute.xlu0 %4267
  %v4270 = vmul.f32 %v4258, %v4263
  %v4271 = vmul.f32 %v4259, %v4268
  %4272 = vst.msk [vmem:[#allocation5 + $0x10] sm:$0xff] %vm154, %v4270
  %4273 = vst.msk [vmem:[#allocation5 + $0x58] sm:$0xff] %vm154, %v4271
  %v4274 = vld [vmem:[#allocation3 + $0x4] sm:$0xff]
  %v4275 = vld [vmem:[#allocation3 + $0xc] sm:$0xff]
  %v4276 = vmul.f32 %v4274, %v4243
  %v4277 = vmul.f32 %v4275, %v4248
  %4278 = vst.msk [vmem:[#allocation5 + $0x18] sm:$0xff] %vm154, %v4276
  %4279 = vst.msk [vmem:[#allocation5 + $0x60] sm:$0xff] %vm154, %v4277
  %v4280 = vld [vmem:[#allocation3 + $0x5] sm:$0xff]
  %v4281 = vld [vmem:[#allocation3 + $0xd] sm:$0xff]
  %4282 = vst.msk [vmem:[#allocation5 + $0x20] sm:$0xff] %vm154, %v4280
  %4283 = vst.msk [vmem:[#allocation5 + $0x68] sm:$0xff] %vm154, %v4281
  %v4284 = vld [vmem:[#allocation3 + $0x6] sm:$0xff]
  %v4285 = vld [vmem:[#allocation3 + $0xe] sm:$0xff]
  %v4286 = vmul.f32 %v4284, %v4263
  %v4287 = vmul.f32 %v4285, %v4268
  %4288 = vst.msk [vmem:[#allocation5 + $0x28] sm:$0xff] %vm154, %v4286
  %4289 = vst.msk [vmem:[#allocation5 + $0x70] sm:$0xff] %vm154, %v4287
  %v4290 = vld [vmem:[#allocation3 + $0x8] sm:$0xff]
  %v4291 = vld [vmem:[#allocation3 + $0x10] sm:$0xff]
  %v4292 = vmul.f32 %v4290, %v4243
  %v4293 = vmul.f32 %v4291, %v4248
  %4294 = vst.msk [vmem:[#allocation5 + $0x30] sm:$0xff] %vm154, %v4292
  %4295 = vst.msk [vmem:[#allocation5 + $0x78] sm:$0xff] %vm154, %v4293
  %v4296 = vld [vmem:[#allocation3 + $0x9] sm:$0xff]
  %v4297 = vld [vmem:[#allocation3 + $0x11] sm:$0xff]
  %4298 = vst.msk [vmem:[#allocation5 + $0x38] sm:$0xff] %vm154, %v4296
  %4299 = vst.msk [vmem:[#allocation5 + $0x80] sm:$0xff] %vm154, %v4297
  %v4300 = vld [vmem:[#allocation3 + $0xa] sm:$0xff]
  %v4301 = vld [vmem:[#allocation3 + $0x12] sm:$0xff]
  %v4302 = vmul.f32 %v4300, %v4263
  %v4303 = vmul.f32 %v4301, %v4268
  %4304 = vst.msk [vmem:[#allocation5 + $0x40] sm:$0xff] %vm154, %v4302
  %4305 = vst.msk [vmem:[#allocation5 + $0x88] sm:$0xff] %vm154, %v4303
  %v4306 = vld [vmem:[#allocation3 + $0x1a] sm:$0xff]
  %v4307 = vld [vmem:[#allocation3 + $0x22] sm:$0xff]
  %v4308 = vmul.f32 %v4306, %v4243
  %v4309 = vmul.f32 %v4307, %v4248
  %4310 = vst.msk [vmem:[#allocation5 + $0x90] sm:$0xff] %vm154, %v4308
  %4311 = vst.msk [vmem:[#allocation5 + $0xd8] sm:$0xff] %vm154, %v4309
  %v4312 = vld [vmem:[#allocation3 + $0x1b] sm:$0xff]
  %v4313 = vld [vmem:[#allocation3 + $0x23] sm:$0xff]
  %4314 = vst.msk [vmem:[#allocation5 + $0x98] sm:$0xff] %vm154, %v4312
  %4315 = vst.msk [vmem:[#allocation5 + $0xe0] sm:$0xff] %vm154, %v4313
  %v4316 = vld [vmem:[#allocation3 + $0x1c] sm:$0xff]
  %v4317 = vld [vmem:[#allocation3 + $0x24] sm:$0xff]
  %v4318 = vmul.f32 %v4316, %v4263
  %v4319 = vmul.f32 %v4317, %v4268
  %4320 = vst.msk [vmem:[#allocation5 + $0xa0] sm:$0xff] %vm154, %v4318
  %4321 = vst.msk [vmem:[#allocation5 + $0xe8] sm:$0xff] %vm154, %v4319
  %v4322 = vld [vmem:[#allocation3 + $0x1e] sm:$0xff]
  %v4323 = vld [vmem:[#allocation3 + $0x26] sm:$0xff]
  %v4324 = vmul.f32 %v4322, %v4243
  %v4325 = vmul.f32 %v4323, %v4248
  %4326 = vst.msk [vmem:[#allocation5 + $0xa8] sm:$0xff] %vm154, %v4324
  %4327 = vst.msk [vmem:[#allocation5 + $0xf0] sm:$0xff] %vm154, %v4325
  %v4328 = vld [vmem:[#allocation3 + $0x1f] sm:$0xff]
  %v4329 = vld [vmem:[#allocation3 + $0x27] sm:$0xff]
  %4330 = vst.msk [vmem:[#allocation5 + $0xb0] sm:$0xff] %vm154, %v4328
  %4331 = vst.msk [vmem:[#allocation5 + $0xf8] sm:$0xff] %vm154, %v4329
  %v4332 = vld [vmem:[#allocation3 + $0x20] sm:$0xff]
  %v4333 = vld [vmem:[#allocation3 + $0x28] sm:$0xff]
  %v4334 = vmul.f32 %v4332, %v4263
  %v4335 = vmul.f32 %v4333, %v4268
  %4336 = vst.msk [vmem:[#allocation5 + $0xb8] sm:$0xff] %vm154, %v4334
  %4337 = vst.msk [vmem:[#allocation5 + $0x100] sm:$0xff] %vm154, %v4335
  %v4338 = vld [vmem:[#allocation3 + $0x22] sm:$0xff]
  %v4339 = vld [vmem:[#allocation3 + $0x2a] sm:$0xff]
  %v4340 = vmul.f32 %v4338, %v4243
  %v4341 = vmul.f32 %v4339, %v4248
  %4342 = vst.msk [vmem:[#allocation5 + $0xc0] sm:$0xff] %vm154, %v4340
  %4343 = vst.msk [vmem:[#allocation5 + $0x108] sm:$0xff] %vm154, %v4341
  %v4344 = vld [vmem:[#allocation3 + $0x23] sm:$0xff]
  %v4345 = vld [vmem:[#allocation3 + $0x2b] sm:$0xff]
  %4346 = vst.msk [vmem:[#allocation5 + $0xc8] sm:$0xff] %vm154, %v4344
  %4347 = vst.msk [vmem:[#allocation5 + $0x110] sm:$0xff] %vm154, %v4345
  %v4348 = vld [vmem:[#allocation3 + $0x24] sm:$0xff]
  %v4349 = vld [vmem:[#allocation3 + $0x2c] sm:$0xff]
  %v4350 = vmul.f32 %v4348, %v4263
  %v4351 = vmul.f32 %v4349, %v4268
  %4352 = vst.msk [vmem:[#allocation5 + $0xd0] sm:$0xff] %vm154, %v4350
  %4353 = vst.msk [vmem:[#allocation5 + $0x118] sm:$0xff] %vm154, %v4351
  %v4354 = vld [vmem:[#allocation5] sm:$0xff]
  %v4355 = vld [vmem:[#allocation5 + $0x8] sm:$0xff]
  %v4356 = vld [vmem:[#allocation5 + $0x10] sm:$0xff]
  %v4357 = vld [vmem:[#allocation5 + $0x18] sm:$0xff]
  %v4358 = vld [vmem:[#allocation5 + $0x20] sm:$0xff]
  %v4359 = vld [vmem:[#allocation5 + $0x28] sm:$0xff]
  %v4360 = vld [vmem:[#allocation5 + $0x30] sm:$0xff]
  %v4361 = vld [vmem:[#allocation5 + $0x38] sm:$0xff]
  %v4362 = vld [vmem:[#allocation5 + $0x40] sm:$0xff]
  %v4363 = vld [vmem:[#allocation5 + $0x48] sm:$0xff]
  %v4364 = vld [vmem:[#allocation5 + $0x50] sm:$0xff]
  %v4365 = vld [vmem:[#allocation5 + $0x58] sm:$0xff]
  %v4366 = vld [vmem:[#allocation5 + $0x60] sm:$0xff]
  %v4367 = vld [vmem:[#allocation5 + $0x68] sm:$0xff]
  %v4368 = vld [vmem:[#allocation5 + $0x70] sm:$0xff]
  %v4369 = vld [vmem:[#allocation5 + $0x78] sm:$0xff]
  %v4370 = vld [vmem:[#allocation5 + $0x80] sm:$0xff]
  %v4371 = vld [vmem:[#allocation5 + $0x88] sm:$0xff]
  %v4372 = vld [vmem:[#allocation5 + $0x90] sm:$0xff]
  %v4373 = vld [vmem:[#allocation5 + $0x98] sm:$0xff]
  %v4374 = vld [vmem:[#allocation5 + $0xa0] sm:$0xff]
  %v4375 = vld [vmem:[#allocation5 + $0xa8] sm:$0xff]
  %v4376 = vld [vmem:[#allocation5 + $0xb0] sm:$0xff]
  %v4377 = vld [vmem:[#allocation5 + $0xb8] sm:$0xff]
  %v4378 = vld [vmem:[#allocation5 + $0xc0] sm:$0xff]
  %v4379 = vld [vmem:[#allocation5 + $0xc8] sm:$0xff]
  %v4380 = vld [vmem:[#allocation5 + $0xd0] sm:$0xff]
  %v4381 = vld [vmem:[#allocation5 + $0xd8] sm:$0xff]
  %v4382 = vld [vmem:[#allocation5 + $0xe0] sm:$0xff]
  %v4383 = vld [vmem:[#allocation5 + $0xe8] sm:$0xff]
  %v4384 = vld [vmem:[#allocation5 + $0xf0] sm:$0xff]
  %v4385 = vld [vmem:[#allocation5 + $0xf8] sm:$0xff]
  %v4386 = vld [vmem:[#allocation5 + $0x100] sm:$0xff]
  %v4387 = vld [vmem:[#allocation5 + $0x108] sm:$0xff]
  %v4388 = vld [vmem:[#allocation5 + $0x110] sm:$0xff]
  %v4389 = vld [vmem:[#allocation5 + $0x118] sm:$0xff]
  %v4390 = vpack.c.bf16 %v4363, %v4354
  %v4391 = vpack.c.bf16 %v4364, %v4355
  %v4392 = vpack.c.bf16 %v4365, %v4356
  %v4393 = vpack.c.bf16 %v4366, %v4357
  %v4394 = vpack.c.bf16 %v4367, %v4358
  %v4395 = vpack.c.bf16 %v4368, %v4359
  %v4396 = vpack.c.bf16 %v4369, %v4360
  %v4397 = vpack.c.bf16 %v4370, %v4361
  %v4398 = vpack.c.bf16 %v4371, %v4362
  %v4399 = vpack.c.bf16 %v4381, %v4372
  %v4400 = vpack.c.bf16 %v4382, %v4373
  %v4401 = vpack.c.bf16 %v4383, %v4374
  %v4402 = vpack.c.bf16 %v4384, %v4375
  %v4403 = vpack.c.bf16 %v4385, %v4376
  %v4404 = vpack.c.bf16 %v4386, %v4377
  %v4405 = vpack.c.bf16 %v4387, %v4378
  %v4406 = vpack.c.bf16 %v4388, %v4379
  %v4407 = vpack.c.bf16 %v4389, %v4380
  %v4408 = vld [vmem:[%s31] sm:$0xf]
  %v4409 = vld [vmem:[%s31 + $0x4] sm:$0xf]
  %v4410 = vld [vmem:[%s31 + $0x8] sm:$0xf]
  %v4411 = vld [vmem:[%s31 + $0xc] sm:$0xf]
  %v4412 = vld [vmem:[%s31 + $0x10] sm:$0xf]
  %v4413 = vld [vmem:[%s31 + $0x14] sm:$0xf]
  %v4414 = vld [vmem:[%s31 + $0x18] sm:$0xf]
  %v4415 = vld [vmem:[%s31 + $0x1c] sm:$0xf]
  %v4416 = vld [vmem:[%s31 + $0x20] sm:$0xf]
  %v4417 = vld [vmem:[%s31 + $0x24] sm:$0xf]
  %v4418 = vld [vmem:[%s31 + $0x28] sm:$0xf]
  %v4419 = vld [vmem:[%s31 + $0x2c] sm:$0xf]
  %v4420 = vld [vmem:[%s31 + $0x30] sm:$0xf]
  %v4421 = vld [vmem:[%s31 + $0x34] sm:$0xf]
  %v4422 = vld [vmem:[%s31 + $0x38] sm:$0xf]
  %v4423 = vld [vmem:[%s31 + $0x3c] sm:$0xf]
  %v4424 = vld [vmem:[%s31 + $0x40] sm:$0xf]
  %v4425 = vld [vmem:[%s31 + $0x44] sm:$0xf]
  %v4426 = vld [vmem:[%s31 + $0x48] sm:$0xf]
  %v4427 = vld [vmem:[%s31 + $0x4c] sm:$0xf]
  %v4428 = vld [vmem:[%s31 + $0x50] sm:$0xf]
  %v4429 = vld [vmem:[%s31 + $0x54] sm:$0xf]
  %v4430 = vld [vmem:[%s31 + $0x58] sm:$0xf]
  %v4431 = vld [vmem:[%s31 + $0x5c] sm:$0xf]
  %v4432 = vld [vmem:[%s31 + $0x60] sm:$0xf]
  %v4433 = vld [vmem:[%s31 + $0x64] sm:$0xf]
  %v4434 = vld [vmem:[%s31 + $0x68] sm:$0xf]
  %v4435 = vld [vmem:[%s31 + $0x6c] sm:$0xf]
  %v4436 = vld [vmem:[%s31 + $0x70] sm:$0xf]
  %v4437 = vld [vmem:[%s31 + $0x74] sm:$0xf]
  %v4438 = vld [vmem:[%s31 + $0x78] sm:$0xf]
  %v4439 = vld [vmem:[%s31 + $0x7c] sm:$0xf]
  %v4440 = vld [vmem:[%s31 + $0x80] sm:$0xf]
  %v4441 = vld [vmem:[%s31 + $0x84] sm:$0xf]
  %v4442 = vld [vmem:[%s31 + $0x88] sm:$0xf]
  %v4443 = vld [vmem:[%s31 + $0x8c] sm:$0xf]
  %v4444 = vld [vmem:[%s31 + $0x90] sm:$0xf]
  %v4445 = vld [vmem:[%s31 + $0x94] sm:$0xf]
  %v4446 = vld [vmem:[%s31 + $0x98] sm:$0xf]
  %v4447 = vld [vmem:[%s31 + $0x9c] sm:$0xf]
  %v4448 = vld [vmem:[%s31 + $0xa0] sm:$0xf]
  %v4449 = vld [vmem:[%s31 + $0xa4] sm:$0xf]
  %v4450 = vld [vmem:[%s31 + $0xa8] sm:$0xf]
  %v4451 = vld [vmem:[%s31 + $0xac] sm:$0xf]
  %v4452 = vld [vmem:[%s31 + $0xb0] sm:$0xf]
  %v4453 = vld [vmem:[%s31 + $0xb4] sm:$0xf]
  %v4454 = vld [vmem:[%s31 + $0xb8] sm:$0xf]
  %v4455 = vld [vmem:[%s31 + $0xbc] sm:$0xf]
  %v4456 = vld [vmem:[%s31 + $0xc0] sm:$0xf]
  %v4457 = vld [vmem:[%s31 + $0xc4] sm:$0xf]
  %v4458 = vld [vmem:[%s31 + $0xc8] sm:$0xf]
  %v4459 = vld [vmem:[%s31 + $0xcc] sm:$0xf]
  %v4460 = vld [vmem:[%s31 + $0xd0] sm:$0xf]
  %v4461 = vld [vmem:[%s31 + $0xd4] sm:$0xf]
  %v4462 = vld [vmem:[%s31 + $0xd8] sm:$0xf]
  %v4463 = vld [vmem:[%s31 + $0xdc] sm:$0xf]
  %v4464 = vld [vmem:[%s31 + $0xe0] sm:$0xf]
  %v4465 = vld [vmem:[%s31 + $0xe4] sm:$0xf]
  %v4466 = vld [vmem:[%s31 + $0xe8] sm:$0xf]
  %v4467 = vld [vmem:[%s31 + $0xec] sm:$0xf]
  %v4468 = vld [vmem:[%s31 + $0xf0] sm:$0xf]
  %v4469 = vld [vmem:[%s31 + $0xf4] sm:$0xf]
  %v4470 = vld [vmem:[%s31 + $0xf8] sm:$0xf]
  %v4471 = vld [vmem:[%s31 + $0xfc] sm:$0xf]
  %v4472 = vld [vmem:[%s31 + $0x100] sm:$0xf]
  %v4473 = vld [vmem:[%s31 + $0x104] sm:$0xf]
  %v4474 = vld [vmem:[%s31 + $0x108] sm:$0xf]
  %v4475 = vld [vmem:[%s31 + $0x10c] sm:$0xf]
  %v4476 = vld [vmem:[%s31 + $0x110] sm:$0xf]
  %v4477 = vld [vmem:[%s31 + $0x114] sm:$0xf]
  %v4478 = vld [vmem:[%s31 + $0x118] sm:$0xf]
  %v4479 = vld [vmem:[%s31 + $0x11c] sm:$0xf]
  %v4480 = vld [vmem:[%s31 + $0x120] sm:$0xf]
  %v4481 = vld [vmem:[%s31 + $0x124] sm:$0xf]
  %v4482 = vld [vmem:[%s31 + $0x128] sm:$0xf]
  %v4483 = vld [vmem:[%s31 + $0x12c] sm:$0xf]
  %v4484 = vld [vmem:[%s31 + $0x130] sm:$0xf]
  %v4485 = vld [vmem:[%s31 + $0x134] sm:$0xf]
  %v4486 = vld [vmem:[%s31 + $0x138] sm:$0xf]
  %v4487 = vld [vmem:[%s31 + $0x13c] sm:$0xf]
  %v4488 = vld [vmem:[%s31 + $0x140] sm:$0xf]
  %v4489 = vld [vmem:[%s31 + $0x144] sm:$0xf]
  %v4490 = vld [vmem:[%s31 + $0x148] sm:$0xf]
  %v4491 = vld [vmem:[%s31 + $0x14c] sm:$0xf]
  %v4492 = vld [vmem:[%s31 + $0x150] sm:$0xf]
  %v4493 = vld [vmem:[%s31 + $0x154] sm:$0xf]
  %v4494 = vld [vmem:[%s31 + $0x158] sm:$0xf]
  %v4495 = vld [vmem:[%s31 + $0x15c] sm:$0xf]
  %v4496 = vld [vmem:[%s31 + $0x160] sm:$0xf]
  %v4497 = vld [vmem:[%s31 + $0x164] sm:$0xf]
  %v4498 = vld [vmem:[%s31 + $0x168] sm:$0xf]
  %v4499 = vld [vmem:[%s31 + $0x16c] sm:$0xf]
  %v4500 = vld [vmem:[%s31 + $0x170] sm:$0xf]
  %v4501 = vld [vmem:[%s31 + $0x174] sm:$0xf]
  %v4502 = vld [vmem:[%s31 + $0x178] sm:$0xf]
  %v4503 = vld [vmem:[%s31 + $0x17c] sm:$0xf]
  %v4504 = vld [vmem:[%s31 + $0x180] sm:$0xf]
  %v4505 = vld [vmem:[%s31 + $0x184] sm:$0xf]
  %v4506 = vld [vmem:[%s31 + $0x188] sm:$0xf]
  %v4507 = vld [vmem:[%s31 + $0x18c] sm:$0xf]
  %v4508 = vld [vmem:[%s31 + $0x190] sm:$0xf]
  %v4509 = vld [vmem:[%s31 + $0x194] sm:$0xf]
  %v4510 = vld [vmem:[%s31 + $0x198] sm:$0xf]
  %v4511 = vld [vmem:[%s31 + $0x19c] sm:$0xf]
  %v4512 = vld [vmem:[%s31 + $0x1a0] sm:$0xf]
  %v4513 = vld [vmem:[%s31 + $0x1a4] sm:$0xf]
  %v4514 = vld [vmem:[%s31 + $0x1a8] sm:$0xf]
  %v4515 = vld [vmem:[%s31 + $0x1ac] sm:$0xf]
  %v4516 = vld [vmem:[%s31 + $0x1b0] sm:$0xf]
  %v4517 = vld [vmem:[%s31 + $0x1b4] sm:$0xf]
  %v4518 = vld [vmem:[%s31 + $0x1b8] sm:$0xf]
  %v4519 = vld [vmem:[%s31 + $0x1bc] sm:$0xf]
  %v4520 = vld [vmem:[%s31 + $0x1c0] sm:$0xf]
  %v4521 = vld [vmem:[%s31 + $0x1c4] sm:$0xf]
  %v4522 = vld [vmem:[%s31 + $0x1c8] sm:$0xf]
  %v4523 = vld [vmem:[%s31 + $0x1cc] sm:$0xf]
  %v4524 = vld [vmem:[%s31 + $0x1d0] sm:$0xf]
  %v4525 = vld [vmem:[%s31 + $0x1d4] sm:$0xf]
  %v4526 = vld [vmem:[%s31 + $0x1d8] sm:$0xf]
  %v4527 = vld [vmem:[%s31 + $0x1dc] sm:$0xf]
  %v4528 = vld [vmem:[%s31 + $0x1e0] sm:$0xf]
  %v4529 = vld [vmem:[%s31 + $0x1e4] sm:$0xf]
  %v4530 = vld [vmem:[%s31 + $0x1e8] sm:$0xf]
  %v4531 = vld [vmem:[%s31 + $0x1ec] sm:$0xf]
  %v4532 = vld [vmem:[%s31 + $0x1f0] sm:$0xf]
  %v4533 = vld [vmem:[%s31 + $0x1f4] sm:$0xf]
  %v4534 = vld [vmem:[%s31 + $0x1f8] sm:$0xf]
  %v4535 = vld [vmem:[%s31 + $0x1fc] sm:$0xf]
  %v4536 = vld [vmem:[%s31 + $0x200] sm:$0xf]
  %v4537 = vld [vmem:[%s31 + $0x204] sm:$0xf]
  %v4538 = vld [vmem:[%s31 + $0x208] sm:$0xf]
  %v4539 = vld [vmem:[%s31 + $0x20c] sm:$0xf]
  %v4540 = vld [vmem:[%s31 + $0x210] sm:$0xf]
  %v4541 = vld [vmem:[%s31 + $0x214] sm:$0xf]
  %v4542 = vld [vmem:[%s31 + $0x218] sm:$0xf]
  %v4543 = vld [vmem:[%s31 + $0x21c] sm:$0xf]
  %v4544 = vld [vmem:[%s31 + $0x220] sm:$0xf]
  %v4545 = vld [vmem:[%s31 + $0x224] sm:$0xf]
  %v4546 = vld [vmem:[%s31 + $0x228] sm:$0xf]
  %v4547 = vld [vmem:[%s31 + $0x22c] sm:$0xf]
  %v4548 = vld [vmem:[%s31 + $0x230] sm:$0xf]
  %v4549 = vld [vmem:[%s31 + $0x234] sm:$0xf]
  %v4550 = vld [vmem:[%s31 + $0x238] sm:$0xf]
  %v4551 = vld [vmem:[%s31 + $0x23c] sm:$0xf]
  %v4552 = vld [vmem:[%s33] sm:$0x1]
  %v4554 = vperm.slane %v4552, 0
  %v4700 = vunpack.c.l.b16 %v4408
  %v4701 = vunpack.c.l.b16 %v4409
  %v4702 = vunpack.c.l.b16 %v4410
  %v4703 = vunpack.c.l.b16 %v4411
  %v4704 = vunpack.c.l.b16 %v4412
  %v4705 = vunpack.c.l.b16 %v4413
  %v4706 = vunpack.c.l.b16 %v4414
  %v4707 = vunpack.c.l.b16 %v4415
  %v4708 = vunpack.c.l.b16 %v4416
  %v4709 = vunpack.c.l.b16 %v4417
  %v4710 = vunpack.c.l.b16 %v4418
  %v4711 = vunpack.c.l.b16 %v4419
  %v4712 = vunpack.c.l.b16 %v4420
  %v4713 = vunpack.c.l.b16 %v4421
  %v4714 = vunpack.c.l.b16 %v4422
  %v4715 = vunpack.c.l.b16 %v4423
  %v4716 = vunpack.c.l.b16 %v4424
  %v4717 = vunpack.c.l.b16 %v4425
  %v4718 = vunpack.c.l.b16 %v4426
  %v4719 = vunpack.c.l.b16 %v4427
  %v4720 = vunpack.c.l.b16 %v4428
  %v4721 = vunpack.c.l.b16 %v4429
  %v4722 = vunpack.c.l.b16 %v4430
  %v4723 = vunpack.c.l.b16 %v4431
  %v4724 = vunpack.c.l.b16 %v4432
  %v4725 = vunpack.c.l.b16 %v4433
  %v4726 = vunpack.c.l.b16 %v4434
  %v4727 = vunpack.c.l.b16 %v4435
  %v4728 = vunpack.c.l.b16 %v4436
  %v4729 = vunpack.c.l.b16 %v4437
  %v4730 = vunpack.c.l.b16 %v4438
  %v4731 = vunpack.c.l.b16 %v4439
  %v4732 = vunpack.c.l.b16 %v4440
  %v4733 = vunpack.c.l.b16 %v4441
  %v4734 = vunpack.c.l.b16 %v4442
  %v4735 = vunpack.c.l.b16 %v4443
  %v4736 = vunpack.c.l.b16 %v4444
  %v4737 = vunpack.c.l.b16 %v4445
  %v4738 = vunpack.c.l.b16 %v4446
  %v4739 = vunpack.c.l.b16 %v4447
  %v4740 = vunpack.c.l.b16 %v4448
  %v4741 = vunpack.c.l.b16 %v4449
  %v4742 = vunpack.c.l.b16 %v4450
  %v4743 = vunpack.c.l.b16 %v4451
  %v4744 = vunpack.c.l.b16 %v4452
  %v4745 = vunpack.c.l.b16 %v4453
  %v4746 = vunpack.c.l.b16 %v4454
  %v4747 = vunpack.c.l.b16 %v4455
  %v4748 = vunpack.c.l.b16 %v4456
  %v4749 = vunpack.c.l.b16 %v4457
  %v4750 = vunpack.c.l.b16 %v4458
  %v4751 = vunpack.c.l.b16 %v4459
  %v4752 = vunpack.c.l.b16 %v4460
  %v4753 = vunpack.c.l.b16 %v4461
  %v4754 = vunpack.c.l.b16 %v4462
  %v4755 = vunpack.c.l.b16 %v4463
  %v4756 = vunpack.c.l.b16 %v4464
  %v4757 = vunpack.c.l.b16 %v4465
  %v4758 = vunpack.c.l.b16 %v4466
  %v4759 = vunpack.c.l.b16 %v4467
  %v4760 = vunpack.c.l.b16 %v4468
  %v4761 = vunpack.c.l.b16 %v4469
  %v4762 = vunpack.c.l.b16 %v4470
  %v4763 = vunpack.c.l.b16 %v4471
  %v4764 = vunpack.c.l.b16 %v4472
  %v4765 = vunpack.c.l.b16 %v4473
  %v4766 = vunpack.c.l.b16 %v4474
  %v4767 = vunpack.c.l.b16 %v4475
  %v4768 = vunpack.c.l.b16 %v4476
  %v4769 = vunpack.c.l.b16 %v4477
  %v4770 = vunpack.c.l.b16 %v4478
  %v4771 = vunpack.c.l.b16 %v4479
  %v4772 = vunpack.c.l.b16 %v4480
  %v4773 = vunpack.c.l.b16 %v4481
  %v4774 = vunpack.c.l.b16 %v4482
  %v4775 = vunpack.c.l.b16 %v4483
  %v4776 = vunpack.c.l.b16 %v4484
  %v4777 = vunpack.c.l.b16 %v4485
  %v4778 = vunpack.c.l.b16 %v4486
  %v4779 = vunpack.c.l.b16 %v4487
  %v4780 = vunpack.c.l.b16 %v4488
  %v4781 = vunpack.c.l.b16 %v4489
  %v4782 = vunpack.c.l.b16 %v4490
  %v4783 = vunpack.c.l.b16 %v4491
  %v4784 = vunpack.c.l.b16 %v4492
  %v4785 = vunpack.c.l.b16 %v4493
  %v4786 = vunpack.c.l.b16 %v4494
  %v4787 = vunpack.c.l.b16 %v4495
  %v4788 = vunpack.c.l.b16 %v4496
  %v4789 = vunpack.c.l.b16 %v4497
  %v4790 = vunpack.c.l.b16 %v4498
  %v4791 = vunpack.c.l.b16 %v4499
  %v4792 = vunpack.c.l.b16 %v4500
  %v4793 = vunpack.c.l.b16 %v4501
  %v4794 = vunpack.c.l.b16 %v4502
  %v4795 = vunpack.c.l.b16 %v4503
  %v4796 = vunpack.c.l.b16 %v4504
  %v4797 = vunpack.c.l.b16 %v4505
  %v4798 = vunpack.c.l.b16 %v4506
  %v4799 = vunpack.c.l.b16 %v4507
  %v4800 = vunpack.c.l.b16 %v4508
  %v4801 = vunpack.c.l.b16 %v4509
  %v4802 = vunpack.c.l.b16 %v4510
  %v4803 = vunpack.c.l.b16 %v4511
  %v4804 = vunpack.c.l.b16 %v4512
  %v4805 = vunpack.c.l.b16 %v4513
  %v4806 = vunpack.c.l.b16 %v4514
  %v4807 = vunpack.c.l.b16 %v4515
  %v4808 = vunpack.c.l.b16 %v4516
  %v4809 = vunpack.c.l.b16 %v4517
  %v4810 = vunpack.c.l.b16 %v4518
  %v4811 = vunpack.c.l.b16 %v4519
  %v4812 = vunpack.c.l.b16 %v4520
  %v4813 = vunpack.c.l.b16 %v4521
  %v4814 = vunpack.c.l.b16 %v4522
  %v4815 = vunpack.c.l.b16 %v4523
  %v4816 = vunpack.c.l.b16 %v4524
  %v4817 = vunpack.c.l.b16 %v4525
  %v4818 = vunpack.c.l.b16 %v4526
  %v4819 = vunpack.c.l.b16 %v4527
  %v4820 = vunpack.c.l.b16 %v4528
  %v4821 = vunpack.c.l.b16 %v4529
  %v4822 = vunpack.c.l.b16 %v4530
  %v4823 = vunpack.c.l.b16 %v4531
  %v4824 = vunpack.c.l.b16 %v4532
  %v4825 = vunpack.c.l.b16 %v4533
  %v4826 = vunpack.c.l.b16 %v4534
  %v4827 = vunpack.c.l.b16 %v4535
  %v4828 = vunpack.c.l.b16 %v4536
  %v4829 = vunpack.c.l.b16 %v4537
  %v4830 = vunpack.c.l.b16 %v4538
  %v4831 = vunpack.c.l.b16 %v4539
  %v4832 = vunpack.c.l.b16 %v4540
  %v4833 = vunpack.c.l.b16 %v4541
  %v4834 = vunpack.c.l.b16 %v4542
  %v4835 = vunpack.c.l.b16 %v4543
  %v4836 = vunpack.c.l.b16 %v4544
  %v4837 = vunpack.c.l.b16 %v4545
  %v4838 = vunpack.c.l.b16 %v4546
  %v4839 = vunpack.c.l.b16 %v4547
  %v4840 = vunpack.c.l.b16 %v4548
  %v4841 = vunpack.c.l.b16 %v4549
  %v4842 = vunpack.c.l.b16 %v4550
  %v4843 = vunpack.c.l.b16 %v4551
  %v4844 = vpack.c.b16 %v4701, %v4700
  %v4845 = vpack.c.b16 %v4703, %v4702
  %v4846 = vpack.c.b16 %v4705, %v4704
  %v4847 = vpack.c.b16 %v4707, %v4706
  %v4848 = vpack.c.b16 %v4709, %v4708
  %v4849 = vpack.c.b16 %v4711, %v4710
  %v4850 = vpack.c.b16 %v4713, %v4712
  %v4851 = vpack.c.b16 %v4715, %v4714
  %v4852 = vpack.c.b16 %v4717, %v4716
  %v4853 = vpack.c.b16 %v4719, %v4718
  %v4854 = vpack.c.b16 %v4721, %v4720
  %v4855 = vpack.c.b16 %v4723, %v4722
  %v4856 = vpack.c.b16 %v4725, %v4724
  %v4857 = vpack.c.b16 %v4727, %v4726
  %v4858 = vpack.c.b16 %v4729, %v4728
  %v4859 = vpack.c.b16 %v4731, %v4730
  %v4860 = vpack.c.b16 %v4733, %v4732
  %v4861 = vpack.c.b16 %v4735, %v4734
  %v4862 = vpack.c.b16 %v4737, %v4736
  %v4863 = vpack.c.b16 %v4739, %v4738
  %v4864 = vpack.c.b16 %v4741, %v4740
  %v4865 = vpack.c.b16 %v4743, %v4742
  %v4866 = vpack.c.b16 %v4745, %v4744
  %v4867 = vpack.c.b16 %v4747, %v4746
  %v4868 = vpack.c.b16 %v4749, %v4748
  %v4869 = vpack.c.b16 %v4751, %v4750
  %v4870 = vpack.c.b16 %v4753, %v4752
  %v4871 = vpack.c.b16 %v4755, %v4754
  %v4872 = vpack.c.b16 %v4757, %v4756
  %v4873 = vpack.c.b16 %v4759, %v4758
  %v4874 = vpack.c.b16 %v4761, %v4760
  %v4875 = vpack.c.b16 %v4763, %v4762
  %v4876 = vpack.c.b16 %v4765, %v4764
  %v4877 = vpack.c.b16 %v4767, %v4766
  %v4878 = vpack.c.b16 %v4769, %v4768
  %v4879 = vpack.c.b16 %v4771, %v4770
  %v4880 = vpack.c.b16 %v4773, %v4772
  %v4881 = vpack.c.b16 %v4775, %v4774
  %v4882 = vpack.c.b16 %v4777, %v4776
  %v4883 = vpack.c.b16 %v4779, %v4778
  %v4884 = vpack.c.b16 %v4781, %v4780
  %v4885 = vpack.c.b16 %v4783, %v4782
  %v4886 = vpack.c.b16 %v4785, %v4784
  %v4887 = vpack.c.b16 %v4787, %v4786
  %v4888 = vpack.c.b16 %v4789, %v4788
  %v4889 = vpack.c.b16 %v4791, %v4790
  %v4890 = vpack.c.b16 %v4793, %v4792
  %v4891 = vpack.c.b16 %v4795, %v4794
  %v4892 = vpack.c.b16 %v4797, %v4796
  %v4893 = vpack.c.b16 %v4799, %v4798
  %v4894 = vpack.c.b16 %v4801, %v4800
  %v4895 = vpack.c.b16 %v4803, %v4802
  %v4896 = vpack.c.b16 %v4805, %v4804
  %v4897 = vpack.c.b16 %v4807, %v4806
  %v4898 = vpack.c.b16 %v4809, %v4808
  %v4899 = vpack.c.b16 %v4811, %v4810
  %v4900 = vpack.c.b16 %v4813, %v4812
  %v4901 = vpack.c.b16 %v4815, %v4814
  %v4902 = vpack.c.b16 %v4817, %v4816
  %v4903 = vpack.c.b16 %v4819, %v4818
  %v4904 = vpack.c.b16 %v4821, %v4820
  %v4905 = vpack.c.b16 %v4823, %v4822
  %v4906 = vpack.c.b16 %v4825, %v4824
  %v4907 = vpack.c.b16 %v4827, %v4826
  %v4908 = vpack.c.b16 %v4829, %v4828
  %v4909 = vpack.c.b16 %v4831, %v4830
  %v4910 = vpack.c.b16 %v4833, %v4832
  %v4911 = vpack.c.b16 %v4835, %v4834
  %v4912 = vpack.c.b16 %v4837, %v4836
  %v4913 = vpack.c.b16 %v4839, %v4838
  %v4914 = vpack.c.b16 %v4841, %v4840
  %v4915 = vpack.c.b16 %v4843, %v4842
  %4988 = vmatpush.bf16.msra.mxu0 %v4851
  %4989 = vmatpush.bf16.msra.mxu0 %v4850
  %4990 = vmatpush.bf16.msra.mxu0 %v4849
  %4991 = vmatpush.bf16.msra.mxu0 %v4848
  %4992 = vmatpush.bf16.msra.mxu0 %v4847
  %4993 = vmatpush.bf16.msra.mxu0 %v4846
  %4994 = vmatpush.bf16.msra.mxu0 %v4845
  %4995 = vmatpush.bf16.msra.mxu0 %v4844
  %4996 = vmatmul.bf16.gmra.mxu0 %v4390
  %v4997 = vpop.f32.mrf.mxu0
  %v4998 = vadd.f32 %v4554, %v4997
  %v4999 = vpop.f32.mrf.mxu0
  %v5000 = vadd.f32 %v4554, %v4999
  %5001 = vmatmul.bf16.gmra.mxu0 %v4399
  %v5002 = vpop.f32.mrf.mxu0
  %v5003 = vadd.f32 %v4554, %v5002
  %v5004 = vpop.f32.mrf.mxu0
  %v5005 = vadd.f32 %v4554, %v5004
  %5006 = vdwg.mxu0
  %5007 = vmatpush.bf16.msra.mxu0 %v4859
  %5008 = vmatpush.bf16.msra.mxu0 %v4858
  %5009 = vmatpush.bf16.msra.mxu0 %v4857
  %5010 = vmatpush.bf16.msra.mxu0 %v4856
  %5011 = vmatpush.bf16.msra.mxu0 %v4855
  %5012 = vmatpush.bf16.msra.mxu0 %v4854
  %5013 = vmatpush.bf16.msra.mxu0 %v4853
  %5014 = vmatpush.bf16.msra.mxu0 %v4852
  %5015 = vmatmul.bf16.gmra.mxu0 %v4391
  %v5016 = vpop.f32.mrf.mxu0
  %v5017 = vadd.f32 %v4998, %v5016
  %v5018 = vpop.f32.mrf.mxu0
  %v5019 = vadd.f32 %v5000, %v5018
  %5020 = vmatmul.bf16.gmra.mxu0 %v4400
  %v5021 = vpop.f32.mrf.mxu0
  %v5022 = vadd.f32 %v5003, %v5021
  %v5023 = vpop.f32.mrf.mxu0
  %v5024 = vadd.f32 %v5005, %v5023
  %5025 = vdwg.mxu0
  %5026 = vmatpush.bf16.msra.mxu0 %v4867
  %5027 = vmatpush.bf16.msra.mxu0 %v4866
  %5028 = vmatpush.bf16.msra.mxu0 %v4865
  %5029 = vmatpush.bf16.msra.mxu0 %v4864
  %5030 = vmatpush.bf16.msra.mxu0 %v4863
  %5031 = vmatpush.bf16.msra.mxu0 %v4862
  %5032 = vmatpush.bf16.msra.mxu0 %v4861
  %5033 = vmatpush.bf16.msra.mxu0 %v4860
  %5034 = vmatmul.bf16.gmra.mxu0 %v4392
  %v5035 = vpop.f32.mrf.mxu0
  %v5036 = vadd.f32 %v5017, %v5035
  %v5037 = vpop.f32.mrf.mxu0
  %v5038 = vadd.f32 %v5019, %v5037
  %5039 = vmatmul.bf16.gmra.mxu0 %v4401
  %v5040 = vpop.f32.mrf.mxu0
  %v5041 = vadd.f32 %v5022, %v5040
  %v5042 = vpop.f32.mrf.mxu0
  %v5043 = vadd.f32 %v5024, %v5042
  %5044 = vdwg.mxu0
  %5045 = vmatpush.bf16.msra.mxu0 %v4875
  %5046 = vmatpush.bf16.msra.mxu0 %v4874
  %5047 = vmatpush.bf16.msra.mxu0 %v4873
  %5048 = vmatpush.bf16.msra.mxu0 %v4872
  %5049 = vmatpush.bf16.msra.mxu0 %v4871
  %5050 = vmatpush.bf16.msra.mxu0 %v4870
  %5051 = vmatpush.bf16.msra.mxu0 %v4869
  %5052 = vmatpush.bf16.msra.mxu0 %v4868
  %5053 = vmatmul.bf16.gmra.mxu0 %v4393
  %v5054 = vpop.f32.mrf.mxu0
  %v5055 = vadd.f32 %v5036, %v5054
  %v5056 = vpop.f32.mrf.mxu0
  %v5057 = vadd.f32 %v5038, %v5056
  %5058 = vmatmul.bf16.gmra.mxu0 %v4402
  %v5059 = vpop.f32.mrf.mxu0
  %v5060 = vadd.f32 %v5041, %v5059
  %v5061 = vpop.f32.mrf.mxu0
  %v5062 = vadd.f32 %v5043, %v5061
  %5063 = vdwg.mxu0
  %5064 = vmatpush.bf16.msra.mxu0 %v4883
  %5065 = vmatpush.bf16.msra.mxu0 %v4882
  %5066 = vmatpush.bf16.msra.mxu0 %v4881
  %5067 = vmatpush.bf16.msra.mxu0 %v4880
  %5068 = vmatpush.bf16.msra.mxu0 %v4879
  %5069 = vmatpush.bf16.msra.mxu0 %v4878
  %5070 = vmatpush.bf16.msra.mxu0 %v4877
  %5071 = vmatpush.bf16.msra.mxu0 %v4876
  %5072 = vmatmul.bf16.gmra.mxu0 %v4394
  %v5073 = vpop.f32.mrf.mxu0
  %v5074 = vadd.f32 %v5055, %v5073
  %v5075 = vpop.f32.mrf.mxu0
  %v5076 = vadd.f32 %v5057, %v5075
  %5077 = vmatmul.bf16.gmra.mxu0 %v4403
  %v5078 = vpop.f32.mrf.mxu0
  %v5079 = vadd.f32 %v5060, %v5078
  %v5080 = vpop.f32.mrf.mxu0
  %v5081 = vadd.f32 %v5062, %v5080
  %5082 = vdwg.mxu0
  %5083 = vmatpush.bf16.msra.mxu0 %v4891
  %5084 = vmatpush.bf16.msra.mxu0 %v4890
  %5085 = vmatpush.bf16.msra.mxu0 %v4889
  %5086 = vmatpush.bf16.msra.mxu0 %v4888
  %5087 = vmatpush.bf16.msra.mxu0 %v4887
  %5088 = vmatpush.bf16.msra.mxu0 %v4886
  %5089 = vmatpush.bf16.msra.mxu0 %v4885
  %5090 = vmatpush.bf16.msra.mxu0 %v4884
  %5091 = vmatmul.bf16.gmra.mxu0 %v4395
  %v5092 = vpop.f32.mrf.mxu0
  %v5093 = vadd.f32 %v5074, %v5092
  %v5094 = vpop.f32.mrf.mxu0
  %v5095 = vadd.f32 %v5076, %v5094
  %5096 = vmatmul.bf16.gmra.mxu0 %v4404
  %v5097 = vpop.f32.mrf.mxu0
  %v5098 = vadd.f32 %v5079, %v5097
  %v5099 = vpop.f32.mrf.mxu0
  %v5100 = vadd.f32 %v5081, %v5099
  %5101 = vdwg.mxu0
  %5102 = vmatpush.bf16.msra.mxu0 %v4899
  %5103 = vmatpush.bf16.msra.mxu0 %v4898
  %5104 = vmatpush.bf16.msra.mxu0 %v4897
  %5105 = vmatpush.bf16.msra.mxu0 %v4896
  %5106 = vmatpush.bf16.msra.mxu0 %v4895
  %5107 = vmatpush.bf16.msra.mxu0 %v4894
  %5108 = vmatpush.bf16.msra.mxu0 %v4893
  %5109 = vmatpush.bf16.msra.mxu0 %v4892
  %5110 = vmatmul.bf16.gmra.mxu0 %v4396
  %v5111 = vpop.f32.mrf.mxu0
  %v5112 = vadd.f32 %v5093, %v5111
  %v5113 = vpop.f32.mrf.mxu0
  %v5114 = vadd.f32 %v5095, %v5113
  %5115 = vmatmul.bf16.gmra.mxu0 %v4405
  %v5116 = vpop.f32.mrf.mxu0
  %v5117 = vadd.f32 %v5098, %v5116
  %v5118 = vpop.f32.mrf.mxu0
  %v5119 = vadd.f32 %v5100, %v5118
  %5120 = vdwg.mxu0
  %5121 = vmatpush.bf16.msra.mxu0 %v4907
  %5122 = vmatpush.bf16.msra.mxu0 %v4906
  %5123 = vmatpush.bf16.msra.mxu0 %v4905
  %5124 = vmatpush.bf16.msra.mxu0 %v4904
  %5125 = vmatpush.bf16.msra.mxu0 %v4903
  %5126 = vmatpush.bf16.msra.mxu0 %v4902
  %5127 = vmatpush.bf16.msra.mxu0 %v4901
  %5128 = vmatpush.bf16.msra.mxu0 %v4900
  %5129 = vmatmul.bf16.gmra.mxu0 %v4397
  %v5130 = vpop.f32.mrf.mxu0
  %v5131 = vadd.f32 %v5112, %v5130
  %v5132 = vpop.f32.mrf.mxu0
  %v5133 = vadd.f32 %v5114, %v5132
  %5134 = vmatmul.bf16.gmra.mxu0 %v4406
  %v5135 = vpop.f32.mrf.mxu0
  %v5136 = vadd.f32 %v5117, %v5135
  %v5137 = vpop.f32.mrf.mxu0
  %v5138 = vadd.f32 %v5119, %v5137
  %5139 = vdwg.mxu0
  %5140 = vmatpush.bf16.msra.mxu0 %v4915
  %5141 = vmatpush.bf16.msra.mxu0 %v4914
  %5142 = vmatpush.bf16.msra.mxu0 %v4913
  %5143 = vmatpush.bf16.msra.mxu0 %v4912
  %5144 = vmatpush.bf16.msra.mxu0 %v4911
  %5145 = vmatpush.bf16.msra.mxu0 %v4910
  %5146 = vmatpush.bf16.msra.mxu0 %v4909
  %5147 = vmatpush.bf16.msra.mxu0 %v4908
  %5148 = vmatmul.bf16.gmra.mxu0 %v4398
  %v5149 = vpop.f32.mrf.mxu0
  %v5150 = vadd.f32 %v5131, %v5149
  %v5151 = vpop.f32.mrf.mxu0
  %v5152 = vadd.f32 %v5133, %v5151
  %5153 = vmatmul.bf16.gmra.mxu0 %v4407
  %v5154 = vpop.f32.mrf.mxu0
  %v5155 = vadd.f32 %v5136, %v5154
  %v5156 = vpop.f32.mrf.mxu0
  %v5157 = vadd.f32 %v5138, %v5156
  %5158 = vdwg.mxu0
  %5159 = vst [vmem:[#allocation8] sm:$0xff] %v5150
  %5160 = vst [vmem:[#allocation8 + $0x8] sm:$0xff] %v5152
  %5161 = vst [vmem:[#allocation8 + $0x10] sm:$0xff] %v5155
  %5162 = vst [vmem:[#allocation8 + $0x18] sm:$0xff] %v5157
  %v5163 = vld [vmem:[%s39] sm:$0xff]
  %v5164 = vld [vmem:[%s39 + $0x8] sm:$0xff]
  %v5165 = vld [vmem:[%s39 + $0x10] sm:$0xff]
  %v5166 = vld [vmem:[%s39 + $0x18] sm:$0xff]
  %v5167 = vld [vmem:[%s39 + $0x20] sm:$0xff]
  %v5168 = vld [vmem:[%s39 + $0x28] sm:$0xff]
  %v5169 = vld [vmem:[%s39 + $0x30] sm:$0xff]
  %v5170 = vld [vmem:[%s39 + $0x38] sm:$0xff]
  %v5171 = vld [vmem:[%s39 + $0x40] sm:$0xff]
  %v5172 = vld [vmem:[%s39 + $0x48] sm:$0xff]
  %v5173 = vld [vmem:[%s39 + $0x50] sm:$0xff]
  %v5174 = vld [vmem:[%s39 + $0x58] sm:$0xff]
  %v5175 = vld [vmem:[%s39 + $0x60] sm:$0xff]
  %v5176 = vld [vmem:[%s39 + $0x68] sm:$0xff]
  %v5177 = vld [vmem:[%s39 + $0x70] sm:$0xff]
  %v5178 = vld [vmem:[%s39 + $0x78] sm:$0xff]
  %v5179 = vld [vmem:[%s41] sm:$0xff]
  %v5180 = vld [vmem:[%s41 + $0x8] sm:$0xff]
  %v5181 = vld [vmem:[%s41 + $0x10] sm:$0xff]
  %v5182 = vld [vmem:[%s41 + $0x18] sm:$0xff]
  %v5183 = vld [vmem:[%s35] sm:$0x1]
  %v5184 = vld [vmem:[%s37] sm:$0x1]
  %v5185 = vld [vmem:[#allocation8] sm:$0xff]
  %v5186 = vld [vmem:[#allocation8 + $0x8] sm:$0xff]
  %v5187 = vadd.f32 %v5185, %v5186
  %v5188 = vrot.slane %v5187, 4
  %v5189 = vadd.f32 %v5187, %v5188
  %v5190 = vrot.slane %v5189, 2
  %v5191 = vadd.f32 %v5189, %v5190
  %v5192 = vrot.slane %v5191, 1
  %v5193 = vadd.f32 %v5191, %v5192
  %v5194 = vmul.f32 %v5185, %v5185
  %v5195 = vmul.f32 %v5186, %v5186
  %v5196 = vadd.f32 %v5194, %v5195
  %v5197 = vrot.slane %v5196, 4
  %v5198 = vadd.f32 %v5196, %v5197
  %v5199 = vrot.slane %v5198, 2
  %v5200 = vadd.f32 %v5198, %v5199
  %v5201 = vrot.slane %v5200, 1
  %v5202 = vadd.f32 %v5200, %v5201
  %5203 = vmatpush.msra.mxu0 %v5178
  %5204 = vmatpush.msra.mxu0 %v5177
  %5205 = vmatpush.msra.mxu0 %v5176
  %5206 = vmatpush.msra.mxu0 %v5175
  %5207 = vmatpush.msra.mxu0 %v5174
  %5208 = vmatpush.msra.mxu0 %v5173
  %5209 = vmatpush.msra.mxu0 %v5172
  %5210 = vmatpush.msra.mxu0 %v5171
  %5211 = vmatpush.msra.mxu0 %v5170
  %5212 = vmatpush.msra.mxu0 %v5169
  %5213 = vmatpush.msra.mxu0 %v5168
  %5214 = vmatpush.msra.mxu0 %v5167
  %5215 = vmatpush.msra.mxu0 %v5166
  %5216 = vmatpush.msra.mxu0 %v5165
  %5217 = vmatpush.msra.mxu0 %v5164
  %5218 = vmatpush.msra.mxu0 %v5163
  %5219 = vmatmul.f32.gmra.mxu0 %v5193
  %v5220 = vpop.f32.mrf.mxu0
  %v5221 = vadd.f32 0.0, %v5220
  %5222 = vdwg.mxu0
  %v5223 = vmul.f32 %v5221, 0.015625
  %v5225 = vsel %vm1130, %v5223, 0
  %5227 = vmatpush.msra.mxu0 0.0
  %5228 = vmatpush.msra.mxu0 0.0
  %5229 = vmatpush.msra.mxu0 0.0
  %5230 = vmatpush.msra.mxu0 0.0
  %5231 = vmatpush.msra.mxu0 0.0
  %5232 = vmatpush.msra.mxu0 0.0
  %5233 = vmatpush.msra.mxu0 0.0
  %5234 = vmatpush.msra.mxu0 0.0
  %5235 = vmatpush.msra.mxu0 0.0
  %5236 = vmatpush.msra.mxu0 0.0
  %5237 = vmatpush.msra.mxu0 0.0
  %5238 = vmatpush.msra.mxu0 0.0
  %5239 = vmatpush.msra.mxu0 %v5182
  %5240 = vmatpush.msra.mxu0 %v5181
  %5241 = vmatpush.msra.mxu0 %v5180
  %5242 = vmatpush.msra.mxu0 %v5179
  %5243 = vmatmul.f32.gmra.mxu0 %v5225
  %v5244 = vpop.f32.mrf.mxu0
  %v5245 = vadd.f32 0.0, %v5244
  %5246 = vdwg.mxu0
  %5247 = vmatpush.msra.mxu0 %v5178
  %5248 = vmatpush.msra.mxu0 %v5177
  %5249 = vmatpush.msra.mxu0 %v5176
  %5250 = vmatpush.msra.mxu0 %v5175
  %5251 = vmatpush.msra.mxu0 %v5174
  %5252 = vmatpush.msra.mxu0 %v5173
  %5253 = vmatpush.msra.mxu0 %v5172
  %5254 = vmatpush.msra.mxu0 %v5171
  %5255 = vmatpush.msra.mxu0 %v5170
  %5256 = vmatpush.msra.mxu0 %v5169
  %5257 = vmatpush.msra.mxu0 %v5168
  %5258 = vmatpush.msra.mxu0 %v5167
  %5259 = vmatpush.msra.mxu0 %v5166
  %5260 = vmatpush.msra.mxu0 %v5165
  %5261 = vmatpush.msra.mxu0 %v5164
  %5262 = vmatpush.msra.mxu0 %v5163
  %5263 = vmatmul.f32.gmra.mxu0 %v5202
  %v5264 = vpop.f32.mrf.mxu0
  %v5265 = vadd.f32 0.0, %v5264
  %5266 = vdwg.mxu0
  %v5267 = vmul.f32 %v5265, 0.015625
  %v5269 = vsel %vm1130, %v5267, 0
  %5271 = vmatpush.msra.mxu0 0.0
  %5272 = vmatpush.msra.mxu0 0.0
  %5273 = vmatpush.msra.mxu0 0.0
  %5274 = vmatpush.msra.mxu0 0.0
  %5275 = vmatpush.msra.mxu0 0.0
  %5276 = vmatpush.msra.mxu0 0.0
  %5277 = vmatpush.msra.mxu0 0.0
  %5278 = vmatpush.msra.mxu0 0.0
  %5279 = vmatpush.msra.mxu0 0.0
  %5280 = vmatpush.msra.mxu0 0.0
  %5281 = vmatpush.msra.mxu0 0.0
  %5282 = vmatpush.msra.mxu0 0.0
  %5283 = vmatpush.msra.mxu0 %v5182
  %5284 = vmatpush.msra.mxu0 %v5181
  %5285 = vmatpush.msra.mxu0 %v5180
  %5286 = vmatpush.msra.mxu0 %v5179
  %5287 = vmatmul.f32.gmra.mxu0 %v5269
  %v5288 = vpop.f32.mrf.mxu0
  %v5289 = vadd.f32 0.0, %v5288
  %5290 = vdwg.mxu0
  %v5291 = vmul.f32 %v5245, %v5245
  %v5292 = vsub.f32 %v5289, %v5291
  %v5293 = vmax.f32 %v5292, 0.0
  %v5294 = vadd.f32 %v5293, 1e-05
  %v5295 = vrsqrt.pop %v5294
  %v5296 = vmul.f32 %v5295, %v5294
  %v5297 = vmul.f32 %v5296, %v5295
  %v5298 = vmul.f32 0.5, %v5297
  %v5299 = vsub.f32 1.5, %v5298
  %v5300 = vmul.f32 %v5295, %v5299
  %vm5301 = vweird.f32 %v5294
  %vm5302 = vweird.f32 %v5295
  %vm5303 = vmor %vm5301, %vm5302
  %v5304 = vsel %vm5303, %v5295, %v5300
  %v5305 = vmul.f32 %v5183, %v5304
  %v5306 = vmul.f32 %v5245, %v5305
  %v5307 = vsub.f32 %v5184, %v5306
  %v5309 = vperm.slane %v5305, 0
  %v5311 = vmul.f32 %v5185, %v5309
  %v5312 = vmul.f32 %v5186, %v5309
  %v5314 = vperm.slane %v5307, 0
  %v5316 = vadd.f32 %v5311, %v5314
  %v5317 = vadd.f32 %v5312, %v5314
  %v5318 = vmax.f32 %v5316, 0.0
  %v5319 = vmax.f32 %v5317, 0.0
  %5320 = vst [vmem:[#allocation8] sm:$0xff] %v5318
  %5321 = vst [vmem:[#allocation8 + $0x8] sm:$0xff] %v5319
  %v5322 = vld [vmem:[#allocation8] ss:$2 sm:$0xff]
  %s5323 = scalar_lea.vmem [#allocation8], 1
  %v5324 = vld [vmem:[%s5323] ss:$2 sm:$0xff]
  %v5325 = vmax.f32 %v5322, %v5324
  %v5327 = vrot.slane %v5325, 2
  %v5329 = vmax.f32 %v5325, %v5327
  %5330 = vst [vmem:[#allocation4 + $0x3] sm:$0x3] %v5329
  %5331 = vst [vmem:[#allocation4 + $0x1] sm:$0x30] %v5329
  %v5332 = vld [vmem:[#allocation8 + $0x10] sm:$0xff]
  %v5333 = vld [vmem:[#allocation8 + $0x18] sm:$0xff]
  %v5334 = vadd.f32 %v5332, %v5333
  %v5335 = vrot.slane %v5334, 4
  %v5336 = vadd.f32 %v5334, %v5335
  %v5337 = vrot.slane %v5336, 2
  %v5338 = vadd.f32 %v5336, %v5337
  %v5339 = vrot.slane %v5338, 1
  %v5340 = vadd.f32 %v5338, %v5339
  %v5341 = vmul.f32 %v5332, %v5332
  %v5342 = vmul.f32 %v5333, %v5333
  %v5343 = vadd.f32 %v5341, %v5342
  %v5344 = vrot.slane %v5343, 4
  %v5345 = vadd.f32 %v5343, %v5344
  %v5346 = vrot.slane %v5345, 2
  %v5347 = vadd.f32 %v5345, %v5346
  %v5348 = vrot.slane %v5347, 1
  %v5349 = vadd.f32 %v5347, %v5348
  %5350 = vmatpush.msra.mxu0 %v5178
  %5351 = vmatpush.msra.mxu0 %v5177
  %5352 = vmatpush.msra.mxu0 %v5176
  %5353 = vmatpush.msra.mxu0 %v5175
  %5354 = vmatpush.msra.mxu0 %v5174
  %5355 = vmatpush.msra.mxu0 %v5173
  %5356 = vmatpush.msra.mxu0 %v5172
  %5357 = vmatpush.msra.mxu0 %v5171
  %5358 = vmatpush.msra.mxu0 %v5170
  %5359 = vmatpush.msra.mxu0 %v5169
  %5360 = vmatpush.msra.mxu0 %v5168
  %5361 = vmatpush.msra.mxu0 %v5167
  %5362 = vmatpush.msra.mxu0 %v5166
  %5363 = vmatpush.msra.mxu0 %v5165
  %5364 = vmatpush.msra.mxu0 %v5164
  %5365 = vmatpush.msra.mxu0 %v5163
  %5366 = vmatmul.f32.gmra.mxu0 %v5340
  %v5367 = vpop.f32.mrf.mxu0
  %v5368 = vadd.f32 0.0, %v5367
  %5369 = vdwg.mxu0
  %v5370 = vmul.f32 %v5368, 0.015625
  %v5372 = vsel %vm1130, %v5370, 0
  %5374 = vmatpush.msra.mxu0 0.0
  %5375 = vmatpush.msra.mxu0 0.0
  %5376 = vmatpush.msra.mxu0 0.0
  %5377 = vmatpush.msra.mxu0 0.0
  %5378 = vmatpush.msra.mxu0 0.0
  %5379 = vmatpush.msra.mxu0 0.0
  %5380 = vmatpush.msra.mxu0 0.0
  %5381 = vmatpush.msra.mxu0 0.0
  %5382 = vmatpush.msra.mxu0 0.0
  %5383 = vmatpush.msra.mxu0 0.0
  %5384 = vmatpush.msra.mxu0 0.0
  %5385 = vmatpush.msra.mxu0 0.0
  %5386 = vmatpush.msra.mxu0 %v5182
  %5387 = vmatpush.msra.mxu0 %v5181
  %5388 = vmatpush.msra.mxu0 %v5180
  %5389 = vmatpush.msra.mxu0 %v5179
  %5390 = vmatmul.f32.gmra.mxu0 %v5372
  %v5391 = vpop.f32.mrf.mxu0
  %v5392 = vadd.f32 0.0, %v5391
  %5393 = vdwg.mxu0
  %5394 = vmatpush.msra.mxu0 %v5178
  %5395 = vmatpush.msra.mxu0 %v5177
  %5396 = vmatpush.msra.mxu0 %v5176
  %5397 = vmatpush.msra.mxu0 %v5175
  %5398 = vmatpush.msra.mxu0 %v5174
  %5399 = vmatpush.msra.mxu0 %v5173
  %5400 = vmatpush.msra.mxu0 %v5172
  %5401 = vmatpush.msra.mxu0 %v5171
  %5402 = vmatpush.msra.mxu0 %v5170
  %5403 = vmatpush.msra.mxu0 %v5169
  %5404 = vmatpush.msra.mxu0 %v5168
  %5405 = vmatpush.msra.mxu0 %v5167
  %5406 = vmatpush.msra.mxu0 %v5166
  %5407 = vmatpush.msra.mxu0 %v5165
  %5408 = vmatpush.msra.mxu0 %v5164
  %5409 = vmatpush.msra.mxu0 %v5163
  %5410 = vmatmul.f32.gmra.mxu0 %v5349
  %v5411 = vpop.f32.mrf.mxu0
  %v5412 = vadd.f32 0.0, %v5411
  %5413 = vdwg.mxu0
  %v5414 = vmul.f32 %v5412, 0.015625
  %v5416 = vsel %vm1130, %v5414, 0
  %5418 = vmatpush.msra.mxu0 0.0
  %5419 = vmatpush.msra.mxu0 0.0
  %5420 = vmatpush.msra.mxu0 0.0
  %5421 = vmatpush.msra.mxu0 0.0
  %5422 = vmatpush.msra.mxu0 0.0
  %5423 = vmatpush.msra.mxu0 0.0
  %5424 = vmatpush.msra.mxu0 0.0
  %5425 = vmatpush.msra.mxu0 0.0
  %5426 = vmatpush.msra.mxu0 0.0
  %5427 = vmatpush.msra.mxu0 0.0
  %5428 = vmatpush.msra.mxu0 0.0
  %5429 = vmatpush.msra.mxu0 0.0
  %5430 = vmatpush.msra.mxu0 %v5182
  %5431 = vmatpush.msra.mxu0 %v5181
  %5432 = vmatpush.msra.mxu0 %v5180
  %5433 = vmatpush.msra.mxu0 %v5179
  %5434 = vmatmul.f32.gmra.mxu0 %v5416
  %v5435 = vpop.f32.mrf.mxu0
  %v5436 = vadd.f32 0.0, %v5435
  %5437 = vdwg.mxu0
  %v5438 = vmul.f32 %v5392, %v5392
  %v5439 = vsub.f32 %v5436, %v5438
  %v5440 = vmax.f32 %v5439, 0.0
  %v5441 = vadd.f32 %v5440, 1e-05
  %v5442 = vrsqrt.pop %v5441
  %v5443 = vmul.f32 %v5442, %v5441
  %v5444 = vmul.f32 %v5443, %v5442
  %v5445 = vmul.f32 0.5, %v5444
  %v5446 = vsub.f32 1.5, %v5445
  %v5447 = vmul.f32 %v5442, %v5446
  %vm5448 = vweird.f32 %v5441
  %vm5449 = vweird.f32 %v5442
  %vm5450 = vmor %vm5448, %vm5449
  %v5451 = vsel %vm5450, %v5442, %v5447
  %v5452 = vmul.f32 %v5183, %v5451
  %v5453 = vmul.f32 %v5392, %v5452
  %v5454 = vsub.f32 %v5184, %v5453
  %v5456 = vperm.slane %v5452, 0
  %v5458 = vmul.f32 %v5332, %v5456
  %v5459 = vmul.f32 %v5333, %v5456
  %v5461 = vperm.slane %v5454, 0
  %v5463 = vadd.f32 %v5458, %v5461
  %v5464 = vadd.f32 %v5459, %v5461
  %v5465 = vmax.f32 %v5463, 0.0
  %v5466 = vmax.f32 %v5464, 0.0
  %5467 = vst [vmem:[#allocation8 + $0x10] sm:$0xff] %v5465
  %5468 = vst [vmem:[#allocation8 + $0x18] sm:$0xff] %v5466
  %s5469 = scalar_lea.vmem [#allocation8], 16
  %v5470 = vld [vmem:[%s5469] ss:$2 sm:$0xff]
  %s5471 = scalar_lea.vmem [#allocation8], 17
  %v5472 = vld [vmem:[%s5471] ss:$2 sm:$0xff]
  %v5473 = vmax.f32 %v5470, %v5472
  %v5475 = vrot.slane %v5473, 2
  %v5477 = vmax.f32 %v5473, %v5475
  %5478 = vst [vmem:[#allocation4 + $0xd] sm:$0x3] %v5477
  %5479 = vst [vmem:[#allocation4 + $0xb] sm:$0x30] %v5477
  %v5480 = vld [vmem:[%s59] sm:$0xf]
  %v5481 = vld [vmem:[%s61] sm:$0xf]
  %v5482 = vld [vmem:[#allocation4] sm:$0xf]
  %5484 = vset.pattern.permute.xlu0 0
  %5485 = vperm.xlu0 %5484, %v5480
  %v5486 = vpop.permute.xlu0 %5485
  %v5488 = vmul.f32 %v5482, %v5486
  %5489 = vst [vmem:[#allocation5] sm:$0xf] %v5488
  %v5490 = vld [vmem:[#allocation4 + $0x1] sm:$0xf]
  %5491 = vst [vmem:[#allocation5 + $0x8] sm:$0xf] %v5490
  %v5492 = vld [vmem:[#allocation4 + $0x2] sm:$0xf]
  %5494 = vset.pattern.permute.xlu0 0
  %5495 = vperm.xlu0 %5494, %v5481
  %v5496 = vpop.permute.xlu0 %5495
  %v5498 = vmul.f32 %v5492, %v5496
  %5499 = vst [vmem:[#allocation5 + $0x10] sm:$0xf] %v5498
  %v5500 = vld [vmem:[#allocation4 + $0x2] sm:$0xf]
  %v5501 = vmul.f32 %v5500, %v5486
  %5502 = vst [vmem:[#allocation5 + $0x18] sm:$0xf] %v5501
  %v5503 = vld [vmem:[#allocation4 + $0x3] sm:$0xf]
  %5504 = vst [vmem:[#allocation5 + $0x20] sm:$0xf] %v5503
  %v5505 = vld [vmem:[#allocation4 + $0x4] sm:$0xf]
  %v5506 = vmul.f32 %v5505, %v5496
  %5507 = vst [vmem:[#allocation5 + $0x28] sm:$0xf] %v5506
  %v5508 = vld [vmem:[#allocation4 + $0x4] sm:$0xf]
  %v5509 = vmul.f32 %v5508, %v5486
  %5510 = vst [vmem:[#allocation5 + $0x30] sm:$0xf] %v5509
  %v5511 = vld [vmem:[#allocation4 + $0x5] sm:$0xf]
  %5512 = vst [vmem:[#allocation5 + $0x38] sm:$0xf] %v5511
  %v5513 = vld [vmem:[#allocation4 + $0x6] sm:$0xf]
  %v5514 = vmul.f32 %v5513, %v5496
  %5515 = vst [vmem:[#allocation5 + $0x40] sm:$0xf] %v5514
  %v5516 = vld [vmem:[#allocation4 + $0xa] sm:$0xf]
  %v5517 = vmul.f32 %v5516, %v5486
  %v5519 = vrot.slane %v5517, 4
  %5521 = vst [vmem:[#allocation5] sm:$0xf0] %v5519
  %v5522 = vld [vmem:[#allocation4 + $0xb] sm:$0xf]
  %v5524 = vrot.slane %v5522, 4
  %5526 = vst [vmem:[#allocation5 + $0x8] sm:$0xf0] %v5524
  %v5527 = vld [vmem:[#allocation4 + $0xc] sm:$0xf]
  %v5528 = vmul.f32 %v5527, %v5496
  %v5530 = vrot.slane %v5528, 4
  %5532 = vst [vmem:[#allocation5 + $0x10] sm:$0xf0] %v5530
  %v5533 = vld [vmem:[#allocation4 + $0xc] sm:$0xf]
  %v5534 = vmul.f32 %v5533, %v5486
  %v5536 = vrot.slane %v5534, 4
  %5538 = vst [vmem:[#allocation5 + $0x18] sm:$0xf0] %v5536
  %v5539 = vld [vmem:[#allocation4 + $0xd] sm:$0xf]
  %v5541 = vrot.slane %v5539, 4
  %5543 = vst [vmem:[#allocation5 + $0x20] sm:$0xf0] %v5541
  %v5544 = vld [vmem:[#allocation4 + $0xe] sm:$0xf]
  %v5545 = vmul.f32 %v5544, %v5496
  %v5547 = vrot.slane %v5545, 4
  %5549 = vst [vmem:[#allocation5 + $0x28] sm:$0xf0] %v5547
  %v5550 = vld [vmem:[#allocation4 + $0xe] sm:$0xf]
  %v5551 = vmul.f32 %v5550, %v5486
  %v5553 = vrot.slane %v5551, 4
  %5555 = vst [vmem:[#allocation5 + $0x30] sm:$0xf0] %v5553
  %v5556 = vld [vmem:[#allocation4 + $0xf] sm:$0xf]
  %v5558 = vrot.slane %v5556, 4
  %5560 = vst [vmem:[#allocation5 + $0x38] sm:$0xf0] %v5558
  %v5561 = vld [vmem:[#allocation4 + $0x10] sm:$0xf]
  %v5562 = vmul.f32 %v5561, %v5496
  %v5564 = vrot.slane %v5562, 4
  %5566 = vst [vmem:[#allocation5 + $0x40] sm:$0xf0] %v5564
  %v5567 = vld [vmem:[#allocation5] sm:$0xff]
  %v5568 = vld [vmem:[#allocation5 + $0x8] sm:$0xff]
  %v5569 = vld [vmem:[#allocation5 + $0x10] sm:$0xff]
  %v5570 = vld [vmem:[#allocation5 + $0x18] sm:$0xff]
  %v5571 = vld [vmem:[#allocation5 + $0x20] sm:$0xff]
  %v5572 = vld [vmem:[#allocation5 + $0x28] sm:$0xff]
  %v5573 = vld [vmem:[#allocation5 + $0x30] sm:$0xff]
  %v5574 = vld [vmem:[#allocation5 + $0x38] sm:$0xff]
  %v5575 = vld [vmem:[#allocation5 + $0x40] sm:$0xff]
  %v5576 = vpack.c.bf16 %v5567, %v5567
  %v5577 = vpack.c.bf16 %v5568, %v5568
  %v5578 = vpack.c.bf16 %v5569, %v5569
  %v5579 = vpack.c.bf16 %v5570, %v5570
  %v5580 = vpack.c.bf16 %v5571, %v5571
  %v5581 = vpack.c.bf16 %v5572, %v5572
  %v5582 = vpack.c.bf16 %v5573, %v5573
  %v5583 = vpack.c.bf16 %v5574, %v5574
  %v5584 = vpack.c.bf16 %v5575, %v5575
  %v5585 = vld [vmem:[%s47] sm:$0xff]
  %v5586 = vld [vmem:[%s47 + $0x8] sm:$0xff]
  %v5587 = vld [vmem:[%s47 + $0x10] sm:$0xff]
  %v5588 = vld [vmem:[%s47 + $0x18] sm:$0xff]
  %v5589 = vld [vmem:[%s47 + $0x20] sm:$0xff]
  %v5590 = vld [vmem:[%s47 + $0x28] sm:$0xff]
  %v5591 = vld [vmem:[%s47 + $0x30] sm:$0xff]
  %v5592 = vld [vmem:[%s47 + $0x38] sm:$0xff]
  %v5593 = vld [vmem:[%s47 + $0x40] sm:$0xff]
  %v5594 = vld [vmem:[%s47 + $0x48] sm:$0xff]
  %v5595 = vld [vmem:[%s47 + $0x50] sm:$0xff]
  %v5596 = vld [vmem:[%s47 + $0x58] sm:$0xff]
  %v5597 = vld [vmem:[%s47 + $0x60] sm:$0xff]
  %v5598 = vld [vmem:[%s47 + $0x68] sm:$0xff]
  %v5599 = vld [vmem:[%s47 + $0x70] sm:$0xff]
  %v5600 = vld [vmem:[%s47 + $0x78] sm:$0xff]
  %v5601 = vld [vmem:[%s47 + $0x80] sm:$0xff]
  %v5602 = vld [vmem:[%s47 + $0x88] sm:$0xff]
  %v5603 = vld [vmem:[%s47 + $0x90] sm:$0xff]
  %v5604 = vld [vmem:[%s47 + $0x98] sm:$0xff]
  %v5605 = vld [vmem:[%s47 + $0xa0] sm:$0xff]
  %v5606 = vld [vmem:[%s47 + $0xa8] sm:$0xff]
  %v5607 = vld [vmem:[%s47 + $0xb0] sm:$0xff]
  %v5608 = vld [vmem:[%s47 + $0xb8] sm:$0xff]
  %v5609 = vld [vmem:[%s47 + $0xc0] sm:$0xff]
  %v5610 = vld [vmem:[%s47 + $0xc8] sm:$0xff]
  %v5611 = vld [vmem:[%s47 + $0xd0] sm:$0xff]
  %v5612 = vld [vmem:[%s47 + $0xd8] sm:$0xff]
  %v5613 = vld [vmem:[%s47 + $0xe0] sm:$0xff]
  %v5614 = vld [vmem:[%s47 + $0xe8] sm:$0xff]
  %v5615 = vld [vmem:[%s47 + $0xf0] sm:$0xff]
  %v5616 = vld [vmem:[%s47 + $0xf8] sm:$0xff]
  %v5617 = vld [vmem:[%s47 + $0x100] sm:$0xff]
  %v5618 = vld [vmem:[%s47 + $0x108] sm:$0xff]
  %v5619 = vld [vmem:[%s47 + $0x110] sm:$0xff]
  %v5620 = vld [vmem:[%s47 + $0x118] sm:$0xff]
  %v5621 = vld [vmem:[%s47 + $0x120] sm:$0xff]
  %v5622 = vld [vmem:[%s47 + $0x128] sm:$0xff]
  %v5623 = vld [vmem:[%s47 + $0x130] sm:$0xff]
  %v5624 = vld [vmem:[%s47 + $0x138] sm:$0xff]
  %v5625 = vld [vmem:[%s47 + $0x140] sm:$0xff]
  %v5626 = vld [vmem:[%s47 + $0x148] sm:$0xff]
  %v5627 = vld [vmem:[%s47 + $0x150] sm:$0xff]
  %v5628 = vld [vmem:[%s47 + $0x158] sm:$0xff]
  %v5629 = vld [vmem:[%s47 + $0x160] sm:$0xff]
  %v5630 = vld [vmem:[%s47 + $0x168] sm:$0xff]
  %v5631 = vld [vmem:[%s47 + $0x170] sm:$0xff]
  %v5632 = vld [vmem:[%s47 + $0x178] sm:$0xff]
  %v5633 = vld [vmem:[%s47 + $0x180] sm:$0xff]
  %v5634 = vld [vmem:[%s47 + $0x188] sm:$0xff]
  %v5635 = vld [vmem:[%s47 + $0x190] sm:$0xff]
  %v5636 = vld [vmem:[%s47 + $0x198] sm:$0xff]
  %v5637 = vld [vmem:[%s47 + $0x1a0] sm:$0xff]
  %v5638 = vld [vmem:[%s47 + $0x1a8] sm:$0xff]
  %v5639 = vld [vmem:[%s47 + $0x1b0] sm:$0xff]
  %v5640 = vld [vmem:[%s47 + $0x1b8] sm:$0xff]
  %v5641 = vld [vmem:[%s47 + $0x1c0] sm:$0xff]
  %v5642 = vld [vmem:[%s47 + $0x1c8] sm:$0xff]
  %v5643 = vld [vmem:[%s47 + $0x1d0] sm:$0xff]
  %v5644 = vld [vmem:[%s47 + $0x1d8] sm:$0xff]
  %v5645 = vld [vmem:[%s47 + $0x1e0] sm:$0xff]
  %v5646 = vld [vmem:[%s47 + $0x1e8] sm:$0xff]
  %v5647 = vld [vmem:[%s47 + $0x1f0] sm:$0xff]
  %v5648 = vld [vmem:[%s47 + $0x1f8] sm:$0xff]
  %v5649 = vld [vmem:[%s47 + $0x200] sm:$0xff]
  %v5650 = vld [vmem:[%s47 + $0x208] sm:$0xff]
  %v5651 = vld [vmem:[%s47 + $0x210] sm:$0xff]
  %v5652 = vld [vmem:[%s47 + $0x218] sm:$0xff]
  %v5653 = vld [vmem:[%s47 + $0x220] sm:$0xff]
  %v5654 = vld [vmem:[%s47 + $0x228] sm:$0xff]
  %v5655 = vld [vmem:[%s47 + $0x230] sm:$0xff]
  %v5656 = vld [vmem:[%s47 + $0x238] sm:$0xff]
  %v5657 = vld [vmem:[%s47 + $0x240] sm:$0xff]
  %v5658 = vld [vmem:[%s47 + $0x248] sm:$0xff]
  %v5659 = vld [vmem:[%s47 + $0x250] sm:$0xff]
  %v5660 = vld [vmem:[%s47 + $0x258] sm:$0xff]
  %v5661 = vld [vmem:[%s47 + $0x260] sm:$0xff]
  %v5662 = vld [vmem:[%s47 + $0x268] sm:$0xff]
  %v5663 = vld [vmem:[%s47 + $0x270] sm:$0xff]
  %v5664 = vld [vmem:[%s47 + $0x278] sm:$0xff]
  %v5665 = vld [vmem:[%s47 + $0x280] sm:$0xff]
  %v5666 = vld [vmem:[%s47 + $0x288] sm:$0xff]
  %v5667 = vld [vmem:[%s47 + $0x290] sm:$0xff]
  %v5668 = vld [vmem:[%s47 + $0x298] sm:$0xff]
  %v5669 = vld [vmem:[%s47 + $0x2a0] sm:$0xff]
  %v5670 = vld [vmem:[%s47 + $0x2a8] sm:$0xff]
  %v5671 = vld [vmem:[%s47 + $0x2b0] sm:$0xff]
  %v5672 = vld [vmem:[%s47 + $0x2b8] sm:$0xff]
  %v5673 = vld [vmem:[%s47 + $0x2c0] sm:$0xff]
  %v5674 = vld [vmem:[%s47 + $0x2c8] sm:$0xff]
  %v5675 = vld [vmem:[%s47 + $0x2d0] sm:$0xff]
  %v5676 = vld [vmem:[%s47 + $0x2d8] sm:$0xff]
  %v5677 = vld [vmem:[%s47 + $0x2e0] sm:$0xff]
  %v5678 = vld [vmem:[%s47 + $0x2e8] sm:$0xff]
  %v5679 = vld [vmem:[%s47 + $0x2f0] sm:$0xff]
  %v5680 = vld [vmem:[%s47 + $0x2f8] sm:$0xff]
  %v5681 = vld [vmem:[%s47 + $0x300] sm:$0xff]
  %v5682 = vld [vmem:[%s47 + $0x308] sm:$0xff]
  %v5683 = vld [vmem:[%s47 + $0x310] sm:$0xff]
  %v5684 = vld [vmem:[%s47 + $0x318] sm:$0xff]
  %v5685 = vld [vmem:[%s47 + $0x320] sm:$0xff]
  %v5686 = vld [vmem:[%s47 + $0x328] sm:$0xff]
  %v5687 = vld [vmem:[%s47 + $0x330] sm:$0xff]
  %v5688 = vld [vmem:[%s47 + $0x338] sm:$0xff]
  %v5689 = vld [vmem:[%s47 + $0x340] sm:$0xff]
  %v5690 = vld [vmem:[%s47 + $0x348] sm:$0xff]
  %v5691 = vld [vmem:[%s47 + $0x350] sm:$0xff]
  %v5692 = vld [vmem:[%s47 + $0x358] sm:$0xff]
  %v5693 = vld [vmem:[%s47 + $0x360] sm:$0xff]
  %v5694 = vld [vmem:[%s47 + $0x368] sm:$0xff]
  %v5695 = vld [vmem:[%s47 + $0x370] sm:$0xff]
  %v5696 = vld [vmem:[%s47 + $0x378] sm:$0xff]
  %v5697 = vld [vmem:[%s47 + $0x380] sm:$0xff]
  %v5698 = vld [vmem:[%s47 + $0x388] sm:$0xff]
  %v5699 = vld [vmem:[%s47 + $0x390] sm:$0xff]
  %v5700 = vld [vmem:[%s47 + $0x398] sm:$0xff]
  %v5701 = vld [vmem:[%s47 + $0x3a0] sm:$0xff]
  %v5702 = vld [vmem:[%s47 + $0x3a8] sm:$0xff]
  %v5703 = vld [vmem:[%s47 + $0x3b0] sm:$0xff]
  %v5704 = vld [vmem:[%s47 + $0x3b8] sm:$0xff]
  %v5705 = vld [vmem:[%s47 + $0x3c0] sm:$0xff]
  %v5706 = vld [vmem:[%s47 + $0x3c8] sm:$0xff]
  %v5707 = vld [vmem:[%s47 + $0x3d0] sm:$0xff]
  %v5708 = vld [vmem:[%s47 + $0x3d8] sm:$0xff]
  %v5709 = vld [vmem:[%s47 + $0x3e0] sm:$0xff]
  %v5710 = vld [vmem:[%s47 + $0x3e8] sm:$0xff]
  %v5711 = vld [vmem:[%s47 + $0x3f0] sm:$0xff]
  %v5712 = vld [vmem:[%s47 + $0x3f8] sm:$0xff]
  %v5713 = vld [vmem:[%s47 + $0x400] sm:$0xff]
  %v5714 = vld [vmem:[%s47 + $0x408] sm:$0xff]
  %v5715 = vld [vmem:[%s47 + $0x410] sm:$0xff]
  %v5716 = vld [vmem:[%s47 + $0x418] sm:$0xff]
  %v5717 = vld [vmem:[%s47 + $0x420] sm:$0xff]
  %v5718 = vld [vmem:[%s47 + $0x428] sm:$0xff]
  %v5719 = vld [vmem:[%s47 + $0x430] sm:$0xff]
  %v5720 = vld [vmem:[%s47 + $0x438] sm:$0xff]
  %v5721 = vld [vmem:[%s47 + $0x440] sm:$0xff]
  %v5722 = vld [vmem:[%s47 + $0x448] sm:$0xff]
  %v5723 = vld [vmem:[%s47 + $0x450] sm:$0xff]
  %v5724 = vld [vmem:[%s47 + $0x458] sm:$0xff]
  %v5725 = vld [vmem:[%s47 + $0x460] sm:$0xff]
  %v5726 = vld [vmem:[%s47 + $0x468] sm:$0xff]
  %v5727 = vld [vmem:[%s47 + $0x470] sm:$0xff]
  %v5728 = vld [vmem:[%s47 + $0x478] sm:$0xff]
  %v5729 = vld [vmem:[%s49] sm:$0x3]
  %v5731 = vperm.slane %v5729, 0
  %v5732 = vperm.slane %v5729, 1
  %v5879 = vunpack.c.l.b16 %v5585
  %v5880 = vunpack.c.h.b16 %v5585
  %v5881 = vunpack.c.l.b16 %v5586
  %v5882 = vunpack.c.h.b16 %v5586
  %v5883 = vunpack.c.l.b16 %v5587
  %v5884 = vunpack.c.h.b16 %v5587
  %v5885 = vunpack.c.l.b16 %v5588
  %v5886 = vunpack.c.h.b16 %v5588
  %v5887 = vunpack.c.l.b16 %v5589
  %v5888 = vunpack.c.h.b16 %v5589
  %v5889 = vunpack.c.l.b16 %v5590
  %v5890 = vunpack.c.h.b16 %v5590
  %v5891 = vunpack.c.l.b16 %v5591
  %v5892 = vunpack.c.h.b16 %v5591
  %v5893 = vunpack.c.l.b16 %v5592
  %v5894 = vunpack.c.h.b16 %v5592
  %v5895 = vunpack.c.l.b16 %v5593
  %v5896 = vunpack.c.h.b16 %v5593
  %v5897 = vunpack.c.l.b16 %v5594
  %v5898 = vunpack.c.h.b16 %v5594
  %v5899 = vunpack.c.l.b16 %v5595
  %v5900 = vunpack.c.h.b16 %v5595
  %v5901 = vunpack.c.l.b16 %v5596
  %v5902 = vunpack.c.h.b16 %v5596
  %v5903 = vunpack.c.l.b16 %v5597
  %v5904 = vunpack.c.h.b16 %v5597
  %v5905 = vunpack.c.l.b16 %v5598
  %v5906 = vunpack.c.h.b16 %v5598
  %v5907 = vunpack.c.l.b16 %v5599
  %v5908 = vunpack.c.h.b16 %v5599
  %v5909 = vunpack.c.l.b16 %v5600
  %v5910 = vunpack.c.h.b16 %v5600
  %v5911 = vunpack.c.l.b16 %v5601
  %v5912 = vunpack.c.h.b16 %v5601
  %v5913 = vunpack.c.l.b16 %v5602
  %v5914 = vunpack.c.h.b16 %v5602
  %v5915 = vunpack.c.l.b16 %v5603
  %v5916 = vunpack.c.h.b16 %v5603
  %v5917 = vunpack.c.l.b16 %v5604
  %v5918 = vunpack.c.h.b16 %v5604
  %v5919 = vunpack.c.l.b16 %v5605
  %v5920 = vunpack.c.h.b16 %v5605
  %v5921 = vunpack.c.l.b16 %v5606
  %v5922 = vunpack.c.h.b16 %v5606
  %v5923 = vunpack.c.l.b16 %v5607
  %v5924 = vunpack.c.h.b16 %v5607
  %v5925 = vunpack.c.l.b16 %v5608
  %v5926 = vunpack.c.h.b16 %v5608
  %v5927 = vunpack.c.l.b16 %v5609
  %v5928 = vunpack.c.h.b16 %v5609
  %v5929 = vunpack.c.l.b16 %v5610
  %v5930 = vunpack.c.h.b16 %v5610
  %v5931 = vunpack.c.l.b16 %v5611
  %v5932 = vunpack.c.h.b16 %v5611
  %v5933 = vunpack.c.l.b16 %v5612
  %v5934 = vunpack.c.h.b16 %v5612
  %v5935 = vunpack.c.l.b16 %v5613
  %v5936 = vunpack.c.h.b16 %v5613
  %v5937 = vunpack.c.l.b16 %v5614
  %v5938 = vunpack.c.h.b16 %v5614
  %v5939 = vunpack.c.l.b16 %v5615
  %v5940 = vunpack.c.h.b16 %v5615
  %v5941 = vunpack.c.l.b16 %v5616
  %v5942 = vunpack.c.h.b16 %v5616
  %v5943 = vunpack.c.l.b16 %v5617
  %v5944 = vunpack.c.h.b16 %v5617
  %v5945 = vunpack.c.l.b16 %v5618
  %v5946 = vunpack.c.h.b16 %v5618
  %v5947 = vunpack.c.l.b16 %v5619
  %v5948 = vunpack.c.h.b16 %v5619
  %v5949 = vunpack.c.l.b16 %v5620
  %v5950 = vunpack.c.h.b16 %v5620
  %v5951 = vunpack.c.l.b16 %v5621
  %v5952 = vunpack.c.h.b16 %v5621
  %v5953 = vunpack.c.l.b16 %v5622
  %v5954 = vunpack.c.h.b16 %v5622
  %v5955 = vunpack.c.l.b16 %v5623
  %v5956 = vunpack.c.h.b16 %v5623
  %v5957 = vunpack.c.l.b16 %v5624
  %v5958 = vunpack.c.h.b16 %v5624
  %v5959 = vunpack.c.l.b16 %v5625
  %v5960 = vunpack.c.h.b16 %v5625
  %v5961 = vunpack.c.l.b16 %v5626
  %v5962 = vunpack.c.h.b16 %v5626
  %v5963 = vunpack.c.l.b16 %v5627
  %v5964 = vunpack.c.h.b16 %v5627
  %v5965 = vunpack.c.l.b16 %v5628
  %v5966 = vunpack.c.h.b16 %v5628
  %v5967 = vunpack.c.l.b16 %v5629
  %v5968 = vunpack.c.h.b16 %v5629
  %v5969 = vunpack.c.l.b16 %v5630
  %v5970 = vunpack.c.h.b16 %v5630
  %v5971 = vunpack.c.l.b16 %v5631
  %v5972 = vunpack.c.h.b16 %v5631
  %v5973 = vunpack.c.l.b16 %v5632
  %v5974 = vunpack.c.h.b16 %v5632
  %v5975 = vunpack.c.l.b16 %v5633
  %v5976 = vunpack.c.h.b16 %v5633
  %v5977 = vunpack.c.l.b16 %v5634
  %v5978 = vunpack.c.h.b16 %v5634
  %v5979 = vunpack.c.l.b16 %v5635
  %v5980 = vunpack.c.h.b16 %v5635
  %v5981 = vunpack.c.l.b16 %v5636
  %v5982 = vunpack.c.h.b16 %v5636
  %v5983 = vunpack.c.l.b16 %v5637
  %v5984 = vunpack.c.h.b16 %v5637
  %v5985 = vunpack.c.l.b16 %v5638
  %v5986 = vunpack.c.h.b16 %v5638
  %v5987 = vunpack.c.l.b16 %v5639
  %v5988 = vunpack.c.h.b16 %v5639
  %v5989 = vunpack.c.l.b16 %v5640
  %v5990 = vunpack.c.h.b16 %v5640
  %v5991 = vunpack.c.l.b16 %v5641
  %v5992 = vunpack.c.h.b16 %v5641
  %v5993 = vunpack.c.l.b16 %v5642
  %v5994 = vunpack.c.h.b16 %v5642
  %v5995 = vunpack.c.l.b16 %v5643
  %v5996 = vunpack.c.h.b16 %v5643
  %v5997 = vunpack.c.l.b16 %v5644
  %v5998 = vunpack.c.h.b16 %v5644
  %v5999 = vunpack.c.l.b16 %v5645
  %v6000 = vunpack.c.h.b16 %v5645
  %v6001 = vunpack.c.l.b16 %v5646
  %v6002 = vunpack.c.h.b16 %v5646
  %v6003 = vunpack.c.l.b16 %v5647
  %v6004 = vunpack.c.h.b16 %v5647
  %v6005 = vunpack.c.l.b16 %v5648
  %v6006 = vunpack.c.h.b16 %v5648
  %v6007 = vunpack.c.l.b16 %v5649
  %v6008 = vunpack.c.h.b16 %v5649
  %v6009 = vunpack.c.l.b16 %v5650
  %v6010 = vunpack.c.h.b16 %v5650
  %v6011 = vunpack.c.l.b16 %v5651
  %v6012 = vunpack.c.h.b16 %v5651
  %v6013 = vunpack.c.l.b16 %v5652
  %v6014 = vunpack.c.h.b16 %v5652
  %v6015 = vunpack.c.l.b16 %v5653
  %v6016 = vunpack.c.h.b16 %v5653
  %v6017 = vunpack.c.l.b16 %v5654
  %v6018 = vunpack.c.h.b16 %v5654
  %v6019 = vunpack.c.l.b16 %v5655
  %v6020 = vunpack.c.h.b16 %v5655
  %v6021 = vunpack.c.l.b16 %v5656
  %v6022 = vunpack.c.h.b16 %v5656
  %v6023 = vunpack.c.l.b16 %v5657
  %v6024 = vunpack.c.h.b16 %v5657
  %v6025 = vunpack.c.l.b16 %v5658
  %v6026 = vunpack.c.h.b16 %v5658
  %v6027 = vunpack.c.l.b16 %v5659
  %v6028 = vunpack.c.h.b16 %v5659
  %v6029 = vunpack.c.l.b16 %v5660
  %v6030 = vunpack.c.h.b16 %v5660
  %v6031 = vunpack.c.l.b16 %v5661
  %v6032 = vunpack.c.h.b16 %v5661
  %v6033 = vunpack.c.l.b16 %v5662
  %v6034 = vunpack.c.h.b16 %v5662
  %v6035 = vunpack.c.l.b16 %v5663
  %v6036 = vunpack.c.h.b16 %v5663
  %v6037 = vunpack.c.l.b16 %v5664
  %v6038 = vunpack.c.h.b16 %v5664
  %v6039 = vunpack.c.l.b16 %v5665
  %v6040 = vunpack.c.h.b16 %v5665
  %v6041 = vunpack.c.l.b16 %v5666
  %v6042 = vunpack.c.h.b16 %v5666
  %v6043 = vunpack.c.l.b16 %v5667
  %v6044 = vunpack.c.h.b16 %v5667
  %v6045 = vunpack.c.l.b16 %v5668
  %v6046 = vunpack.c.h.b16 %v5668
  %v6047 = vunpack.c.l.b16 %v5669
  %v6048 = vunpack.c.h.b16 %v5669
  %v6049 = vunpack.c.l.b16 %v5670
  %v6050 = vunpack.c.h.b16 %v5670
  %v6051 = vunpack.c.l.b16 %v5671
  %v6052 = vunpack.c.h.b16 %v5671
  %v6053 = vunpack.c.l.b16 %v5672
  %v6054 = vunpack.c.h.b16 %v5672
  %v6055 = vunpack.c.l.b16 %v5673
  %v6056 = vunpack.c.h.b16 %v5673
  %v6057 = vunpack.c.l.b16 %v5674
  %v6058 = vunpack.c.h.b16 %v5674
  %v6059 = vunpack.c.l.b16 %v5675
  %v6060 = vunpack.c.h.b16 %v5675
  %v6061 = vunpack.c.l.b16 %v5676
  %v6062 = vunpack.c.h.b16 %v5676
  %v6063 = vunpack.c.l.b16 %v5677
  %v6064 = vunpack.c.h.b16 %v5677
  %v6065 = vunpack.c.l.b16 %v5678
  %v6066 = vunpack.c.h.b16 %v5678
  %v6067 = vunpack.c.l.b16 %v5679
  %v6068 = vunpack.c.h.b16 %v5679
  %v6069 = vunpack.c.l.b16 %v5680
  %v6070 = vunpack.c.h.b16 %v5680
  %v6071 = vunpack.c.l.b16 %v5681
  %v6072 = vunpack.c.h.b16 %v5681
  %v6073 = vunpack.c.l.b16 %v5682
  %v6074 = vunpack.c.h.b16 %v5682
  %v6075 = vunpack.c.l.b16 %v5683
  %v6076 = vunpack.c.h.b16 %v5683
  %v6077 = vunpack.c.l.b16 %v5684
  %v6078 = vunpack.c.h.b16 %v5684
  %v6079 = vunpack.c.l.b16 %v5685
  %v6080 = vunpack.c.h.b16 %v5685
  %v6081 = vunpack.c.l.b16 %v5686
  %v6082 = vunpack.c.h.b16 %v5686
  %v6083 = vunpack.c.l.b16 %v5687
  %v6084 = vunpack.c.h.b16 %v5687
  %v6085 = vunpack.c.l.b16 %v5688
  %v6086 = vunpack.c.h.b16 %v5688
  %v6087 = vunpack.c.l.b16 %v5689
  %v6088 = vunpack.c.h.b16 %v5689
  %v6089 = vunpack.c.l.b16 %v5690
  %v6090 = vunpack.c.h.b16 %v5690
  %v6091 = vunpack.c.l.b16 %v5691
  %v6092 = vunpack.c.h.b16 %v5691
  %v6093 = vunpack.c.l.b16 %v5692
  %v6094 = vunpack.c.h.b16 %v5692
  %v6095 = vunpack.c.l.b16 %v5693
  %v6096 = vunpack.c.h.b16 %v5693
  %v6097 = vunpack.c.l.b16 %v5694
  %v6098 = vunpack.c.h.b16 %v5694
  %v6099 = vunpack.c.l.b16 %v5695
  %v6100 = vunpack.c.h.b16 %v5695
  %v6101 = vunpack.c.l.b16 %v5696
  %v6102 = vunpack.c.h.b16 %v5696
  %v6103 = vunpack.c.l.b16 %v5697
  %v6104 = vunpack.c.h.b16 %v5697
  %v6105 = vunpack.c.l.b16 %v5698
  %v6106 = vunpack.c.h.b16 %v5698
  %v6107 = vunpack.c.l.b16 %v5699
  %v6108 = vunpack.c.h.b16 %v5699
  %v6109 = vunpack.c.l.b16 %v5700
  %v6110 = vunpack.c.h.b16 %v5700
  %v6111 = vunpack.c.l.b16 %v5701
  %v6112 = vunpack.c.h.b16 %v5701
  %v6113 = vunpack.c.l.b16 %v5702
  %v6114 = vunpack.c.h.b16 %v5702
  %v6115 = vunpack.c.l.b16 %v5703
  %v6116 = vunpack.c.h.b16 %v5703
  %v6117 = vunpack.c.l.b16 %v5704
  %v6118 = vunpack.c.h.b16 %v5704
  %v6119 = vunpack.c.l.b16 %v5705
  %v6120 = vunpack.c.h.b16 %v5705
  %v6121 = vunpack.c.l.b16 %v5706
  %v6122 = vunpack.c.h.b16 %v5706
  %v6123 = vunpack.c.l.b16 %v5707
  %v6124 = vunpack.c.h.b16 %v5707
  %v6125 = vunpack.c.l.b16 %v5708
  %v6126 = vunpack.c.h.b16 %v5708
  %v6127 = vunpack.c.l.b16 %v5709
  %v6128 = vunpack.c.h.b16 %v5709
  %v6129 = vunpack.c.l.b16 %v5710
  %v6130 = vunpack.c.h.b16 %v5710
  %v6131 = vunpack.c.l.b16 %v5711
  %v6132 = vunpack.c.h.b16 %v5711
  %v6133 = vunpack.c.l.b16 %v5712
  %v6134 = vunpack.c.h.b16 %v5712
  %v6135 = vunpack.c.l.b16 %v5713
  %v6136 = vunpack.c.h.b16 %v5713
  %v6137 = vunpack.c.l.b16 %v5714
  %v6138 = vunpack.c.h.b16 %v5714
  %v6139 = vunpack.c.l.b16 %v5715
  %v6140 = vunpack.c.h.b16 %v5715
  %v6141 = vunpack.c.l.b16 %v5716
  %v6142 = vunpack.c.h.b16 %v5716
  %v6143 = vunpack.c.l.b16 %v5717
  %v6144 = vunpack.c.h.b16 %v5717
  %v6145 = vunpack.c.l.b16 %v5718
  %v6146 = vunpack.c.h.b16 %v5718
  %v6147 = vunpack.c.l.b16 %v5719
  %v6148 = vunpack.c.h.b16 %v5719
  %v6149 = vunpack.c.l.b16 %v5720
  %v6150 = vunpack.c.h.b16 %v5720
  %v6151 = vunpack.c.l.b16 %v5721
  %v6152 = vunpack.c.h.b16 %v5721
  %v6153 = vunpack.c.l.b16 %v5722
  %v6154 = vunpack.c.h.b16 %v5722
  %v6155 = vunpack.c.l.b16 %v5723
  %v6156 = vunpack.c.h.b16 %v5723
  %v6157 = vunpack.c.l.b16 %v5724
  %v6158 = vunpack.c.h.b16 %v5724
  %v6159 = vunpack.c.l.b16 %v5725
  %v6160 = vunpack.c.h.b16 %v5725
  %v6161 = vunpack.c.l.b16 %v5726
  %v6162 = vunpack.c.h.b16 %v5726
  %v6163 = vunpack.c.l.b16 %v5727
  %v6164 = vunpack.c.h.b16 %v5727
  %v6165 = vunpack.c.l.b16 %v5728
  %v6166 = vunpack.c.h.b16 %v5728
  %v6167 = vpack.c.b16 %v5881, %v5879
  %v6168 = vpack.c.b16 %v5882, %v5880
  %v6169 = vpack.c.b16 %v5885, %v5883
  %v6170 = vpack.c.b16 %v5886, %v5884
  %v6171 = vpack.c.b16 %v5889, %v5887
  %v6172 = vpack.c.b16 %v5890, %v5888
  %v6173 = vpack.c.b16 %v5893, %v5891
  %v6174 = vpack.c.b16 %v5894, %v5892
  %v6175 = vpack.c.b16 %v5897, %v5895
  %v6176 = vpack.c.b16 %v5898, %v5896
  %v6177 = vpack.c.b16 %v5901, %v5899
  %v6178 = vpack.c.b16 %v5902, %v5900
  %v6179 = vpack.c.b16 %v5905, %v5903
  %v6180 = vpack.c.b16 %v5906, %v5904
  %v6181 = vpack.c.b16 %v5909, %v5907
  %v6182 = vpack.c.b16 %v5910, %v5908
  %v6183 = vpack.c.b16 %v5913, %v5911
  %v6184 = vpack.c.b16 %v5914, %v5912
  %v6185 = vpack.c.b16 %v5917, %v5915
  %v6186 = vpack.c.b16 %v5918, %v5916
  %v6187 = vpack.c.b16 %v5921, %v5919
  %v6188 = vpack.c.b16 %v5922, %v5920
  %v6189 = vpack.c.b16 %v5925, %v5923
  %v6190 = vpack.c.b16 %v5926, %v5924
  %v6191 = vpack.c.b16 %v5929, %v5927
  %v6192 = vpack.c.b16 %v5930, %v5928
  %v6193 = vpack.c.b16 %v5933, %v5931
  %v6194 = vpack.c.b16 %v5934, %v5932
  %v6195 = vpack.c.b16 %v5937, %v5935
  %v6196 = vpack.c.b16 %v5938, %v5936
  %v6197 = vpack.c.b16 %v5941, %v5939
  %v6198 = vpack.c.b16 %v5942, %v5940
  %v6199 = vpack.c.b16 %v5945, %v5943
  %v6200 = vpack.c.b16 %v5946, %v5944
  %v6201 = vpack.c.b16 %v5949, %v5947
  %v6202 = vpack.c.b16 %v5950, %v5948
  %v6203 = vpack.c.b16 %v5953, %v5951
  %v6204 = vpack.c.b16 %v5954, %v5952
  %v6205 = vpack.c.b16 %v5957, %v5955
  %v6206 = vpack.c.b16 %v5958, %v5956
  %v6207 = vpack.c.b16 %v5961, %v5959
  %v6208 = vpack.c.b16 %v5962, %v5960
  %v6209 = vpack.c.b16 %v5965, %v5963
  %v6210 = vpack.c.b16 %v5966, %v5964
  %v6211 = vpack.c.b16 %v5969, %v5967
  %v6212 = vpack.c.b16 %v5970, %v5968
  %v6213 = vpack.c.b16 %v5973, %v5971
  %v6214 = vpack.c.b16 %v5974, %v5972
  %v6215 = vpack.c.b16 %v5977, %v5975
  %v6216 = vpack.c.b16 %v5978, %v5976
  %v6217 = vpack.c.b16 %v5981, %v5979
  %v6218 = vpack.c.b16 %v5982, %v5980
  %v6219 = vpack.c.b16 %v5985, %v5983
  %v6220 = vpack.c.b16 %v5986, %v5984
  %v6221 = vpack.c.b16 %v5989, %v5987
  %v6222 = vpack.c.b16 %v5990, %v5988
  %v6223 = vpack.c.b16 %v5993, %v5991
  %v6224 = vpack.c.b16 %v5994, %v5992
  %v6225 = vpack.c.b16 %v5997, %v5995
  %v6226 = vpack.c.b16 %v5998, %v5996
  %v6227 = vpack.c.b16 %v6001, %v5999
  %v6228 = vpack.c.b16 %v6002, %v6000
  %v6229 = vpack.c.b16 %v6005, %v6003
  %v6230 = vpack.c.b16 %v6006, %v6004
  %v6231 = vpack.c.b16 %v6009, %v6007
  %v6232 = vpack.c.b16 %v6010, %v6008
  %v6233 = vpack.c.b16 %v6013, %v6011
  %v6234 = vpack.c.b16 %v6014, %v6012
  %v6235 = vpack.c.b16 %v6017, %v6015
  %v6236 = vpack.c.b16 %v6018, %v6016
  %v6237 = vpack.c.b16 %v6021, %v6019
  %v6238 = vpack.c.b16 %v6022, %v6020
  %v6239 = vpack.c.b16 %v6025, %v6023
  %v6240 = vpack.c.b16 %v6026, %v6024
  %v6241 = vpack.c.b16 %v6029, %v6027
  %v6242 = vpack.c.b16 %v6030, %v6028
  %v6243 = vpack.c.b16 %v6033, %v6031
  %v6244 = vpack.c.b16 %v6034, %v6032
  %v6245 = vpack.c.b16 %v6037, %v6035
  %v6246 = vpack.c.b16 %v6038, %v6036
  %v6247 = vpack.c.b16 %v6041, %v6039
  %v6248 = vpack.c.b16 %v6042, %v6040
  %v6249 = vpack.c.b16 %v6045, %v6043
  %v6250 = vpack.c.b16 %v6046, %v6044
  %v6251 = vpack.c.b16 %v6049, %v6047
  %v6252 = vpack.c.b16 %v6050, %v6048
  %v6253 = vpack.c.b16 %v6053, %v6051
  %v6254 = vpack.c.b16 %v6054, %v6052
  %v6255 = vpack.c.b16 %v6057, %v6055
  %v6256 = vpack.c.b16 %v6058, %v6056
  %v6257 = vpack.c.b16 %v6061, %v6059
  %v6258 = vpack.c.b16 %v6062, %v6060
  %v6259 = vpack.c.b16 %v6065, %v6063
  %v6260 = vpack.c.b16 %v6066, %v6064
  %v6261 = vpack.c.b16 %v6069, %v6067
  %v6262 = vpack.c.b16 %v6070, %v6068
  %v6263 = vpack.c.b16 %v6073, %v6071
  %v6264 = vpack.c.b16 %v6074, %v6072
  %v6265 = vpack.c.b16 %v6077, %v6075
  %v6266 = vpack.c.b16 %v6078, %v6076
  %v6267 = vpack.c.b16 %v6081, %v6079
  %v6268 = vpack.c.b16 %v6082, %v6080
  %v6269 = vpack.c.b16 %v6085, %v6083
  %v6270 = vpack.c.b16 %v6086, %v6084
  %v6271 = vpack.c.b16 %v6089, %v6087
  %v6272 = vpack.c.b16 %v6090, %v6088
  %v6273 = vpack.c.b16 %v6093, %v6091
  %v6274 = vpack.c.b16 %v6094, %v6092
  %v6275 = vpack.c.b16 %v6097, %v6095
  %v6276 = vpack.c.b16 %v6098, %v6096
  %v6277 = vpack.c.b16 %v6101, %v6099
  %v6278 = vpack.c.b16 %v6102, %v6100
  %v6279 = vpack.c.b16 %v6105, %v6103
  %v6280 = vpack.c.b16 %v6106, %v6104
  %v6281 = vpack.c.b16 %v6109, %v6107
  %v6282 = vpack.c.b16 %v6110, %v6108
  %v6283 = vpack.c.b16 %v6113, %v6111
  %v6284 = vpack.c.b16 %v6114, %v6112
  %v6285 = vpack.c.b16 %v6117, %v6115
  %v6286 = vpack.c.b16 %v6118, %v6116
  %v6287 = vpack.c.b16 %v6121, %v6119
  %v6288 = vpack.c.b16 %v6122, %v6120
  %v6289 = vpack.c.b16 %v6125, %v6123
  %v6290 = vpack.c.b16 %v6126, %v6124
  %v6291 = vpack.c.b16 %v6129, %v6127
  %v6292 = vpack.c.b16 %v6130, %v6128
  %v6293 = vpack.c.b16 %v6133, %v6131
  %v6294 = vpack.c.b16 %v6134, %v6132
  %v6295 = vpack.c.b16 %v6137, %v6135
  %v6296 = vpack.c.b16 %v6138, %v6136
  %v6297 = vpack.c.b16 %v6141, %v6139
  %v6298 = vpack.c.b16 %v6142, %v6140
  %v6299 = vpack.c.b16 %v6145, %v6143
  %v6300 = vpack.c.b16 %v6146, %v6144
  %v6301 = vpack.c.b16 %v6149, %v6147
  %v6302 = vpack.c.b16 %v6150, %v6148
  %v6303 = vpack.c.b16 %v6153, %v6151
  %v6304 = vpack.c.b16 %v6154, %v6152
  %v6305 = vpack.c.b16 %v6157, %v6155
  %v6306 = vpack.c.b16 %v6158, %v6156
  %v6307 = vpack.c.b16 %v6161, %v6159
  %v6308 = vpack.c.b16 %v6162, %v6160
  %v6309 = vpack.c.b16 %v6165, %v6163
  %v6310 = vpack.c.b16 %v6166, %v6164
  %6455 = vmatpush.bf16.msra.mxu0 %v6181
  %6456 = vmatpush.bf16.msra.mxu0 %v6179
  %6457 = vmatpush.bf16.msra.mxu0 %v6177
  %6458 = vmatpush.bf16.msra.mxu0 %v6175
  %6459 = vmatpush.bf16.msra.mxu0 %v6173
  %6460 = vmatpush.bf16.msra.mxu0 %v6171
  %6461 = vmatpush.bf16.msra.mxu0 %v6169
  %6462 = vmatpush.bf16.msra.mxu0 %v6167
  %6463 = vmatmul.bf16.gmra.mxu0 %v5576
  %v6464 = vpop.f32.mrf.mxu0
  %v6465 = vadd.f32 %v5731, %v6464
  %v6466 = vpop.f32.mrf.mxu0
  %6467 = vdwg.mxu0
  %6468 = vmatpush.bf16.msra.mxu0 %v6197
  %6469 = vmatpush.bf16.msra.mxu0 %v6195
  %6470 = vmatpush.bf16.msra.mxu0 %v6193
  %6471 = vmatpush.bf16.msra.mxu0 %v6191
  %6472 = vmatpush.bf16.msra.mxu0 %v6189
  %6473 = vmatpush.bf16.msra.mxu0 %v6187
  %6474 = vmatpush.bf16.msra.mxu0 %v6185
  %6475 = vmatpush.bf16.msra.mxu0 %v6183
  %6476 = vmatmul.bf16.gmra.mxu0 %v5577
  %v6477 = vpop.f32.mrf.mxu0
  %v6478 = vadd.f32 %v6465, %v6477
  %v6479 = vpop.f32.mrf.mxu0
  %6480 = vdwg.mxu0
  %6481 = vmatpush.bf16.msra.mxu0 %v6213
  %6482 = vmatpush.bf16.msra.mxu0 %v6211
  %6483 = vmatpush.bf16.msra.mxu0 %v6209
  %6484 = vmatpush.bf16.msra.mxu0 %v6207
  %6485 = vmatpush.bf16.msra.mxu0 %v6205
  %6486 = vmatpush.bf16.msra.mxu0 %v6203
  %6487 = vmatpush.bf16.msra.mxu0 %v6201
  %6488 = vmatpush.bf16.msra.mxu0 %v6199
  %6489 = vmatmul.bf16.gmra.mxu0 %v5578
  %v6490 = vpop.f32.mrf.mxu0
  %v6491 = vadd.f32 %v6478, %v6490
  %v6492 = vpop.f32.mrf.mxu0
  %6493 = vdwg.mxu0
  %6494 = vmatpush.bf16.msra.mxu0 %v6229
  %6495 = vmatpush.bf16.msra.mxu0 %v6227
  %6496 = vmatpush.bf16.msra.mxu0 %v6225
  %6497 = vmatpush.bf16.msra.mxu0 %v6223
  %6498 = vmatpush.bf16.msra.mxu0 %v6221
  %6499 = vmatpush.bf16.msra.mxu0 %v6219
  %6500 = vmatpush.bf16.msra.mxu0 %v6217
  %6501 = vmatpush.bf16.msra.mxu0 %v6215
  %6502 = vmatmul.bf16.gmra.mxu0 %v5579
  %v6503 = vpop.f32.mrf.mxu0
  %v6504 = vadd.f32 %v6491, %v6503
  %v6505 = vpop.f32.mrf.mxu0
  %6506 = vdwg.mxu0
  %6507 = vmatpush.bf16.msra.mxu0 %v6245
  %6508 = vmatpush.bf16.msra.mxu0 %v6243
  %6509 = vmatpush.bf16.msra.mxu0 %v6241
  %6510 = vmatpush.bf16.msra.mxu0 %v6239
  %6511 = vmatpush.bf16.msra.mxu0 %v6237
  %6512 = vmatpush.bf16.msra.mxu0 %v6235
  %6513 = vmatpush.bf16.msra.mxu0 %v6233
  %6514 = vmatpush.bf16.msra.mxu0 %v6231
  %6515 = vmatmul.bf16.gmra.mxu0 %v5580
  %v6516 = vpop.f32.mrf.mxu0
  %v6517 = vadd.f32 %v6504, %v6516
  %v6518 = vpop.f32.mrf.mxu0
  %6519 = vdwg.mxu0
  %6520 = vmatpush.bf16.msra.mxu0 %v6261
  %6521 = vmatpush.bf16.msra.mxu0 %v6259
  %6522 = vmatpush.bf16.msra.mxu0 %v6257
  %6523 = vmatpush.bf16.msra.mxu0 %v6255
  %6524 = vmatpush.bf16.msra.mxu0 %v6253
  %6525 = vmatpush.bf16.msra.mxu0 %v6251
  %6526 = vmatpush.bf16.msra.mxu0 %v6249
  %6527 = vmatpush.bf16.msra.mxu0 %v6247
  %6528 = vmatmul.bf16.gmra.mxu0 %v5581
  %v6529 = vpop.f32.mrf.mxu0
  %v6530 = vadd.f32 %v6517, %v6529
  %v6531 = vpop.f32.mrf.mxu0
  %6532 = vdwg.mxu0
  %6533 = vmatpush.bf16.msra.mxu0 %v6277
  %6534 = vmatpush.bf16.msra.mxu0 %v6275
  %6535 = vmatpush.bf16.msra.mxu0 %v6273
  %6536 = vmatpush.bf16.msra.mxu0 %v6271
  %6537 = vmatpush.bf16.msra.mxu0 %v6269
  %6538 = vmatpush.bf16.msra.mxu0 %v6267
  %6539 = vmatpush.bf16.msra.mxu0 %v6265
  %6540 = vmatpush.bf16.msra.mxu0 %v6263
  %6541 = vmatmul.bf16.gmra.mxu0 %v5582
  %v6542 = vpop.f32.mrf.mxu0
  %v6543 = vadd.f32 %v6530, %v6542
  %v6544 = vpop.f32.mrf.mxu0
  %6545 = vdwg.mxu0
  %6546 = vmatpush.bf16.msra.mxu0 %v6293
  %6547 = vmatpush.bf16.msra.mxu0 %v6291
  %6548 = vmatpush.bf16.msra.mxu0 %v6289
  %6549 = vmatpush.bf16.msra.mxu0 %v6287
  %6550 = vmatpush.bf16.msra.mxu0 %v6285
  %6551 = vmatpush.bf16.msra.mxu0 %v6283
  %6552 = vmatpush.bf16.msra.mxu0 %v6281
  %6553 = vmatpush.bf16.msra.mxu0 %v6279
  %6554 = vmatmul.bf16.gmra.mxu0 %v5583
  %v6555 = vpop.f32.mrf.mxu0
  %v6556 = vadd.f32 %v6543, %v6555
  %v6557 = vpop.f32.mrf.mxu0
  %6558 = vdwg.mxu0
  %6559 = vmatpush.bf16.msra.mxu0 %v6309
  %6560 = vmatpush.bf16.msra.mxu0 %v6307
  %6561 = vmatpush.bf16.msra.mxu0 %v6305
  %6562 = vmatpush.bf16.msra.mxu0 %v6303
  %6563 = vmatpush.bf16.msra.mxu0 %v6301
  %6564 = vmatpush.bf16.msra.mxu0 %v6299
  %6565 = vmatpush.bf16.msra.mxu0 %v6297
  %6566 = vmatpush.bf16.msra.mxu0 %v6295
  %6567 = vmatmul.bf16.gmra.mxu0 %v5584
  %v6568 = vpop.f32.mrf.mxu0
  %v6569 = vadd.f32 %v6556, %v6568
  %v6570 = vpop.f32.mrf.mxu0
  %6571 = vdwg.mxu0
  %6572 = vmatpush.bf16.msra.mxu0 %v6182
  %6573 = vmatpush.bf16.msra.mxu0 %v6180
  %6574 = vmatpush.bf16.msra.mxu0 %v6178
  %6575 = vmatpush.bf16.msra.mxu0 %v6176
  %6576 = vmatpush.bf16.msra.mxu0 %v6174
  %6577 = vmatpush.bf16.msra.mxu0 %v6172
  %6578 = vmatpush.bf16.msra.mxu0 %v6170
  %6579 = vmatpush.bf16.msra.mxu0 %v6168
  %6580 = vmatmul.bf16.gmra.mxu0 %v5576
  %v6581 = vpop.f32.mrf.mxu0
  %v6582 = vadd.f32 %v5732, %v6581
  %v6583 = vpop.f32.mrf.mxu0
  %6584 = vdwg.mxu0
  %6585 = vmatpush.bf16.msra.mxu0 %v6198
  %6586 = vmatpush.bf16.msra.mxu0 %v6196
  %6587 = vmatpush.bf16.msra.mxu0 %v6194
  %6588 = vmatpush.bf16.msra.mxu0 %v6192
  %6589 = vmatpush.bf16.msra.mxu0 %v6190
  %6590 = vmatpush.bf16.msra.mxu0 %v6188
  %6591 = vmatpush.bf16.msra.mxu0 %v6186
  %6592 = vmatpush.bf16.msra.mxu0 %v6184
  %6593 = vmatmul.bf16.gmra.mxu0 %v5577
  %v6594 = vpop.f32.mrf.mxu0
  %v6595 = vadd.f32 %v6582, %v6594
  %v6596 = vpop.f32.mrf.mxu0
  %6597 = vdwg.mxu0
  %6598 = vmatpush.bf16.msra.mxu0 %v6214
  %6599 = vmatpush.bf16.msra.mxu0 %v6212
  %6600 = vmatpush.bf16.msra.mxu0 %v6210
  %6601 = vmatpush.bf16.msra.mxu0 %v6208
  %6602 = vmatpush.bf16.msra.mxu0 %v6206
  %6603 = vmatpush.bf16.msra.mxu0 %v6204
  %6604 = vmatpush.bf16.msra.mxu0 %v6202
  %6605 = vmatpush.bf16.msra.mxu0 %v6200
  %6606 = vmatmul.bf16.gmra.mxu0 %v5578
  %v6607 = vpop.f32.mrf.mxu0
  %v6608 = vadd.f32 %v6595, %v6607
  %v6609 = vpop.f32.mrf.mxu0
  %6610 = vdwg.mxu0
  %6611 = vmatpush.bf16.msra.mxu0 %v6230
  %6612 = vmatpush.bf16.msra.mxu0 %v6228
  %6613 = vmatpush.bf16.msra.mxu0 %v6226
  %6614 = vmatpush.bf16.msra.mxu0 %v6224
  %6615 = vmatpush.bf16.msra.mxu0 %v6222
  %6616 = vmatpush.bf16.msra.mxu0 %v6220
  %6617 = vmatpush.bf16.msra.mxu0 %v6218
  %6618 = vmatpush.bf16.msra.mxu0 %v6216
  %6619 = vmatmul.bf16.gmra.mxu0 %v5579
  %v6620 = vpop.f32.mrf.mxu0
  %v6621 = vadd.f32 %v6608, %v6620
  %v6622 = vpop.f32.mrf.mxu0
  %6623 = vdwg.mxu0
  %6624 = vmatpush.bf16.msra.mxu0 %v6246
  %6625 = vmatpush.bf16.msra.mxu0 %v6244
  %6626 = vmatpush.bf16.msra.mxu0 %v6242
  %6627 = vmatpush.bf16.msra.mxu0 %v6240
  %6628 = vmatpush.bf16.msra.mxu0 %v6238
  %6629 = vmatpush.bf16.msra.mxu0 %v6236
  %6630 = vmatpush.bf16.msra.mxu0 %v6234
  %6631 = vmatpush.bf16.msra.mxu0 %v6232
  %6632 = vmatmul.bf16.gmra.mxu0 %v5580
  %v6633 = vpop.f32.mrf.mxu0
  %v6634 = vadd.f32 %v6621, %v6633
  %v6635 = vpop.f32.mrf.mxu0
  %6636 = vdwg.mxu0
  %6637 = vmatpush.bf16.msra.mxu0 %v6262
  %6638 = vmatpush.bf16.msra.mxu0 %v6260
  %6639 = vmatpush.bf16.msra.mxu0 %v6258
  %6640 = vmatpush.bf16.msra.mxu0 %v6256
  %6641 = vmatpush.bf16.msra.mxu0 %v6254
  %6642 = vmatpush.bf16.msra.mxu0 %v6252
  %6643 = vmatpush.bf16.msra.mxu0 %v6250
  %6644 = vmatpush.bf16.msra.mxu0 %v6248
  %6645 = vmatmul.bf16.gmra.mxu0 %v5581
  %v6646 = vpop.f32.mrf.mxu0
  %v6647 = vadd.f32 %v6634, %v6646
  %v6648 = vpop.f32.mrf.mxu0
  %6649 = vdwg.mxu0
  %6650 = vmatpush.bf16.msra.mxu0 %v6278
  %6651 = vmatpush.bf16.msra.mxu0 %v6276
  %6652 = vmatpush.bf16.msra.mxu0 %v6274
  %6653 = vmatpush.bf16.msra.mxu0 %v6272
  %6654 = vmatpush.bf16.msra.mxu0 %v6270
  %6655 = vmatpush.bf16.msra.mxu0 %v6268
  %6656 = vmatpush.bf16.msra.mxu0 %v6266
  %6657 = vmatpush.bf16.msra.mxu0 %v6264
  %6658 = vmatmul.bf16.gmra.mxu0 %v5582
  %v6659 = vpop.f32.mrf.mxu0
  %v6660 = vadd.f32 %v6647, %v6659
  %v6661 = vpop.f32.mrf.mxu0
  %6662 = vdwg.mxu0
  %6663 = vmatpush.bf16.msra.mxu0 %v6294
  %6664 = vmatpush.bf16.msra.mxu0 %v6292
  %6665 = vmatpush.bf16.msra.mxu0 %v6290
  %6666 = vmatpush.bf16.msra.mxu0 %v6288
  %6667 = vmatpush.bf16.msra.mxu0 %v6286
  %6668 = vmatpush.bf16.msra.mxu0 %v6284
  %6669 = vmatpush.bf16.msra.mxu0 %v6282
  %6670 = vmatpush.bf16.msra.mxu0 %v6280
  %6671 = vmatmul.bf16.gmra.mxu0 %v5583
  %v6672 = vpop.f32.mrf.mxu0
  %v6673 = vadd.f32 %v6660, %v6672
  %v6674 = vpop.f32.mrf.mxu0
  %6675 = vdwg.mxu0
  %6676 = vmatpush.bf16.msra.mxu0 %v6310
  %6677 = vmatpush.bf16.msra.mxu0 %v6308
  %6678 = vmatpush.bf16.msra.mxu0 %v6306
  %6679 = vmatpush.bf16.msra.mxu0 %v6304
  %6680 = vmatpush.bf16.msra.mxu0 %v6302
  %6681 = vmatpush.bf16.msra.mxu0 %v6300
  %6682 = vmatpush.bf16.msra.mxu0 %v6298
  %6683 = vmatpush.bf16.msra.mxu0 %v6296
  %6684 = vmatmul.bf16.gmra.mxu0 %v5584
  %v6685 = vpop.f32.mrf.mxu0
  %v6686 = vadd.f32 %v6673, %v6685
  %v6687 = vpop.f32.mrf.mxu0
  %6688 = vdwg.mxu0
  %6689 = vst [vmem:[#allocation9] sm:$0xff] %v6569
  %6690 = vst [vmem:[#allocation9 + $0x8] sm:$0xff] %v6686
  %v6691 = vld [vmem:[%s55] sm:$0xff]
  %v6692 = vld [vmem:[%s55 + $0x8] sm:$0xff]
  %v6693 = vld [vmem:[%s55 + $0x10] sm:$0xff]
  %v6694 = vld [vmem:[%s55 + $0x18] sm:$0xff]
  %v6695 = vld [vmem:[%s55 + $0x20] sm:$0xff]
  %v6696 = vld [vmem:[%s55 + $0x28] sm:$0xff]
  %v6697 = vld [vmem:[%s55 + $0x30] sm:$0xff]
  %v6698 = vld [vmem:[%s55 + $0x38] sm:$0xff]
  %v6699 = vld [vmem:[%s55 + $0x40] sm:$0xff]
  %v6700 = vld [vmem:[%s55 + $0x48] sm:$0xff]
  %v6701 = vld [vmem:[%s55 + $0x50] sm:$0xff]
  %v6702 = vld [vmem:[%s55 + $0x58] sm:$0xff]
  %v6703 = vld [vmem:[%s55 + $0x60] sm:$0xff]
  %v6704 = vld [vmem:[%s55 + $0x68] sm:$0xff]
  %v6705 = vld [vmem:[%s55 + $0x70] sm:$0xff]
  %v6706 = vld [vmem:[%s55 + $0x78] sm:$0xff]
  %v6707 = vld [vmem:[%s55 + $0x80] sm:$0xff]
  %v6708 = vld [vmem:[%s55 + $0x88] sm:$0xff]
  %v6709 = vld [vmem:[%s55 + $0x90] sm:$0xff]
  %v6710 = vld [vmem:[%s55 + $0x98] sm:$0xff]
  %v6711 = vld [vmem:[%s55 + $0xa0] sm:$0xff]
  %v6712 = vld [vmem:[%s55 + $0xa8] sm:$0xff]
  %v6713 = vld [vmem:[%s55 + $0xb0] sm:$0xff]
  %v6714 = vld [vmem:[%s55 + $0xb8] sm:$0xff]
  %v6715 = vld [vmem:[%s55 + $0xc0] sm:$0xff]
  %v6716 = vld [vmem:[%s55 + $0xc8] sm:$0xff]
  %v6717 = vld [vmem:[%s55 + $0xd0] sm:$0xff]
  %v6718 = vld [vmem:[%s55 + $0xd8] sm:$0xff]
  %v6719 = vld [vmem:[%s55 + $0xe0] sm:$0xff]
  %v6720 = vld [vmem:[%s55 + $0xe8] sm:$0xff]
  %v6721 = vld [vmem:[%s55 + $0xf0] sm:$0xff]
  %v6722 = vld [vmem:[%s55 + $0xf8] sm:$0xff]
  %v6723 = vld [vmem:[%s57] sm:$0xff]
  %v6724 = vld [vmem:[%s57 + $0x8] sm:$0xff]
  %v6725 = vld [vmem:[%s57 + $0x10] sm:$0xff]
  %v6726 = vld [vmem:[%s57 + $0x18] sm:$0xff]
  %v6727 = vld [vmem:[%s57 + $0x20] sm:$0xff]
  %v6728 = vld [vmem:[%s57 + $0x28] sm:$0xff]
  %v6729 = vld [vmem:[%s57 + $0x30] sm:$0xff]
  %v6730 = vld [vmem:[%s57 + $0x38] sm:$0xff]
  %v6731 = vld [vmem:[%s51] sm:$0x3]
  %v6732 = vld [vmem:[%s53] sm:$0x3]
  %v6733 = vld [vmem:[#allocation9] sm:$0xf]
  %v6734 = vld [vmem:[#allocation9 + $0x8] sm:$0xf]
  %vm6735 = vcmask 1043456
  %v6736 = vsel %vm6735, %v6733, 0.0
  %v6737 = vrot.slane %v6736, 4
  %v6738 = vadd.f32 %v6736, %v6737
  %v6739 = vrot.slane %v6738, 2
  %v6740 = vadd.f32 %v6738, %v6739
  %v6741 = vrot.slane %v6740, 1
  %v6742 = vadd.f32 %v6740, %v6741
  %v6743 = vsel %vm6735, %v6734, 0.0
  %v6744 = vrot.slane %v6743, 4
  %v6745 = vadd.f32 %v6743, %v6744
  %v6746 = vrot.slane %v6745, 2
  %v6747 = vadd.f32 %v6745, %v6746
  %v6748 = vrot.slane %v6747, 1
  %v6749 = vadd.f32 %v6747, %v6748
  %v6750 = vmul.f32 %v6733, %v6733
  %v6751 = vmul.f32 %v6734, %v6734
  %v6752 = vsel %vm6735, %v6750, 0.0
  %v6753 = vrot.slane %v6752, 4
  %v6754 = vadd.f32 %v6752, %v6753
  %v6755 = vrot.slane %v6754, 2
  %v6756 = vadd.f32 %v6754, %v6755
  %v6757 = vrot.slane %v6756, 1
  %v6758 = vadd.f32 %v6756, %v6757
  %v6759 = vsel %vm6735, %v6751, 0.0
  %v6760 = vrot.slane %v6759, 4
  %v6761 = vadd.f32 %v6759, %v6760
  %v6762 = vrot.slane %v6761, 2
  %v6763 = vadd.f32 %v6761, %v6762
  %v6764 = vrot.slane %v6763, 1
  %v6765 = vadd.f32 %v6763, %v6764
  %6766 = vmatpush.msra.mxu0 %v6706
  %6767 = vmatpush.msra.mxu0 %v6705
  %6768 = vmatpush.msra.mxu0 %v6704
  %6769 = vmatpush.msra.mxu0 %v6703
  %6770 = vmatpush.msra.mxu0 %v6702
  %6771 = vmatpush.msra.mxu0 %v6701
  %6772 = vmatpush.msra.mxu0 %v6700
  %6773 = vmatpush.msra.mxu0 %v6699
  %6774 = vmatpush.msra.mxu0 %v6698
  %6775 = vmatpush.msra.mxu0 %v6697
  %6776 = vmatpush.msra.mxu0 %v6696
  %6777 = vmatpush.msra.mxu0 %v6695
  %6778 = vmatpush.msra.mxu0 %v6694
  %6779 = vmatpush.msra.mxu0 %v6693
  %6780 = vmatpush.msra.mxu0 %v6692
  %6781 = vmatpush.msra.mxu0 %v6691
  %6782 = vmatmul.f32.gmra.mxu0 %v6742
  %v6783 = vpop.f32.mrf.mxu0
  %v6784 = vadd.f32 0.0, %v6783
  %6785 = vdwg.mxu0
  %6786 = vmatpush.msra.mxu0 %v6722
  %6787 = vmatpush.msra.mxu0 %v6721
  %6788 = vmatpush.msra.mxu0 %v6720
  %6789 = vmatpush.msra.mxu0 %v6719
  %6790 = vmatpush.msra.mxu0 %v6718
  %6791 = vmatpush.msra.mxu0 %v6717
  %6792 = vmatpush.msra.mxu0 %v6716
  %6793 = vmatpush.msra.mxu0 %v6715
  %6794 = vmatpush.msra.mxu0 %v6714
  %6795 = vmatpush.msra.mxu0 %v6713
  %6796 = vmatpush.msra.mxu0 %v6712
  %6797 = vmatpush.msra.mxu0 %v6711
  %6798 = vmatpush.msra.mxu0 %v6710
  %6799 = vmatpush.msra.mxu0 %v6709
  %6800 = vmatpush.msra.mxu0 %v6708
  %6801 = vmatpush.msra.mxu0 %v6707
  %6802 = vmatmul.f32.gmra.mxu0 %v6749
  %v6803 = vpop.f32.mrf.mxu0
  %v6804 = vadd.f32 %v6784, %v6803
  %6805 = vdwg.mxu0
  %v6806 = vmul.f32 %v6804, 0.03125
  %v6808 = vsel %vm1130, %v6806, 0
  %6810 = vmatpush.msra.mxu0 0.0
  %6811 = vmatpush.msra.mxu0 0.0
  %6812 = vmatpush.msra.mxu0 0.0
  %6813 = vmatpush.msra.mxu0 0.0
  %6814 = vmatpush.msra.mxu0 0.0
  %6815 = vmatpush.msra.mxu0 0.0
  %6816 = vmatpush.msra.mxu0 0.0
  %6817 = vmatpush.msra.mxu0 0.0
  %6818 = vmatpush.msra.mxu0 0.0
  %6819 = vmatpush.msra.mxu0 0.0
  %6820 = vmatpush.msra.mxu0 0.0
  %6821 = vmatpush.msra.mxu0 0.0
  %6822 = vmatpush.msra.mxu0 %v6729
  %6823 = vmatpush.msra.mxu0 %v6727
  %6824 = vmatpush.msra.mxu0 %v6725
  %6825 = vmatpush.msra.mxu0 %v6723
  %6826 = vmatmul.f32.gmra.mxu0 %v6808
  %v6827 = vpop.f32.mrf.mxu0
  %v6828 = vadd.f32 0.0, %v6827
  %6829 = vdwg.mxu0
  %6830 = vmatpush.msra.mxu0 0.0
  %6831 = vmatpush.msra.mxu0 0.0
  %6832 = vmatpush.msra.mxu0 0.0
  %6833 = vmatpush.msra.mxu0 0.0
  %6834 = vmatpush.msra.mxu0 0.0
  %6835 = vmatpush.msra.mxu0 0.0
  %6836 = vmatpush.msra.mxu0 0.0
  %6837 = vmatpush.msra.mxu0 0.0
  %6838 = vmatpush.msra.mxu0 0.0
  %6839 = vmatpush.msra.mxu0 0.0
  %6840 = vmatpush.msra.mxu0 0.0
  %6841 = vmatpush.msra.mxu0 0.0
  %6842 = vmatpush.msra.mxu0 %v6730
  %6843 = vmatpush.msra.mxu0 %v6728
  %6844 = vmatpush.msra.mxu0 %v6726
  %6845 = vmatpush.msra.mxu0 %v6724
  %6846 = vmatmul.f32.gmra.mxu0 %v6808
  %v6847 = vpop.f32.mrf.mxu0
  %v6848 = vadd.f32 0.0, %v6847
  %6849 = vdwg.mxu0
  %6850 = vmatpush.msra.mxu0 %v6706
  %6851 = vmatpush.msra.mxu0 %v6705
  %6852 = vmatpush.msra.mxu0 %v6704
  %6853 = vmatpush.msra.mxu0 %v6703
  %6854 = vmatpush.msra.mxu0 %v6702
  %6855 = vmatpush.msra.mxu0 %v6701
  %6856 = vmatpush.msra.mxu0 %v6700
  %6857 = vmatpush.msra.mxu0 %v6699
  %6858 = vmatpush.msra.mxu0 %v6698
  %6859 = vmatpush.msra.mxu0 %v6697
  %6860 = vmatpush.msra.mxu0 %v6696
  %6861 = vmatpush.msra.mxu0 %v6695
  %6862 = vmatpush.msra.mxu0 %v6694
  %6863 = vmatpush.msra.mxu0 %v6693
  %6864 = vmatpush.msra.mxu0 %v6692
  %6865 = vmatpush.msra.mxu0 %v6691
  %6866 = vmatmul.f32.gmra.mxu0 %v6758
  %v6867 = vpop.f32.mrf.mxu0
  %v6868 = vadd.f32 0.0, %v6867
  %6869 = vdwg.mxu0
  %6870 = vmatpush.msra.mxu0 %v6722
  %6871 = vmatpush.msra.mxu0 %v6721
  %6872 = vmatpush.msra.mxu0 %v6720
  %6873 = vmatpush.msra.mxu0 %v6719
  %6874 = vmatpush.msra.mxu0 %v6718
  %6875 = vmatpush.msra.mxu0 %v6717
  %6876 = vmatpush.msra.mxu0 %v6716
  %6877 = vmatpush.msra.mxu0 %v6715
  %6878 = vmatpush.msra.mxu0 %v6714
  %6879 = vmatpush.msra.mxu0 %v6713
  %6880 = vmatpush.msra.mxu0 %v6712
  %6881 = vmatpush.msra.mxu0 %v6711
  %6882 = vmatpush.msra.mxu0 %v6710
  %6883 = vmatpush.msra.mxu0 %v6709
  %6884 = vmatpush.msra.mxu0 %v6708
  %6885 = vmatpush.msra.mxu0 %v6707
  %6886 = vmatmul.f32.gmra.mxu0 %v6765
  %v6887 = vpop.f32.mrf.mxu0
  %v6888 = vadd.f32 %v6868, %v6887
  %6889 = vdwg.mxu0
  %v6890 = vmul.f32 %v6888, 0.03125
  %v6892 = vsel %vm1130, %v6890, 0
  %6894 = vmatpush.msra.mxu0 0.0
  %6895 = vmatpush.msra.mxu0 0.0
  %6896 = vmatpush.msra.mxu0 0.0
  %6897 = vmatpush.msra.mxu0 0.0
  %6898 = vmatpush.msra.mxu0 0.0
  %6899 = vmatpush.msra.mxu0 0.0
  %6900 = vmatpush.msra.mxu0 0.0
  %6901 = vmatpush.msra.mxu0 0.0
  %6902 = vmatpush.msra.mxu0 0.0
  %6903 = vmatpush.msra.mxu0 0.0
  %6904 = vmatpush.msra.mxu0 0.0
  %6905 = vmatpush.msra.mxu0 0.0
  %6906 = vmatpush.msra.mxu0 %v6729
  %6907 = vmatpush.msra.mxu0 %v6727
  %6908 = vmatpush.msra.mxu0 %v6725
  %6909 = vmatpush.msra.mxu0 %v6723
  %6910 = vmatmul.f32.gmra.mxu0 %v6892
  %v6911 = vpop.f32.mrf.mxu0
  %v6912 = vadd.f32 0.0, %v6911
  %6913 = vdwg.mxu0
  %6914 = vmatpush.msra.mxu0 0.0
  %6915 = vmatpush.msra.mxu0 0.0
  %6916 = vmatpush.msra.mxu0 0.0
  %6917 = vmatpush.msra.mxu0 0.0
  %6918 = vmatpush.msra.mxu0 0.0
  %6919 = vmatpush.msra.mxu0 0.0
  %6920 = vmatpush.msra.mxu0 0.0
  %6921 = vmatpush.msra.mxu0 0.0
  %6922 = vmatpush.msra.mxu0 0.0
  %6923 = vmatpush.msra.mxu0 0.0
  %6924 = vmatpush.msra.mxu0 0.0
  %6925 = vmatpush.msra.mxu0 0.0
  %6926 = vmatpush.msra.mxu0 %v6730
  %6927 = vmatpush.msra.mxu0 %v6728
  %6928 = vmatpush.msra.mxu0 %v6726
  %6929 = vmatpush.msra.mxu0 %v6724
  %6930 = vmatmul.f32.gmra.mxu0 %v6892
  %v6931 = vpop.f32.mrf.mxu0
  %v6932 = vadd.f32 0.0, %v6931
  %6933 = vdwg.mxu0
  %v6934 = vmul.f32 %v6828, %v6828
  %v6935 = vmul.f32 %v6848, %v6848
  %v6936 = vsub.f32 %v6912, %v6934
  %v6937 = vsub.f32 %v6932, %v6935
  %v6938 = vmax.f32 %v6936, 0.0
  %v6939 = vmax.f32 %v6937, 0.0
  %v6940 = vadd.f32 %v6938, 1e-05
  %v6941 = vadd.f32 %v6939, 1e-05
  %v6942 = vrsqrt.pop %v6940
  %v6943 = vmul.f32 %v6942, %v6940
  %v6944 = vmul.f32 %v6943, %v6942
  %v6945 = vmul.f32 0.5, %v6944
  %v6946 = vsub.f32 1.5, %v6945
  %v6947 = vmul.f32 %v6942, %v6946
  %vm6948 = vweird.f32 %v6940
  %vm6949 = vweird.f32 %v6942
  %vm6950 = vmor %vm6948, %vm6949
  %v6951 = vsel %vm6950, %v6942, %v6947
  %v6952 = vrsqrt.pop %v6941
  %v6953 = vmul.f32 %v6952, %v6941
  %v6954 = vmul.f32 %v6953, %v6952
  %v6955 = vmul.f32 0.5, %v6954
  %v6956 = vsub.f32 1.5, %v6955
  %v6957 = vmul.f32 %v6952, %v6956
  %vm6958 = vweird.f32 %v6941
  %vm6959 = vweird.f32 %v6952
  %vm6960 = vmor %vm6958, %vm6959
  %v6961 = vsel %vm6960, %v6952, %v6957
  %v6964 = vrot.slane %v6961, 7
  %vm6965 = vcmask 1040384
  %v6966 = vsel %vm6965, %v6951, %v6964
  %v6968 = vmul.f32 %v6731, %v6966
  %v6970 = vperm.slane %v6968, 0
  %v6971 = vperm.slane %v6968, 1
  %v6974 = vmul.f32 %v6828, %v6970
  %v6975 = vmul.f32 %v6848, %v6971
  %v6978 = vrot.slane %v6975, 7
  %v6979 = vsel %vm6965, %v6974, %v6978
  %v6981 = vsub.f32 %v6732, %v6979
  %v6982 = vmul.f32 %v6733, %v6970
  %v6983 = vmul.f32 %v6734, %v6971
  %v6985 = vperm.slane %v6981, 0
  %v6986 = vperm.slane %v6981, 1
  %v6989 = vadd.f32 %v6982, %v6985
  %v6990 = vadd.f32 %v6983, %v6986
  %v6991 = vmax.f32 %v6989, 0.0
  %v6992 = vmax.f32 %v6990, 0.0
  %6993 = vst [vmem:[%s63] sm:$0xf] %v6991
  %6994 = vst [vmem:[%s63 + $0x8] sm:$0xf] %v6992
  %v6995 = vld [vmem:[#allocation9] sm:$0xf0]
  %v6996 = vld [vmem:[#allocation9 + $0x8] sm:$0xf0]
  %v6999 = vrot.slane %v6995, 4
  %v7000 = vrot.slane %v6996, 4
  %v7003 = vsel %vm6735, %v6999, 0.0
  %v7004 = vrot.slane %v7003, 4
  %v7005 = vadd.f32 %v7003, %v7004
  %v7006 = vrot.slane %v7005, 2
  %v7007 = vadd.f32 %v7005, %v7006
  %v7008 = vrot.slane %v7007, 1
  %v7009 = vadd.f32 %v7007, %v7008
  %v7010 = vsel %vm6735, %v7000, 0.0
  %v7011 = vrot.slane %v7010, 4
  %v7012 = vadd.f32 %v7010, %v7011
  %v7013 = vrot.slane %v7012, 2
  %v7014 = vadd.f32 %v7012, %v7013
  %v7015 = vrot.slane %v7014, 1
  %v7016 = vadd.f32 %v7014, %v7015
  %v7017 = vmul.f32 %v6995, %v6995
  %v7018 = vmul.f32 %v6996, %v6996
  %v7021 = vrot.slane %v7017, 4
  %v7022 = vrot.slane %v7018, 4
  %v7025 = vsel %vm6735, %v7021, 0.0
  %v7026 = vrot.slane %v7025, 4
  %v7027 = vadd.f32 %v7025, %v7026
  %v7028 = vrot.slane %v7027, 2
  %v7029 = vadd.f32 %v7027, %v7028
  %v7030 = vrot.slane %v7029, 1
  %v7031 = vadd.f32 %v7029, %v7030
  %v7032 = vsel %vm6735, %v7022, 0.0
  %v7033 = vrot.slane %v7032, 4
  %v7034 = vadd.f32 %v7032, %v7033
  %v7035 = vrot.slane %v7034, 2
  %v7036 = vadd.f32 %v7034, %v7035
  %v7037 = vrot.slane %v7036, 1
  %v7038 = vadd.f32 %v7036, %v7037
  %7039 = vmatpush.msra.mxu0 %v6706
  %7040 = vmatpush.msra.mxu0 %v6705
  %7041 = vmatpush.msra.mxu0 %v6704
  %7042 = vmatpush.msra.mxu0 %v6703
  %7043 = vmatpush.msra.mxu0 %v6702
  %7044 = vmatpush.msra.mxu0 %v6701
  %7045 = vmatpush.msra.mxu0 %v6700
  %7046 = vmatpush.msra.mxu0 %v6699
  %7047 = vmatpush.msra.mxu0 %v6698
  %7048 = vmatpush.msra.mxu0 %v6697
  %7049 = vmatpush.msra.mxu0 %v6696
  %7050 = vmatpush.msra.mxu0 %v6695
  %7051 = vmatpush.msra.mxu0 %v6694
  %7052 = vmatpush.msra.mxu0 %v6693
  %7053 = vmatpush.msra.mxu0 %v6692
  %7054 = vmatpush.msra.mxu0 %v6691
  %7055 = vmatmul.f32.gmra.mxu0 %v7009
  %v7056 = vpop.f32.mrf.mxu0
  %v7057 = vadd.f32 0.0, %v7056
  %7058 = vdwg.mxu0
  %7059 = vmatpush.msra.mxu0 %v6722
  %7060 = vmatpush.msra.mxu0 %v6721
  %7061 = vmatpush.msra.mxu0 %v6720
  %7062 = vmatpush.msra.mxu0 %v6719
  %7063 = vmatpush.msra.mxu0 %v6718
  %7064 = vmatpush.msra.mxu0 %v6717
  %7065 = vmatpush.msra.mxu0 %v6716
  %7066 = vmatpush.msra.mxu0 %v6715
  %7067 = vmatpush.msra.mxu0 %v6714
  %7068 = vmatpush.msra.mxu0 %v6713
  %7069 = vmatpush.msra.mxu0 %v6712
  %7070 = vmatpush.msra.mxu0 %v6711
  %7071 = vmatpush.msra.mxu0 %v6710
  %7072 = vmatpush.msra.mxu0 %v6709
  %7073 = vmatpush.msra.mxu0 %v6708
  %7074 = vmatpush.msra.mxu0 %v6707
  %7075 = vmatmul.f32.gmra.mxu0 %v7016
  %v7076 = vpop.f32.mrf.mxu0
  %v7077 = vadd.f32 %v7057, %v7076
  %7078 = vdwg.mxu0
  %v7079 = vmul.f32 %v7077, 0.03125
  %v7081 = vsel %vm1130, %v7079, 0
  %7083 = vmatpush.msra.mxu0 0.0
  %7084 = vmatpush.msra.mxu0 0.0
  %7085 = vmatpush.msra.mxu0 0.0
  %7086 = vmatpush.msra.mxu0 0.0
  %7087 = vmatpush.msra.mxu0 0.0
  %7088 = vmatpush.msra.mxu0 0.0
  %7089 = vmatpush.msra.mxu0 0.0
  %7090 = vmatpush.msra.mxu0 0.0
  %7091 = vmatpush.msra.mxu0 0.0
  %7092 = vmatpush.msra.mxu0 0.0
  %7093 = vmatpush.msra.mxu0 0.0
  %7094 = vmatpush.msra.mxu0 0.0
  %7095 = vmatpush.msra.mxu0 %v6729
  %7096 = vmatpush.msra.mxu0 %v6727
  %7097 = vmatpush.msra.mxu0 %v6725
  %7098 = vmatpush.msra.mxu0 %v6723
  %7099 = vmatmul.f32.gmra.mxu0 %v7081
  %v7100 = vpop.f32.mrf.mxu0
  %v7101 = vadd.f32 0.0, %v7100
  %7102 = vdwg.mxu0
  %7103 = vmatpush.msra.mxu0 0.0
  %7104 = vmatpush.msra.mxu0 0.0
  %7105 = vmatpush.msra.mxu0 0.0
  %7106 = vmatpush.msra.mxu0 0.0
  %7107 = vmatpush.msra.mxu0 0.0
  %7108 = vmatpush.msra.mxu0 0.0
  %7109 = vmatpush.msra.mxu0 0.0
  %7110 = vmatpush.msra.mxu0 0.0
  %7111 = vmatpush.msra.mxu0 0.0
  %7112 = vmatpush.msra.mxu0 0.0
  %7113 = vmatpush.msra.mxu0 0.0
  %7114 = vmatpush.msra.mxu0 0.0
  %7115 = vmatpush.msra.mxu0 %v6730
  %7116 = vmatpush.msra.mxu0 %v6728
  %7117 = vmatpush.msra.mxu0 %v6726
  %7118 = vmatpush.msra.mxu0 %v6724
  %7119 = vmatmul.f32.gmra.mxu0 %v7081
  %v7120 = vpop.f32.mrf.mxu0
  %v7121 = vadd.f32 0.0, %v7120
  %7122 = vdwg.mxu0
  %7123 = vmatpush.msra.mxu0 %v6706
  %7124 = vmatpush.msra.mxu0 %v6705
  %7125 = vmatpush.msra.mxu0 %v6704
  %7126 = vmatpush.msra.mxu0 %v6703
  %7127 = vmatpush.msra.mxu0 %v6702
  %7128 = vmatpush.msra.mxu0 %v6701
  %7129 = vmatpush.msra.mxu0 %v6700
  %7130 = vmatpush.msra.mxu0 %v6699
  %7131 = vmatpush.msra.mxu0 %v6698
  %7132 = vmatpush.msra.mxu0 %v6697
  %7133 = vmatpush.msra.mxu0 %v6696
  %7134 = vmatpush.msra.mxu0 %v6695
  %7135 = vmatpush.msra.mxu0 %v6694
  %7136 = vmatpush.msra.mxu0 %v6693
  %7137 = vmatpush.msra.mxu0 %v6692
  %7138 = vmatpush.msra.mxu0 %v6691
  %7139 = vmatmul.f32.gmra.mxu0 %v7031
  %v7140 = vpop.f32.mrf.mxu0
  %v7141 = vadd.f32 0.0, %v7140
  %7142 = vdwg.mxu0
  %7143 = vmatpush.msra.mxu0 %v6722
  %7144 = vmatpush.msra.mxu0 %v6721
  %7145 = vmatpush.msra.mxu0 %v6720
  %7146 = vmatpush.msra.mxu0 %v6719
  %7147 = vmatpush.msra.mxu0 %v6718
  %7148 = vmatpush.msra.mxu0 %v6717
  %7149 = vmatpush.msra.mxu0 %v6716
  %7150 = vmatpush.msra.mxu0 %v6715
  %7151 = vmatpush.msra.mxu0 %v6714
  %7152 = vmatpush.msra.mxu0 %v6713
  %7153 = vmatpush.msra.mxu0 %v6712
  %7154 = vmatpush.msra.mxu0 %v6711
  %7155 = vmatpush.msra.mxu0 %v6710
  %7156 = vmatpush.msra.mxu0 %v6709
  %7157 = vmatpush.msra.mxu0 %v6708
  %7158 = vmatpush.msra.mxu0 %v6707
  %7159 = vmatmul.f32.gmra.mxu0 %v7038
  %v7160 = vpop.f32.mrf.mxu0
  %v7161 = vadd.f32 %v7141, %v7160
  %7162 = vdwg.mxu0
  %v7163 = vmul.f32 %v7161, 0.03125
  %v7165 = vsel %vm1130, %v7163, 0
  %7167 = vmatpush.msra.mxu0 0.0
  %7168 = vmatpush.msra.mxu0 0.0
  %7169 = vmatpush.msra.mxu0 0.0
  %7170 = vmatpush.msra.mxu0 0.0
  %7171 = vmatpush.msra.mxu0 0.0
  %7172 = vmatpush.msra.mxu0 0.0
  %7173 = vmatpush.msra.mxu0 0.0
  %7174 = vmatpush.msra.mxu0 0.0
  %7175 = vmatpush.msra.mxu0 0.0
  %7176 = vmatpush.msra.mxu0 0.0
  %7177 = vmatpush.msra.mxu0 0.0
  %7178 = vmatpush.msra.mxu0 0.0
  %7179 = vmatpush.msra.mxu0 %v6729
  %7180 = vmatpush.msra.mxu0 %v6727
  %7181 = vmatpush.msra.mxu0 %v6725
  %7182 = vmatpush.msra.mxu0 %v6723
  %7183 = vmatmul.f32.gmra.mxu0 %v7165
  %v7184 = vpop.f32.mrf.mxu0
  %v7185 = vadd.f32 0.0, %v7184
  %7186 = vdwg.mxu0
  %7187 = vmatpush.msra.mxu0 0.0
  %7188 = vmatpush.msra.mxu0 0.0
  %7189 = vmatpush.msra.mxu0 0.0
  %7190 = vmatpush.msra.mxu0 0.0
  %7191 = vmatpush.msra.mxu0 0.0
  %7192 = vmatpush.msra.mxu0 0.0
  %7193 = vmatpush.msra.mxu0 0.0
  %7194 = vmatpush.msra.mxu0 0.0
  %7195 = vmatpush.msra.mxu0 0.0
  %7196 = vmatpush.msra.mxu0 0.0
  %7197 = vmatpush.msra.mxu0 0.0
  %7198 = vmatpush.msra.mxu0 0.0
  %7199 = vmatpush.msra.mxu0 %v6730
  %7200 = vmatpush.msra.mxu0 %v6728
  %7201 = vmatpush.msra.mxu0 %v6726
  %7202 = vmatpush.msra.mxu0 %v6724
  %7203 = vmatmul.f32.gmra.mxu0 %v7165
  %v7204 = vpop.f32.mrf.mxu0
  %v7205 = vadd.f32 0.0, %v7204
  %7206 = vdwg.mxu0
  %v7207 = vmul.f32 %v7101, %v7101
  %v7208 = vmul.f32 %v7121, %v7121
  %v7209 = vsub.f32 %v7185, %v7207
  %v7210 = vsub.f32 %v7205, %v7208
  %v7211 = vmax.f32 %v7209, 0.0
  %v7212 = vmax.f32 %v7210, 0.0
  %v7213 = vadd.f32 %v7211, 1e-05
  %v7214 = vadd.f32 %v7212, 1e-05
  %v7215 = vrsqrt.pop %v7213
  %v7216 = vmul.f32 %v7215, %v7213
  %v7217 = vmul.f32 %v7216, %v7215
  %v7218 = vmul.f32 0.5, %v7217
  %v7219 = vsub.f32 1.5, %v7218
  %v7220 = vmul.f32 %v7215, %v7219
  %vm7221 = vweird.f32 %v7213
  %vm7222 = vweird.f32 %v7215
  %vm7223 = vmor %vm7221, %vm7222
  %v7224 = vsel %vm7223, %v7215, %v7220
  %v7225 = vrsqrt.pop %v7214
  %v7226 = vmul.f32 %v7225, %v7214
  %v7227 = vmul.f32 %v7226, %v7225
  %v7228 = vmul.f32 0.5, %v7227
  %v7229 = vsub.f32 1.5, %v7228
  %v7230 = vmul.f32 %v7225, %v7229
  %vm7231 = vweird.f32 %v7214
  %vm7232 = vweird.f32 %v7225
  %vm7233 = vmor %vm7231, %vm7232
  %v7234 = vsel %vm7233, %v7225, %v7230
  %v7237 = vrot.slane %v7234, 7
  %v7238 = vsel %vm6965, %v7224, %v7237
  %v7240 = vmul.f32 %v6731, %v7238
  %v7242 = vperm.slane %v7240, 0
  %v7243 = vperm.slane %v7240, 1
  %v7246 = vmul.f32 %v7101, %v7242
  %v7247 = vmul.f32 %v7121, %v7243
  %v7250 = vrot.slane %v7247, 7
  %v7251 = vsel %vm6965, %v7246, %v7250
  %v7253 = vsub.f32 %v6732, %v7251
  %v7254 = vmul.f32 %v6995, %v7242
  %v7255 = vmul.f32 %v6996, %v7243
  %v7257 = vperm.slane %v7253, 0
  %v7258 = vperm.slane %v7253, 1
  %v7261 = vadd.f32 %v7254, %v7257
  %v7262 = vadd.f32 %v7255, %v7258
  %v7263 = vmax.f32 %v7261, 0.0
  %v7264 = vmax.f32 %v7262, 0.0
  %7265 = vst [vmem:[%s63] sm:$0xf0] %v7263
  %7266 = vst [vmem:[%s63 + $0x8] sm:$0xf0] %v7264
  // Predicated region
  $region126: #{simple_cnn_forward.1} parent=0 // pred_check
    _
  $region127: #{simple_cnn_forward.1} parent=0 // pred_check_branch
    %7268 = sbr.rel (0) target = $region129
  $region128: #{simple_cnn_forward.1} parent=0 // pred_region
    _
  $region129: #{simple_cnn_forward.1} parent=0 // pred_fallthru
    _
  // Predicated region
  $region130: #{simple_cnn_forward.1} parent=0 // pred_check
    _
  $region131: #{simple_cnn_forward.1} parent=0 // pred_check_branch
    %7270 = sbr.rel (0) target = $region133
  $region132: #{simple_cnn_forward.1} parent=0 // pred_region
    _
  $region133: #{simple_cnn_forward.1} parent=0 // pred_fallthru
    _

</llo_original>
